<compile_context>
chip_gen: v6e
topology: v6e:2x2x1
jax: 0.10.0
libtpu: 0.0.40
codegen_flags: <defaults>
</compile_context>

<pallas_src>
import functools

import jax
import jax.numpy as jnp
from jax import lax
from jax.experimental import pallas as pl
from jax.experimental.pallas import tpu as pltpu

LANE = 128   # vreg lane width  -> channel padding target
SUB = 8      # vreg sublane width -> row-offset alignment target
MR = 8       # flat-row margin around the padded image (>=1, 8-aligned)


# ------------------------------ Pallas kernel -------------------------------

def _basic_block_kernel(x_ref, w1_ref, b1_ref, w2_ref, b2_ref, o_ref,
                        x3_ref, h_ref, *, H, W, Wp8, Cp, strips):
    """Fused conv3x3+bn+relu -> conv3x3+bn+add+relu for one batch element.

    x_ref : (1, MR+P+MR, Cp) f32  spatially padded input, flattened to
                                  P=(H+2)*Wp8 rows, +MR zero margin rows/side
    w*_ref: (3, 3*Cp, Cp)    mxu  per-kh weight slabs, K = (kw, Cin) tap-major,
                                  BN scale folded in
    b*_ref: (1, Cp)          f32  folded BN bias
    o_ref : (1, H*Wp8, Cp)   f32  interior image rows only (halo rows are
                                  never computed nor written)
    x3_ref: (P, 3*Cp)        mxu  K-concatenated (kw = -1/0/+1 column taps)
                                  conv operand scratch
    h_ref : (MR+P+MR, Cp)    mxu  conv1 output, zero on its conv-padding ring
    """
    P = (H + 2) * Wp8

    def conv_strip(w_ref, p0, rs):
        # 3 matmuls with K = 3*Cp.  All operand slices are 8-row aligned:
        # p0 and Wp8 are multiples of 8, the column shifts live in K.
        acc = jnp.dot(x3_ref[p0 - Wp8:p0 - Wp8 + rs, :], w_ref[0],
                      preferred_element_type=jnp.float32)
        acc = acc + jnp.dot(x3_ref[p0:p0 + rs, :], w_ref[1],
                            preferred_element_type=jnp.float32)
        acc = acc + jnp.dot(x3_ref[p0 + Wp8:p0 + Wp8 + rs, :], w_ref[2],
                            preferred_element_type=jnp.float32)
        return acc

    # ---- conv1 operand: K-concat of the 3 column taps of x (read directly
    #      from x_ref; the cast to the MXU dtype rides along) ----------------
    for kw in range(3):
        x3_ref[:, kw * Cp:(kw + 1) * Cp] = (
            x_ref[0, MR - 1 + kw:MR - 1 + kw + P, :].astype(x3_ref.dtype))

    # ---- zero only the conv2 zero-padding ring of h (top/bottom image rows
    #      + margins).  Re-done every grid step: tiny, and megacore-safe. ----
    h_ref[0:MR + Wp8, :] = jnp.zeros((MR + Wp8, Cp), dtype=h_ref.dtype)
    h_ref[MR + (H + 1) * Wp8:MR + P + MR, :] = jnp.zeros(
        (Wp8 + MR, Cp), dtype=h_ref.dtype)

    # ---- conv1 -> bn1 (folded) -> relu, 128-row strips of the interior -----
    for start, rs in strips:
        p0 = Wp8 + start                                 # first flat row
        h = jnp.maximum(conv_strip(w1_ref, p0, rs) + b1_ref[...], 0.0)
        # zero the in-row padding columns (jj == 0 or jj > W) so conv2 sees
        # proper zero padding; row-halo (ii) rows are never computed at all.
        jj = (lax.broadcasted_iota(jnp.int32, (rs, 1), 0) + p0) % Wp8
        h = jnp.where((jj >= 1) & (jj <= W), h, 0.0)
        h_ref[MR + p0:MR + p0 + rs, :] = h.astype(h_ref.dtype)

    # ---- conv2 operand: K-concat of the 3 column taps of h -----------------
    for kw in range(3):
        x3_ref[:, kw * Cp:(kw + 1) * Cp] = h_ref[MR - 1 + kw:MR - 1 + kw + P, :]

    # ---- conv2 -> bn2 (folded) -> + residual (f32 x) -> relu ----------------
    for start, rs in strips:
        p0 = Wp8 + start
        y = (conv_strip(w2_ref, p0, rs) + b2_ref[...]
             + x_ref[0, MR + p0:MR + p0 + rs, :])
        o_ref[0, start:start + rs, :] = jnp.maximum(y, 0.0).astype(o_ref.dtype)


# ------------------------------ JAX wrappers ---------------------------------

def _prep_conv_bn(w_oihw, gamma, beta, mean, var, Cp, mxu_dtype, eps=1e-5):
    """Fold eval-mode BN into conv weights + bias; pad channels; K tap-major."""
    c_out, c_in = w_oihw.shape[0], w_oihw.shape[1]
    scale = gamma / jnp.sqrt(var + eps)                   # (Cout,)
    bias = beta - mean * scale                            # (Cout,)
    w = jnp.transpose(w_oihw, (2, 3, 1, 0))               # OIHW -> (3,3,Cin,Cout)
    w = w * scale[None, None, None, :]                    # fold BN scale
    w = jnp.pad(w, ((0, 0), (0, 0), (0, Cp - c_in), (0, Cp - c_out)))
    # per-kh slab, K = (kw, Cin) tap-major -> matches the x3 K-concat layout
    w = w.reshape(3, 3 * Cp, Cp).astype(mxu_dtype)
    b = jnp.pad(bias, (0, Cp - c_out)).reshape(1, Cp).astype(jnp.float32)
    return w, b


def _row_strips(total, max_rows=128):
    """Static (start, size) row strips; all offsets/sizes are multiples of 8."""
    strips, s = [], 0
    while s < total:
        rs = min(max_rows, total - s)
        strips.append((s, rs))
        s += rs
    return tuple(strips)


def basic_block_forward(x_nchw, params, *, mxu_dtype=jnp.bfloat16):
    """BasicBlock forward (stride=1, downsample=None). Input/output: NCHW."""
    N, C, H, W = x_nchw.shape
    Cp = ((C + LANE - 1) // LANE) * LANE         # lane-dense channels
    Wp8 = ((W + 2 + SUB - 1) // SUB) * SUB       # padded row width, 8-aligned
    P = (H + 2) * Wp8                            # flat rows incl. conv halo
    Pout = H * Wp8                               # interior image rows only

    w1, b1 = _prep_conv_bn(params["w1"], params["g1"], params["beta1"],
                           params["m1"], params["v1"], Cp, mxu_dtype)
    w2, b2 = _prep_conv_bn(params["w2"], params["g2"], params["beta2"],
                           params["m2"], params["v2"], Cp, mxu_dtype)

    # NCHW -> NHWC, one combined pad: 1-px conv halo, right pad to the
    # 8-aligned row width, channel pad to the 128-lane width; then flatten
    # and add a small flat-row margin so the +-1 column-tap slices are in
    # bounds (conv1 reads x_ref directly, no in-kernel staging copy).
    x = jnp.transpose(x_nchw, (0, 2, 3, 1))
    x = jnp.pad(x, ((0, 0), (1, 1), (1, Wp8 - W - 1), (0, Cp - C)))
    x = x.reshape(N, P, Cp)
    x = jnp.pad(x, ((0, 0), (MR, MR), (0, 0)))

    strips = _row_strips(Pout, max_rows=128)
    kern = functools.partial(_basic_block_kernel, H=H, W=W, Wp8=Wp8, Cp=Cp,
                             strips=strips)

    out = pl.pallas_call(
        kern,
        out_shape=jax.ShapeDtypeStruct((N, Pout, Cp), x_nchw.dtype),
        grid=(N,),
        in_specs=[
            pl.BlockSpec((1, MR + P + MR, Cp), lambda n: (n, 0, 0)),  # x
            pl.BlockSpec((3, 3 * Cp, Cp), lambda n: (0, 0, 0)),       # w1
            pl.BlockSpec((1, Cp), lambda n: (0, 0)),                  # b1
            pl.BlockSpec((3, 3 * Cp, Cp), lambda n: (0, 0, 0)),       # w2
            pl.BlockSpec((1, Cp), lambda n: (0, 0)),                  # b2
        ],
        out_specs=pl.BlockSpec((1, Pout, Cp), lambda n: (n, 0, 0)),
        scratch_shapes=[
            pltpu.VMEM((P, 3 * Cp), mxu_dtype),          # K-concat operand
            pltpu.VMEM((MR + P + MR, Cp), mxu_dtype),    # conv1 output h
        ],
        compiler_params=pltpu.CompilerParams(
            dimension_semantics=("parallel",),           # megacore on v7x
            vmem_limit_bytes=64 * 1024 * 1024),
    )(x, w1, b1, w2, b2)

    # Strip the in-row halo columns and the channel padding; back to NCHW.
    out = out.reshape(N, H, Wp8, Cp)[:, :, 1:W + 1, :C]
    return jnp.transpose(out, (0, 3, 1, 2))


# -------------------------------- Reference ----------------------------------

def reference_forward(x, params, eps=1e-5):
    def conv(inp, w):
        return lax.conv_general_dilated(
            inp, w, window_strides=(1, 1), padding=((1, 1), (1, 1)),
            dimension_numbers=("NCHW", "OIHW", "NCHW"))

    def bn(y, g, b, m, v):
        g = g[None, :, None, None]
        b = b[None, :, None, None]
        m = m[None, :, None, None]
        v = v[None, :, None, None]
        return (y - m) / jnp.sqrt(v + eps) * g + b

    h = jax.nn.relu(bn(conv(x, params["w1"]),
                       params["g1"], params["beta1"], params["m1"], params["v1"]))
    o = bn(conv(h, params["w2"]),
           params["g2"], params["beta2"], params["m2"], params["v2"]) + x
    return jax.nn.relu(o)


# ---------------------------------- Main --------------------------------------

if __name__ == "__main__":
    N, C, H, W = 2, 4, 16, 16   # in_planes = planes = 4, stride = 1
    key = jax.random.PRNGKey(0)
    keys = jax.random.split(key, 11)

    x = jax.random.normal(keys[0], (N, C, H, W), jnp.float32)

    params = {
        # conv weights, PyTorch OIHW layout: (out_planes, in_planes, 3, 3)
        "w1": jax.random.normal(keys[1], (C, C, 3, 3), jnp.float32) * 0.1,
        "w2": jax.random.normal(keys[2], (C, C, 3, 3), jnp.float32) * 0.1,
        # bn1 params (eval-mode running stats)
        "g1": 1.0 + 0.1 * jax.random.normal(keys[3], (C,), jnp.float32),
        "beta1": 0.1 * jax.random.normal(keys[4], (C,), jnp.float32),
        "m1": 0.1 * jax.random.normal(keys[5], (C,), jnp.float32),
        "v1": 0.5 + jnp.abs(jax.random.normal(keys[6], (C,), jnp.float32)),
        # bn2 params
        "g2": 1.0 + 0.1 * jax.random.normal(keys[7], (C,), jnp.float32),
        "beta2": 0.1 * jax.random.normal(keys[8], (C,), jnp.float32),
        "m2": 0.1 * jax.random.normal(keys[9], (C,), jnp.float32),
        "v2": 0.5 + jnp.abs(jax.random.normal(keys[10], (C,), jnp.float32)),
    }

    ref = jax.block_until_ready(reference_forward(x, params))
    fwd = jax.jit(basic_block_forward, static_argnames=("mxu_dtype",))

    # 1) f32 MXU operands: tight correctness check.
    out_f32 = jax.block_until_ready(fwd(x, params, mxu_dtype=jnp.float32))
    assert out_f32.shape == (N, C, H, W), out_f32.shape
    assert jnp.allclose(out_f32, ref, atol=1e-3, rtol=1e-3), \
        f"f32 max abs err = {jnp.max(jnp.abs(out_f32 - ref))}"

    # 2) bf16 MXU operands, f32 accumulation (v6e/v7x fast path): tolerance
    #    reflects bf16 operand rounding through two 3x3 convs; any indexing /
    #    layout bug would produce O(1) errors.
    out_bf16 = jax.block_until_ready(fwd(x, params, mxu_dtype=jnp.bfloat16))
    assert out_bf16.shape == (N, C, H, W), out_bf16.shape
    assert jnp.allclose(out_bf16, ref, atol=1e-1, rtol=1e-1), \
        f"bf16 max abs err = {jnp.max(jnp.abs(out_bf16 - ref))}"

    print("KERNEL_OK")
</pallas_src>

<mosaic_0001>
module attributes {stable_mosaic.version = 11 : i64} {
  func.func @_basic_block_kernel(%arg0: i32, %arg1: memref<1x448x128xf32, #tpu.memory_space<vmem>>, %arg2: memref<3x384x128xf32, #tpu.memory_space<vmem>>, %arg3: memref<1x128xf32, #tpu.memory_space<vmem>>, %arg4: memref<3x384x128xf32, #tpu.memory_space<vmem>>, %arg5: memref<1x128xf32, #tpu.memory_space<vmem>>, %arg6: memref<1x384x128xf32, #tpu.memory_space<vmem>>, %arg7: memref<432x384xf32, #tpu.memory_space<vmem>>, %arg8: memref<448x128xf32, #tpu.memory_space<vmem>>) attributes {dimension_semantics = [#tpu.dimension_semantics<parallel>], iteration_bounds = array<i64: 2>, scalar_prefetch = 0 : i64, scratch_operands = 2 : i64, tpu.core_type = #tpu.core_type<tc>, window_params = [{transform_indices = @transform_0, window_bounds = array<i64: 1, 448, 128>}, {pipeline_mode = #tpu.pipeline_mode<synchronous>, transform_indices = @transform_1, window_bounds = array<i64: 3, 384, 128>}, {pipeline_mode = #tpu.pipeline_mode<synchronous>, transform_indices = @transform_2, window_bounds = array<i64: 1, 128>}, {pipeline_mode = #tpu.pipeline_mode<synchronous>, transform_indices = @transform_3, window_bounds = array<i64: 3, 384, 128>}, {pipeline_mode = #tpu.pipeline_mode<synchronous>, transform_indices = @transform_4, window_bounds = array<i64: 1, 128>}, {transform_indices = @transform_5, window_bounds = array<i64: 1, 384, 128>}]} {
    %c0 = arith.constant 0 : index
    %c7 = arith.constant 7 : index
    %c0_0 = arith.constant 0 : index
    %0 = vector.load %arg1[%c0, %c7, %c0_0] : memref<1x448x128xf32, #tpu.memory_space<vmem>>, vector<1x432x128xf32>
    %1 = vector.shape_cast %0 : vector<1x432x128xf32> to vector<432x128xf32>
    %c0_1 = arith.constant 0 : index
    %c0_2 = arith.constant 0 : index
    %2 = vector.load %arg7[%c0_1, %c0_2] : memref<432x384xf32, #tpu.memory_space<vmem>>, vector<432x128xf32>
    tpu.vector_store %arg7[%c0_1, %c0_2], %1 {strides = array<i32>} : memref<432x384xf32, #tpu.memory_space<vmem>>, vector<432x128xf32>,
    %c0_3 = arith.constant 0 : index
    %c8 = arith.constant 8 : index
    %c0_4 = arith.constant 0 : index
    %3 = vector.load %arg1[%c0_3, %c8, %c0_4] : memref<1x448x128xf32, #tpu.memory_space<vmem>>, vector<1x432x128xf32>
    %4 = vector.shape_cast %3 : vector<1x432x128xf32> to vector<432x128xf32>
    %c0_5 = arith.constant 0 : index
    %c128 = arith.constant 128 : index
    %5 = vector.load %arg7[%c0_5, %c128] : memref<432x384xf32, #tpu.memory_space<vmem>>, vector<432x128xf32>
    tpu.vector_store %arg7[%c0_5, %c128], %4 {strides = array<i32>} : memref<432x384xf32, #tpu.memory_space<vmem>>, vector<432x128xf32>,
    %c0_6 = arith.constant 0 : index
    %c9 = arith.constant 9 : index
    %c0_7 = arith.constant 0 : index
    %6 = vector.load %arg1[%c0_6, %c9, %c0_7] : memref<1x448x128xf32, #tpu.memory_space<vmem>>, vector<1x432x128xf32>
    %7 = vector.shape_cast %6 : vector<1x432x128xf32> to vector<432x128xf32>
    %c0_8 = arith.constant 0 : index
    %c256 = arith.constant 256 : index
    %8 = vector.load %arg7[%c0_8, %c256] : memref<432x384xf32, #tpu.memory_space<vmem>>, vector<432x128xf32>
    tpu.vector_store %arg7[%c0_8, %c256], %7 {strides = array<i32>} : memref<432x384xf32, #tpu.memory_space<vmem>>, vector<432x128xf32>,
    %cst = arith.constant 0.000000e+00 : f32
    %9 = vector.broadcast %cst : f32 to vector<32x128xf32>
    %c0_9 = arith.constant 0 : index
    %c0_10 = arith.constant 0 : index
    %10 = vector.load %arg8[%c0_9, %c0_10] : memref<448x128xf32, #tpu.memory_space<vmem>>, vector<32x128xf32>
    tpu.vector_store %arg8[%c0_9, %c0_10], %9 {strides = array<i32>} : memref<448x128xf32, #tpu.memory_space<vmem>>, vector<32x128xf32>,
    %cst_11 = arith.constant 0.000000e+00 : f32
    %11 = vector.broadcast %cst_11 : f32 to vector<32x128xf32>
    %c416 = arith.constant 416 : index
    %c0_12 = arith.constant 0 : index
    %12 = vector.load %arg8[%c416, %c0_12] : memref<448x128xf32, #tpu.memory_space<vmem>>, vector<32x128xf32>
    tpu.vector_store %arg8[%c416, %c0_12], %11 {strides = array<i32>} : memref<448x128xf32, #tpu.memory_space<vmem>>, vector<32x128xf32>,
    %c0_13 = arith.constant 0 : index
    %c0_14 = arith.constant 0 : index
    %13 = vector.load %arg7[%c0_13, %c0_14] : memref<432x384xf32, #tpu.memory_space<vmem>>, vector<128x384xf32>
    %c0_15 = arith.constant 0 : index
    %c0_16 = arith.constant 0 : index
    %c0_17 = arith.constant 0 : index
    %14 = vector.load %arg2[%c0_15, %c0_16, %c0_17] : memref<3x384x128xf32, #tpu.memory_space<vmem>>, vector<1x384x128xf32>
    %15 = vector.shape_cast %14 : vector<1x384x128xf32> to vector<384x128xf32>
    %cst_18 = arith.constant dense<0.000000e+00> : vector<128x128xf32>
    %16 = tpu.matmul %13, %15, %cst_18 {dimension_numbers = #tpu.dot_dimension_numbers<[1], [0], [0], [1], [0, 0, 1, 1], [], []>} : vector<128x384xf32>, vector<384x128xf32>, vector<128x128xf32> -> vector<128x128xf32>
    %c24 = arith.constant 24 : index
    %c0_19 = arith.constant 0 : index
    %17 = vector.load %arg7[%c24, %c0_19] : memref<432x384xf32, #tpu.memory_space<vmem>>, vector<128x384xf32>
    %c1 = arith.constant 1 : index
    %c0_20 = arith.constant 0 : index
    %c0_21 = arith.constant 0 : index
    %18 = vector.load %arg2[%c1, %c0_20, %c0_21] : memref<3x384x128xf32, #tpu.memory_space<vmem>>, vector<1x384x128xf32>
    %19 = vector.shape_cast %18 : vector<1x384x128xf32> to vector<384x128xf32>
    %cst_22 = arith.constant dense<0.000000e+00> : vector<128x128xf32>
    %20 = tpu.matmul %17, %19, %cst_22 {dimension_numbers = #tpu.dot_dimension_numbers<[1], [0], [0], [1], [0, 0, 1, 1], [], []>} : vector<128x384xf32>, vector<384x128xf32>, vector<128x128xf32> -> vector<128x128xf32>
    %21 = arith.addf %16, %20 : vector<128x128xf32>
    %c48 = arith.constant 48 : index
    %c0_23 = arith.constant 0 : index
    %22 = vector.load %arg7[%c48, %c0_23] : memref<432x384xf32, #tpu.memory_space<vmem>>, vector<128x384xf32>
    %c2 = arith.constant 2 : index
    %c0_24 = arith.constant 0 : index
    %c0_25 = arith.constant 0 : index
    %23 = vector.load %arg2[%c2, %c0_24, %c0_25] : memref<3x384x128xf32, #tpu.memory_space<vmem>>, vector<1x384x128xf32>
    %24 = vector.shape_cast %23 : vector<1x384x128xf32> to vector<384x128xf32>
    %cst_26 = arith.constant dense<0.000000e+00> : vector<128x128xf32>
    %25 = tpu.matmul %22, %24, %cst_26 {dimension_numbers = #tpu.dot_dimension_numbers<[1], [0], [0], [1], [0, 0, 1, 1], [], []>} : vector<128x384xf32>, vector<384x128xf32>, vector<128x128xf32> -> vector<128x128xf32>
    %26 = arith.addf %21, %25 : vector<128x128xf32>
    %c0_27 = arith.constant 0 : index
    %c0_28 = arith.constant 0 : index
    %27 = vector.load %arg3[%c0_27, %c0_28] : memref<1x128xf32, #tpu.memory_space<vmem>>, vector<1x128xf32>
    %28 = vector.broadcast %27 : vector<1x128xf32> to vector<128x128xf32>
    %29 = arith.addf %26, %28 : vector<128x128xf32>
    %cst_29 = arith.constant 0.000000e+00 : f32
    %30 = vector.broadcast %cst_29 : f32 to vector<128x128xf32>
    %31 = arith.maximumf %29, %30 : vector<128x128xf32>
    %32 = tpu.iota {dimensions = array<i32: 0>} : vector<128x1xi32>
    %c24_i32 = arith.constant 24 : i32
    %33 = vector.broadcast %c24_i32 : i32 to vector<128x1xi32>
    %34 = arith.addi %32, %33 : vector<128x1xi32>
    %c24_i32_30 = arith.constant 24 : i32
    %c0_i32 = arith.constant 0 : i32
    %35 = arith.cmpi eq, %c24_i32_30, %c0_i32 : i32
    %c1_i32 = arith.constant 1 : i32
    %36 = arith.select %35, %c1_i32, %c24_i32_30 : i32
    %37 = vector.broadcast %36 : i32 to vector<128x1xi32>
    %38 = arith.remsi %34, %37 : vector<128x1xi32>
    %c0_i32_31 = arith.constant 0 : i32
    %39 = vector.broadcast %c0_i32_31 : i32 to vector<128x1xi32>
    %40 = arith.cmpi ne, %38, %39 : vector<128x1xi32>
    %c0_i32_32 = arith.constant 0 : i32
    %41 = vector.broadcast %c0_i32_32 : i32 to vector<128x1xi32>
    %42 = arith.cmpi slt, %38, %41 : vector<128x1xi32>
    %c0_i32_33 = arith.constant 0 : i32
    %43 = arith.cmpi slt, %36, %c0_i32_33 : i32
    %44 = vector.broadcast %43 : i1 to vector<128x1xi1>
    %45 = vector.broadcast %44 : vector<128x1xi1> to vector<128x1xi1>
    %46 = arith.xori %42, %45 : vector<128x1xi1>
    %47 = arith.andi %46, %40 : vector<128x1xi1>
    %48 = vector.broadcast %36 : i32 to vector<128x1xi32>
    %49 = arith.addi %38, %48 : vector<128x1xi32>
    %50 = arith.select %47, %49, %38 : vector<128x1xi1>, vector<128x1xi32>
    %c1_i32_34 = arith.constant 1 : i32
    %51 = vector.broadcast %c1_i32_34 : i32 to vector<128x1xi32>
    %52 = arith.cmpi sge, %50, %51 : vector<128x1xi32>
    %c16_i32 = arith.constant 16 : i32
    %53 = vector.broadcast %c16_i32 : i32 to vector<128x1xi32>
    %54 = arith.cmpi sle, %50, %53 : vector<128x1xi32>
    %55 = arith.andi %52, %54 : vector<128x1xi1>
    %cst_35 = arith.constant 0.000000e+00 : f32
    %56 = vector.shape_cast %55 : vector<128x1xi1> to vector<128x1xi1>
    %57 = vector.broadcast %56 : vector<128x1xi1> to vector<128x128xi1>
    %58 = vector.broadcast %cst_35 : f32 to vector<128x128xf32>
    %59 = arith.select %57, %31, %58 : vector<128x128xi1>, vector<128x128xf32>
    %c32 = arith.constant 32 : index
    %c0_36 = arith.constant 0 : index
    %60 = vector.load %arg8[%c32, %c0_36] : memref<448x128xf32, #tpu.memory_space<vmem>>, vector<128x128xf32>
    tpu.vector_store %arg8[%c32, %c0_36], %59 {strides = array<i32>} : memref<448x128xf32, #tpu.memory_space<vmem>>, vector<128x128xf32>,
    %c128_37 = arith.constant 128 : index
    %c0_38 = arith.constant 0 : index
    %61 = vector.load %arg7[%c128_37, %c0_38] : memref<432x384xf32, #tpu.memory_space<vmem>>, vector<128x384xf32>
    %c0_39 = arith.constant 0 : index
    %c0_40 = arith.constant 0 : index
    %c0_41 = arith.constant 0 : index
    %62 = vector.load %arg2[%c0_39, %c0_40, %c0_41] : memref<3x384x128xf32, #tpu.memory_space<vmem>>, vector<1x384x128xf32>
    %63 = vector.shape_cast %62 : vector<1x384x128xf32> to vector<384x128xf32>
    %cst_42 = arith.constant dense<0.000000e+00> : vector<128x128xf32>
    %64 = tpu.matmul %61, %63, %cst_42 {dimension_numbers = #tpu.dot_dimension_numbers<[1], [0], [0], [1], [0, 0, 1, 1], [], []>} : vector<128x384xf32>, vector<384x128xf32>, vector<128x128xf32> -> vector<128x128xf32>
    %c152 = arith.constant 152 : index
    %c0_43 = arith.constant 0 : index
    %65 = vector.load %arg7[%c152, %c0_43] : memref<432x384xf32, #tpu.memory_space<vmem>>, vector<128x384xf32>
    %c1_44 = arith.constant 1 : index
    %c0_45 = arith.constant 0 : index
    %c0_46 = arith.constant 0 : index
    %66 = vector.load %arg2[%c1_44, %c0_45, %c0_46] : memref<3x384x128xf32, #tpu.memory_space<vmem>>, vector<1x384x128xf32>
    %67 = vector.shape_cast %66 : vector<1x384x128xf32> to vector<384x128xf32>
    %cst_47 = arith.constant dense<0.000000e+00> : vector<128x128xf32>
    %68 = tpu.matmul %65, %67, %cst_47 {dimension_numbers = #tpu.dot_dimension_numbers<[1], [0], [0], [1], [0, 0, 1, 1], [], []>} : vector<128x384xf32>, vector<384x128xf32>, vector<128x128xf32> -> vector<128x128xf32>
    %69 = arith.addf %64, %68 : vector<128x128xf32>
    %c176 = arith.constant 176 : index
    %c0_48 = arith.constant 0 : index
    %70 = vector.load %arg7[%c176, %c0_48] : memref<432x384xf32, #tpu.memory_space<vmem>>, vector<128x384xf32>
    %c2_49 = arith.constant 2 : index
    %c0_50 = arith.constant 0 : index
    %c0_51 = arith.constant 0 : index
    %71 = vector.load %arg2[%c2_49, %c0_50, %c0_51] : memref<3x384x128xf32, #tpu.memory_space<vmem>>, vector<1x384x128xf32>
    %72 = vector.shape_cast %71 : vector<1x384x128xf32> to vector<384x128xf32>
    %cst_52 = arith.constant dense<0.000000e+00> : vector<128x128xf32>
    %73 = tpu.matmul %70, %72, %cst_52 {dimension_numbers = #tpu.dot_dimension_numbers<[1], [0], [0], [1], [0, 0, 1, 1], [], []>} : vector<128x384xf32>, vector<384x128xf32>, vector<128x128xf32> -> vector<128x128xf32>
    %74 = arith.addf %69, %73 : vector<128x128xf32>
    %c0_53 = arith.constant 0 : index
    %c0_54 = arith.constant 0 : index
    %75 = vector.load %arg3[%c0_53, %c0_54] : memref<1x128xf32, #tpu.memory_space<vmem>>, vector<1x128xf32>
    %76 = vector.broadcast %75 : vector<1x128xf32> to vector<128x128xf32>
    %77 = arith.addf %74, %76 : vector<128x128xf32>
    %cst_55 = arith.constant 0.000000e+00 : f32
    %78 = vector.broadcast %cst_55 : f32 to vector<128x128xf32>
    %79 = arith.maximumf %77, %78 : vector<128x128xf32>
    %80 = tpu.iota {dimensions = array<i32: 0>} : vector<128x1xi32>
    %c152_i32 = arith.constant 152 : i32
    %81 = vector.broadcast %c152_i32 : i32 to vector<128x1xi32>
    %82 = arith.addi %80, %81 : vector<128x1xi32>
    %c24_i32_56 = arith.constant 24 : i32
    %c0_i32_57 = arith.constant 0 : i32
    %83 = arith.cmpi eq, %c24_i32_56, %c0_i32_57 : i32
    %c1_i32_58 = arith.constant 1 : i32
    %84 = arith.select %83, %c1_i32_58, %c24_i32_56 : i32
    %85 = vector.broadcast %84 : i32 to vector<128x1xi32>
    %86 = arith.remsi %82, %85 : vector<128x1xi32>
    %c0_i32_59 = arith.constant 0 : i32
    %87 = vector.broadcast %c0_i32_59 : i32 to vector<128x1xi32>
    %88 = arith.cmpi ne, %86, %87 : vector<128x1xi32>
    %c0_i32_60 = arith.constant 0 : i32
    %89 = vector.broadcast %c0_i32_60 : i32 to vector<128x1xi32>
    %90 = arith.cmpi slt, %86, %89 : vector<128x1xi32>
    %c0_i32_61 = arith.constant 0 : i32
    %91 = arith.cmpi slt, %84, %c0_i32_61 : i32
    %92 = vector.broadcast %91 : i1 to vector<128x1xi1>
    %93 = vector.broadcast %92 : vector<128x1xi1> to vector<128x1xi1>
    %94 = arith.xori %90, %93 : vector<128x1xi1>
    %95 = arith.andi %94, %88 : vector<128x1xi1>
    %96 = vector.broadcast %84 : i32 to vector<128x1xi32>
    %97 = arith.addi %86, %96 : vector<128x1xi32>
    %98 = arith.select %95, %97, %86 : vector<128x1xi1>, vector<128x1xi32>
    %c1_i32_62 = arith.constant 1 : i32
    %99 = vector.broadcast %c1_i32_62 : i32 to vector<128x1xi32>
    %100 = arith.cmpi sge, %98, %99 : vector<128x1xi32>
    %c16_i32_63 = arith.constant 16 : i32
    %101 = vector.broadcast %c16_i32_63 : i32 to vector<128x1xi32>
    %102 = arith.cmpi sle, %98, %101 : vector<128x1xi32>
    %103 = arith.andi %100, %102 : vector<128x1xi1>
    %cst_64 = arith.constant 0.000000e+00 : f32
    %104 = vector.shape_cast %103 : vector<128x1xi1> to vector<128x1xi1>
    %105 = vector.broadcast %104 : vector<128x1xi1> to vector<128x128xi1>
    %106 = vector.broadcast %cst_64 : f32 to vector<128x128xf32>
    %107 = arith.select %105, %79, %106 : vector<128x128xi1>, vector<128x128xf32>
    %c160 = arith.constant 160 : index
    %c0_65 = arith.constant 0 : index
    %108 = vector.load %arg8[%c160, %c0_65] : memref<448x128xf32, #tpu.memory_space<vmem>>, vector<128x128xf32>
    tpu.vector_store %arg8[%c160, %c0_65], %107 {strides = array<i32>} : memref<448x128xf32, #tpu.memory_space<vmem>>, vector<128x128xf32>,
    %c256_66 = arith.constant 256 : index
    %c0_67 = arith.constant 0 : index
    %109 = vector.load %arg7[%c256_66, %c0_67] : memref<432x384xf32, #tpu.memory_space<vmem>>, vector<128x384xf32>
    %c0_68 = arith.constant 0 : index
    %c0_69 = arith.constant 0 : index
    %c0_70 = arith.constant 0 : index
    %110 = vector.load %arg2[%c0_68, %c0_69, %c0_70] : memref<3x384x128xf32, #tpu.memory_space<vmem>>, vector<1x384x128xf32>
    %111 = vector.shape_cast %110 : vector<1x384x128xf32> to vector<384x128xf32>
    %cst_71 = arith.constant dense<0.000000e+00> : vector<128x128xf32>
    %112 = tpu.matmul %109, %111, %cst_71 {dimension_numbers = #tpu.dot_dimension_numbers<[1], [0], [0], [1], [0, 0, 1, 1], [], []>} : vector<128x384xf32>, vector<384x128xf32>, vector<128x128xf32> -> vector<128x128xf32>
    %c280 = arith.constant 280 : index
    %c0_72 = arith.constant 0 : index
    %113 = vector.load %arg7[%c280, %c0_72] : memref<432x384xf32, #tpu.memory_space<vmem>>, vector<128x384xf32>
    %c1_73 = arith.constant 1 : index
    %c0_74 = arith.constant 0 : index
    %c0_75 = arith.constant 0 : index
    %114 = vector.load %arg2[%c1_73, %c0_74, %c0_75] : memref<3x384x128xf32, #tpu.memory_space<vmem>>, vector<1x384x128xf32>
    %115 = vector.shape_cast %114 : vector<1x384x128xf32> to vector<384x128xf32>
    %cst_76 = arith.constant dense<0.000000e+00> : vector<128x128xf32>
    %116 = tpu.matmul %113, %115, %cst_76 {dimension_numbers = #tpu.dot_dimension_numbers<[1], [0], [0], [1], [0, 0, 1, 1], [], []>} : vector<128x384xf32>, vector<384x128xf32>, vector<128x128xf32> -> vector<128x128xf32>
    %117 = arith.addf %112, %116 : vector<128x128xf32>
    %c304 = arith.constant 304 : index
    %c0_77 = arith.constant 0 : index
    %118 = vector.load %arg7[%c304, %c0_77] : memref<432x384xf32, #tpu.memory_space<vmem>>, vector<128x384xf32>
    %c2_78 = arith.constant 2 : index
    %c0_79 = arith.constant 0 : index
    %c0_80 = arith.constant 0 : index
    %119 = vector.load %arg2[%c2_78, %c0_79, %c0_80] : memref<3x384x128xf32, #tpu.memory_space<vmem>>, vector<1x384x128xf32>
    %120 = vector.shape_cast %119 : vector<1x384x128xf32> to vector<384x128xf32>
    %cst_81 = arith.constant dense<0.000000e+00> : vector<128x128xf32>
    %121 = tpu.matmul %118, %120, %cst_81 {dimension_numbers = #tpu.dot_dimension_numbers<[1], [0], [0], [1], [0, 0, 1, 1], [], []>} : vector<128x384xf32>, vector<384x128xf32>, vector<128x128xf32> -> vector<128x128xf32>
    %122 = arith.addf %117, %121 : vector<128x128xf32>
    %c0_82 = arith.constant 0 : index
    %c0_83 = arith.constant 0 : index
    %123 = vector.load %arg3[%c0_82, %c0_83] : memref<1x128xf32, #tpu.memory_space<vmem>>, vector<1x128xf32>
    %124 = vector.broadcast %123 : vector<1x128xf32> to vector<128x128xf32>
    %125 = arith.addf %122, %124 : vector<128x128xf32>
    %cst_84 = arith.constant 0.000000e+00 : f32
    %126 = vector.broadcast %cst_84 : f32 to vector<128x128xf32>
    %127 = arith.maximumf %125, %126 : vector<128x128xf32>
    %128 = tpu.iota {dimensions = array<i32: 0>} : vector<128x1xi32>
    %c280_i32 = arith.constant 280 : i32
    %129 = vector.broadcast %c280_i32 : i32 to vector<128x1xi32>
    %130 = arith.addi %128, %129 : vector<128x1xi32>
    %c24_i32_85 = arith.constant 24 : i32
    %c0_i32_86 = arith.constant 0 : i32
    %131 = arith.cmpi eq, %c24_i32_85, %c0_i32_86 : i32
    %c1_i32_87 = arith.constant 1 : i32
    %132 = arith.select %131, %c1_i32_87, %c24_i32_85 : i32
    %133 = vector.broadcast %132 : i32 to vector<128x1xi32>
    %134 = arith.remsi %130, %133 : vector<128x1xi32>
    %c0_i32_88 = arith.constant 0 : i32
    %135 = vector.broadcast %c0_i32_88 : i32 to vector<128x1xi32>
    %136 = arith.cmpi ne, %134, %135 : vector<128x1xi32>
    %c0_i32_89 = arith.constant 0 : i32
    %137 = vector.broadcast %c0_i32_89 : i32 to vector<128x1xi32>
    %138 = arith.cmpi slt, %134, %137 : vector<128x1xi32>
    %c0_i32_90 = arith.constant 0 : i32
    %139 = arith.cmpi slt, %132, %c0_i32_90 : i32
    %140 = vector.broadcast %139 : i1 to vector<128x1xi1>
    %141 = vector.broadcast %140 : vector<128x1xi1> to vector<128x1xi1>
    %142 = arith.xori %138, %141 : vector<128x1xi1>
    %143 = arith.andi %142, %136 : vector<128x1xi1>
    %144 = vector.broadcast %132 : i32 to vector<128x1xi32>
    %145 = arith.addi %134, %144 : vector<128x1xi32>
    %146 = arith.select %143, %145, %134 : vector<128x1xi1>, vector<128x1xi32>
    %c1_i32_91 = arith.constant 1 : i32
    %147 = vector.broadcast %c1_i32_91 : i32 to vector<128x1xi32>
    %148 = arith.cmpi sge, %146, %147 : vector<128x1xi32>
    %c16_i32_92 = arith.constant 16 : i32
    %149 = vector.broadcast %c16_i32_92 : i32 to vector<128x1xi32>
    %150 = arith.cmpi sle, %146, %149 : vector<128x1xi32>
    %151 = arith.andi %148, %150 : vector<128x1xi1>
    %cst_93 = arith.constant 0.000000e+00 : f32
    %152 = vector.shape_cast %151 : vector<128x1xi1> to vector<128x1xi1>
    %153 = vector.broadcast %152 : vector<128x1xi1> to vector<128x128xi1>
    %154 = vector.broadcast %cst_93 : f32 to vector<128x128xf32>
    %155 = arith.select %153, %127, %154 : vector<128x128xi1>, vector<128x128xf32>
    %c288 = arith.constant 288 : index
    %c0_94 = arith.constant 0 : index
    %156 = vector.load %arg8[%c288, %c0_94] : memref<448x128xf32, #tpu.memory_space<vmem>>, vector<128x128xf32>
    tpu.vector_store %arg8[%c288, %c0_94], %155 {strides = array<i32>} : memref<448x128xf32, #tpu.memory_space<vmem>>, vector<128x128xf32>,
    %c7_95 = arith.constant 7 : index
    %c0_96 = arith.constant 0 : index
    %157 = vector.load %arg8[%c7_95, %c0_96] : memref<448x128xf32, #tpu.memory_space<vmem>>, vector<432x128xf32>
    %c0_97 = arith.constant 0 : index
    %c0_98 = arith.constant 0 : index
    %158 = vector.load %arg7[%c0_97, %c0_98] : memref<432x384xf32, #tpu.memory_space<vmem>>, vector<432x128xf32>
    tpu.vector_store %arg7[%c0_97, %c0_98], %157 {strides = array<i32>} : memref<432x384xf32, #tpu.memory_space<vmem>>, vector<432x128xf32>,
    %c8_99 = arith.constant 8 : index
    %c0_100 = arith.constant 0 : index
    %159 = vector.load %arg8[%c8_99, %c0_100] : memref<448x128xf32, #tpu.memory_space<vmem>>, vector<432x128xf32>
    %c0_101 = arith.constant 0 : index
    %c128_102 = arith.constant 128 : index
    %160 = vector.load %arg7[%c0_101, %c128_102] : memref<432x384xf32, #tpu.memory_space<vmem>>, vector<432x128xf32>
    tpu.vector_store %arg7[%c0_101, %c128_102], %159 {strides = array<i32>} : memref<432x384xf32, #tpu.memory_space<vmem>>, vector<432x128xf32>,
    %c9_103 = arith.constant 9 : index
    %c0_104 = arith.constant 0 : index
    %161 = vector.load %arg8[%c9_103, %c0_104] : memref<448x128xf32, #tpu.memory_space<vmem>>, vector<432x128xf32>
    %c0_105 = arith.constant 0 : index
    %c256_106 = arith.constant 256 : index
    %162 = vector.load %arg7[%c0_105, %c256_106] : memref<432x384xf32, #tpu.memory_space<vmem>>, vector<432x128xf32>
    tpu.vector_store %arg7[%c0_105, %c256_106], %161 {strides = array<i32>} : memref<432x384xf32, #tpu.memory_space<vmem>>, vector<432x128xf32>,
    %c0_107 = arith.constant 0 : index
    %c0_108 = arith.constant 0 : index
    %163 = vector.load %arg7[%c0_107, %c0_108] : memref<432x384xf32, #tpu.memory_space<vmem>>, vector<128x384xf32>
    %c0_109 = arith.constant 0 : index
    %c0_110 = arith.constant 0 : index
    %c0_111 = arith.constant 0 : index
    %164 = vector.load %arg4[%c0_109, %c0_110, %c0_111] : memref<3x384x128xf32, #tpu.memory_space<vmem>>, vector<1x384x128xf32>
    %165 = vector.shape_cast %164 : vector<1x384x128xf32> to vector<384x128xf32>
    %cst_112 = arith.constant dense<0.000000e+00> : vector<128x128xf32>
    %166 = tpu.matmul %163, %165, %cst_112 {dimension_numbers = #tpu.dot_dimension_numbers<[1], [0], [0], [1], [0, 0, 1, 1], [], []>} : vector<128x384xf32>, vector<384x128xf32>, vector<128x128xf32> -> vector<128x128xf32>
    %c24_113 = arith.constant 24 : index
    %c0_114 = arith.constant 0 : index
    %167 = vector.load %arg7[%c24_113, %c0_114] : memref<432x384xf32, #tpu.memory_space<vmem>>, vector<128x384xf32>
    %c1_115 = arith.constant 1 : index
    %c0_116 = arith.constant 0 : index
    %c0_117 = arith.constant 0 : index
    %168 = vector.load %arg4[%c1_115, %c0_116, %c0_117] : memref<3x384x128xf32, #tpu.memory_space<vmem>>, vector<1x384x128xf32>
    %169 = vector.shape_cast %168 : vector<1x384x128xf32> to vector<384x128xf32>
    %cst_118 = arith.constant dense<0.000000e+00> : vector<128x128xf32>
    %170 = tpu.matmul %167, %169, %cst_118 {dimension_numbers = #tpu.dot_dimension_numbers<[1], [0], [0], [1], [0, 0, 1, 1], [], []>} : vector<128x384xf32>, vector<384x128xf32>, vector<128x128xf32> -> vector<128x128xf32>
    %171 = arith.addf %166, %170 : vector<128x128xf32>
    %c48_119 = arith.constant 48 : index
    %c0_120 = arith.constant 0 : index
    %172 = vector.load %arg7[%c48_119, %c0_120] : memref<432x384xf32, #tpu.memory_space<vmem>>, vector<128x384xf32>
    %c2_121 = arith.constant 2 : index
    %c0_122 = arith.constant 0 : index
    %c0_123 = arith.constant 0 : index
    %173 = vector.load %arg4[%c2_121, %c0_122, %c0_123] : memref<3x384x128xf32, #tpu.memory_space<vmem>>, vector<1x384x128xf32>
    %174 = vector.shape_cast %173 : vector<1x384x128xf32> to vector<384x128xf32>
    %cst_124 = arith.constant dense<0.000000e+00> : vector<128x128xf32>
    %175 = tpu.matmul %172, %174, %cst_124 {dimension_numbers = #tpu.dot_dimension_numbers<[1], [0], [0], [1], [0, 0, 1, 1], [], []>} : vector<128x384xf32>, vector<384x128xf32>, vector<128x128xf32> -> vector<128x128xf32>
    %176 = arith.addf %171, %175 : vector<128x128xf32>
    %c0_125 = arith.constant 0 : index
    %c0_126 = arith.constant 0 : index
    %177 = vector.load %arg5[%c0_125, %c0_126] : memref<1x128xf32, #tpu.memory_space<vmem>>, vector<1x128xf32>
    %178 = vector.broadcast %177 : vector<1x128xf32> to vector<128x128xf32>
    %179 = arith.addf %176, %178 : vector<128x128xf32>
    %c0_127 = arith.constant 0 : index
    %c32_128 = arith.constant 32 : index
    %c0_129 = arith.constant 0 : index
    %180 = vector.load %arg1[%c0_127, %c32_128, %c0_129] : memref<1x448x128xf32, #tpu.memory_space<vmem>>, vector<1x128x128xf32>
    %181 = vector.shape_cast %180 : vector<1x128x128xf32> to vector<128x128xf32>
    %182 = arith.addf %179, %181 : vector<128x128xf32>
    %cst_130 = arith.constant 0.000000e+00 : f32
    %183 = vector.broadcast %cst_130 : f32 to vector<128x128xf32>
    %184 = arith.maximumf %182, %183 : vector<128x128xf32>
    %c0_131 = arith.constant 0 : index
    %c0_132 = arith.constant 0 : index
    %c0_133 = arith.constant 0 : index
    %185 = vector.load %arg6[%c0_131, %c0_132, %c0_133] : memref<1x384x128xf32, #tpu.memory_space<vmem>>, vector<1x128x128xf32>
    %186 = vector.shape_cast %185 : vector<1x128x128xf32> to vector<128x128xf32>
    %187 = vector.shape_cast %184 : vector<128x128xf32> to vector<1x128x128xf32>
    tpu.vector_store %arg6[%c0_131, %c0_132, %c0_133], %187 {strides = array<i32>} : memref<1x384x128xf32, #tpu.memory_space<vmem>>, vector<1x128x128xf32>,
    %c128_134 = arith.constant 128 : index
    %c0_135 = arith.constant 0 : index
    %188 = vector.load %arg7[%c128_134, %c0_135] : memref<432x384xf32, #tpu.memory_space<vmem>>, vector<128x384xf32>
    %c0_136 = arith.constant 0 : index
    %c0_137 = arith.constant 0 : index
    %c0_138 = arith.constant 0 : index
    %189 = vector.load %arg4[%c0_136, %c0_137, %c0_138] : memref<3x384x128xf32, #tpu.memory_space<vmem>>, vector<1x384x128xf32>
    %190 = vector.shape_cast %189 : vector<1x384x128xf32> to vector<384x128xf32>
    %cst_139 = arith.constant dense<0.000000e+00> : vector<128x128xf32>
    %191 = tpu.matmul %188, %190, %cst_139 {dimension_numbers = #tpu.dot_dimension_numbers<[1], [0], [0], [1], [0, 0, 1, 1], [], []>} : vector<128x384xf32>, vector<384x128xf32>, vector<128x128xf32> -> vector<128x128xf32>
    %c152_140 = arith.constant 152 : index
    %c0_141 = arith.constant 0 : index
    %192 = vector.load %arg7[%c152_140, %c0_141] : memref<432x384xf32, #tpu.memory_space<vmem>>, vector<128x384xf32>
    %c1_142 = arith.constant 1 : index
    %c0_143 = arith.constant 0 : index
    %c0_144 = arith.constant 0 : index
    %193 = vector.load %arg4[%c1_142, %c0_143, %c0_144] : memref<3x384x128xf32, #tpu.memory_space<vmem>>, vector<1x384x128xf32>
    %194 = vector.shape_cast %193 : vector<1x384x128xf32> to vector<384x128xf32>
    %cst_145 = arith.constant dense<0.000000e+00> : vector<128x128xf32>
    %195 = tpu.matmul %192, %194, %cst_145 {dimension_numbers = #tpu.dot_dimension_numbers<[1], [0], [0], [1], [0, 0, 1, 1], [], []>} : vector<128x384xf32>, vector<384x128xf32>, vector<128x128xf32> -> vector<128x128xf32>
    %196 = arith.addf %191, %195 : vector<128x128xf32>
    %c176_146 = arith.constant 176 : index
    %c0_147 = arith.constant 0 : index
    %197 = vector.load %arg7[%c176_146, %c0_147] : memref<432x384xf32, #tpu.memory_space<vmem>>, vector<128x384xf32>
    %c2_148 = arith.constant 2 : index
    %c0_149 = arith.constant 0 : index
    %c0_150 = arith.constant 0 : index
    %198 = vector.load %arg4[%c2_148, %c0_149, %c0_150] : memref<3x384x128xf32, #tpu.memory_space<vmem>>, vector<1x384x128xf32>
    %199 = vector.shape_cast %198 : vector<1x384x128xf32> to vector<384x128xf32>
    %cst_151 = arith.constant dense<0.000000e+00> : vector<128x128xf32>
    %200 = tpu.matmul %197, %199, %cst_151 {dimension_numbers = #tpu.dot_dimension_numbers<[1], [0], [0], [1], [0, 0, 1, 1], [], []>} : vector<128x384xf32>, vector<384x128xf32>, vector<128x128xf32> -> vector<128x128xf32>
    %201 = arith.addf %196, %200 : vector<128x128xf32>
    %c0_152 = arith.constant 0 : index
    %c0_153 = arith.constant 0 : index
    %202 = vector.load %arg5[%c0_152, %c0_153] : memref<1x128xf32, #tpu.memory_space<vmem>>, vector<1x128xf32>
    %203 = vector.broadcast %202 : vector<1x128xf32> to vector<128x128xf32>
    %204 = arith.addf %201, %203 : vector<128x128xf32>
    %c0_154 = arith.constant 0 : index
    %c160_155 = arith.constant 160 : index
    %c0_156 = arith.constant 0 : index
    %205 = vector.load %arg1[%c0_154, %c160_155, %c0_156] : memref<1x448x128xf32, #tpu.memory_space<vmem>>, vector<1x128x128xf32>
    %206 = vector.shape_cast %205 : vector<1x128x128xf32> to vector<128x128xf32>
    %207 = arith.addf %204, %206 : vector<128x128xf32>
    %cst_157 = arith.constant 0.000000e+00 : f32
    %208 = vector.broadcast %cst_157 : f32 to vector<128x128xf32>
    %209 = arith.maximumf %207, %208 : vector<128x128xf32>
    %c0_158 = arith.constant 0 : index
    %c128_159 = arith.constant 128 : index
    %c0_160 = arith.constant 0 : index
    %210 = vector.load %arg6[%c0_158, %c128_159, %c0_160] : memref<1x384x128xf32, #tpu.memory_space<vmem>>, vector<1x128x128xf32>
    %211 = vector.shape_cast %210 : vector<1x128x128xf32> to vector<128x128xf32>
    %212 = vector.shape_cast %209 : vector<128x128xf32> to vector<1x128x128xf32>
    tpu.vector_store %arg6[%c0_158, %c128_159, %c0_160], %212 {strides = array<i32>} : memref<1x384x128xf32, #tpu.memory_space<vmem>>, vector<1x128x128xf32>,
    %c256_161 = arith.constant 256 : index
    %c0_162 = arith.constant 0 : index
    %213 = vector.load %arg7[%c256_161, %c0_162] : memref<432x384xf32, #tpu.memory_space<vmem>>, vector<128x384xf32>
    %c0_163 = arith.constant 0 : index
    %c0_164 = arith.constant 0 : index
    %c0_165 = arith.constant 0 : index
    %214 = vector.load %arg4[%c0_163, %c0_164, %c0_165] : memref<3x384x128xf32, #tpu.memory_space<vmem>>, vector<1x384x128xf32>
    %215 = vector.shape_cast %214 : vector<1x384x128xf32> to vector<384x128xf32>
    %cst_166 = arith.constant dense<0.000000e+00> : vector<128x128xf32>
    %216 = tpu.matmul %213, %215, %cst_166 {dimension_numbers = #tpu.dot_dimension_numbers<[1], [0], [0], [1], [0, 0, 1, 1], [], []>} : vector<128x384xf32>, vector<384x128xf32>, vector<128x128xf32> -> vector<128x128xf32>
    %c280_167 = arith.constant 280 : index
    %c0_168 = arith.constant 0 : index
    %217 = vector.load %arg7[%c280_167, %c0_168] : memref<432x384xf32, #tpu.memory_space<vmem>>, vector<128x384xf32>
    %c1_169 = arith.constant 1 : index
    %c0_170 = arith.constant 0 : index
    %c0_171 = arith.constant 0 : index
    %218 = vector.load %arg4[%c1_169, %c0_170, %c0_171] : memref<3x384x128xf32, #tpu.memory_space<vmem>>, vector<1x384x128xf32>
    %219 = vector.shape_cast %218 : vector<1x384x128xf32> to vector<384x128xf32>
    %cst_172 = arith.constant dense<0.000000e+00> : vector<128x128xf32>
    %220 = tpu.matmul %217, %219, %cst_172 {dimension_numbers = #tpu.dot_dimension_numbers<[1], [0], [0], [1], [0, 0, 1, 1], [], []>} : vector<128x384xf32>, vector<384x128xf32>, vector<128x128xf32> -> vector<128x128xf32>
    %221 = arith.addf %216, %220 : vector<128x128xf32>
    %c304_173 = arith.constant 304 : index
    %c0_174 = arith.constant 0 : index
    %222 = vector.load %arg7[%c304_173, %c0_174] : memref<432x384xf32, #tpu.memory_space<vmem>>, vector<128x384xf32>
    %c2_175 = arith.constant 2 : index
    %c0_176 = arith.constant 0 : index
    %c0_177 = arith.constant 0 : index
    %223 = vector.load %arg4[%c2_175, %c0_176, %c0_177] : memref<3x384x128xf32, #tpu.memory_space<vmem>>, vector<1x384x128xf32>
    %224 = vector.shape_cast %223 : vector<1x384x128xf32> to vector<384x128xf32>
    %cst_178 = arith.constant dense<0.000000e+00> : vector<128x128xf32>
    %225 = tpu.matmul %222, %224, %cst_178 {dimension_numbers = #tpu.dot_dimension_numbers<[1], [0], [0], [1], [0, 0, 1, 1], [], []>} : vector<128x384xf32>, vector<384x128xf32>, vector<128x128xf32> -> vector<128x128xf32>
    %226 = arith.addf %221, %225 : vector<128x128xf32>
    %c0_179 = arith.constant 0 : index
    %c0_180 = arith.constant 0 : index
    %227 = vector.load %arg5[%c0_179, %c0_180] : memref<1x128xf32, #tpu.memory_space<vmem>>, vector<1x128xf32>
    %228 = vector.broadcast %227 : vector<1x128xf32> to vector<128x128xf32>
    %229 = arith.addf %226, %228 : vector<128x128xf32>
    %c0_181 = arith.constant 0 : index
    %c288_182 = arith.constant 288 : index
    %c0_183 = arith.constant 0 : index
    %230 = vector.load %arg1[%c0_181, %c288_182, %c0_183] : memref<1x448x128xf32, #tpu.memory_space<vmem>>, vector<1x128x128xf32>
    %231 = vector.shape_cast %230 : vector<1x128x128xf32> to vector<128x128xf32>
    %232 = arith.addf %229, %231 : vector<128x128xf32>
    %cst_184 = arith.constant 0.000000e+00 : f32
    %233 = vector.broadcast %cst_184 : f32 to vector<128x128xf32>
    %234 = arith.maximumf %232, %233 : vector<128x128xf32>
    %c0_185 = arith.constant 0 : index
    %c256_186 = arith.constant 256 : index
    %c0_187 = arith.constant 0 : index
    %235 = vector.load %arg6[%c0_185, %c256_186, %c0_187] : memref<1x384x128xf32, #tpu.memory_space<vmem>>, vector<1x128x128xf32>
    %236 = vector.shape_cast %235 : vector<1x128x128xf32> to vector<128x128xf32>
    %237 = vector.shape_cast %234 : vector<128x128xf32> to vector<1x128x128xf32>
    tpu.vector_store %arg6[%c0_185, %c256_186, %c0_187], %237 {strides = array<i32>} : memref<1x384x128xf32, #tpu.memory_space<vmem>>, vector<1x128x128xf32>,
    return
  }
  func.func @transform_0(%arg0: i32) -> (i32, i32, i32) {
    %c0_i32 = arith.constant 0 : i32
    %c0_i32_0 = arith.constant 0 : i32
    %c0_i32_1 = arith.constant 0 : i32
    return %arg0, %c0_i32, %c0_i32_0 : i32, i32, i32
  }
  func.func @transform_1(%arg0: i32) -> (i32, i32, i32) {
    %c0_i32 = arith.constant 0 : i32
    %c0_i32_0 = arith.constant 0 : i32
    %c0_i32_1 = arith.constant 0 : i32
    %c0_i32_2 = arith.constant 0 : i32
    return %c0_i32, %c0_i32_0, %c0_i32_1 : i32, i32, i32
  }
  func.func @transform_2(%arg0: i32) -> (i32, i32) {
    %c0_i32 = arith.constant 0 : i32
    %c0_i32_0 = arith.constant 0 : i32
    %c0_i32_1 = arith.constant 0 : i32
    return %c0_i32, %c0_i32_0 : i32, i32
  }
  func.func @transform_3(%arg0: i32) -> (i32, i32, i32) {
    %c0_i32 = arith.constant 0 : i32
    %c0_i32_0 = arith.constant 0 : i32
    %c0_i32_1 = arith.constant 0 : i32
    %c0_i32_2 = arith.constant 0 : i32
    return %c0_i32, %c0_i32_0, %c0_i32_1 : i32, i32, i32
  }
  func.func @transform_4(%arg0: i32) -> (i32, i32) {
    %c0_i32 = arith.constant 0 : i32
    %c0_i32_0 = arith.constant 0 : i32
    %c0_i32_1 = arith.constant 0 : i32
    return %c0_i32, %c0_i32_0 : i32, i32
  }
  func.func @transform_5(%arg0: i32) -> (i32, i32, i32) {
    %c0_i32 = arith.constant 0 : i32
    %c0_i32_0 = arith.constant 0 : i32
    %c0_i32_1 = arith.constant 0 : i32
    return %arg0, %c0_i32, %c0_i32_0 : i32, i32, i32
  }
}

</mosaic_0001>

<llo_original>
// kernel: basic_block_forward.1
$region0: #{basic_block_forward.1}
  #allocation0 [shape = 'u32[]', space=smem, size = 0x4, offset = 0x4, fixed_abs, tag = 'smem constant byte address 0x4 - core index']
  #allocation1 [shape = 'u32[144,128]{1,0:T(1,128)}', space=vmem, size = 0x12000, scoped, tag = 'internal scratch']
  #allocation2 [shape = 'f32[432,384]{1,0:T(8,128)}', space=vmem, size = 0xa2000, scoped, tag = 'scratch operand']
  #allocation3 [shape = 'f32[448,128]{1,0:T(8,128)}', space=vmem, size = 0x38000, scoped, tag = 'scratch operand']
  %s0 = inlined_call_operand.vmem [shape: f32[2,448,128], index: 0, kind: input, shape index: {}]
  %s1 = inlined_call_operand.vmem [shape: f32[3,384,128], index: 1, kind: input, shape index: {}]
  %s2 = inlined_call_operand.vmem [shape: f32[1,128], index: 2, kind: input, shape index: {}]
  %s3 = inlined_call_operand.vmem [shape: f32[3,384,128], index: 3, kind: input, shape index: {}]
  %s4 = inlined_call_operand.vmem [shape: f32[1,128], index: 4, kind: input, shape index: {}]
  %s5 = inlined_call_operand.vmem [shape: f32[2,384,128], index: 5, kind: output, shape index: {}]
  %s6 = sld [smem:[#allocation0]]
  $region53: #{basic_block_forward.1} parent=0
    _
  %s8 = ssub.s32 1, %s6
  %s9 = scalar_select 0, %s8, %s6
  loop: start=0, step=1, limit=4
  $region2: #{basic_block_forward.1} parent=0 // loop_pre_header
    _
  $region3: #{basic_block_forward.1} parent=0 // loop_header
    %s11 = sphi 0, %s15
    %p12 = scmp.ge.s32.totalorder %s11, 4
    %s21 = sphi 0, %s23
    %s24 = sphi 0, %s21
    %s25 = sphi 0, %s24
    %s41 = sphi 0, %s25
    %s45 = sphi 0, %s45
    %s47 = sphi 0, %s45
    %s48 = sphi 0, %s47
    %s62 = sphi 0, %s48
    %s66 = sphi 0, %s66
    %s68 = sphi 0, %s66
    %s69 = sphi 0, %s68
    %s83 = sphi 0, %s69
    %s87 = sphi 0, %s87
    %s89 = sphi 0, %s87
    %s90 = sphi 0, %s89
    %s104 = sphi 0, %s90
    %s108 = sphi 0, %s108
    %s110 = sphi 0, %s108
    %s111 = sphi 0, %s110
    %s125 = sphi 0, %s111
    %s131 = sphi 0, %s133
    %s134 = sphi 0, %s131
    %s135 = sphi 0, %s134
    %s151 = sphi 0, %s135
  $region4: #{basic_block_forward.1} parent=0 // loop_header_branch
    %14 = sbr.rel (%p12) target = $region8
  $region5: #{basic_block_forward.1} parent=0 // loop_body
    %s16 = ssub.s32 %s11, 1
    %s17 = ssub.s32 %s11, 2
    %s18 = sadd.s32 %s11, 1
    %s19 = ssub.s32 %s11, %s18
    %p20 = scmp.eq.s32.totalorder %s19, 0
    %s22 = sadd.s32 %s21, 1
    %s23 = scalar_select %p20, %s21, %s22
    %p26 = pneg %p20
    %p27 = scmp.eq.s32.totalorder %s11, 1
    %p28 = por %p26, %p27
    %p29 = scmp.ne.s32.totalorder %s21, %s24
    %p30 = scmp.eq.s32.totalorder %s11, 0
    %p31 = por %p29, %p30
    %p32 = scmp.ne.s32.totalorder %s21, %s24
    %p33 = scmp.eq.s32.totalorder %s16, 1
    %p34 = por %p32, %p33
    %p35 = scmp.ne.s32.totalorder %s24, %s25
    %p36 = scmp.eq.s32.totalorder %s16, 0
    %p37 = por %p35, %p36
    %p38 = scmp.ne.s32.totalorder %s24, %s25
    %p39 = scmp.eq.s32.totalorder %s17, 1
    %p40 = por %p38, %p39
    %p42 = scmp.ne.s32.totalorder %s25, %s41
    %p43 = scmp.eq.s32.totalorder %s17, 0
    %p44 = por %p42, %p43
    %s46 = sadd.s32 %s45, 1
    %p49 = scmp.eq.s32.totalorder %s11, 1
    %p50 = scmp.ne.s32.totalorder %s45, %s47
    %p51 = scmp.eq.s32.totalorder %s11, 0
    %p52 = por %p50, %p51
    %p53 = scmp.ne.s32.totalorder %s45, %s47
    %p54 = scmp.eq.s32.totalorder %s16, 1
    %p55 = por %p53, %p54
    %p56 = scmp.ne.s32.totalorder %s47, %s48
    %p57 = scmp.eq.s32.totalorder %s16, 0
    %p58 = por %p56, %p57
    %p59 = scmp.ne.s32.totalorder %s47, %s48
    %p60 = scmp.eq.s32.totalorder %s17, 1
    %p61 = por %p59, %p60
    %p63 = scmp.ne.s32.totalorder %s48, %s62
    %p64 = scmp.eq.s32.totalorder %s17, 0
    %p65 = por %p63, %p64
    %s67 = sadd.s32 %s66, 1
    %p70 = scmp.eq.s32.totalorder %s11, 1
    %p71 = scmp.ne.s32.totalorder %s66, %s68
    %p72 = scmp.eq.s32.totalorder %s11, 0
    %p73 = por %p71, %p72
    %p74 = scmp.ne.s32.totalorder %s66, %s68
    %p75 = scmp.eq.s32.totalorder %s16, 1
    %p76 = por %p74, %p75
    %p77 = scmp.ne.s32.totalorder %s68, %s69
    %p78 = scmp.eq.s32.totalorder %s16, 0
    %p79 = por %p77, %p78
    %p80 = scmp.ne.s32.totalorder %s68, %s69
    %p81 = scmp.eq.s32.totalorder %s17, 1
    %p82 = por %p80, %p81
    %p84 = scmp.ne.s32.totalorder %s69, %s83
    %p85 = scmp.eq.s32.totalorder %s17, 0
    %p86 = por %p84, %p85
    %s88 = sadd.s32 %s87, 1
    %p91 = scmp.eq.s32.totalorder %s11, 1
    %p92 = scmp.ne.s32.totalorder %s87, %s89
    %p93 = scmp.eq.s32.totalorder %s11, 0
    %p94 = por %p92, %p93
    %p95 = scmp.ne.s32.totalorder %s87, %s89
    %p96 = scmp.eq.s32.totalorder %s16, 1
    %p97 = por %p95, %p96
    %p98 = scmp.ne.s32.totalorder %s89, %s90
    %p99 = scmp.eq.s32.totalorder %s16, 0
    %p100 = por %p98, %p99
    %p101 = scmp.ne.s32.totalorder %s89, %s90
    %p102 = scmp.eq.s32.totalorder %s17, 1
    %p103 = por %p101, %p102
    %p105 = scmp.ne.s32.totalorder %s90, %s104
    %p106 = scmp.eq.s32.totalorder %s17, 0
    %p107 = por %p105, %p106
    %s109 = sadd.s32 %s108, 1
    %p112 = scmp.eq.s32.totalorder %s11, 1
    %p113 = scmp.ne.s32.totalorder %s108, %s110
    %p114 = scmp.eq.s32.totalorder %s11, 0
    %p115 = por %p113, %p114
    %p116 = scmp.ne.s32.totalorder %s108, %s110
    %p117 = scmp.eq.s32.totalorder %s16, 1
    %p118 = por %p116, %p117
    %p119 = scmp.ne.s32.totalorder %s110, %s111
    %p120 = scmp.eq.s32.totalorder %s16, 0
    %p121 = por %p119, %p120
    %p122 = scmp.ne.s32.totalorder %s110, %s111
    %p123 = scmp.eq.s32.totalorder %s17, 1
    %p124 = por %p122, %p123
    %p126 = scmp.ne.s32.totalorder %s111, %s125
    %p127 = scmp.eq.s32.totalorder %s17, 0
    %p128 = por %p126, %p127
    %s129 = ssub.s32 %s11, %s18
    %p130 = scmp.eq.s32.totalorder %s129, 0
    %s132 = sadd.s32 %s131, 1
    %s133 = scalar_select %p130, %s131, %s132
    %p136 = pneg %p130
    %p137 = scmp.eq.s32.totalorder %s11, 1
    %p138 = por %p136, %p137
    %p139 = scmp.ne.s32.totalorder %s131, %s134
    %p140 = scmp.eq.s32.totalorder %s11, 0
    %p141 = por %p139, %p140
    %p142 = scmp.ne.s32.totalorder %s131, %s134
    %p143 = scmp.eq.s32.totalorder %s16, 1
    %p144 = por %p142, %p143
    %p145 = scmp.ne.s32.totalorder %s134, %s135
    %p146 = scmp.eq.s32.totalorder %s16, 0
    %p147 = por %p145, %p146
    %p148 = scmp.ne.s32.totalorder %s134, %s135
    %p149 = scmp.eq.s32.totalorder %s17, 1
    %p150 = por %p148, %p149
    %p152 = scmp.ne.s32.totalorder %s135, %s151
    %p153 = scmp.eq.s32.totalorder %s17, 0
    %p154 = por %p152, %p153
    %p155 = scmp.le.s32.totalorder 1, %s11
    %p156 = scmp.lt.s32.totalorder %s11, 3
    %p157 = pnand %p155, %p156
    %p158 = pneg %p157
    // Predicated region
    $region9: #{basic_block_forward.1} parent=5 // pred_check
      _
    $region10: #{basic_block_forward.1} parent=5 // pred_check_branch
      %160 = sbr.rel (%p157) target = $region12
    $region11: #{basic_block_forward.1} parent=5 // pred_region
      %s161 = ssub.s32 %s11, 1
      // Predicated region
      $region13: #{basic_block_forward.1} parent=11 // pred_check
        %p162 = pneg %p58
      $region14: #{basic_block_forward.1} parent=11 // pred_check_branch
        %164 = sbr.rel (%p162) target = $region16
      $region15: #{basic_block_forward.1} parent=11 // pred_region
        _
      $region16: #{basic_block_forward.1} parent=11 // pred_fallthru
        _
      // Predicated region
      $region17: #{basic_block_forward.1} parent=11 // pred_check
        %p165 = pneg %p79
      $region18: #{basic_block_forward.1} parent=11 // pred_check_branch
        %167 = sbr.rel (%p165) target = $region20
      $region19: #{basic_block_forward.1} parent=11 // pred_region
        _
      $region20: #{basic_block_forward.1} parent=11 // pred_fallthru
        _
      // Predicated region
      $region21: #{basic_block_forward.1} parent=11 // pred_check
        %p168 = pneg %p100
      $region22: #{basic_block_forward.1} parent=11 // pred_check_branch
        %170 = sbr.rel (%p168) target = $region24
      $region23: #{basic_block_forward.1} parent=11 // pred_region
        _
      $region24: #{basic_block_forward.1} parent=11 // pred_fallthru
        _
      // Predicated region
      $region25: #{basic_block_forward.1} parent=11 // pred_check
        %p171 = pneg %p121
      $region26: #{basic_block_forward.1} parent=11 // pred_check_branch
        %173 = sbr.rel (%p171) target = $region28
      $region27: #{basic_block_forward.1} parent=11 // pred_region
        _
      $region28: #{basic_block_forward.1} parent=11 // pred_fallthru
        _
    $region12: #{basic_block_forward.1} parent=5 // pred_fallthru
      _
    %p174 = scmp.lt.s32.totalorder %s11, 2
    // Predicated region
    $region29: #{basic_block_forward.1} parent=5 // pred_check
      %p175 = pneg %p174
    $region30: #{basic_block_forward.1} parent=5 // pred_check_branch
      %177 = sbr.rel (%p175) target = $region32
    $region31: #{basic_block_forward.1} parent=5 // pred_region
      // Predicated region
      $region33: #{basic_block_forward.1} parent=31 // pred_check
        %p178 = pneg %p31
      $region34: #{basic_block_forward.1} parent=31 // pred_check_branch
        %180 = sbr.rel (%p178) target = $region36
      $region35: #{basic_block_forward.1} parent=31 // pred_region
        %p181 = scmp.lt.s32.totalorder %s11, 1
        %s182 = scalar_select %p181, %s11, 1
        %s183 = smul.addr %s182, 56
        %s184 = smul.addr %s183, 8
        %s185 = scalar_lea.vmem %s0, %s184
      $region36: #{basic_block_forward.1} parent=31 // pred_fallthru
        _
    $region32: #{basic_block_forward.1} parent=5 // pred_fallthru
      _
    %p186 = scmp.le.s32.totalorder 1, %s11
    %p187 = scmp.lt.s32.totalorder %s11, 3
    %p188 = pnand %p186, %p187
    %p189 = pneg %p188
    // Predicated region
    $region37: #{basic_block_forward.1} parent=5 // pred_check
      _
    $region38: #{basic_block_forward.1} parent=5 // pred_check_branch
      %191 = sbr.rel (%p188) target = $region40
    $region39: #{basic_block_forward.1} parent=5 // pred_region
      %s192 = ssub.s32 %s11, 1
      %p193 = scmp.lt.s32.totalorder %s16, 1
      %s194 = scalar_select %p193, %s16, 1
      %s195 = smul.addr %s194, 56
      %s196 = smul.addr %s195, 8
      %s197 = scalar_lea.vmem %s0, %s196
      %p198 = pneg %p37
      %p199 = pneg %p34
      %p200 = pneg %p58
      %p201 = pneg %p55
      %p202 = pneg %p79
      %p203 = pneg %p76
      %p204 = pneg %p100
      %p205 = pneg %p97
      %p206 = pneg %p121
      %p207 = pneg %p118
      %p208 = pneg %p147
      %p209 = pneg %p144
      %p210 = scmp.lt.s32.totalorder %s16, 1
      %s211 = scalar_select %p210, %s16, 1
      %s212 = smul.addr %s211, 48
      %s213 = smul.addr %s212, 8
      %s214 = scalar_lea.vmem %s5, %s213
      %p215 = scmp.lt.s32.totalorder %s16, 1
      %s216 = scalar_select %p215, %s16, 1
      %s217 = smul.addr %s216, 56
      %s218 = smul.addr %s217, 8
      %s219 = scalar_lea.vmem %s0, %s218
      %p220 = scmp.lt.s32.totalorder %s16, 1
      %s221 = scalar_select %p220, %s16, 1
      %s222 = smul.addr %s221, 48
      %s223 = smul.addr %s222, 8
      %s224 = scalar_lea.vmem %s5, %s223
      %v225 = vld [vmem:[%s219 + $0x7] sm:$0xff]
      %v226 = vld [vmem:[%s219 + $0xf] sm:$0xff]
      %v227 = vld [vmem:[%s219 + $0x17] sm:$0xff]
      %v228 = vld [vmem:[%s219 + $0x1f] sm:$0xff]
      %v229 = vld [vmem:[%s219 + $0x27] sm:$0xff]
      %v230 = vld [vmem:[%s219 + $0x2f] sm:$0xff]
      %v231 = vld [vmem:[%s219 + $0x37] sm:$0xff]
      %v232 = vld [vmem:[%s219 + $0x3f] sm:$0xff]
      %v233 = vld [vmem:[%s219 + $0x47] sm:$0xff]
      %v234 = vld [vmem:[%s219 + $0x4f] sm:$0xff]
      %v235 = vld [vmem:[%s219 + $0x57] sm:$0xff]
      %v236 = vld [vmem:[%s219 + $0x5f] sm:$0xff]
      %v237 = vld [vmem:[%s219 + $0x67] sm:$0xff]
      %v238 = vld [vmem:[%s219 + $0x6f] sm:$0xff]
      %v239 = vld [vmem:[%s219 + $0x77] sm:$0xff]
      %v240 = vld [vmem:[%s219 + $0x7f] sm:$0xff]
      %v241 = vld [vmem:[%s219 + $0x87] sm:$0xff]
      %v242 = vld [vmem:[%s219 + $0x8f] sm:$0xff]
      %v243 = vld [vmem:[%s219 + $0x97] sm:$0xff]
      %v244 = vld [vmem:[%s219 + $0x9f] sm:$0xff]
      %v245 = vld [vmem:[%s219 + $0xa7] sm:$0xff]
      %v246 = vld [vmem:[%s219 + $0xaf] sm:$0xff]
      %v247 = vld [vmem:[%s219 + $0xb7] sm:$0xff]
      %v248 = vld [vmem:[%s219 + $0xbf] sm:$0xff]
      %v249 = vld [vmem:[%s219 + $0xc7] sm:$0xff]
      %v250 = vld [vmem:[%s219 + $0xcf] sm:$0xff]
      %v251 = vld [vmem:[%s219 + $0xd7] sm:$0xff]
      %v252 = vld [vmem:[%s219 + $0xdf] sm:$0xff]
      %v253 = vld [vmem:[%s219 + $0xe7] sm:$0xff]
      %v254 = vld [vmem:[%s219 + $0xef] sm:$0xff]
      %v255 = vld [vmem:[%s219 + $0xf7] sm:$0xff]
      %v256 = vld [vmem:[%s219 + $0xff] sm:$0xff]
      %v257 = vld [vmem:[%s219 + $0x107] sm:$0xff]
      %v258 = vld [vmem:[%s219 + $0x10f] sm:$0xff]
      %v259 = vld [vmem:[%s219 + $0x117] sm:$0xff]
      %v260 = vld [vmem:[%s219 + $0x11f] sm:$0xff]
      %v261 = vld [vmem:[%s219 + $0x127] sm:$0xff]
      %v262 = vld [vmem:[%s219 + $0x12f] sm:$0xff]
      %v263 = vld [vmem:[%s219 + $0x137] sm:$0xff]
      %v264 = vld [vmem:[%s219 + $0x13f] sm:$0xff]
      %v265 = vld [vmem:[%s219 + $0x147] sm:$0xff]
      %v266 = vld [vmem:[%s219 + $0x14f] sm:$0xff]
      %v267 = vld [vmem:[%s219 + $0x157] sm:$0xff]
      %v268 = vld [vmem:[%s219 + $0x15f] sm:$0xff]
      %v269 = vld [vmem:[%s219 + $0x167] sm:$0xff]
      %v270 = vld [vmem:[%s219 + $0x16f] sm:$0xff]
      %v271 = vld [vmem:[%s219 + $0x177] sm:$0xff]
      %v272 = vld [vmem:[%s219 + $0x17f] sm:$0xff]
      %v273 = vld [vmem:[%s219 + $0x187] sm:$0xff]
      %v274 = vld [vmem:[%s219 + $0x18f] sm:$0xff]
      %v275 = vld [vmem:[%s219 + $0x197] sm:$0xff]
      %v276 = vld [vmem:[%s219 + $0x19f] sm:$0xff]
      %v277 = vld [vmem:[%s219 + $0x1a7] sm:$0xff]
      %v278 = vld [vmem:[%s219 + $0x1af] sm:$0xff]
      %279 = vst [vmem:[#allocation2] sm:$0xff] %v225
      %280 = vst [vmem:[#allocation2 + $0x18] sm:$0xff] %v226
      %281 = vst [vmem:[#allocation2 + $0x30] sm:$0xff] %v227
      %282 = vst [vmem:[#allocation2 + $0x48] sm:$0xff] %v228
      %283 = vst [vmem:[#allocation2 + $0x60] sm:$0xff] %v229
      %284 = vst [vmem:[#allocation2 + $0x78] sm:$0xff] %v230
      %285 = vst [vmem:[#allocation2 + $0x90] sm:$0xff] %v231
      %286 = vst [vmem:[#allocation2 + $0xa8] sm:$0xff] %v232
      %287 = vst [vmem:[#allocation2 + $0xc0] sm:$0xff] %v233
      %288 = vst [vmem:[#allocation2 + $0xd8] sm:$0xff] %v234
      %289 = vst [vmem:[#allocation2 + $0xf0] sm:$0xff] %v235
      %290 = vst [vmem:[#allocation2 + $0x108] sm:$0xff] %v236
      %291 = vst [vmem:[#allocation2 + $0x120] sm:$0xff] %v237
      %292 = vst [vmem:[#allocation2 + $0x138] sm:$0xff] %v238
      %293 = vst [vmem:[#allocation2 + $0x150] sm:$0xff] %v239
      %294 = vst [vmem:[#allocation2 + $0x168] sm:$0xff] %v240
      %295 = vst [vmem:[#allocation2 + $0x180] sm:$0xff] %v241
      %296 = vst [vmem:[#allocation2 + $0x198] sm:$0xff] %v242
      %297 = vst [vmem:[#allocation2 + $0x1b0] sm:$0xff] %v243
      %298 = vst [vmem:[#allocation2 + $0x1c8] sm:$0xff] %v244
      %299 = vst [vmem:[#allocation2 + $0x1e0] sm:$0xff] %v245
      %300 = vst [vmem:[#allocation2 + $0x1f8] sm:$0xff] %v246
      %301 = vst [vmem:[#allocation2 + $0x210] sm:$0xff] %v247
      %302 = vst [vmem:[#allocation2 + $0x228] sm:$0xff] %v248
      %303 = vst [vmem:[#allocation2 + $0x240] sm:$0xff] %v249
      %304 = vst [vmem:[#allocation2 + $0x258] sm:$0xff] %v250
      %305 = vst [vmem:[#allocation2 + $0x270] sm:$0xff] %v251
      %306 = vst [vmem:[#allocation2 + $0x288] sm:$0xff] %v252
      %307 = vst [vmem:[#allocation2 + $0x2a0] sm:$0xff] %v253
      %308 = vst [vmem:[#allocation2 + $0x2b8] sm:$0xff] %v254
      %309 = vst [vmem:[#allocation2 + $0x2d0] sm:$0xff] %v255
      %310 = vst [vmem:[#allocation2 + $0x2e8] sm:$0xff] %v256
      %311 = vst [vmem:[#allocation2 + $0x300] sm:$0xff] %v257
      %312 = vst [vmem:[#allocation2 + $0x318] sm:$0xff] %v258
      %313 = vst [vmem:[#allocation2 + $0x330] sm:$0xff] %v259
      %314 = vst [vmem:[#allocation2 + $0x348] sm:$0xff] %v260
      %315 = vst [vmem:[#allocation2 + $0x360] sm:$0xff] %v261
      %316 = vst [vmem:[#allocation2 + $0x378] sm:$0xff] %v262
      %317 = vst [vmem:[#allocation2 + $0x390] sm:$0xff] %v263
      %318 = vst [vmem:[#allocation2 + $0x3a8] sm:$0xff] %v264
      %319 = vst [vmem:[#allocation2 + $0x3c0] sm:$0xff] %v265
      %320 = vst [vmem:[#allocation2 + $0x3d8] sm:$0xff] %v266
      %321 = vst [vmem:[#allocation2 + $0x3f0] sm:$0xff] %v267
      %322 = vst [vmem:[#allocation2 + $0x408] sm:$0xff] %v268
      %323 = vst [vmem:[#allocation2 + $0x420] sm:$0xff] %v269
      %324 = vst [vmem:[#allocation2 + $0x438] sm:$0xff] %v270
      %325 = vst [vmem:[#allocation2 + $0x450] sm:$0xff] %v271
      %326 = vst [vmem:[#allocation2 + $0x468] sm:$0xff] %v272
      %327 = vst [vmem:[#allocation2 + $0x480] sm:$0xff] %v273
      %328 = vst [vmem:[#allocation2 + $0x498] sm:$0xff] %v274
      %329 = vst [vmem:[#allocation2 + $0x4b0] sm:$0xff] %v275
      %330 = vst [vmem:[#allocation2 + $0x4c8] sm:$0xff] %v276
      %331 = vst [vmem:[#allocation2 + $0x4e0] sm:$0xff] %v277
      %332 = vst [vmem:[#allocation2 + $0x4f8] sm:$0xff] %v278
      %v333 = vld [vmem:[%s219 + $0x8] sm:$0xff]
      %v334 = vld [vmem:[%s219 + $0x10] sm:$0xff]
      %v335 = vld [vmem:[%s219 + $0x18] sm:$0xff]
      %v336 = vld [vmem:[%s219 + $0x20] sm:$0xff]
      %v337 = vld [vmem:[%s219 + $0x28] sm:$0xff]
      %v338 = vld [vmem:[%s219 + $0x30] sm:$0xff]
      %v339 = vld [vmem:[%s219 + $0x38] sm:$0xff]
      %v340 = vld [vmem:[%s219 + $0x40] sm:$0xff]
      %v341 = vld [vmem:[%s219 + $0x48] sm:$0xff]
      %v342 = vld [vmem:[%s219 + $0x50] sm:$0xff]
      %v343 = vld [vmem:[%s219 + $0x58] sm:$0xff]
      %v344 = vld [vmem:[%s219 + $0x60] sm:$0xff]
      %v345 = vld [vmem:[%s219 + $0x68] sm:$0xff]
      %v346 = vld [vmem:[%s219 + $0x70] sm:$0xff]
      %v347 = vld [vmem:[%s219 + $0x78] sm:$0xff]
      %v348 = vld [vmem:[%s219 + $0x80] sm:$0xff]
      %v349 = vld [vmem:[%s219 + $0x88] sm:$0xff]
      %v350 = vld [vmem:[%s219 + $0x90] sm:$0xff]
      %v351 = vld [vmem:[%s219 + $0x98] sm:$0xff]
      %v352 = vld [vmem:[%s219 + $0xa0] sm:$0xff]
      %v353 = vld [vmem:[%s219 + $0xa8] sm:$0xff]
      %v354 = vld [vmem:[%s219 + $0xb0] sm:$0xff]
      %v355 = vld [vmem:[%s219 + $0xb8] sm:$0xff]
      %v356 = vld [vmem:[%s219 + $0xc0] sm:$0xff]
      %v357 = vld [vmem:[%s219 + $0xc8] sm:$0xff]
      %v358 = vld [vmem:[%s219 + $0xd0] sm:$0xff]
      %v359 = vld [vmem:[%s219 + $0xd8] sm:$0xff]
      %v360 = vld [vmem:[%s219 + $0xe0] sm:$0xff]
      %v361 = vld [vmem:[%s219 + $0xe8] sm:$0xff]
      %v362 = vld [vmem:[%s219 + $0xf0] sm:$0xff]
      %v363 = vld [vmem:[%s219 + $0xf8] sm:$0xff]
      %v364 = vld [vmem:[%s219 + $0x100] sm:$0xff]
      %v365 = vld [vmem:[%s219 + $0x108] sm:$0xff]
      %v366 = vld [vmem:[%s219 + $0x110] sm:$0xff]
      %v367 = vld [vmem:[%s219 + $0x118] sm:$0xff]
      %v368 = vld [vmem:[%s219 + $0x120] sm:$0xff]
      %v369 = vld [vmem:[%s219 + $0x128] sm:$0xff]
      %v370 = vld [vmem:[%s219 + $0x130] sm:$0xff]
      %v371 = vld [vmem:[%s219 + $0x138] sm:$0xff]
      %v372 = vld [vmem:[%s219 + $0x140] sm:$0xff]
      %v373 = vld [vmem:[%s219 + $0x148] sm:$0xff]
      %v374 = vld [vmem:[%s219 + $0x150] sm:$0xff]
      %v375 = vld [vmem:[%s219 + $0x158] sm:$0xff]
      %v376 = vld [vmem:[%s219 + $0x160] sm:$0xff]
      %v377 = vld [vmem:[%s219 + $0x168] sm:$0xff]
      %v378 = vld [vmem:[%s219 + $0x170] sm:$0xff]
      %v379 = vld [vmem:[%s219 + $0x178] sm:$0xff]
      %v380 = vld [vmem:[%s219 + $0x180] sm:$0xff]
      %v381 = vld [vmem:[%s219 + $0x188] sm:$0xff]
      %v382 = vld [vmem:[%s219 + $0x190] sm:$0xff]
      %v383 = vld [vmem:[%s219 + $0x198] sm:$0xff]
      %v384 = vld [vmem:[%s219 + $0x1a0] sm:$0xff]
      %v385 = vld [vmem:[%s219 + $0x1a8] sm:$0xff]
      %v386 = vld [vmem:[%s219 + $0x1b0] sm:$0xff]
      %387 = vst [vmem:[#allocation2 + $0x8] sm:$0xff] %v333
      %388 = vst [vmem:[#allocation2 + $0x20] sm:$0xff] %v334
      %389 = vst [vmem:[#allocation2 + $0x38] sm:$0xff] %v335
      %390 = vst [vmem:[#allocation2 + $0x50] sm:$0xff] %v336
      %391 = vst [vmem:[#allocation2 + $0x68] sm:$0xff] %v337
      %392 = vst [vmem:[#allocation2 + $0x80] sm:$0xff] %v338
      %393 = vst [vmem:[#allocation2 + $0x98] sm:$0xff] %v339
      %394 = vst [vmem:[#allocation2 + $0xb0] sm:$0xff] %v340
      %395 = vst [vmem:[#allocation2 + $0xc8] sm:$0xff] %v341
      %396 = vst [vmem:[#allocation2 + $0xe0] sm:$0xff] %v342
      %397 = vst [vmem:[#allocation2 + $0xf8] sm:$0xff] %v343
      %398 = vst [vmem:[#allocation2 + $0x110] sm:$0xff] %v344
      %399 = vst [vmem:[#allocation2 + $0x128] sm:$0xff] %v345
      %400 = vst [vmem:[#allocation2 + $0x140] sm:$0xff] %v346
      %401 = vst [vmem:[#allocation2 + $0x158] sm:$0xff] %v347
      %402 = vst [vmem:[#allocation2 + $0x170] sm:$0xff] %v348
      %403 = vst [vmem:[#allocation2 + $0x188] sm:$0xff] %v349
      %404 = vst [vmem:[#allocation2 + $0x1a0] sm:$0xff] %v350
      %405 = vst [vmem:[#allocation2 + $0x1b8] sm:$0xff] %v351
      %406 = vst [vmem:[#allocation2 + $0x1d0] sm:$0xff] %v352
      %407 = vst [vmem:[#allocation2 + $0x1e8] sm:$0xff] %v353
      %408 = vst [vmem:[#allocation2 + $0x200] sm:$0xff] %v354
      %409 = vst [vmem:[#allocation2 + $0x218] sm:$0xff] %v355
      %410 = vst [vmem:[#allocation2 + $0x230] sm:$0xff] %v356
      %411 = vst [vmem:[#allocation2 + $0x248] sm:$0xff] %v357
      %412 = vst [vmem:[#allocation2 + $0x260] sm:$0xff] %v358
      %413 = vst [vmem:[#allocation2 + $0x278] sm:$0xff] %v359
      %414 = vst [vmem:[#allocation2 + $0x290] sm:$0xff] %v360
      %415 = vst [vmem:[#allocation2 + $0x2a8] sm:$0xff] %v361
      %416 = vst [vmem:[#allocation2 + $0x2c0] sm:$0xff] %v362
      %417 = vst [vmem:[#allocation2 + $0x2d8] sm:$0xff] %v363
      %418 = vst [vmem:[#allocation2 + $0x2f0] sm:$0xff] %v364
      %419 = vst [vmem:[#allocation2 + $0x308] sm:$0xff] %v365
      %420 = vst [vmem:[#allocation2 + $0x320] sm:$0xff] %v366
      %421 = vst [vmem:[#allocation2 + $0x338] sm:$0xff] %v367
      %422 = vst [vmem:[#allocation2 + $0x350] sm:$0xff] %v368
      %423 = vst [vmem:[#allocation2 + $0x368] sm:$0xff] %v369
      %424 = vst [vmem:[#allocation2 + $0x380] sm:$0xff] %v370
      %425 = vst [vmem:[#allocation2 + $0x398] sm:$0xff] %v371
      %426 = vst [vmem:[#allocation2 + $0x3b0] sm:$0xff] %v372
      %427 = vst [vmem:[#allocation2 + $0x3c8] sm:$0xff] %v373
      %428 = vst [vmem:[#allocation2 + $0x3e0] sm:$0xff] %v374
      %429 = vst [vmem:[#allocation2 + $0x3f8] sm:$0xff] %v375
      %430 = vst [vmem:[#allocation2 + $0x410] sm:$0xff] %v376
      %431 = vst [vmem:[#allocation2 + $0x428] sm:$0xff] %v377
      %432 = vst [vmem:[#allocation2 + $0x440] sm:$0xff] %v378
      %433 = vst [vmem:[#allocation2 + $0x458] sm:$0xff] %v379
      %434 = vst [vmem:[#allocation2 + $0x470] sm:$0xff] %v380
      %435 = vst [vmem:[#allocation2 + $0x488] sm:$0xff] %v381
      %436 = vst [vmem:[#allocation2 + $0x4a0] sm:$0xff] %v382
      %437 = vst [vmem:[#allocation2 + $0x4b8] sm:$0xff] %v383
      %438 = vst [vmem:[#allocation2 + $0x4d0] sm:$0xff] %v384
      %439 = vst [vmem:[#allocation2 + $0x4e8] sm:$0xff] %v385
      %440 = vst [vmem:[#allocation2 + $0x500] sm:$0xff] %v386
      %v441 = vld [vmem:[%s219 + $0x9] sm:$0xff]
      %v442 = vld [vmem:[%s219 + $0x11] sm:$0xff]
      %v443 = vld [vmem:[%s219 + $0x19] sm:$0xff]
      %v444 = vld [vmem:[%s219 + $0x21] sm:$0xff]
      %v445 = vld [vmem:[%s219 + $0x29] sm:$0xff]
      %v446 = vld [vmem:[%s219 + $0x31] sm:$0xff]
      %v447 = vld [vmem:[%s219 + $0x39] sm:$0xff]
      %v448 = vld [vmem:[%s219 + $0x41] sm:$0xff]
      %v449 = vld [vmem:[%s219 + $0x49] sm:$0xff]
      %v450 = vld [vmem:[%s219 + $0x51] sm:$0xff]
      %v451 = vld [vmem:[%s219 + $0x59] sm:$0xff]
      %v452 = vld [vmem:[%s219 + $0x61] sm:$0xff]
      %v453 = vld [vmem:[%s219 + $0x69] sm:$0xff]
      %v454 = vld [vmem:[%s219 + $0x71] sm:$0xff]
      %v455 = vld [vmem:[%s219 + $0x79] sm:$0xff]
      %v456 = vld [vmem:[%s219 + $0x81] sm:$0xff]
      %v457 = vld [vmem:[%s219 + $0x89] sm:$0xff]
      %v458 = vld [vmem:[%s219 + $0x91] sm:$0xff]
      %v459 = vld [vmem:[%s219 + $0x99] sm:$0xff]
      %v460 = vld [vmem:[%s219 + $0xa1] sm:$0xff]
      %v461 = vld [vmem:[%s219 + $0xa9] sm:$0xff]
      %v462 = vld [vmem:[%s219 + $0xb1] sm:$0xff]
      %v463 = vld [vmem:[%s219 + $0xb9] sm:$0xff]
      %v464 = vld [vmem:[%s219 + $0xc1] sm:$0xff]
      %v465 = vld [vmem:[%s219 + $0xc9] sm:$0xff]
      %v466 = vld [vmem:[%s219 + $0xd1] sm:$0xff]
      %v467 = vld [vmem:[%s219 + $0xd9] sm:$0xff]
      %v468 = vld [vmem:[%s219 + $0xe1] sm:$0xff]
      %v469 = vld [vmem:[%s219 + $0xe9] sm:$0xff]
      %v470 = vld [vmem:[%s219 + $0xf1] sm:$0xff]
      %v471 = vld [vmem:[%s219 + $0xf9] sm:$0xff]
      %v472 = vld [vmem:[%s219 + $0x101] sm:$0xff]
      %v473 = vld [vmem:[%s219 + $0x109] sm:$0xff]
      %v474 = vld [vmem:[%s219 + $0x111] sm:$0xff]
      %v475 = vld [vmem:[%s219 + $0x119] sm:$0xff]
      %v476 = vld [vmem:[%s219 + $0x121] sm:$0xff]
      %v477 = vld [vmem:[%s219 + $0x129] sm:$0xff]
      %v478 = vld [vmem:[%s219 + $0x131] sm:$0xff]
      %v479 = vld [vmem:[%s219 + $0x139] sm:$0xff]
      %v480 = vld [vmem:[%s219 + $0x141] sm:$0xff]
      %v481 = vld [vmem:[%s219 + $0x149] sm:$0xff]
      %v482 = vld [vmem:[%s219 + $0x151] sm:$0xff]
      %v483 = vld [vmem:[%s219 + $0x159] sm:$0xff]
      %v484 = vld [vmem:[%s219 + $0x161] sm:$0xff]
      %v485 = vld [vmem:[%s219 + $0x169] sm:$0xff]
      %v486 = vld [vmem:[%s219 + $0x171] sm:$0xff]
      %v487 = vld [vmem:[%s219 + $0x179] sm:$0xff]
      %v488 = vld [vmem:[%s219 + $0x181] sm:$0xff]
      %v489 = vld [vmem:[%s219 + $0x189] sm:$0xff]
      %v490 = vld [vmem:[%s219 + $0x191] sm:$0xff]
      %v491 = vld [vmem:[%s219 + $0x199] sm:$0xff]
      %v492 = vld [vmem:[%s219 + $0x1a1] sm:$0xff]
      %v493 = vld [vmem:[%s219 + $0x1a9] sm:$0xff]
      %v494 = vld [vmem:[%s219 + $0x1b1] sm:$0xff]
      %495 = vst [vmem:[#allocation2 + $0x10] sm:$0xff] %v441
      %496 = vst [vmem:[#allocation2 + $0x28] sm:$0xff] %v442
      %497 = vst [vmem:[#allocation2 + $0x40] sm:$0xff] %v443
      %498 = vst [vmem:[#allocation2 + $0x58] sm:$0xff] %v444
      %499 = vst [vmem:[#allocation2 + $0x70] sm:$0xff] %v445
      %500 = vst [vmem:[#allocation2 + $0x88] sm:$0xff] %v446
      %501 = vst [vmem:[#allocation2 + $0xa0] sm:$0xff] %v447
      %502 = vst [vmem:[#allocation2 + $0xb8] sm:$0xff] %v448
      %503 = vst [vmem:[#allocation2 + $0xd0] sm:$0xff] %v449
      %504 = vst [vmem:[#allocation2 + $0xe8] sm:$0xff] %v450
      %505 = vst [vmem:[#allocation2 + $0x100] sm:$0xff] %v451
      %506 = vst [vmem:[#allocation2 + $0x118] sm:$0xff] %v452
      %507 = vst [vmem:[#allocation2 + $0x130] sm:$0xff] %v453
      %508 = vst [vmem:[#allocation2 + $0x148] sm:$0xff] %v454
      %509 = vst [vmem:[#allocation2 + $0x160] sm:$0xff] %v455
      %510 = vst [vmem:[#allocation2 + $0x178] sm:$0xff] %v456
      %511 = vst [vmem:[#allocation2 + $0x190] sm:$0xff] %v457
      %512 = vst [vmem:[#allocation2 + $0x1a8] sm:$0xff] %v458
      %513 = vst [vmem:[#allocation2 + $0x1c0] sm:$0xff] %v459
      %514 = vst [vmem:[#allocation2 + $0x1d8] sm:$0xff] %v460
      %515 = vst [vmem:[#allocation2 + $0x1f0] sm:$0xff] %v461
      %516 = vst [vmem:[#allocation2 + $0x208] sm:$0xff] %v462
      %517 = vst [vmem:[#allocation2 + $0x220] sm:$0xff] %v463
      %518 = vst [vmem:[#allocation2 + $0x238] sm:$0xff] %v464
      %519 = vst [vmem:[#allocation2 + $0x250] sm:$0xff] %v465
      %520 = vst [vmem:[#allocation2 + $0x268] sm:$0xff] %v466
      %521 = vst [vmem:[#allocation2 + $0x280] sm:$0xff] %v467
      %522 = vst [vmem:[#allocation2 + $0x298] sm:$0xff] %v468
      %523 = vst [vmem:[#allocation2 + $0x2b0] sm:$0xff] %v469
      %524 = vst [vmem:[#allocation2 + $0x2c8] sm:$0xff] %v470
      %525 = vst [vmem:[#allocation2 + $0x2e0] sm:$0xff] %v471
      %526 = vst [vmem:[#allocation2 + $0x2f8] sm:$0xff] %v472
      %527 = vst [vmem:[#allocation2 + $0x310] sm:$0xff] %v473
      %528 = vst [vmem:[#allocation2 + $0x328] sm:$0xff] %v474
      %529 = vst [vmem:[#allocation2 + $0x340] sm:$0xff] %v475
      %530 = vst [vmem:[#allocation2 + $0x358] sm:$0xff] %v476
      %531 = vst [vmem:[#allocation2 + $0x370] sm:$0xff] %v477
      %532 = vst [vmem:[#allocation2 + $0x388] sm:$0xff] %v478
      %533 = vst [vmem:[#allocation2 + $0x3a0] sm:$0xff] %v479
      %534 = vst [vmem:[#allocation2 + $0x3b8] sm:$0xff] %v480
      %535 = vst [vmem:[#allocation2 + $0x3d0] sm:$0xff] %v481
      %536 = vst [vmem:[#allocation2 + $0x3e8] sm:$0xff] %v482
      %537 = vst [vmem:[#allocation2 + $0x400] sm:$0xff] %v483
      %538 = vst [vmem:[#allocation2 + $0x418] sm:$0xff] %v484
      %539 = vst [vmem:[#allocation2 + $0x430] sm:$0xff] %v485
      %540 = vst [vmem:[#allocation2 + $0x448] sm:$0xff] %v486
      %541 = vst [vmem:[#allocation2 + $0x460] sm:$0xff] %v487
      %542 = vst [vmem:[#allocation2 + $0x478] sm:$0xff] %v488
      %543 = vst [vmem:[#allocation2 + $0x490] sm:$0xff] %v489
      %544 = vst [vmem:[#allocation2 + $0x4a8] sm:$0xff] %v490
      %545 = vst [vmem:[#allocation2 + $0x4c0] sm:$0xff] %v491
      %546 = vst [vmem:[#allocation2 + $0x4d8] sm:$0xff] %v492
      %547 = vst [vmem:[#allocation2 + $0x4f0] sm:$0xff] %v493
      %548 = vst [vmem:[#allocation2 + $0x508] sm:$0xff] %v494
      %549 = vst [vmem:[#allocation3] sm:$0xff] 0.0
      %550 = vst [vmem:[#allocation3 + $0x8] sm:$0xff] 0.0
      %551 = vst [vmem:[#allocation3 + $0x10] sm:$0xff] 0.0
      %552 = vst [vmem:[#allocation3 + $0x18] sm:$0xff] 0.0
      %553 = vst [vmem:[#allocation3 + $0x1a0] sm:$0xff] 0.0
      %554 = vst [vmem:[#allocation3 + $0x1a8] sm:$0xff] 0.0
      %555 = vst [vmem:[#allocation3 + $0x1b0] sm:$0xff] 0.0
      %556 = vst [vmem:[#allocation3 + $0x1b8] sm:$0xff] 0.0
      %v557 = vld [vmem:[#allocation2] sm:$0xff]
      %v558 = vld [vmem:[#allocation2 + $0x8] sm:$0xff]
      %v559 = vld [vmem:[#allocation2 + $0x10] sm:$0xff]
      %v560 = vld [vmem:[#allocation2 + $0x18] sm:$0xff]
      %v561 = vld [vmem:[#allocation2 + $0x20] sm:$0xff]
      %v562 = vld [vmem:[#allocation2 + $0x28] sm:$0xff]
      %v563 = vld [vmem:[#allocation2 + $0x30] sm:$0xff]
      %v564 = vld [vmem:[#allocation2 + $0x38] sm:$0xff]
      %v565 = vld [vmem:[#allocation2 + $0x40] sm:$0xff]
      %v566 = vld [vmem:[#allocation2 + $0x48] sm:$0xff]
      %v567 = vld [vmem:[#allocation2 + $0x50] sm:$0xff]
      %v568 = vld [vmem:[#allocation2 + $0x58] sm:$0xff]
      %v569 = vld [vmem:[#allocation2 + $0x60] sm:$0xff]
      %v570 = vld [vmem:[#allocation2 + $0x68] sm:$0xff]
      %v571 = vld [vmem:[#allocation2 + $0x70] sm:$0xff]
      %v572 = vld [vmem:[#allocation2 + $0x78] sm:$0xff]
      %v573 = vld [vmem:[#allocation2 + $0x80] sm:$0xff]
      %v574 = vld [vmem:[#allocation2 + $0x88] sm:$0xff]
      %v575 = vld [vmem:[#allocation2 + $0x90] sm:$0xff]
      %v576 = vld [vmem:[#allocation2 + $0x98] sm:$0xff]
      %v577 = vld [vmem:[#allocation2 + $0xa0] sm:$0xff]
      %v578 = vld [vmem:[#allocation2 + $0xa8] sm:$0xff]
      %v579 = vld [vmem:[#allocation2 + $0xb0] sm:$0xff]
      %v580 = vld [vmem:[#allocation2 + $0xb8] sm:$0xff]
      %v581 = vld [vmem:[#allocation2 + $0xc0] sm:$0xff]
      %v582 = vld [vmem:[#allocation2 + $0xc8] sm:$0xff]
      %v583 = vld [vmem:[#allocation2 + $0xd0] sm:$0xff]
      %v584 = vld [vmem:[#allocation2 + $0xd8] sm:$0xff]
      %v585 = vld [vmem:[#allocation2 + $0xe0] sm:$0xff]
      %v586 = vld [vmem:[#allocation2 + $0xe8] sm:$0xff]
      %v587 = vld [vmem:[#allocation2 + $0xf0] sm:$0xff]
      %v588 = vld [vmem:[#allocation2 + $0xf8] sm:$0xff]
      %v589 = vld [vmem:[#allocation2 + $0x100] sm:$0xff]
      %v590 = vld [vmem:[#allocation2 + $0x108] sm:$0xff]
      %v591 = vld [vmem:[#allocation2 + $0x110] sm:$0xff]
      %v592 = vld [vmem:[#allocation2 + $0x118] sm:$0xff]
      %v593 = vld [vmem:[#allocation2 + $0x120] sm:$0xff]
      %v594 = vld [vmem:[#allocation2 + $0x128] sm:$0xff]
      %v595 = vld [vmem:[#allocation2 + $0x130] sm:$0xff]
      %v596 = vld [vmem:[#allocation2 + $0x138] sm:$0xff]
      %v597 = vld [vmem:[#allocation2 + $0x140] sm:$0xff]
      %v598 = vld [vmem:[#allocation2 + $0x148] sm:$0xff]
      %v599 = vld [vmem:[#allocation2 + $0x150] sm:$0xff]
      %v600 = vld [vmem:[#allocation2 + $0x158] sm:$0xff]
      %v601 = vld [vmem:[#allocation2 + $0x160] sm:$0xff]
      %v602 = vld [vmem:[#allocation2 + $0x168] sm:$0xff]
      %v603 = vld [vmem:[#allocation2 + $0x170] sm:$0xff]
      %v604 = vld [vmem:[#allocation2 + $0x178] sm:$0xff]
      %v605 = vld [vmem:[%s1] sm:$0xff]
      %v606 = vld [vmem:[%s1 + $0x8] sm:$0xff]
      %v607 = vld [vmem:[%s1 + $0x10] sm:$0xff]
      %v608 = vld [vmem:[%s1 + $0x18] sm:$0xff]
      %v609 = vld [vmem:[%s1 + $0x20] sm:$0xff]
      %v610 = vld [vmem:[%s1 + $0x28] sm:$0xff]
      %v611 = vld [vmem:[%s1 + $0x30] sm:$0xff]
      %v612 = vld [vmem:[%s1 + $0x38] sm:$0xff]
      %v613 = vld [vmem:[%s1 + $0x40] sm:$0xff]
      %v614 = vld [vmem:[%s1 + $0x48] sm:$0xff]
      %v615 = vld [vmem:[%s1 + $0x50] sm:$0xff]
      %v616 = vld [vmem:[%s1 + $0x58] sm:$0xff]
      %v617 = vld [vmem:[%s1 + $0x60] sm:$0xff]
      %v618 = vld [vmem:[%s1 + $0x68] sm:$0xff]
      %v619 = vld [vmem:[%s1 + $0x70] sm:$0xff]
      %v620 = vld [vmem:[%s1 + $0x78] sm:$0xff]
      %v621 = vld [vmem:[%s1 + $0x80] sm:$0xff]
      %v622 = vld [vmem:[%s1 + $0x88] sm:$0xff]
      %v623 = vld [vmem:[%s1 + $0x90] sm:$0xff]
      %v624 = vld [vmem:[%s1 + $0x98] sm:$0xff]
      %v625 = vld [vmem:[%s1 + $0xa0] sm:$0xff]
      %v626 = vld [vmem:[%s1 + $0xa8] sm:$0xff]
      %v627 = vld [vmem:[%s1 + $0xb0] sm:$0xff]
      %v628 = vld [vmem:[%s1 + $0xb8] sm:$0xff]
      %v629 = vld [vmem:[%s1 + $0xc0] sm:$0xff]
      %v630 = vld [vmem:[%s1 + $0xc8] sm:$0xff]
      %v631 = vld [vmem:[%s1 + $0xd0] sm:$0xff]
      %v632 = vld [vmem:[%s1 + $0xd8] sm:$0xff]
      %v633 = vld [vmem:[%s1 + $0xe0] sm:$0xff]
      %v634 = vld [vmem:[%s1 + $0xe8] sm:$0xff]
      %v635 = vld [vmem:[%s1 + $0xf0] sm:$0xff]
      %v636 = vld [vmem:[%s1 + $0xf8] sm:$0xff]
      %v637 = vld [vmem:[%s1 + $0x100] sm:$0xff]
      %v638 = vld [vmem:[%s1 + $0x108] sm:$0xff]
      %v639 = vld [vmem:[%s1 + $0x110] sm:$0xff]
      %v640 = vld [vmem:[%s1 + $0x118] sm:$0xff]
      %v641 = vld [vmem:[%s1 + $0x120] sm:$0xff]
      %v642 = vld [vmem:[%s1 + $0x128] sm:$0xff]
      %v643 = vld [vmem:[%s1 + $0x130] sm:$0xff]
      %v644 = vld [vmem:[%s1 + $0x138] sm:$0xff]
      %v645 = vld [vmem:[%s1 + $0x140] sm:$0xff]
      %v646 = vld [vmem:[%s1 + $0x148] sm:$0xff]
      %v647 = vld [vmem:[%s1 + $0x150] sm:$0xff]
      %v648 = vld [vmem:[%s1 + $0x158] sm:$0xff]
      %v649 = vld [vmem:[%s1 + $0x160] sm:$0xff]
      %v650 = vld [vmem:[%s1 + $0x168] sm:$0xff]
      %v651 = vld [vmem:[%s1 + $0x170] sm:$0xff]
      %v652 = vld [vmem:[%s1 + $0x178] sm:$0xff]
      %v653 = vld [vmem:[#allocation2 + $0x180] sm:$0xff]
      %v654 = vld [vmem:[#allocation2 + $0x188] sm:$0xff]
      %v655 = vld [vmem:[#allocation2 + $0x190] sm:$0xff]
      %v656 = vld [vmem:[#allocation2 + $0x198] sm:$0xff]
      %v657 = vld [vmem:[#allocation2 + $0x1a0] sm:$0xff]
      %v658 = vld [vmem:[#allocation2 + $0x1a8] sm:$0xff]
      %v659 = vld [vmem:[#allocation2 + $0x1b0] sm:$0xff]
      %v660 = vld [vmem:[#allocation2 + $0x1b8] sm:$0xff]
      %v661 = vld [vmem:[#allocation2 + $0x1c0] sm:$0xff]
      %s662 = scalar_lea.vmem %s1, 384
      %v663 = vld [vmem:[%s662] sm:$0xff]
      %v664 = vld [vmem:[%s662 + $0x8] sm:$0xff]
      %v665 = vld [vmem:[%s662 + $0x10] sm:$0xff]
      %v666 = vld [vmem:[%s662 + $0x18] sm:$0xff]
      %v667 = vld [vmem:[%s662 + $0x20] sm:$0xff]
      %v668 = vld [vmem:[%s662 + $0x28] sm:$0xff]
      %v669 = vld [vmem:[%s662 + $0x30] sm:$0xff]
      %v670 = vld [vmem:[%s662 + $0x38] sm:$0xff]
      %v671 = vld [vmem:[%s662 + $0x40] sm:$0xff]
      %v672 = vld [vmem:[%s662 + $0x48] sm:$0xff]
      %v673 = vld [vmem:[%s662 + $0x50] sm:$0xff]
      %v674 = vld [vmem:[%s662 + $0x58] sm:$0xff]
      %v675 = vld [vmem:[%s662 + $0x60] sm:$0xff]
      %v676 = vld [vmem:[%s662 + $0x68] sm:$0xff]
      %v677 = vld [vmem:[%s662 + $0x70] sm:$0xff]
      %v678 = vld [vmem:[%s662 + $0x78] sm:$0xff]
      %v679 = vld [vmem:[%s662 + $0x80] sm:$0xff]
      %v680 = vld [vmem:[%s662 + $0x88] sm:$0xff]
      %v681 = vld [vmem:[%s662 + $0x90] sm:$0xff]
      %v682 = vld [vmem:[%s662 + $0x98] sm:$0xff]
      %v683 = vld [vmem:[%s662 + $0xa0] sm:$0xff]
      %v684 = vld [vmem:[%s662 + $0xa8] sm:$0xff]
      %v685 = vld [vmem:[%s662 + $0xb0] sm:$0xff]
      %v686 = vld [vmem:[%s662 + $0xb8] sm:$0xff]
      %v687 = vld [vmem:[%s662 + $0xc0] sm:$0xff]
      %v688 = vld [vmem:[%s662 + $0xc8] sm:$0xff]
      %v689 = vld [vmem:[%s662 + $0xd0] sm:$0xff]
      %v690 = vld [vmem:[%s662 + $0xd8] sm:$0xff]
      %v691 = vld [vmem:[%s662 + $0xe0] sm:$0xff]
      %v692 = vld [vmem:[%s662 + $0xe8] sm:$0xff]
      %v693 = vld [vmem:[%s662 + $0xf0] sm:$0xff]
      %v694 = vld [vmem:[%s662 + $0xf8] sm:$0xff]
      %v695 = vld [vmem:[%s662 + $0x100] sm:$0xff]
      %v696 = vld [vmem:[%s662 + $0x108] sm:$0xff]
      %v697 = vld [vmem:[%s662 + $0x110] sm:$0xff]
      %v698 = vld [vmem:[%s662 + $0x118] sm:$0xff]
      %v699 = vld [vmem:[%s662 + $0x120] sm:$0xff]
      %v700 = vld [vmem:[%s662 + $0x128] sm:$0xff]
      %v701 = vld [vmem:[%s662 + $0x130] sm:$0xff]
      %v702 = vld [vmem:[%s662 + $0x138] sm:$0xff]
      %v703 = vld [vmem:[%s662 + $0x140] sm:$0xff]
      %v704 = vld [vmem:[%s662 + $0x148] sm:$0xff]
      %v705 = vld [vmem:[%s662 + $0x150] sm:$0xff]
      %v706 = vld [vmem:[%s662 + $0x158] sm:$0xff]
      %v707 = vld [vmem:[%s662 + $0x160] sm:$0xff]
      %v708 = vld [vmem:[%s662 + $0x168] sm:$0xff]
      %v709 = vld [vmem:[%s662 + $0x170] sm:$0xff]
      %v710 = vld [vmem:[%s662 + $0x178] sm:$0xff]
      %711 = vmatprep.subr.mxu0 0.0
      %712 = vmatpush1.msra.mxu0 %v678
      %713 = vmatprep.subr.mxu0 0.0
      %714 = vmatpush1.msra.mxu0 %v677
      %715 = vmatprep.subr.mxu0 0.0
      %716 = vmatpush1.msra.mxu0 %v676
      %717 = vmatprep.subr.mxu0 0.0
      %718 = vmatpush1.msra.mxu0 %v675
      %719 = vmatprep.subr.mxu0 0.0
      %720 = vmatpush1.msra.mxu0 %v674
      %721 = vmatprep.subr.mxu0 0.0
      %722 = vmatpush1.msra.mxu0 %v673
      %723 = vmatprep.subr.mxu0 0.0
      %724 = vmatpush1.msra.mxu0 %v672
      %725 = vmatprep.subr.mxu0 0.0
      %726 = vmatpush1.msra.mxu0 %v671
      %727 = vmatprep.subr.mxu0 0.0
      %728 = vmatpush1.msra.mxu0 %v670
      %729 = vmatprep.subr.mxu0 0.0
      %730 = vmatpush1.msra.mxu0 %v669
      %731 = vmatprep.subr.mxu0 0.0
      %732 = vmatpush1.msra.mxu0 %v668
      %733 = vmatprep.subr.mxu0 0.0
      %734 = vmatpush1.msra.mxu0 %v667
      %735 = vmatprep.subr.mxu0 0.0
      %736 = vmatpush1.msra.mxu0 %v666
      %737 = vmatprep.subr.mxu0 0.0
      %738 = vmatpush1.msra.mxu0 %v665
      %739 = vmatprep.subr.mxu0 0.0
      %740 = vmatpush1.msra.mxu0 %v664
      %741 = vmatprep.subr.mxu0 0.0
      %742 = vmatpush1.msra.mxu0 %v663
      %743 = vmatprep.subr.mxu0 0.0
      %744 = vmatpush2.msra.mxu0 %v694
      %745 = vmatprep.subr.mxu0 0.0
      %746 = vmatpush2.msra.mxu0 %v693
      %747 = vmatprep.subr.mxu0 0.0
      %748 = vmatpush2.msra.mxu0 %v692
      %749 = vmatprep.subr.mxu0 0.0
      %750 = vmatpush2.msra.mxu0 %v691
      %751 = vmatprep.subr.mxu0 0.0
      %752 = vmatpush2.msra.mxu0 %v690
      %753 = vmatprep.subr.mxu0 0.0
      %754 = vmatpush2.msra.mxu0 %v689
      %755 = vmatprep.subr.mxu0 0.0
      %756 = vmatpush2.msra.mxu0 %v688
      %757 = vmatprep.subr.mxu0 0.0
      %758 = vmatpush2.msra.mxu0 %v687
      %759 = vmatprep.subr.mxu0 0.0
      %760 = vmatpush2.msra.mxu0 %v686
      %761 = vmatprep.subr.mxu0 0.0
      %762 = vmatpush2.msra.mxu0 %v685
      %763 = vmatprep.subr.mxu0 0.0
      %764 = vmatpush2.msra.mxu0 %v684
      %765 = vmatprep.subr.mxu0 0.0
      %766 = vmatpush2.msra.mxu0 %v683
      %767 = vmatprep.subr.mxu0 0.0
      %768 = vmatpush2.msra.mxu0 %v682
      %769 = vmatprep.subr.mxu0 0.0
      %770 = vmatpush2.msra.mxu0 %v681
      %771 = vmatprep.subr.mxu0 0.0
      %772 = vmatpush2.msra.mxu0 %v680
      %773 = vmatprep.subr.mxu0 0.0
      %774 = vmatpush2.msra.mxu0 %v679
      %775 = vmatprep.mubr.f32.mxu0 %v567
      %776 = vmatmul.mubr.f32.gmra.mxu0 %v566
      %v777 = vpop.f32.mrf.mxu0
      %v778 = vadd.f32 0.0, %v777
      %v779 = vpop.f32.mrf.mxu0
      %780 = vmatprep.mubr.f32.mxu0 %v570
      %781 = vmatmul.mubr.f32.gmra.mxu0 %v569
      %v782 = vpop.f32.mrf.mxu0
      %v783 = vadd.f32 0.0, %v782
      %v784 = vpop.f32.mrf.mxu0
      %785 = vmatprep.mubr.f32.mxu0 %v573
      %786 = vmatmul.mubr.f32.gmra.mxu0 %v572
      %v787 = vpop.f32.mrf.mxu0
      %v788 = vadd.f32 0.0, %v787
      %v789 = vpop.f32.mrf.mxu0
      %790 = vmatprep.mubr.f32.mxu0 %v576
      %791 = vmatmul.mubr.f32.gmra.mxu0 %v575
      %v792 = vpop.f32.mrf.mxu0
      %v793 = vadd.f32 0.0, %v792
      %v794 = vpop.f32.mrf.mxu0
      %795 = vmatprep.mubr.f32.mxu0 %v579
      %796 = vmatmul.mubr.f32.gmra.mxu0 %v578
      %v797 = vpop.f32.mrf.mxu0
      %v798 = vadd.f32 0.0, %v797
      %v799 = vpop.f32.mrf.mxu0
      %800 = vmatprep.mubr.f32.mxu0 %v582
      %801 = vmatmul.mubr.f32.gmra.mxu0 %v581
      %v802 = vpop.f32.mrf.mxu0
      %v803 = vadd.f32 0.0, %v802
      %v804 = vpop.f32.mrf.mxu0
      %805 = vmatprep.mubr.f32.mxu0 %v585
      %806 = vmatmul.mubr.f32.gmra.mxu0 %v584
      %v807 = vpop.f32.mrf.mxu0
      %v808 = vadd.f32 0.0, %v807
      %v809 = vpop.f32.mrf.mxu0
      %810 = vmatprep.mubr.f32.mxu0 %v588
      %811 = vmatmul.mubr.f32.gmra.mxu0 %v587
      %v812 = vpop.f32.mrf.mxu0
      %v813 = vadd.f32 0.0, %v812
      %v814 = vpop.f32.mrf.mxu0
      %815 = vmatprep.mubr.f32.mxu0 %v591
      %816 = vmatmul.mubr.f32.gmra.mxu0 %v590
      %v817 = vpop.f32.mrf.mxu0
      %v818 = vadd.f32 0.0, %v817
      %v819 = vpop.f32.mrf.mxu0
      %820 = vmatprep.mubr.f32.mxu0 %v594
      %821 = vmatmul.mubr.f32.gmra.mxu0 %v593
      %v822 = vpop.f32.mrf.mxu0
      %v823 = vadd.f32 0.0, %v822
      %v824 = vpop.f32.mrf.mxu0
      %825 = vmatprep.mubr.f32.mxu0 %v597
      %826 = vmatmul.mubr.f32.gmra.mxu0 %v596
      %v827 = vpop.f32.mrf.mxu0
      %v828 = vadd.f32 0.0, %v827
      %v829 = vpop.f32.mrf.mxu0
      %830 = vmatprep.mubr.f32.mxu0 %v600
      %831 = vmatmul.mubr.f32.gmra.mxu0 %v599
      %v832 = vpop.f32.mrf.mxu0
      %v833 = vadd.f32 0.0, %v832
      %v834 = vpop.f32.mrf.mxu0
      %835 = vmatprep.mubr.f32.mxu0 %v603
      %836 = vmatmul.mubr.f32.gmra.mxu0 %v602
      %v837 = vpop.f32.mrf.mxu0
      %v838 = vadd.f32 0.0, %v837
      %v839 = vpop.f32.mrf.mxu0
      %840 = vmatprep.mubr.f32.mxu0 %v654
      %841 = vmatmul.mubr.f32.gmra.mxu0 %v653
      %v842 = vpop.f32.mrf.mxu0
      %v843 = vadd.f32 0.0, %v842
      %v844 = vpop.f32.mrf.mxu0
      %845 = vmatprep.mubr.f32.mxu0 %v657
      %846 = vmatmul.mubr.f32.gmra.mxu0 %v656
      %v847 = vpop.f32.mrf.mxu0
      %v848 = vadd.f32 0.0, %v847
      %v849 = vpop.f32.mrf.mxu0
      %850 = vmatprep.mubr.f32.mxu0 %v660
      %851 = vmatmul.mubr.f32.gmra.mxu0 %v659
      %v852 = vpop.f32.mrf.mxu0
      %v853 = vadd.f32 0.0, %v852
      %v854 = vpop.f32.mrf.mxu0
      %855 = vdwg.mxu0
      %856 = vmatprep.subr.mxu0 0.0
      %857 = vmatpush1.msra.mxu0 %v710
      %858 = vmatprep.subr.mxu0 0.0
      %859 = vmatpush1.msra.mxu0 %v709
      %860 = vmatprep.subr.mxu0 0.0
      %861 = vmatpush1.msra.mxu0 %v708
      %862 = vmatprep.subr.mxu0 0.0
      %863 = vmatpush1.msra.mxu0 %v707
      %864 = vmatprep.subr.mxu0 0.0
      %865 = vmatpush1.msra.mxu0 %v706
      %866 = vmatprep.subr.mxu0 0.0
      %867 = vmatpush1.msra.mxu0 %v705
      %868 = vmatprep.subr.mxu0 0.0
      %869 = vmatpush1.msra.mxu0 %v704
      %870 = vmatprep.subr.mxu0 0.0
      %871 = vmatpush1.msra.mxu0 %v703
      %872 = vmatprep.subr.mxu0 0.0
      %873 = vmatpush1.msra.mxu0 %v702
      %874 = vmatprep.subr.mxu0 0.0
      %875 = vmatpush1.msra.mxu0 %v701
      %876 = vmatprep.subr.mxu0 0.0
      %877 = vmatpush1.msra.mxu0 %v700
      %878 = vmatprep.subr.mxu0 0.0
      %879 = vmatpush1.msra.mxu0 %v699
      %880 = vmatprep.subr.mxu0 0.0
      %881 = vmatpush1.msra.mxu0 %v698
      %882 = vmatprep.subr.mxu0 0.0
      %883 = vmatpush1.msra.mxu0 %v697
      %884 = vmatprep.subr.mxu0 0.0
      %885 = vmatpush1.msra.mxu0 %v696
      %886 = vmatprep.subr.mxu0 0.0
      %887 = vmatpush1.msra.mxu0 %v695
      %888 = vmatprep.subr.mxu0 0.0
      %889 = vmatpush2.msra.mxu0 0.0
      %890 = vmatprep.subr.mxu0 0.0
      %891 = vmatpush2.msra.mxu0 0.0
      %892 = vmatprep.subr.mxu0 0.0
      %893 = vmatpush2.msra.mxu0 0.0
      %894 = vmatprep.subr.mxu0 0.0
      %895 = vmatpush2.msra.mxu0 0.0
      %896 = vmatprep.subr.mxu0 0.0
      %897 = vmatpush2.msra.mxu0 0.0
      %898 = vmatprep.subr.mxu0 0.0
      %899 = vmatpush2.msra.mxu0 0.0
      %900 = vmatprep.subr.mxu0 0.0
      %901 = vmatpush2.msra.mxu0 0.0
      %902 = vmatprep.subr.mxu0 0.0
      %903 = vmatpush2.msra.mxu0 0.0
      %904 = vmatprep.subr.mxu0 0.0
      %905 = vmatpush2.msra.mxu0 0.0
      %906 = vmatprep.subr.mxu0 0.0
      %907 = vmatpush2.msra.mxu0 0.0
      %908 = vmatprep.subr.mxu0 0.0
      %909 = vmatpush2.msra.mxu0 0.0
      %910 = vmatprep.subr.mxu0 0.0
      %911 = vmatpush2.msra.mxu0 0.0
      %912 = vmatprep.subr.mxu0 0.0
      %913 = vmatpush2.msra.mxu0 0.0
      %914 = vmatprep.subr.mxu0 0.0
      %915 = vmatpush2.msra.mxu0 0.0
      %916 = vmatprep.subr.mxu0 0.0
      %917 = vmatpush2.msra.mxu0 0.0
      %918 = vmatprep.subr.mxu0 0.0
      %919 = vmatpush2.msra.mxu0 0.0
      %920 = vmatprep.mubr.f32.mxu0 0.0
      %921 = vmatmul.mubr.f32.gmra.mxu0 %v568
      %v922 = vpop.f32.mrf.mxu0
      %v923 = vadd.f32 %v778, %v922
      %v924 = vpop.f32.mrf.mxu0
      %925 = vmatprep.mubr.f32.mxu0 0.0
      %926 = vmatmul.mubr.f32.gmra.mxu0 %v571
      %v927 = vpop.f32.mrf.mxu0
      %v928 = vadd.f32 %v783, %v927
      %v929 = vpop.f32.mrf.mxu0
      %930 = vmatprep.mubr.f32.mxu0 0.0
      %931 = vmatmul.mubr.f32.gmra.mxu0 %v574
      %v932 = vpop.f32.mrf.mxu0
      %v933 = vadd.f32 %v788, %v932
      %v934 = vpop.f32.mrf.mxu0
      %935 = vmatprep.mubr.f32.mxu0 0.0
      %936 = vmatmul.mubr.f32.gmra.mxu0 %v577
      %v937 = vpop.f32.mrf.mxu0
      %v938 = vadd.f32 %v793, %v937
      %v939 = vpop.f32.mrf.mxu0
      %940 = vmatprep.mubr.f32.mxu0 0.0
      %941 = vmatmul.mubr.f32.gmra.mxu0 %v580
      %v942 = vpop.f32.mrf.mxu0
      %v943 = vadd.f32 %v798, %v942
      %v944 = vpop.f32.mrf.mxu0
      %945 = vmatprep.mubr.f32.mxu0 0.0
      %946 = vmatmul.mubr.f32.gmra.mxu0 %v583
      %v947 = vpop.f32.mrf.mxu0
      %v948 = vadd.f32 %v803, %v947
      %v949 = vpop.f32.mrf.mxu0
      %950 = vmatprep.mubr.f32.mxu0 0.0
      %951 = vmatmul.mubr.f32.gmra.mxu0 %v586
      %v952 = vpop.f32.mrf.mxu0
      %v953 = vadd.f32 %v808, %v952
      %v954 = vpop.f32.mrf.mxu0
      %955 = vmatprep.mubr.f32.mxu0 0.0
      %956 = vmatmul.mubr.f32.gmra.mxu0 %v589
      %v957 = vpop.f32.mrf.mxu0
      %v958 = vadd.f32 %v813, %v957
      %v959 = vpop.f32.mrf.mxu0
      %960 = vmatprep.mubr.f32.mxu0 0.0
      %961 = vmatmul.mubr.f32.gmra.mxu0 %v592
      %v962 = vpop.f32.mrf.mxu0
      %v963 = vadd.f32 %v818, %v962
      %v964 = vpop.f32.mrf.mxu0
      %965 = vmatprep.mubr.f32.mxu0 0.0
      %966 = vmatmul.mubr.f32.gmra.mxu0 %v595
      %v967 = vpop.f32.mrf.mxu0
      %v968 = vadd.f32 %v823, %v967
      %v969 = vpop.f32.mrf.mxu0
      %970 = vmatprep.mubr.f32.mxu0 0.0
      %971 = vmatmul.mubr.f32.gmra.mxu0 %v598
      %v972 = vpop.f32.mrf.mxu0
      %v973 = vadd.f32 %v828, %v972
      %v974 = vpop.f32.mrf.mxu0
      %975 = vmatprep.mubr.f32.mxu0 0.0
      %976 = vmatmul.mubr.f32.gmra.mxu0 %v601
      %v977 = vpop.f32.mrf.mxu0
      %v978 = vadd.f32 %v833, %v977
      %v979 = vpop.f32.mrf.mxu0
      %980 = vmatprep.mubr.f32.mxu0 0.0
      %981 = vmatmul.mubr.f32.gmra.mxu0 %v604
      %v982 = vpop.f32.mrf.mxu0
      %v983 = vadd.f32 %v838, %v982
      %v984 = vpop.f32.mrf.mxu0
      %985 = vmatprep.mubr.f32.mxu0 0.0
      %986 = vmatmul.mubr.f32.gmra.mxu0 %v655
      %v987 = vpop.f32.mrf.mxu0
      %v988 = vadd.f32 %v843, %v987
      %v989 = vpop.f32.mrf.mxu0
      %990 = vmatprep.mubr.f32.mxu0 0.0
      %991 = vmatmul.mubr.f32.gmra.mxu0 %v658
      %v992 = vpop.f32.mrf.mxu0
      %v993 = vadd.f32 %v848, %v992
      %v994 = vpop.f32.mrf.mxu0
      %995 = vmatprep.mubr.f32.mxu0 0.0
      %996 = vmatmul.mubr.f32.gmra.mxu0 %v661
      %v997 = vpop.f32.mrf.mxu0
      %v998 = vadd.f32 %v853, %v997
      %v999 = vpop.f32.mrf.mxu0
      %1000 = vdwg.mxu0
      %1001 = vmatprep.subr.mxu0 0.0
      %1002 = vmatpush1.msra.mxu0 %v620
      %1003 = vmatprep.subr.mxu0 0.0
      %1004 = vmatpush1.msra.mxu0 %v619
      %1005 = vmatprep.subr.mxu0 0.0
      %1006 = vmatpush1.msra.mxu0 %v618
      %1007 = vmatprep.subr.mxu0 0.0
      %1008 = vmatpush1.msra.mxu0 %v617
      %1009 = vmatprep.subr.mxu0 0.0
      %1010 = vmatpush1.msra.mxu0 %v616
      %1011 = vmatprep.subr.mxu0 0.0
      %1012 = vmatpush1.msra.mxu0 %v615
      %1013 = vmatprep.subr.mxu0 0.0
      %1014 = vmatpush1.msra.mxu0 %v614
      %1015 = vmatprep.subr.mxu0 0.0
      %1016 = vmatpush1.msra.mxu0 %v613
      %1017 = vmatprep.subr.mxu0 0.0
      %1018 = vmatpush1.msra.mxu0 %v612
      %1019 = vmatprep.subr.mxu0 0.0
      %1020 = vmatpush1.msra.mxu0 %v611
      %1021 = vmatprep.subr.mxu0 0.0
      %1022 = vmatpush1.msra.mxu0 %v610
      %1023 = vmatprep.subr.mxu0 0.0
      %1024 = vmatpush1.msra.mxu0 %v609
      %1025 = vmatprep.subr.mxu0 0.0
      %1026 = vmatpush1.msra.mxu0 %v608
      %1027 = vmatprep.subr.mxu0 0.0
      %1028 = vmatpush1.msra.mxu0 %v607
      %1029 = vmatprep.subr.mxu0 0.0
      %1030 = vmatpush1.msra.mxu0 %v606
      %1031 = vmatprep.subr.mxu0 0.0
      %1032 = vmatpush1.msra.mxu0 %v605
      %1033 = vmatprep.subr.mxu0 0.0
      %1034 = vmatpush2.msra.mxu0 %v636
      %1035 = vmatprep.subr.mxu0 0.0
      %1036 = vmatpush2.msra.mxu0 %v635
      %1037 = vmatprep.subr.mxu0 0.0
      %1038 = vmatpush2.msra.mxu0 %v634
      %1039 = vmatprep.subr.mxu0 0.0
      %1040 = vmatpush2.msra.mxu0 %v633
      %1041 = vmatprep.subr.mxu0 0.0
      %1042 = vmatpush2.msra.mxu0 %v632
      %1043 = vmatprep.subr.mxu0 0.0
      %1044 = vmatpush2.msra.mxu0 %v631
      %1045 = vmatprep.subr.mxu0 0.0
      %1046 = vmatpush2.msra.mxu0 %v630
      %1047 = vmatprep.subr.mxu0 0.0
      %1048 = vmatpush2.msra.mxu0 %v629
      %1049 = vmatprep.subr.mxu0 0.0
      %1050 = vmatpush2.msra.mxu0 %v628
      %1051 = vmatprep.subr.mxu0 0.0
      %1052 = vmatpush2.msra.mxu0 %v627
      %1053 = vmatprep.subr.mxu0 0.0
      %1054 = vmatpush2.msra.mxu0 %v626
      %1055 = vmatprep.subr.mxu0 0.0
      %1056 = vmatpush2.msra.mxu0 %v625
      %1057 = vmatprep.subr.mxu0 0.0
      %1058 = vmatpush2.msra.mxu0 %v624
      %1059 = vmatprep.subr.mxu0 0.0
      %1060 = vmatpush2.msra.mxu0 %v623
      %1061 = vmatprep.subr.mxu0 0.0
      %1062 = vmatpush2.msra.mxu0 %v622
      %1063 = vmatprep.subr.mxu0 0.0
      %1064 = vmatpush2.msra.mxu0 %v621
      %1065 = vmatprep.mubr.f32.mxu0 %v558
      %1066 = vmatmul.mubr.f32.gmra.mxu0 %v557
      %v1067 = vpop.f32.mrf.mxu0
      %v1068 = vadd.f32 %v923, %v1067
      %v1069 = vpop.f32.mrf.mxu0
      %1070 = vmatprep.mubr.f32.mxu0 %v561
      %1071 = vmatmul.mubr.f32.gmra.mxu0 %v560
      %v1072 = vpop.f32.mrf.mxu0
      %v1073 = vadd.f32 %v928, %v1072
      %v1074 = vpop.f32.mrf.mxu0
      %1075 = vmatprep.mubr.f32.mxu0 %v564
      %1076 = vmatmul.mubr.f32.gmra.mxu0 %v563
      %v1077 = vpop.f32.mrf.mxu0
      %v1078 = vadd.f32 %v933, %v1077
      %v1079 = vpop.f32.mrf.mxu0
      %1080 = vmatprep.mubr.f32.mxu0 %v567
      %1081 = vmatmul.mubr.f32.gmra.mxu0 %v566
      %v1082 = vpop.f32.mrf.mxu0
      %v1083 = vadd.f32 %v938, %v1082
      %v1084 = vpop.f32.mrf.mxu0
      %1085 = vmatprep.mubr.f32.mxu0 %v570
      %1086 = vmatmul.mubr.f32.gmra.mxu0 %v569
      %v1087 = vpop.f32.mrf.mxu0
      %v1088 = vadd.f32 %v943, %v1087
      %v1089 = vpop.f32.mrf.mxu0
      %1090 = vmatprep.mubr.f32.mxu0 %v573
      %1091 = vmatmul.mubr.f32.gmra.mxu0 %v572
      %v1092 = vpop.f32.mrf.mxu0
      %v1093 = vadd.f32 %v948, %v1092
      %v1094 = vpop.f32.mrf.mxu0
      %1095 = vmatprep.mubr.f32.mxu0 %v576
      %1096 = vmatmul.mubr.f32.gmra.mxu0 %v575
      %v1097 = vpop.f32.mrf.mxu0
      %v1098 = vadd.f32 %v953, %v1097
      %v1099 = vpop.f32.mrf.mxu0
      %1100 = vmatprep.mubr.f32.mxu0 %v579
      %1101 = vmatmul.mubr.f32.gmra.mxu0 %v578
      %v1102 = vpop.f32.mrf.mxu0
      %v1103 = vadd.f32 %v958, %v1102
      %v1104 = vpop.f32.mrf.mxu0
      %1105 = vmatprep.mubr.f32.mxu0 %v582
      %1106 = vmatmul.mubr.f32.gmra.mxu0 %v581
      %v1107 = vpop.f32.mrf.mxu0
      %v1108 = vadd.f32 %v963, %v1107
      %v1109 = vpop.f32.mrf.mxu0
      %1110 = vmatprep.mubr.f32.mxu0 %v585
      %1111 = vmatmul.mubr.f32.gmra.mxu0 %v584
      %v1112 = vpop.f32.mrf.mxu0
      %v1113 = vadd.f32 %v968, %v1112
      %v1114 = vpop.f32.mrf.mxu0
      %1115 = vmatprep.mubr.f32.mxu0 %v588
      %1116 = vmatmul.mubr.f32.gmra.mxu0 %v587
      %v1117 = vpop.f32.mrf.mxu0
      %v1118 = vadd.f32 %v973, %v1117
      %v1119 = vpop.f32.mrf.mxu0
      %1120 = vmatprep.mubr.f32.mxu0 %v591
      %1121 = vmatmul.mubr.f32.gmra.mxu0 %v590
      %v1122 = vpop.f32.mrf.mxu0
      %v1123 = vadd.f32 %v978, %v1122
      %v1124 = vpop.f32.mrf.mxu0
      %1125 = vmatprep.mubr.f32.mxu0 %v594
      %1126 = vmatmul.mubr.f32.gmra.mxu0 %v593
      %v1127 = vpop.f32.mrf.mxu0
      %v1128 = vadd.f32 %v983, %v1127
      %v1129 = vpop.f32.mrf.mxu0
      %1130 = vmatprep.mubr.f32.mxu0 %v597
      %1131 = vmatmul.mubr.f32.gmra.mxu0 %v596
      %v1132 = vpop.f32.mrf.mxu0
      %v1133 = vadd.f32 %v988, %v1132
      %v1134 = vpop.f32.mrf.mxu0
      %1135 = vmatprep.mubr.f32.mxu0 %v600
      %1136 = vmatmul.mubr.f32.gmra.mxu0 %v599
      %v1137 = vpop.f32.mrf.mxu0
      %v1138 = vadd.f32 %v993, %v1137
      %v1139 = vpop.f32.mrf.mxu0
      %1140 = vmatprep.mubr.f32.mxu0 %v603
      %1141 = vmatmul.mubr.f32.gmra.mxu0 %v602
      %v1142 = vpop.f32.mrf.mxu0
      %v1143 = vadd.f32 %v998, %v1142
      %v1144 = vpop.f32.mrf.mxu0
      %1145 = vdwg.mxu0
      %1146 = vmatprep.subr.mxu0 0.0
      %1147 = vmatpush1.msra.mxu0 %v652
      %1148 = vmatprep.subr.mxu0 0.0
      %1149 = vmatpush1.msra.mxu0 %v651
      %1150 = vmatprep.subr.mxu0 0.0
      %1151 = vmatpush1.msra.mxu0 %v650
      %1152 = vmatprep.subr.mxu0 0.0
      %1153 = vmatpush1.msra.mxu0 %v649
      %1154 = vmatprep.subr.mxu0 0.0
      %1155 = vmatpush1.msra.mxu0 %v648
      %1156 = vmatprep.subr.mxu0 0.0
      %1157 = vmatpush1.msra.mxu0 %v647
      %1158 = vmatprep.subr.mxu0 0.0
      %1159 = vmatpush1.msra.mxu0 %v646
      %1160 = vmatprep.subr.mxu0 0.0
      %1161 = vmatpush1.msra.mxu0 %v645
      %1162 = vmatprep.subr.mxu0 0.0
      %1163 = vmatpush1.msra.mxu0 %v644
      %1164 = vmatprep.subr.mxu0 0.0
      %1165 = vmatpush1.msra.mxu0 %v643
      %1166 = vmatprep.subr.mxu0 0.0
      %1167 = vmatpush1.msra.mxu0 %v642
      %1168 = vmatprep.subr.mxu0 0.0
      %1169 = vmatpush1.msra.mxu0 %v641
      %1170 = vmatprep.subr.mxu0 0.0
      %1171 = vmatpush1.msra.mxu0 %v640
      %1172 = vmatprep.subr.mxu0 0.0
      %1173 = vmatpush1.msra.mxu0 %v639
      %1174 = vmatprep.subr.mxu0 0.0
      %1175 = vmatpush1.msra.mxu0 %v638
      %1176 = vmatprep.subr.mxu0 0.0
      %1177 = vmatpush1.msra.mxu0 %v637
      %1178 = vmatprep.subr.mxu0 0.0
      %1179 = vmatpush2.msra.mxu0 0.0
      %1180 = vmatprep.subr.mxu0 0.0
      %1181 = vmatpush2.msra.mxu0 0.0
      %1182 = vmatprep.subr.mxu0 0.0
      %1183 = vmatpush2.msra.mxu0 0.0
      %1184 = vmatprep.subr.mxu0 0.0
      %1185 = vmatpush2.msra.mxu0 0.0
      %1186 = vmatprep.subr.mxu0 0.0
      %1187 = vmatpush2.msra.mxu0 0.0
      %1188 = vmatprep.subr.mxu0 0.0
      %1189 = vmatpush2.msra.mxu0 0.0
      %1190 = vmatprep.subr.mxu0 0.0
      %1191 = vmatpush2.msra.mxu0 0.0
      %1192 = vmatprep.subr.mxu0 0.0
      %1193 = vmatpush2.msra.mxu0 0.0
      %1194 = vmatprep.subr.mxu0 0.0
      %1195 = vmatpush2.msra.mxu0 0.0
      %1196 = vmatprep.subr.mxu0 0.0
      %1197 = vmatpush2.msra.mxu0 0.0
      %1198 = vmatprep.subr.mxu0 0.0
      %1199 = vmatpush2.msra.mxu0 0.0
      %1200 = vmatprep.subr.mxu0 0.0
      %1201 = vmatpush2.msra.mxu0 0.0
      %1202 = vmatprep.subr.mxu0 0.0
      %1203 = vmatpush2.msra.mxu0 0.0
      %1204 = vmatprep.subr.mxu0 0.0
      %1205 = vmatpush2.msra.mxu0 0.0
      %1206 = vmatprep.subr.mxu0 0.0
      %1207 = vmatpush2.msra.mxu0 0.0
      %1208 = vmatprep.subr.mxu0 0.0
      %1209 = vmatpush2.msra.mxu0 0.0
      %1210 = vmatprep.mubr.f32.mxu0 0.0
      %1211 = vmatmul.mubr.f32.gmra.mxu0 %v559
      %v1212 = vpop.f32.mrf.mxu0
      %v1213 = vadd.f32 %v1068, %v1212
      %v1214 = vpop.f32.mrf.mxu0
      %1215 = vmatprep.mubr.f32.mxu0 0.0
      %1216 = vmatmul.mubr.f32.gmra.mxu0 %v562
      %v1217 = vpop.f32.mrf.mxu0
      %v1218 = vadd.f32 %v1073, %v1217
      %v1219 = vpop.f32.mrf.mxu0
      %1220 = vmatprep.mubr.f32.mxu0 0.0
      %1221 = vmatmul.mubr.f32.gmra.mxu0 %v565
      %v1222 = vpop.f32.mrf.mxu0
      %v1223 = vadd.f32 %v1078, %v1222
      %v1224 = vpop.f32.mrf.mxu0
      %1225 = vmatprep.mubr.f32.mxu0 0.0
      %1226 = vmatmul.mubr.f32.gmra.mxu0 %v568
      %v1227 = vpop.f32.mrf.mxu0
      %v1228 = vadd.f32 %v1083, %v1227
      %v1229 = vpop.f32.mrf.mxu0
      %1230 = vmatprep.mubr.f32.mxu0 0.0
      %1231 = vmatmul.mubr.f32.gmra.mxu0 %v571
      %v1232 = vpop.f32.mrf.mxu0
      %v1233 = vadd.f32 %v1088, %v1232
      %v1234 = vpop.f32.mrf.mxu0
      %1235 = vmatprep.mubr.f32.mxu0 0.0
      %1236 = vmatmul.mubr.f32.gmra.mxu0 %v574
      %v1237 = vpop.f32.mrf.mxu0
      %v1238 = vadd.f32 %v1093, %v1237
      %v1239 = vpop.f32.mrf.mxu0
      %1240 = vmatprep.mubr.f32.mxu0 0.0
      %1241 = vmatmul.mubr.f32.gmra.mxu0 %v577
      %v1242 = vpop.f32.mrf.mxu0
      %v1243 = vadd.f32 %v1098, %v1242
      %v1244 = vpop.f32.mrf.mxu0
      %1245 = vmatprep.mubr.f32.mxu0 0.0
      %1246 = vmatmul.mubr.f32.gmra.mxu0 %v580
      %v1247 = vpop.f32.mrf.mxu0
      %v1248 = vadd.f32 %v1103, %v1247
      %v1249 = vpop.f32.mrf.mxu0
      %1250 = vmatprep.mubr.f32.mxu0 0.0
      %1251 = vmatmul.mubr.f32.gmra.mxu0 %v583
      %v1252 = vpop.f32.mrf.mxu0
      %v1253 = vadd.f32 %v1108, %v1252
      %v1254 = vpop.f32.mrf.mxu0
      %1255 = vmatprep.mubr.f32.mxu0 0.0
      %1256 = vmatmul.mubr.f32.gmra.mxu0 %v586
      %v1257 = vpop.f32.mrf.mxu0
      %v1258 = vadd.f32 %v1113, %v1257
      %v1259 = vpop.f32.mrf.mxu0
      %1260 = vmatprep.mubr.f32.mxu0 0.0
      %1261 = vmatmul.mubr.f32.gmra.mxu0 %v589
      %v1262 = vpop.f32.mrf.mxu0
      %v1263 = vadd.f32 %v1118, %v1262
      %v1264 = vpop.f32.mrf.mxu0
      %1265 = vmatprep.mubr.f32.mxu0 0.0
      %1266 = vmatmul.mubr.f32.gmra.mxu0 %v592
      %v1267 = vpop.f32.mrf.mxu0
      %v1268 = vadd.f32 %v1123, %v1267
      %v1269 = vpop.f32.mrf.mxu0
      %1270 = vmatprep.mubr.f32.mxu0 0.0
      %1271 = vmatmul.mubr.f32.gmra.mxu0 %v595
      %v1272 = vpop.f32.mrf.mxu0
      %v1273 = vadd.f32 %v1128, %v1272
      %v1274 = vpop.f32.mrf.mxu0
      %1275 = vmatprep.mubr.f32.mxu0 0.0
      %1276 = vmatmul.mubr.f32.gmra.mxu0 %v598
      %v1277 = vpop.f32.mrf.mxu0
      %v1278 = vadd.f32 %v1133, %v1277
      %v1279 = vpop.f32.mrf.mxu0
      %1280 = vmatprep.mubr.f32.mxu0 0.0
      %1281 = vmatmul.mubr.f32.gmra.mxu0 %v601
      %v1282 = vpop.f32.mrf.mxu0
      %v1283 = vadd.f32 %v1138, %v1282
      %v1284 = vpop.f32.mrf.mxu0
      %1285 = vmatprep.mubr.f32.mxu0 0.0
      %1286 = vmatmul.mubr.f32.gmra.mxu0 %v604
      %v1287 = vpop.f32.mrf.mxu0
      %v1288 = vadd.f32 %v1143, %v1287
      %v1289 = vpop.f32.mrf.mxu0
      %1290 = vdwg.mxu0
      %v1291 = vld [vmem:[#allocation2 + $0x90] sm:$0xff]
      %v1292 = vld [vmem:[#allocation2 + $0x98] sm:$0xff]
      %v1293 = vld [vmem:[#allocation2 + $0xa0] sm:$0xff]
      %v1294 = vld [vmem:[#allocation2 + $0xa8] sm:$0xff]
      %v1295 = vld [vmem:[#allocation2 + $0xb0] sm:$0xff]
      %v1296 = vld [vmem:[#allocation2 + $0xb8] sm:$0xff]
      %v1297 = vld [vmem:[#allocation2 + $0xc0] sm:$0xff]
      %v1298 = vld [vmem:[#allocation2 + $0xc8] sm:$0xff]
      %v1299 = vld [vmem:[#allocation2 + $0xd0] sm:$0xff]
      %v1300 = vld [vmem:[#allocation2 + $0xd8] sm:$0xff]
      %v1301 = vld [vmem:[#allocation2 + $0xe0] sm:$0xff]
      %v1302 = vld [vmem:[#allocation2 + $0xe8] sm:$0xff]
      %v1303 = vld [vmem:[#allocation2 + $0xf0] sm:$0xff]
      %v1304 = vld [vmem:[#allocation2 + $0xf8] sm:$0xff]
      %v1305 = vld [vmem:[#allocation2 + $0x100] sm:$0xff]
      %v1306 = vld [vmem:[#allocation2 + $0x108] sm:$0xff]
      %v1307 = vld [vmem:[#allocation2 + $0x110] sm:$0xff]
      %v1308 = vld [vmem:[#allocation2 + $0x118] sm:$0xff]
      %v1309 = vld [vmem:[#allocation2 + $0x120] sm:$0xff]
      %v1310 = vld [vmem:[#allocation2 + $0x128] sm:$0xff]
      %v1311 = vld [vmem:[#allocation2 + $0x130] sm:$0xff]
      %v1312 = vld [vmem:[#allocation2 + $0x138] sm:$0xff]
      %v1313 = vld [vmem:[#allocation2 + $0x140] sm:$0xff]
      %v1314 = vld [vmem:[#allocation2 + $0x148] sm:$0xff]
      %v1315 = vld [vmem:[#allocation2 + $0x150] sm:$0xff]
      %v1316 = vld [vmem:[#allocation2 + $0x158] sm:$0xff]
      %v1317 = vld [vmem:[#allocation2 + $0x160] sm:$0xff]
      %v1318 = vld [vmem:[#allocation2 + $0x168] sm:$0xff]
      %v1319 = vld [vmem:[#allocation2 + $0x170] sm:$0xff]
      %v1320 = vld [vmem:[#allocation2 + $0x178] sm:$0xff]
      %v1321 = vld [vmem:[#allocation2 + $0x180] sm:$0xff]
      %v1322 = vld [vmem:[#allocation2 + $0x188] sm:$0xff]
      %v1323 = vld [vmem:[#allocation2 + $0x190] sm:$0xff]
      %v1324 = vld [vmem:[#allocation2 + $0x198] sm:$0xff]
      %v1325 = vld [vmem:[#allocation2 + $0x1a0] sm:$0xff]
      %v1326 = vld [vmem:[#allocation2 + $0x1a8] sm:$0xff]
      %v1327 = vld [vmem:[#allocation2 + $0x1b0] sm:$0xff]
      %v1328 = vld [vmem:[#allocation2 + $0x1b8] sm:$0xff]
      %v1329 = vld [vmem:[#allocation2 + $0x1c0] sm:$0xff]
      %v1330 = vld [vmem:[#allocation2 + $0x1c8] sm:$0xff]
      %v1331 = vld [vmem:[#allocation2 + $0x1d0] sm:$0xff]
      %v1332 = vld [vmem:[#allocation2 + $0x1d8] sm:$0xff]
      %v1333 = vld [vmem:[#allocation2 + $0x1e0] sm:$0xff]
      %v1334 = vld [vmem:[#allocation2 + $0x1e8] sm:$0xff]
      %v1335 = vld [vmem:[#allocation2 + $0x1f0] sm:$0xff]
      %v1336 = vld [vmem:[#allocation2 + $0x1f8] sm:$0xff]
      %v1337 = vld [vmem:[#allocation2 + $0x200] sm:$0xff]
      %v1338 = vld [vmem:[#allocation2 + $0x208] sm:$0xff]
      %s1339 = scalar_lea.vmem %s1, 768
      %v1340 = vld [vmem:[%s1339] sm:$0xff]
      %v1341 = vld [vmem:[%s1339 + $0x8] sm:$0xff]
      %v1342 = vld [vmem:[%s1339 + $0x10] sm:$0xff]
      %v1343 = vld [vmem:[%s1339 + $0x18] sm:$0xff]
      %v1344 = vld [vmem:[%s1339 + $0x20] sm:$0xff]
      %v1345 = vld [vmem:[%s1339 + $0x28] sm:$0xff]
      %v1346 = vld [vmem:[%s1339 + $0x30] sm:$0xff]
      %v1347 = vld [vmem:[%s1339 + $0x38] sm:$0xff]
      %v1348 = vld [vmem:[%s1339 + $0x40] sm:$0xff]
      %v1349 = vld [vmem:[%s1339 + $0x48] sm:$0xff]
      %v1350 = vld [vmem:[%s1339 + $0x50] sm:$0xff]
      %v1351 = vld [vmem:[%s1339 + $0x58] sm:$0xff]
      %v1352 = vld [vmem:[%s1339 + $0x60] sm:$0xff]
      %v1353 = vld [vmem:[%s1339 + $0x68] sm:$0xff]
      %v1354 = vld [vmem:[%s1339 + $0x70] sm:$0xff]
      %v1355 = vld [vmem:[%s1339 + $0x78] sm:$0xff]
      %v1356 = vld [vmem:[%s1339 + $0x80] sm:$0xff]
      %v1357 = vld [vmem:[%s1339 + $0x88] sm:$0xff]
      %v1358 = vld [vmem:[%s1339 + $0x90] sm:$0xff]
      %v1359 = vld [vmem:[%s1339 + $0x98] sm:$0xff]
      %v1360 = vld [vmem:[%s1339 + $0xa0] sm:$0xff]
      %v1361 = vld [vmem:[%s1339 + $0xa8] sm:$0xff]
      %v1362 = vld [vmem:[%s1339 + $0xb0] sm:$0xff]
      %v1363 = vld [vmem:[%s1339 + $0xb8] sm:$0xff]
      %v1364 = vld [vmem:[%s1339 + $0xc0] sm:$0xff]
      %v1365 = vld [vmem:[%s1339 + $0xc8] sm:$0xff]
      %v1366 = vld [vmem:[%s1339 + $0xd0] sm:$0xff]
      %v1367 = vld [vmem:[%s1339 + $0xd8] sm:$0xff]
      %v1368 = vld [vmem:[%s1339 + $0xe0] sm:$0xff]
      %v1369 = vld [vmem:[%s1339 + $0xe8] sm:$0xff]
      %v1370 = vld [vmem:[%s1339 + $0xf0] sm:$0xff]
      %v1371 = vld [vmem:[%s1339 + $0xf8] sm:$0xff]
      %v1372 = vld [vmem:[%s1339 + $0x100] sm:$0xff]
      %v1373 = vld [vmem:[%s1339 + $0x108] sm:$0xff]
      %v1374 = vld [vmem:[%s1339 + $0x110] sm:$0xff]
      %v1375 = vld [vmem:[%s1339 + $0x118] sm:$0xff]
      %v1376 = vld [vmem:[%s1339 + $0x120] sm:$0xff]
      %v1377 = vld [vmem:[%s1339 + $0x128] sm:$0xff]
      %v1378 = vld [vmem:[%s1339 + $0x130] sm:$0xff]
      %v1379 = vld [vmem:[%s1339 + $0x138] sm:$0xff]
      %v1380 = vld [vmem:[%s1339 + $0x140] sm:$0xff]
      %v1381 = vld [vmem:[%s1339 + $0x148] sm:$0xff]
      %v1382 = vld [vmem:[%s1339 + $0x150] sm:$0xff]
      %v1383 = vld [vmem:[%s1339 + $0x158] sm:$0xff]
      %v1384 = vld [vmem:[%s1339 + $0x160] sm:$0xff]
      %v1385 = vld [vmem:[%s1339 + $0x168] sm:$0xff]
      %v1386 = vld [vmem:[%s1339 + $0x170] sm:$0xff]
      %v1387 = vld [vmem:[%s1339 + $0x178] sm:$0xff]
      %1388 = vmatprep.subr.mxu0 0.0
      %1389 = vmatpush1.msra.mxu0 %v1355
      %1390 = vmatprep.subr.mxu0 0.0
      %1391 = vmatpush1.msra.mxu0 %v1354
      %1392 = vmatprep.subr.mxu0 0.0
      %1393 = vmatpush1.msra.mxu0 %v1353
      %1394 = vmatprep.subr.mxu0 0.0
      %1395 = vmatpush1.msra.mxu0 %v1352
      %1396 = vmatprep.subr.mxu0 0.0
      %1397 = vmatpush1.msra.mxu0 %v1351
      %1398 = vmatprep.subr.mxu0 0.0
      %1399 = vmatpush1.msra.mxu0 %v1350
      %1400 = vmatprep.subr.mxu0 0.0
      %1401 = vmatpush1.msra.mxu0 %v1349
      %1402 = vmatprep.subr.mxu0 0.0
      %1403 = vmatpush1.msra.mxu0 %v1348
      %1404 = vmatprep.subr.mxu0 0.0
      %1405 = vmatpush1.msra.mxu0 %v1347
      %1406 = vmatprep.subr.mxu0 0.0
      %1407 = vmatpush1.msra.mxu0 %v1346
      %1408 = vmatprep.subr.mxu0 0.0
      %1409 = vmatpush1.msra.mxu0 %v1345
      %1410 = vmatprep.subr.mxu0 0.0
      %1411 = vmatpush1.msra.mxu0 %v1344
      %1412 = vmatprep.subr.mxu0 0.0
      %1413 = vmatpush1.msra.mxu0 %v1343
      %1414 = vmatprep.subr.mxu0 0.0
      %1415 = vmatpush1.msra.mxu0 %v1342
      %1416 = vmatprep.subr.mxu0 0.0
      %1417 = vmatpush1.msra.mxu0 %v1341
      %1418 = vmatprep.subr.mxu0 0.0
      %1419 = vmatpush1.msra.mxu0 %v1340
      %1420 = vmatprep.subr.mxu0 0.0
      %1421 = vmatpush2.msra.mxu0 %v1371
      %1422 = vmatprep.subr.mxu0 0.0
      %1423 = vmatpush2.msra.mxu0 %v1370
      %1424 = vmatprep.subr.mxu0 0.0
      %1425 = vmatpush2.msra.mxu0 %v1369
      %1426 = vmatprep.subr.mxu0 0.0
      %1427 = vmatpush2.msra.mxu0 %v1368
      %1428 = vmatprep.subr.mxu0 0.0
      %1429 = vmatpush2.msra.mxu0 %v1367
      %1430 = vmatprep.subr.mxu0 0.0
      %1431 = vmatpush2.msra.mxu0 %v1366
      %1432 = vmatprep.subr.mxu0 0.0
      %1433 = vmatpush2.msra.mxu0 %v1365
      %1434 = vmatprep.subr.mxu0 0.0
      %1435 = vmatpush2.msra.mxu0 %v1364
      %1436 = vmatprep.subr.mxu0 0.0
      %1437 = vmatpush2.msra.mxu0 %v1363
      %1438 = vmatprep.subr.mxu0 0.0
      %1439 = vmatpush2.msra.mxu0 %v1362
      %1440 = vmatprep.subr.mxu0 0.0
      %1441 = vmatpush2.msra.mxu0 %v1361
      %1442 = vmatprep.subr.mxu0 0.0
      %1443 = vmatpush2.msra.mxu0 %v1360
      %1444 = vmatprep.subr.mxu0 0.0
      %1445 = vmatpush2.msra.mxu0 %v1359
      %1446 = vmatprep.subr.mxu0 0.0
      %1447 = vmatpush2.msra.mxu0 %v1358
      %1448 = vmatprep.subr.mxu0 0.0
      %1449 = vmatpush2.msra.mxu0 %v1357
      %1450 = vmatprep.subr.mxu0 0.0
      %1451 = vmatpush2.msra.mxu0 %v1356
      %1452 = vmatprep.mubr.f32.mxu0 %v1292
      %1453 = vmatmul.mubr.f32.gmra.mxu0 %v1291
      %v1454 = vpop.f32.mrf.mxu0
      %v1455 = vadd.f32 0.0, %v1454
      %v1456 = vpop.f32.mrf.mxu0
      %1457 = vmatprep.mubr.f32.mxu0 %v1295
      %1458 = vmatmul.mubr.f32.gmra.mxu0 %v1294
      %v1459 = vpop.f32.mrf.mxu0
      %v1460 = vadd.f32 0.0, %v1459
      %v1461 = vpop.f32.mrf.mxu0
      %1462 = vmatprep.mubr.f32.mxu0 %v1298
      %1463 = vmatmul.mubr.f32.gmra.mxu0 %v1297
      %v1464 = vpop.f32.mrf.mxu0
      %v1465 = vadd.f32 0.0, %v1464
      %v1466 = vpop.f32.mrf.mxu0
      %1467 = vmatprep.mubr.f32.mxu0 %v1301
      %1468 = vmatmul.mubr.f32.gmra.mxu0 %v1300
      %v1469 = vpop.f32.mrf.mxu0
      %v1470 = vadd.f32 0.0, %v1469
      %v1471 = vpop.f32.mrf.mxu0
      %1472 = vmatprep.mubr.f32.mxu0 %v1304
      %1473 = vmatmul.mubr.f32.gmra.mxu0 %v1303
      %v1474 = vpop.f32.mrf.mxu0
      %v1475 = vadd.f32 0.0, %v1474
      %v1476 = vpop.f32.mrf.mxu0
      %1477 = vmatprep.mubr.f32.mxu0 %v1307
      %1478 = vmatmul.mubr.f32.gmra.mxu0 %v1306
      %v1479 = vpop.f32.mrf.mxu0
      %v1480 = vadd.f32 0.0, %v1479
      %v1481 = vpop.f32.mrf.mxu0
      %1482 = vmatprep.mubr.f32.mxu0 %v1310
      %1483 = vmatmul.mubr.f32.gmra.mxu0 %v1309
      %v1484 = vpop.f32.mrf.mxu0
      %v1485 = vadd.f32 0.0, %v1484
      %v1486 = vpop.f32.mrf.mxu0
      %1487 = vmatprep.mubr.f32.mxu0 %v1313
      %1488 = vmatmul.mubr.f32.gmra.mxu0 %v1312
      %v1489 = vpop.f32.mrf.mxu0
      %v1490 = vadd.f32 0.0, %v1489
      %v1491 = vpop.f32.mrf.mxu0
      %1492 = vmatprep.mubr.f32.mxu0 %v1316
      %1493 = vmatmul.mubr.f32.gmra.mxu0 %v1315
      %v1494 = vpop.f32.mrf.mxu0
      %v1495 = vadd.f32 0.0, %v1494
      %v1496 = vpop.f32.mrf.mxu0
      %1497 = vmatprep.mubr.f32.mxu0 %v1319
      %1498 = vmatmul.mubr.f32.gmra.mxu0 %v1318
      %v1499 = vpop.f32.mrf.mxu0
      %v1500 = vadd.f32 0.0, %v1499
      %v1501 = vpop.f32.mrf.mxu0
      %1502 = vmatprep.mubr.f32.mxu0 %v1322
      %1503 = vmatmul.mubr.f32.gmra.mxu0 %v1321
      %v1504 = vpop.f32.mrf.mxu0
      %v1505 = vadd.f32 0.0, %v1504
      %v1506 = vpop.f32.mrf.mxu0
      %1507 = vmatprep.mubr.f32.mxu0 %v1325
      %1508 = vmatmul.mubr.f32.gmra.mxu0 %v1324
      %v1509 = vpop.f32.mrf.mxu0
      %v1510 = vadd.f32 0.0, %v1509
      %v1511 = vpop.f32.mrf.mxu0
      %1512 = vmatprep.mubr.f32.mxu0 %v1328
      %1513 = vmatmul.mubr.f32.gmra.mxu0 %v1327
      %v1514 = vpop.f32.mrf.mxu0
      %v1515 = vadd.f32 0.0, %v1514
      %v1516 = vpop.f32.mrf.mxu0
      %1517 = vmatprep.mubr.f32.mxu0 %v1331
      %1518 = vmatmul.mubr.f32.gmra.mxu0 %v1330
      %v1519 = vpop.f32.mrf.mxu0
      %v1520 = vadd.f32 0.0, %v1519
      %v1521 = vpop.f32.mrf.mxu0
      %1522 = vmatprep.mubr.f32.mxu0 %v1334
      %1523 = vmatmul.mubr.f32.gmra.mxu0 %v1333
      %v1524 = vpop.f32.mrf.mxu0
      %v1525 = vadd.f32 0.0, %v1524
      %v1526 = vpop.f32.mrf.mxu0
      %1527 = vmatprep.mubr.f32.mxu0 %v1337
      %1528 = vmatmul.mubr.f32.gmra.mxu0 %v1336
      %v1529 = vpop.f32.mrf.mxu0
      %v1530 = vadd.f32 0.0, %v1529
      %v1531 = vpop.f32.mrf.mxu0
      %1532 = vdwg.mxu0
      %1533 = vmatprep.subr.mxu0 0.0
      %1534 = vmatpush1.msra.mxu0 %v1387
      %1535 = vmatprep.subr.mxu0 0.0
      %1536 = vmatpush1.msra.mxu0 %v1386
      %1537 = vmatprep.subr.mxu0 0.0
      %1538 = vmatpush1.msra.mxu0 %v1385
      %1539 = vmatprep.subr.mxu0 0.0
      %1540 = vmatpush1.msra.mxu0 %v1384
      %1541 = vmatprep.subr.mxu0 0.0
      %1542 = vmatpush1.msra.mxu0 %v1383
      %1543 = vmatprep.subr.mxu0 0.0
      %1544 = vmatpush1.msra.mxu0 %v1382
      %1545 = vmatprep.subr.mxu0 0.0
      %1546 = vmatpush1.msra.mxu0 %v1381
      %1547 = vmatprep.subr.mxu0 0.0
      %1548 = vmatpush1.msra.mxu0 %v1380
      %1549 = vmatprep.subr.mxu0 0.0
      %1550 = vmatpush1.msra.mxu0 %v1379
      %1551 = vmatprep.subr.mxu0 0.0
      %1552 = vmatpush1.msra.mxu0 %v1378
      %1553 = vmatprep.subr.mxu0 0.0
      %1554 = vmatpush1.msra.mxu0 %v1377
      %1555 = vmatprep.subr.mxu0 0.0
      %1556 = vmatpush1.msra.mxu0 %v1376
      %1557 = vmatprep.subr.mxu0 0.0
      %1558 = vmatpush1.msra.mxu0 %v1375
      %1559 = vmatprep.subr.mxu0 0.0
      %1560 = vmatpush1.msra.mxu0 %v1374
      %1561 = vmatprep.subr.mxu0 0.0
      %1562 = vmatpush1.msra.mxu0 %v1373
      %1563 = vmatprep.subr.mxu0 0.0
      %1564 = vmatpush1.msra.mxu0 %v1372
      %1565 = vmatprep.subr.mxu0 0.0
      %1566 = vmatpush2.msra.mxu0 0.0
      %1567 = vmatprep.subr.mxu0 0.0
      %1568 = vmatpush2.msra.mxu0 0.0
      %1569 = vmatprep.subr.mxu0 0.0
      %1570 = vmatpush2.msra.mxu0 0.0
      %1571 = vmatprep.subr.mxu0 0.0
      %1572 = vmatpush2.msra.mxu0 0.0
      %1573 = vmatprep.subr.mxu0 0.0
      %1574 = vmatpush2.msra.mxu0 0.0
      %1575 = vmatprep.subr.mxu0 0.0
      %1576 = vmatpush2.msra.mxu0 0.0
      %1577 = vmatprep.subr.mxu0 0.0
      %1578 = vmatpush2.msra.mxu0 0.0
      %1579 = vmatprep.subr.mxu0 0.0
      %1580 = vmatpush2.msra.mxu0 0.0
      %1581 = vmatprep.subr.mxu0 0.0
      %1582 = vmatpush2.msra.mxu0 0.0
      %1583 = vmatprep.subr.mxu0 0.0
      %1584 = vmatpush2.msra.mxu0 0.0
      %1585 = vmatprep.subr.mxu0 0.0
      %1586 = vmatpush2.msra.mxu0 0.0
      %1587 = vmatprep.subr.mxu0 0.0
      %1588 = vmatpush2.msra.mxu0 0.0
      %1589 = vmatprep.subr.mxu0 0.0
      %1590 = vmatpush2.msra.mxu0 0.0
      %1591 = vmatprep.subr.mxu0 0.0
      %1592 = vmatpush2.msra.mxu0 0.0
      %1593 = vmatprep.subr.mxu0 0.0
      %1594 = vmatpush2.msra.mxu0 0.0
      %1595 = vmatprep.subr.mxu0 0.0
      %1596 = vmatpush2.msra.mxu0 0.0
      %1597 = vmatprep.mubr.f32.mxu0 0.0
      %1598 = vmatmul.mubr.f32.gmra.mxu0 %v1293
      %v1599 = vpop.f32.mrf.mxu0
      %v1600 = vadd.f32 %v1455, %v1599
      %v1601 = vpop.f32.mrf.mxu0
      %1602 = vmatprep.mubr.f32.mxu0 0.0
      %1603 = vmatmul.mubr.f32.gmra.mxu0 %v1296
      %v1604 = vpop.f32.mrf.mxu0
      %v1605 = vadd.f32 %v1460, %v1604
      %v1606 = vpop.f32.mrf.mxu0
      %1607 = vmatprep.mubr.f32.mxu0 0.0
      %1608 = vmatmul.mubr.f32.gmra.mxu0 %v1299
      %v1609 = vpop.f32.mrf.mxu0
      %v1610 = vadd.f32 %v1465, %v1609
      %v1611 = vpop.f32.mrf.mxu0
      %1612 = vmatprep.mubr.f32.mxu0 0.0
      %1613 = vmatmul.mubr.f32.gmra.mxu0 %v1302
      %v1614 = vpop.f32.mrf.mxu0
      %v1615 = vadd.f32 %v1470, %v1614
      %v1616 = vpop.f32.mrf.mxu0
      %1617 = vmatprep.mubr.f32.mxu0 0.0
      %1618 = vmatmul.mubr.f32.gmra.mxu0 %v1305
      %v1619 = vpop.f32.mrf.mxu0
      %v1620 = vadd.f32 %v1475, %v1619
      %v1621 = vpop.f32.mrf.mxu0
      %1622 = vmatprep.mubr.f32.mxu0 0.0
      %1623 = vmatmul.mubr.f32.gmra.mxu0 %v1308
      %v1624 = vpop.f32.mrf.mxu0
      %v1625 = vadd.f32 %v1480, %v1624
      %v1626 = vpop.f32.mrf.mxu0
      %1627 = vmatprep.mubr.f32.mxu0 0.0
      %1628 = vmatmul.mubr.f32.gmra.mxu0 %v1311
      %v1629 = vpop.f32.mrf.mxu0
      %v1630 = vadd.f32 %v1485, %v1629
      %v1631 = vpop.f32.mrf.mxu0
      %1632 = vmatprep.mubr.f32.mxu0 0.0
      %1633 = vmatmul.mubr.f32.gmra.mxu0 %v1314
      %v1634 = vpop.f32.mrf.mxu0
      %v1635 = vadd.f32 %v1490, %v1634
      %v1636 = vpop.f32.mrf.mxu0
      %1637 = vmatprep.mubr.f32.mxu0 0.0
      %1638 = vmatmul.mubr.f32.gmra.mxu0 %v1317
      %v1639 = vpop.f32.mrf.mxu0
      %v1640 = vadd.f32 %v1495, %v1639
      %v1641 = vpop.f32.mrf.mxu0
      %1642 = vmatprep.mubr.f32.mxu0 0.0
      %1643 = vmatmul.mubr.f32.gmra.mxu0 %v1320
      %v1644 = vpop.f32.mrf.mxu0
      %v1645 = vadd.f32 %v1500, %v1644
      %v1646 = vpop.f32.mrf.mxu0
      %1647 = vmatprep.mubr.f32.mxu0 0.0
      %1648 = vmatmul.mubr.f32.gmra.mxu0 %v1323
      %v1649 = vpop.f32.mrf.mxu0
      %v1650 = vadd.f32 %v1505, %v1649
      %v1651 = vpop.f32.mrf.mxu0
      %1652 = vmatprep.mubr.f32.mxu0 0.0
      %1653 = vmatmul.mubr.f32.gmra.mxu0 %v1326
      %v1654 = vpop.f32.mrf.mxu0
      %v1655 = vadd.f32 %v1510, %v1654
      %v1656 = vpop.f32.mrf.mxu0
      %1657 = vmatprep.mubr.f32.mxu0 0.0
      %1658 = vmatmul.mubr.f32.gmra.mxu0 %v1329
      %v1659 = vpop.f32.mrf.mxu0
      %v1660 = vadd.f32 %v1515, %v1659
      %v1661 = vpop.f32.mrf.mxu0
      %1662 = vmatprep.mubr.f32.mxu0 0.0
      %1663 = vmatmul.mubr.f32.gmra.mxu0 %v1332
      %v1664 = vpop.f32.mrf.mxu0
      %v1665 = vadd.f32 %v1520, %v1664
      %v1666 = vpop.f32.mrf.mxu0
      %1667 = vmatprep.mubr.f32.mxu0 0.0
      %1668 = vmatmul.mubr.f32.gmra.mxu0 %v1335
      %v1669 = vpop.f32.mrf.mxu0
      %v1670 = vadd.f32 %v1525, %v1669
      %v1671 = vpop.f32.mrf.mxu0
      %1672 = vmatprep.mubr.f32.mxu0 0.0
      %1673 = vmatmul.mubr.f32.gmra.mxu0 %v1338
      %v1674 = vpop.f32.mrf.mxu0
      %v1675 = vadd.f32 %v1530, %v1674
      %v1676 = vpop.f32.mrf.mxu0
      %1677 = vdwg.mxu0
      %v1678 = vadd.f32 %v1213, %v1600
      %v1679 = vadd.f32 %v1218, %v1605
      %v1680 = vadd.f32 %v1223, %v1610
      %v1681 = vadd.f32 %v1228, %v1615
      %v1682 = vadd.f32 %v1233, %v1620
      %v1683 = vadd.f32 %v1238, %v1625
      %v1684 = vadd.f32 %v1243, %v1630
      %v1685 = vadd.f32 %v1248, %v1635
      %v1686 = vadd.f32 %v1253, %v1640
      %v1687 = vadd.f32 %v1258, %v1645
      %v1688 = vadd.f32 %v1263, %v1650
      %v1689 = vadd.f32 %v1268, %v1655
      %v1690 = vadd.f32 %v1273, %v1660
      %v1691 = vadd.f32 %v1278, %v1665
      %v1692 = vadd.f32 %v1283, %v1670
      %v1693 = vadd.f32 %v1288, %v1675
      %v1694 = vld [vmem:[%s2] sm:$0x1]
      %v1696 = vlaneseq
      %v1697 = vshrl.u32 %v1696, 7
      %v1698 = vsub.s32 0, %v1697
      %v1699 = vrot.slane %v1694, %v1698
      %v1701 = vadd.f32 %v1678, %v1699
      %v1702 = vadd.f32 %v1679, %v1699
      %v1703 = vadd.f32 %v1680, %v1699
      %v1704 = vadd.f32 %v1681, %v1699
      %v1705 = vadd.f32 %v1682, %v1699
      %v1706 = vadd.f32 %v1683, %v1699
      %v1707 = vadd.f32 %v1684, %v1699
      %v1708 = vadd.f32 %v1685, %v1699
      %v1709 = vadd.f32 %v1686, %v1699
      %v1710 = vadd.f32 %v1687, %v1699
      %v1711 = vadd.f32 %v1688, %v1699
      %v1712 = vadd.f32 %v1689, %v1699
      %v1713 = vadd.f32 %v1690, %v1699
      %v1714 = vadd.f32 %v1691, %v1699
      %v1715 = vadd.f32 %v1692, %v1699
      %v1716 = vadd.f32 %v1693, %v1699
      %v1717 = vmax.f32 %v1701, 0.0
      %v1718 = vmax.f32 %v1702, 0.0
      %v1719 = vmax.f32 %v1703, 0.0
      %v1720 = vmax.f32 %v1704, 0.0
      %v1721 = vmax.f32 %v1705, 0.0
      %v1722 = vmax.f32 %v1706, 0.0
      %v1723 = vmax.f32 %v1707, 0.0
      %v1724 = vmax.f32 %v1708, 0.0
      %v1725 = vmax.f32 %v1709, 0.0
      %v1726 = vmax.f32 %v1710, 0.0
      %v1727 = vmax.f32 %v1711, 0.0
      %v1728 = vmax.f32 %v1712, 0.0
      %v1729 = vmax.f32 %v1713, 0.0
      %v1730 = vmax.f32 %v1714, 0.0
      %v1731 = vmax.f32 %v1715, 0.0
      %v1732 = vmax.f32 %v1716, 0.0
      %v1733 = vlaneseq
      %v1734 = vshrl.u32 %v1733, 7
      %v1735 = vadd.s32 %v1734, 8
      %v1736 = vadd.s32 %v1734, 16
      %v1737 = vadd.s32 %v1734, 24
      %v1738 = vadd.s32 %v1734, 32
      %v1739 = vadd.s32 %v1734, 40
      %v1740 = vadd.s32 %v1734, 48
      %v1741 = vadd.s32 %v1734, 56
      %v1742 = vadd.s32 %v1734, 64
      %v1743 = vadd.s32 %v1734, 72
      %v1744 = vadd.s32 %v1734, 80
      %v1745 = vadd.s32 %v1734, 88
      %v1746 = vadd.s32 %v1734, 96
      %v1747 = vadd.s32 %v1734, 104
      %v1748 = vadd.s32 %v1734, 112
      %v1749 = vadd.s32 %v1734, 120
      %v1750 = vadd.s32 %v1735, 24
      %v1751 = vadd.s32 %v1736, 24
      %v1752 = vadd.s32 %v1737, 24
      %v1753 = vadd.s32 %v1738, 24
      %v1754 = vadd.s32 %v1739, 24
      %v1755 = vadd.s32 %v1740, 24
      %v1756 = vadd.s32 %v1741, 24
      %v1757 = vadd.s32 %v1742, 24
      %v1758 = vadd.s32 %v1743, 24
      %v1759 = vadd.s32 %v1744, 24
      %v1760 = vadd.s32 %v1745, 24
      %v1761 = vadd.s32 %v1746, 24
      %v1762 = vadd.s32 %v1747, 24
      %v1763 = vadd.s32 %v1748, 24
      %v1764 = vadd.s32 %v1749, 24
      %vm1765 = vcmp.lt.s32.totalorder %v1737, 0
      %v1766 = vsub.s32 0, %v1737
      %v1767 = vsel %vm1765, %v1766, %v1737
      %v1768 = vmul.u32.u64.compose %v1767, 2863311531
      %v1769 = vextract.low.u32 %v1768
      %v1770 = vextract.high.u32 %v1768
      %v1771 = vshrl.u32 %v1770, 4
      %v1772 = vmul.u32 %v1771, 24
      %v1773 = vsub.s32 %v1767, %v1772
      %v1774 = vsub.s32 0, %v1773
      %v1775 = vsel %vm1765, %v1774, %v1773
      %vm1776 = vcmp.lt.s32.totalorder %v1750, 0
      %v1777 = vsub.s32 0, %v1750
      %v1778 = vsel %vm1776, %v1777, %v1750
      %v1779 = vmul.u32.u64.compose %v1778, 2863311531
      %v1780 = vextract.low.u32 %v1779
      %v1781 = vextract.high.u32 %v1779
      %v1782 = vshrl.u32 %v1781, 4
      %v1783 = vmul.u32 %v1782, 24
      %v1784 = vsub.s32 %v1778, %v1783
      %v1785 = vsub.s32 0, %v1784
      %v1786 = vsel %vm1776, %v1785, %v1784
      %vm1787 = vcmp.lt.s32.totalorder %v1751, 0
      %v1788 = vsub.s32 0, %v1751
      %v1789 = vsel %vm1787, %v1788, %v1751
      %v1790 = vmul.u32.u64.compose %v1789, 2863311531
      %v1791 = vextract.low.u32 %v1790
      %v1792 = vextract.high.u32 %v1790
      %v1793 = vshrl.u32 %v1792, 4
      %v1794 = vmul.u32 %v1793, 24
      %v1795 = vsub.s32 %v1789, %v1794
      %v1796 = vsub.s32 0, %v1795
      %v1797 = vsel %vm1787, %v1796, %v1795
      %vm1798 = vcmp.lt.s32.totalorder %v1752, 0
      %v1799 = vsub.s32 0, %v1752
      %v1800 = vsel %vm1798, %v1799, %v1752
      %v1801 = vmul.u32.u64.compose %v1800, 2863311531
      %v1802 = vextract.low.u32 %v1801
      %v1803 = vextract.high.u32 %v1801
      %v1804 = vshrl.u32 %v1803, 4
      %v1805 = vmul.u32 %v1804, 24
      %v1806 = vsub.s32 %v1800, %v1805
      %v1807 = vsub.s32 0, %v1806
      %v1808 = vsel %vm1798, %v1807, %v1806
      %vm1809 = vcmp.lt.s32.totalorder %v1753, 0
      %v1810 = vsub.s32 0, %v1753
      %v1811 = vsel %vm1809, %v1810, %v1753
      %v1812 = vmul.u32.u64.compose %v1811, 2863311531
      %v1813 = vextract.low.u32 %v1812
      %v1814 = vextract.high.u32 %v1812
      %v1815 = vshrl.u32 %v1814, 4
      %v1816 = vmul.u32 %v1815, 24
      %v1817 = vsub.s32 %v1811, %v1816
      %v1818 = vsub.s32 0, %v1817
      %v1819 = vsel %vm1809, %v1818, %v1817
      %vm1820 = vcmp.lt.s32.totalorder %v1754, 0
      %v1821 = vsub.s32 0, %v1754
      %v1822 = vsel %vm1820, %v1821, %v1754
      %v1823 = vmul.u32.u64.compose %v1822, 2863311531
      %v1824 = vextract.low.u32 %v1823
      %v1825 = vextract.high.u32 %v1823
      %v1826 = vshrl.u32 %v1825, 4
      %v1827 = vmul.u32 %v1826, 24
      %v1828 = vsub.s32 %v1822, %v1827
      %v1829 = vsub.s32 0, %v1828
      %v1830 = vsel %vm1820, %v1829, %v1828
      %vm1831 = vcmp.lt.s32.totalorder %v1755, 0
      %v1832 = vsub.s32 0, %v1755
      %v1833 = vsel %vm1831, %v1832, %v1755
      %v1834 = vmul.u32.u64.compose %v1833, 2863311531
      %v1835 = vextract.low.u32 %v1834
      %v1836 = vextract.high.u32 %v1834
      %v1837 = vshrl.u32 %v1836, 4
      %v1838 = vmul.u32 %v1837, 24
      %v1839 = vsub.s32 %v1833, %v1838
      %v1840 = vsub.s32 0, %v1839
      %v1841 = vsel %vm1831, %v1840, %v1839
      %vm1842 = vcmp.lt.s32.totalorder %v1756, 0
      %v1843 = vsub.s32 0, %v1756
      %v1844 = vsel %vm1842, %v1843, %v1756
      %v1845 = vmul.u32.u64.compose %v1844, 2863311531
      %v1846 = vextract.low.u32 %v1845
      %v1847 = vextract.high.u32 %v1845
      %v1848 = vshrl.u32 %v1847, 4
      %v1849 = vmul.u32 %v1848, 24
      %v1850 = vsub.s32 %v1844, %v1849
      %v1851 = vsub.s32 0, %v1850
      %v1852 = vsel %vm1842, %v1851, %v1850
      %vm1853 = vcmp.lt.s32.totalorder %v1757, 0
      %v1854 = vsub.s32 0, %v1757
      %v1855 = vsel %vm1853, %v1854, %v1757
      %v1856 = vmul.u32.u64.compose %v1855, 2863311531
      %v1857 = vextract.low.u32 %v1856
      %v1858 = vextract.high.u32 %v1856
      %v1859 = vshrl.u32 %v1858, 4
      %v1860 = vmul.u32 %v1859, 24
      %v1861 = vsub.s32 %v1855, %v1860
      %v1862 = vsub.s32 0, %v1861
      %v1863 = vsel %vm1853, %v1862, %v1861
      %vm1864 = vcmp.lt.s32.totalorder %v1758, 0
      %v1865 = vsub.s32 0, %v1758
      %v1866 = vsel %vm1864, %v1865, %v1758
      %v1867 = vmul.u32.u64.compose %v1866, 2863311531
      %v1868 = vextract.low.u32 %v1867
      %v1869 = vextract.high.u32 %v1867
      %v1870 = vshrl.u32 %v1869, 4
      %v1871 = vmul.u32 %v1870, 24
      %v1872 = vsub.s32 %v1866, %v1871
      %v1873 = vsub.s32 0, %v1872
      %v1874 = vsel %vm1864, %v1873, %v1872
      %vm1875 = vcmp.lt.s32.totalorder %v1759, 0
      %v1876 = vsub.s32 0, %v1759
      %v1877 = vsel %vm1875, %v1876, %v1759
      %v1878 = vmul.u32.u64.compose %v1877, 2863311531
      %v1879 = vextract.low.u32 %v1878
      %v1880 = vextract.high.u32 %v1878
      %v1881 = vshrl.u32 %v1880, 4
      %v1882 = vmul.u32 %v1881, 24
      %v1883 = vsub.s32 %v1877, %v1882
      %v1884 = vsub.s32 0, %v1883
      %v1885 = vsel %vm1875, %v1884, %v1883
      %vm1886 = vcmp.lt.s32.totalorder %v1760, 0
      %v1887 = vsub.s32 0, %v1760
      %v1888 = vsel %vm1886, %v1887, %v1760
      %v1889 = vmul.u32.u64.compose %v1888, 2863311531
      %v1890 = vextract.low.u32 %v1889
      %v1891 = vextract.high.u32 %v1889
      %v1892 = vshrl.u32 %v1891, 4
      %v1893 = vmul.u32 %v1892, 24
      %v1894 = vsub.s32 %v1888, %v1893
      %v1895 = vsub.s32 0, %v1894
      %v1896 = vsel %vm1886, %v1895, %v1894
      %vm1897 = vcmp.lt.s32.totalorder %v1761, 0
      %v1898 = vsub.s32 0, %v1761
      %v1899 = vsel %vm1897, %v1898, %v1761
      %v1900 = vmul.u32.u64.compose %v1899, 2863311531
      %v1901 = vextract.low.u32 %v1900
      %v1902 = vextract.high.u32 %v1900
      %v1903 = vshrl.u32 %v1902, 4
      %v1904 = vmul.u32 %v1903, 24
      %v1905 = vsub.s32 %v1899, %v1904
      %v1906 = vsub.s32 0, %v1905
      %v1907 = vsel %vm1897, %v1906, %v1905
      %vm1908 = vcmp.lt.s32.totalorder %v1762, 0
      %v1909 = vsub.s32 0, %v1762
      %v1910 = vsel %vm1908, %v1909, %v1762
      %v1911 = vmul.u32.u64.compose %v1910, 2863311531
      %v1912 = vextract.low.u32 %v1911
      %v1913 = vextract.high.u32 %v1911
      %v1914 = vshrl.u32 %v1913, 4
      %v1915 = vmul.u32 %v1914, 24
      %v1916 = vsub.s32 %v1910, %v1915
      %v1917 = vsub.s32 0, %v1916
      %v1918 = vsel %vm1908, %v1917, %v1916
      %vm1919 = vcmp.lt.s32.totalorder %v1763, 0
      %v1920 = vsub.s32 0, %v1763
      %v1921 = vsel %vm1919, %v1920, %v1763
      %v1922 = vmul.u32.u64.compose %v1921, 2863311531
      %v1923 = vextract.low.u32 %v1922
      %v1924 = vextract.high.u32 %v1922
      %v1925 = vshrl.u32 %v1924, 4
      %v1926 = vmul.u32 %v1925, 24
      %v1927 = vsub.s32 %v1921, %v1926
      %v1928 = vsub.s32 0, %v1927
      %v1929 = vsel %vm1919, %v1928, %v1927
      %vm1930 = vcmp.lt.s32.totalorder %v1764, 0
      %v1931 = vsub.s32 0, %v1764
      %v1932 = vsel %vm1930, %v1931, %v1764
      %v1933 = vmul.u32.u64.compose %v1932, 2863311531
      %v1934 = vextract.low.u32 %v1933
      %v1935 = vextract.high.u32 %v1933
      %v1936 = vshrl.u32 %v1935, 4
      %v1937 = vmul.u32 %v1936, 24
      %v1938 = vsub.s32 %v1932, %v1937
      %v1939 = vsub.s32 0, %v1938
      %v1940 = vsel %vm1930, %v1939, %v1938
      %vm1941 = vcmp.ne.s32.totalorder %v1775, 0
      %vm1942 = vcmp.ne.s32.totalorder %v1786, 0
      %vm1943 = vcmp.ne.s32.totalorder %v1797, 0
      %vm1944 = vcmp.ne.s32.totalorder %v1808, 0
      %vm1945 = vcmp.ne.s32.totalorder %v1819, 0
      %vm1946 = vcmp.ne.s32.totalorder %v1830, 0
      %vm1947 = vcmp.ne.s32.totalorder %v1841, 0
      %vm1948 = vcmp.ne.s32.totalorder %v1852, 0
      %vm1949 = vcmp.ne.s32.totalorder %v1863, 0
      %vm1950 = vcmp.ne.s32.totalorder %v1874, 0
      %vm1951 = vcmp.ne.s32.totalorder %v1885, 0
      %vm1952 = vcmp.ne.s32.totalorder %v1896, 0
      %vm1953 = vcmp.ne.s32.totalorder %v1907, 0
      %vm1954 = vcmp.ne.s32.totalorder %v1918, 0
      %vm1955 = vcmp.ne.s32.totalorder %v1929, 0
      %vm1956 = vcmp.ne.s32.totalorder %v1940, 0
      %vm1957 = vcmp.lt.s32.totalorder %v1775, 0
      %vm1958 = vcmp.lt.s32.totalorder %v1786, 0
      %vm1959 = vcmp.lt.s32.totalorder %v1797, 0
      %vm1960 = vcmp.lt.s32.totalorder %v1808, 0
      %vm1961 = vcmp.lt.s32.totalorder %v1819, 0
      %vm1962 = vcmp.lt.s32.totalorder %v1830, 0
      %vm1963 = vcmp.lt.s32.totalorder %v1841, 0
      %vm1964 = vcmp.lt.s32.totalorder %v1852, 0
      %vm1965 = vcmp.lt.s32.totalorder %v1863, 0
      %vm1966 = vcmp.lt.s32.totalorder %v1874, 0
      %vm1967 = vcmp.lt.s32.totalorder %v1885, 0
      %vm1968 = vcmp.lt.s32.totalorder %v1896, 0
      %vm1969 = vcmp.lt.s32.totalorder %v1907, 0
      %vm1970 = vcmp.lt.s32.totalorder %v1918, 0
      %vm1971 = vcmp.lt.s32.totalorder %v1929, 0
      %vm1972 = vcmp.lt.s32.totalorder %v1940, 0
      %vm1973 = vmand %vm1957, %vm1941
      %vm1974 = vmand %vm1958, %vm1942
      %vm1975 = vmand %vm1959, %vm1943
      %vm1976 = vmand %vm1960, %vm1944
      %vm1977 = vmand %vm1961, %vm1945
      %vm1978 = vmand %vm1962, %vm1946
      %vm1979 = vmand %vm1963, %vm1947
      %vm1980 = vmand %vm1964, %vm1948
      %vm1981 = vmand %vm1965, %vm1949
      %vm1982 = vmand %vm1966, %vm1950
      %vm1983 = vmand %vm1967, %vm1951
      %vm1984 = vmand %vm1968, %vm1952
      %vm1985 = vmand %vm1969, %vm1953
      %vm1986 = vmand %vm1970, %vm1954
      %vm1987 = vmand %vm1971, %vm1955
      %vm1988 = vmand %vm1972, %vm1956
      %v1989 = vadd.s32 %v1775, 24
      %v1990 = vadd.s32 %v1786, 24
      %v1991 = vadd.s32 %v1797, 24
      %v1992 = vadd.s32 %v1808, 24
      %v1993 = vadd.s32 %v1819, 24
      %v1994 = vadd.s32 %v1830, 24
      %v1995 = vadd.s32 %v1841, 24
      %v1996 = vadd.s32 %v1852, 24
      %v1997 = vadd.s32 %v1863, 24
      %v1998 = vadd.s32 %v1874, 24
      %v1999 = vadd.s32 %v1885, 24
      %v2000 = vadd.s32 %v1896, 24
      %v2001 = vadd.s32 %v1907, 24
      %v2002 = vadd.s32 %v1918, 24
      %v2003 = vadd.s32 %v1929, 24
      %v2004 = vadd.s32 %v1940, 24
      %v2005 = vsel %vm1973, %v1989, %v1775
      %v2006 = vsel %vm1974, %v1990, %v1786
      %v2007 = vsel %vm1975, %v1991, %v1797
      %v2008 = vsel %vm1976, %v1992, %v1808
      %v2009 = vsel %vm1977, %v1993, %v1819
      %v2010 = vsel %vm1978, %v1994, %v1830
      %v2011 = vsel %vm1979, %v1995, %v1841
      %v2012 = vsel %vm1980, %v1996, %v1852
      %v2013 = vsel %vm1981, %v1997, %v1863
      %v2014 = vsel %vm1982, %v1998, %v1874
      %v2015 = vsel %vm1983, %v1999, %v1885
      %v2016 = vsel %vm1984, %v2000, %v1896
      %v2017 = vsel %vm1985, %v2001, %v1907
      %v2018 = vsel %vm1986, %v2002, %v1918
      %v2019 = vsel %vm1987, %v2003, %v1929
      %v2020 = vsel %vm1988, %v2004, %v1940
      %vm2021 = vcmp.ge.s32.totalorder %v2005, 1
      %vm2022 = vcmp.ge.s32.totalorder %v2006, 1
      %vm2023 = vcmp.ge.s32.totalorder %v2007, 1
      %vm2024 = vcmp.ge.s32.totalorder %v2008, 1
      %vm2025 = vcmp.ge.s32.totalorder %v2009, 1
      %vm2026 = vcmp.ge.s32.totalorder %v2010, 1
      %vm2027 = vcmp.ge.s32.totalorder %v2011, 1
      %vm2028 = vcmp.ge.s32.totalorder %v2012, 1
      %vm2029 = vcmp.ge.s32.totalorder %v2013, 1
      %vm2030 = vcmp.ge.s32.totalorder %v2014, 1
      %vm2031 = vcmp.ge.s32.totalorder %v2015, 1
      %vm2032 = vcmp.ge.s32.totalorder %v2016, 1
      %vm2033 = vcmp.ge.s32.totalorder %v2017, 1
      %vm2034 = vcmp.ge.s32.totalorder %v2018, 1
      %vm2035 = vcmp.ge.s32.totalorder %v2019, 1
      %vm2036 = vcmp.ge.s32.totalorder %v2020, 1
      %vm2037 = vcmp.le.s32.totalorder %v2005, 16
      %vm2038 = vcmp.le.s32.totalorder %v2006, 16
      %vm2039 = vcmp.le.s32.totalorder %v2007, 16
      %vm2040 = vcmp.le.s32.totalorder %v2008, 16
      %vm2041 = vcmp.le.s32.totalorder %v2009, 16
      %vm2042 = vcmp.le.s32.totalorder %v2010, 16
      %vm2043 = vcmp.le.s32.totalorder %v2011, 16
      %vm2044 = vcmp.le.s32.totalorder %v2012, 16
      %vm2045 = vcmp.le.s32.totalorder %v2013, 16
      %vm2046 = vcmp.le.s32.totalorder %v2014, 16
      %vm2047 = vcmp.le.s32.totalorder %v2015, 16
      %vm2048 = vcmp.le.s32.totalorder %v2016, 16
      %vm2049 = vcmp.le.s32.totalorder %v2017, 16
      %vm2050 = vcmp.le.s32.totalorder %v2018, 16
      %vm2051 = vcmp.le.s32.totalorder %v2019, 16
      %vm2052 = vcmp.le.s32.totalorder %v2020, 16
      %vm2053 = vmand %vm2021, %vm2037
      %vm2054 = vmand %vm2022, %vm2038
      %vm2055 = vmand %vm2023, %vm2039
      %vm2056 = vmand %vm2024, %vm2040
      %vm2057 = vmand %vm2025, %vm2041
      %vm2058 = vmand %vm2026, %vm2042
      %vm2059 = vmand %vm2027, %vm2043
      %vm2060 = vmand %vm2028, %vm2044
      %vm2061 = vmand %vm2029, %vm2045
      %vm2062 = vmand %vm2030, %vm2046
      %vm2063 = vmand %vm2031, %vm2047
      %vm2064 = vmand %vm2032, %vm2048
      %vm2065 = vmand %vm2033, %vm2049
      %vm2066 = vmand %vm2034, %vm2050
      %vm2067 = vmand %vm2035, %vm2051
      %vm2068 = vmand %vm2036, %vm2052
      %v2069 = vsel %vm2053, 1, 0
      %v2070 = vsel %vm2054, 1, 0
      %v2071 = vsel %vm2055, 1, 0
      %v2072 = vsel %vm2056, 1, 0
      %v2073 = vsel %vm2057, 1, 0
      %v2074 = vsel %vm2058, 1, 0
      %v2075 = vsel %vm2059, 1, 0
      %v2076 = vsel %vm2060, 1, 0
      %v2077 = vsel %vm2061, 1, 0
      %v2078 = vsel %vm2062, 1, 0
      %v2079 = vsel %vm2063, 1, 0
      %v2080 = vsel %vm2064, 1, 0
      %v2081 = vsel %vm2065, 1, 0
      %v2082 = vsel %vm2066, 1, 0
      %v2083 = vsel %vm2067, 1, 0
      %v2084 = vsel %vm2068, 1, 0
      %vm2085 = vcmp.eq.s32.totalorder %v2069, 1
      %vm2086 = vcmp.eq.s32.totalorder %v2070, 1
      %vm2087 = vcmp.eq.s32.totalorder %v2071, 1
      %vm2088 = vcmp.eq.s32.totalorder %v2072, 1
      %vm2089 = vcmp.eq.s32.totalorder %v2073, 1
      %vm2090 = vcmp.eq.s32.totalorder %v2074, 1
      %vm2091 = vcmp.eq.s32.totalorder %v2075, 1
      %vm2092 = vcmp.eq.s32.totalorder %v2076, 1
      %vm2093 = vcmp.eq.s32.totalorder %v2077, 1
      %vm2094 = vcmp.eq.s32.totalorder %v2078, 1
      %vm2095 = vcmp.eq.s32.totalorder %v2079, 1
      %vm2096 = vcmp.eq.s32.totalorder %v2080, 1
      %vm2097 = vcmp.eq.s32.totalorder %v2081, 1
      %vm2098 = vcmp.eq.s32.totalorder %v2082, 1
      %vm2099 = vcmp.eq.s32.totalorder %v2083, 1
      %vm2100 = vcmp.eq.s32.totalorder %v2084, 1
      %v2101 = vsel %vm2085, %v1717, 0.0
      %v2102 = vsel %vm2086, %v1718, 0.0
      %v2103 = vsel %vm2087, %v1719, 0.0
      %v2104 = vsel %vm2088, %v1720, 0.0
      %v2105 = vsel %vm2089, %v1721, 0.0
      %v2106 = vsel %vm2090, %v1722, 0.0
      %v2107 = vsel %vm2091, %v1723, 0.0
      %v2108 = vsel %vm2092, %v1724, 0.0
      %v2109 = vsel %vm2093, %v1725, 0.0
      %v2110 = vsel %vm2094, %v1726, 0.0
      %v2111 = vsel %vm2095, %v1727, 0.0
      %v2112 = vsel %vm2096, %v1728, 0.0
      %v2113 = vsel %vm2097, %v1729, 0.0
      %v2114 = vsel %vm2098, %v1730, 0.0
      %v2115 = vsel %vm2099, %v1731, 0.0
      %v2116 = vsel %vm2100, %v1732, 0.0
      %2117 = vst [vmem:[#allocation3 + $0x20] sm:$0xff] %v2101
      %2118 = vst [vmem:[#allocation3 + $0x28] sm:$0xff] %v2102
      %2119 = vst [vmem:[#allocation3 + $0x30] sm:$0xff] %v2103
      %2120 = vst [vmem:[#allocation3 + $0x38] sm:$0xff] %v2104
      %2121 = vst [vmem:[#allocation3 + $0x40] sm:$0xff] %v2105
      %2122 = vst [vmem:[#allocation3 + $0x48] sm:$0xff] %v2106
      %2123 = vst [vmem:[#allocation3 + $0x50] sm:$0xff] %v2107
      %2124 = vst [vmem:[#allocation3 + $0x58] sm:$0xff] %v2108
      %2125 = vst [vmem:[#allocation3 + $0x60] sm:$0xff] %v2109
      %2126 = vst [vmem:[#allocation3 + $0x68] sm:$0xff] %v2110
      %2127 = vst [vmem:[#allocation3 + $0x70] sm:$0xff] %v2111
      %2128 = vst [vmem:[#allocation3 + $0x78] sm:$0xff] %v2112
      %2129 = vst [vmem:[#allocation3 + $0x80] sm:$0xff] %v2113
      %2130 = vst [vmem:[#allocation3 + $0x88] sm:$0xff] %v2114
      %2131 = vst [vmem:[#allocation3 + $0x90] sm:$0xff] %v2115
      %2132 = vst [vmem:[#allocation3 + $0x98] sm:$0xff] %v2116
      %v2133 = vld [vmem:[#allocation2 + $0x180] sm:$0xff]
      %v2134 = vld [vmem:[#allocation2 + $0x188] sm:$0xff]
      %v2135 = vld [vmem:[#allocation2 + $0x190] sm:$0xff]
      %v2136 = vld [vmem:[#allocation2 + $0x198] sm:$0xff]
      %v2137 = vld [vmem:[#allocation2 + $0x1a0] sm:$0xff]
      %v2138 = vld [vmem:[#allocation2 + $0x1a8] sm:$0xff]
      %v2139 = vld [vmem:[#allocation2 + $0x1b0] sm:$0xff]
      %v2140 = vld [vmem:[#allocation2 + $0x1b8] sm:$0xff]
      %v2141 = vld [vmem:[#allocation2 + $0x1c0] sm:$0xff]
      %v2142 = vld [vmem:[#allocation2 + $0x1c8] sm:$0xff]
      %v2143 = vld [vmem:[#allocation2 + $0x1d0] sm:$0xff]
      %v2144 = vld [vmem:[#allocation2 + $0x1d8] sm:$0xff]
      %v2145 = vld [vmem:[#allocation2 + $0x1e0] sm:$0xff]
      %v2146 = vld [vmem:[#allocation2 + $0x1e8] sm:$0xff]
      %v2147 = vld [vmem:[#allocation2 + $0x1f0] sm:$0xff]
      %v2148 = vld [vmem:[#allocation2 + $0x1f8] sm:$0xff]
      %v2149 = vld [vmem:[#allocation2 + $0x200] sm:$0xff]
      %v2150 = vld [vmem:[#allocation2 + $0x208] sm:$0xff]
      %v2151 = vld [vmem:[#allocation2 + $0x210] sm:$0xff]
      %v2152 = vld [vmem:[#allocation2 + $0x218] sm:$0xff]
      %v2153 = vld [vmem:[#allocation2 + $0x220] sm:$0xff]
      %v2154 = vld [vmem:[#allocation2 + $0x228] sm:$0xff]
      %v2155 = vld [vmem:[#allocation2 + $0x230] sm:$0xff]
      %v2156 = vld [vmem:[#allocation2 + $0x238] sm:$0xff]
      %v2157 = vld [vmem:[#allocation2 + $0x240] sm:$0xff]
      %v2158 = vld [vmem:[#allocation2 + $0x248] sm:$0xff]
      %v2159 = vld [vmem:[#allocation2 + $0x250] sm:$0xff]
      %v2160 = vld [vmem:[#allocation2 + $0x258] sm:$0xff]
      %v2161 = vld [vmem:[#allocation2 + $0x260] sm:$0xff]
      %v2162 = vld [vmem:[#allocation2 + $0x268] sm:$0xff]
      %v2163 = vld [vmem:[#allocation2 + $0x270] sm:$0xff]
      %v2164 = vld [vmem:[#allocation2 + $0x278] sm:$0xff]
      %v2165 = vld [vmem:[#allocation2 + $0x280] sm:$0xff]
      %v2166 = vld [vmem:[#allocation2 + $0x288] sm:$0xff]
      %v2167 = vld [vmem:[#allocation2 + $0x290] sm:$0xff]
      %v2168 = vld [vmem:[#allocation2 + $0x298] sm:$0xff]
      %v2169 = vld [vmem:[#allocation2 + $0x2a0] sm:$0xff]
      %v2170 = vld [vmem:[#allocation2 + $0x2a8] sm:$0xff]
      %v2171 = vld [vmem:[#allocation2 + $0x2b0] sm:$0xff]
      %v2172 = vld [vmem:[#allocation2 + $0x2b8] sm:$0xff]
      %v2173 = vld [vmem:[#allocation2 + $0x2c0] sm:$0xff]
      %v2174 = vld [vmem:[#allocation2 + $0x2c8] sm:$0xff]
      %v2175 = vld [vmem:[#allocation2 + $0x2d0] sm:$0xff]
      %v2176 = vld [vmem:[#allocation2 + $0x2d8] sm:$0xff]
      %v2177 = vld [vmem:[#allocation2 + $0x2e0] sm:$0xff]
      %v2178 = vld [vmem:[#allocation2 + $0x2e8] sm:$0xff]
      %v2179 = vld [vmem:[#allocation2 + $0x2f0] sm:$0xff]
      %v2180 = vld [vmem:[#allocation2 + $0x2f8] sm:$0xff]
      %v2181 = vld [vmem:[%s1] sm:$0xff]
      %v2182 = vld [vmem:[%s1 + $0x8] sm:$0xff]
      %v2183 = vld [vmem:[%s1 + $0x10] sm:$0xff]
      %v2184 = vld [vmem:[%s1 + $0x18] sm:$0xff]
      %v2185 = vld [vmem:[%s1 + $0x20] sm:$0xff]
      %v2186 = vld [vmem:[%s1 + $0x28] sm:$0xff]
      %v2187 = vld [vmem:[%s1 + $0x30] sm:$0xff]
      %v2188 = vld [vmem:[%s1 + $0x38] sm:$0xff]
      %v2189 = vld [vmem:[%s1 + $0x40] sm:$0xff]
      %v2190 = vld [vmem:[%s1 + $0x48] sm:$0xff]
      %v2191 = vld [vmem:[%s1 + $0x50] sm:$0xff]
      %v2192 = vld [vmem:[%s1 + $0x58] sm:$0xff]
      %v2193 = vld [vmem:[%s1 + $0x60] sm:$0xff]
      %v2194 = vld [vmem:[%s1 + $0x68] sm:$0xff]
      %v2195 = vld [vmem:[%s1 + $0x70] sm:$0xff]
      %v2196 = vld [vmem:[%s1 + $0x78] sm:$0xff]
      %v2197 = vld [vmem:[%s1 + $0x80] sm:$0xff]
      %v2198 = vld [vmem:[%s1 + $0x88] sm:$0xff]
      %v2199 = vld [vmem:[%s1 + $0x90] sm:$0xff]
      %v2200 = vld [vmem:[%s1 + $0x98] sm:$0xff]
      %v2201 = vld [vmem:[%s1 + $0xa0] sm:$0xff]
      %v2202 = vld [vmem:[%s1 + $0xa8] sm:$0xff]
      %v2203 = vld [vmem:[%s1 + $0xb0] sm:$0xff]
      %v2204 = vld [vmem:[%s1 + $0xb8] sm:$0xff]
      %v2205 = vld [vmem:[%s1 + $0xc0] sm:$0xff]
      %v2206 = vld [vmem:[%s1 + $0xc8] sm:$0xff]
      %v2207 = vld [vmem:[%s1 + $0xd0] sm:$0xff]
      %v2208 = vld [vmem:[%s1 + $0xd8] sm:$0xff]
      %v2209 = vld [vmem:[%s1 + $0xe0] sm:$0xff]
      %v2210 = vld [vmem:[%s1 + $0xe8] sm:$0xff]
      %v2211 = vld [vmem:[%s1 + $0xf0] sm:$0xff]
      %v2212 = vld [vmem:[%s1 + $0xf8] sm:$0xff]
      %v2213 = vld [vmem:[%s1 + $0x100] sm:$0xff]
      %v2214 = vld [vmem:[%s1 + $0x108] sm:$0xff]
      %v2215 = vld [vmem:[%s1 + $0x110] sm:$0xff]
      %v2216 = vld [vmem:[%s1 + $0x118] sm:$0xff]
      %v2217 = vld [vmem:[%s1 + $0x120] sm:$0xff]
      %v2218 = vld [vmem:[%s1 + $0x128] sm:$0xff]
      %v2219 = vld [vmem:[%s1 + $0x130] sm:$0xff]
      %v2220 = vld [vmem:[%s1 + $0x138] sm:$0xff]
      %v2221 = vld [vmem:[%s1 + $0x140] sm:$0xff]
      %v2222 = vld [vmem:[%s1 + $0x148] sm:$0xff]
      %v2223 = vld [vmem:[%s1 + $0x150] sm:$0xff]
      %v2224 = vld [vmem:[%s1 + $0x158] sm:$0xff]
      %v2225 = vld [vmem:[%s1 + $0x160] sm:$0xff]
      %v2226 = vld [vmem:[%s1 + $0x168] sm:$0xff]
      %v2227 = vld [vmem:[%s1 + $0x170] sm:$0xff]
      %v2228 = vld [vmem:[%s1 + $0x178] sm:$0xff]
      %v2229 = vld [vmem:[#allocation2 + $0x300] sm:$0xff]
      %v2230 = vld [vmem:[#allocation2 + $0x308] sm:$0xff]
      %v2231 = vld [vmem:[#allocation2 + $0x310] sm:$0xff]
      %v2232 = vld [vmem:[#allocation2 + $0x318] sm:$0xff]
      %v2233 = vld [vmem:[#allocation2 + $0x320] sm:$0xff]
      %v2234 = vld [vmem:[#allocation2 + $0x328] sm:$0xff]
      %v2235 = vld [vmem:[#allocation2 + $0x330] sm:$0xff]
      %v2236 = vld [vmem:[#allocation2 + $0x338] sm:$0xff]
      %v2237 = vld [vmem:[#allocation2 + $0x340] sm:$0xff]
      %v2238 = vld [vmem:[%s662] sm:$0xff]
      %v2239 = vld [vmem:[%s662 + $0x8] sm:$0xff]
      %v2240 = vld [vmem:[%s662 + $0x10] sm:$0xff]
      %v2241 = vld [vmem:[%s662 + $0x18] sm:$0xff]
      %v2242 = vld [vmem:[%s662 + $0x20] sm:$0xff]
      %v2243 = vld [vmem:[%s662 + $0x28] sm:$0xff]
      %v2244 = vld [vmem:[%s662 + $0x30] sm:$0xff]
      %v2245 = vld [vmem:[%s662 + $0x38] sm:$0xff]
      %v2246 = vld [vmem:[%s662 + $0x40] sm:$0xff]
      %v2247 = vld [vmem:[%s662 + $0x48] sm:$0xff]
      %v2248 = vld [vmem:[%s662 + $0x50] sm:$0xff]
      %v2249 = vld [vmem:[%s662 + $0x58] sm:$0xff]
      %v2250 = vld [vmem:[%s662 + $0x60] sm:$0xff]
      %v2251 = vld [vmem:[%s662 + $0x68] sm:$0xff]
      %v2252 = vld [vmem:[%s662 + $0x70] sm:$0xff]
      %v2253 = vld [vmem:[%s662 + $0x78] sm:$0xff]
      %v2254 = vld [vmem:[%s662 + $0x80] sm:$0xff]
      %v2255 = vld [vmem:[%s662 + $0x88] sm:$0xff]
      %v2256 = vld [vmem:[%s662 + $0x90] sm:$0xff]
      %v2257 = vld [vmem:[%s662 + $0x98] sm:$0xff]
      %v2258 = vld [vmem:[%s662 + $0xa0] sm:$0xff]
      %v2259 = vld [vmem:[%s662 + $0xa8] sm:$0xff]
      %v2260 = vld [vmem:[%s662 + $0xb0] sm:$0xff]
      %v2261 = vld [vmem:[%s662 + $0xb8] sm:$0xff]
      %v2262 = vld [vmem:[%s662 + $0xc0] sm:$0xff]
      %v2263 = vld [vmem:[%s662 + $0xc8] sm:$0xff]
      %v2264 = vld [vmem:[%s662 + $0xd0] sm:$0xff]
      %v2265 = vld [vmem:[%s662 + $0xd8] sm:$0xff]
      %v2266 = vld [vmem:[%s662 + $0xe0] sm:$0xff]
      %v2267 = vld [vmem:[%s662 + $0xe8] sm:$0xff]
      %v2268 = vld [vmem:[%s662 + $0xf0] sm:$0xff]
      %v2269 = vld [vmem:[%s662 + $0xf8] sm:$0xff]
      %v2270 = vld [vmem:[%s662 + $0x100] sm:$0xff]
      %v2271 = vld [vmem:[%s662 + $0x108] sm:$0xff]
      %v2272 = vld [vmem:[%s662 + $0x110] sm:$0xff]
      %v2273 = vld [vmem:[%s662 + $0x118] sm:$0xff]
      %v2274 = vld [vmem:[%s662 + $0x120] sm:$0xff]
      %v2275 = vld [vmem:[%s662 + $0x128] sm:$0xff]
      %v2276 = vld [vmem:[%s662 + $0x130] sm:$0xff]
      %v2277 = vld [vmem:[%s662 + $0x138] sm:$0xff]
      %v2278 = vld [vmem:[%s662 + $0x140] sm:$0xff]
      %v2279 = vld [vmem:[%s662 + $0x148] sm:$0xff]
      %v2280 = vld [vmem:[%s662 + $0x150] sm:$0xff]
      %v2281 = vld [vmem:[%s662 + $0x158] sm:$0xff]
      %v2282 = vld [vmem:[%s662 + $0x160] sm:$0xff]
      %v2283 = vld [vmem:[%s662 + $0x168] sm:$0xff]
      %v2284 = vld [vmem:[%s662 + $0x170] sm:$0xff]
      %v2285 = vld [vmem:[%s662 + $0x178] sm:$0xff]
      %2286 = vmatprep.subr.mxu0 0.0
      %2287 = vmatpush1.msra.mxu0 %v2253
      %2288 = vmatprep.subr.mxu0 0.0
      %2289 = vmatpush1.msra.mxu0 %v2252
      %2290 = vmatprep.subr.mxu0 0.0
      %2291 = vmatpush1.msra.mxu0 %v2251
      %2292 = vmatprep.subr.mxu0 0.0
      %2293 = vmatpush1.msra.mxu0 %v2250
      %2294 = vmatprep.subr.mxu0 0.0
      %2295 = vmatpush1.msra.mxu0 %v2249
      %2296 = vmatprep.subr.mxu0 0.0
      %2297 = vmatpush1.msra.mxu0 %v2248
      %2298 = vmatprep.subr.mxu0 0.0
      %2299 = vmatpush1.msra.mxu0 %v2247
      %2300 = vmatprep.subr.mxu0 0.0
      %2301 = vmatpush1.msra.mxu0 %v2246
      %2302 = vmatprep.subr.mxu0 0.0
      %2303 = vmatpush1.msra.mxu0 %v2245
      %2304 = vmatprep.subr.mxu0 0.0
      %2305 = vmatpush1.msra.mxu0 %v2244
      %2306 = vmatprep.subr.mxu0 0.0
      %2307 = vmatpush1.msra.mxu0 %v2243
      %2308 = vmatprep.subr.mxu0 0.0
      %2309 = vmatpush1.msra.mxu0 %v2242
      %2310 = vmatprep.subr.mxu0 0.0
      %2311 = vmatpush1.msra.mxu0 %v2241
      %2312 = vmatprep.subr.mxu0 0.0
      %2313 = vmatpush1.msra.mxu0 %v2240
      %2314 = vmatprep.subr.mxu0 0.0
      %2315 = vmatpush1.msra.mxu0 %v2239
      %2316 = vmatprep.subr.mxu0 0.0
      %2317 = vmatpush1.msra.mxu0 %v2238
      %2318 = vmatprep.subr.mxu0 0.0
      %2319 = vmatpush2.msra.mxu0 %v2269
      %2320 = vmatprep.subr.mxu0 0.0
      %2321 = vmatpush2.msra.mxu0 %v2268
      %2322 = vmatprep.subr.mxu0 0.0
      %2323 = vmatpush2.msra.mxu0 %v2267
      %2324 = vmatprep.subr.mxu0 0.0
      %2325 = vmatpush2.msra.mxu0 %v2266
      %2326 = vmatprep.subr.mxu0 0.0
      %2327 = vmatpush2.msra.mxu0 %v2265
      %2328 = vmatprep.subr.mxu0 0.0
      %2329 = vmatpush2.msra.mxu0 %v2264
      %2330 = vmatprep.subr.mxu0 0.0
      %2331 = vmatpush2.msra.mxu0 %v2263
      %2332 = vmatprep.subr.mxu0 0.0
      %2333 = vmatpush2.msra.mxu0 %v2262
      %2334 = vmatprep.subr.mxu0 0.0
      %2335 = vmatpush2.msra.mxu0 %v2261
      %2336 = vmatprep.subr.mxu0 0.0
      %2337 = vmatpush2.msra.mxu0 %v2260
      %2338 = vmatprep.subr.mxu0 0.0
      %2339 = vmatpush2.msra.mxu0 %v2259
      %2340 = vmatprep.subr.mxu0 0.0
      %2341 = vmatpush2.msra.mxu0 %v2258
      %2342 = vmatprep.subr.mxu0 0.0
      %2343 = vmatpush2.msra.mxu0 %v2257
      %2344 = vmatprep.subr.mxu0 0.0
      %2345 = vmatpush2.msra.mxu0 %v2256
      %2346 = vmatprep.subr.mxu0 0.0
      %2347 = vmatpush2.msra.mxu0 %v2255
      %2348 = vmatprep.subr.mxu0 0.0
      %2349 = vmatpush2.msra.mxu0 %v2254
      %2350 = vmatprep.mubr.f32.mxu0 %v2143
      %2351 = vmatmul.mubr.f32.gmra.mxu0 %v2142
      %v2352 = vpop.f32.mrf.mxu0
      %v2353 = vadd.f32 0.0, %v2352
      %v2354 = vpop.f32.mrf.mxu0
      %2355 = vmatprep.mubr.f32.mxu0 %v2146
      %2356 = vmatmul.mubr.f32.gmra.mxu0 %v2145
      %v2357 = vpop.f32.mrf.mxu0
      %v2358 = vadd.f32 0.0, %v2357
      %v2359 = vpop.f32.mrf.mxu0
      %2360 = vmatprep.mubr.f32.mxu0 %v2149
      %2361 = vmatmul.mubr.f32.gmra.mxu0 %v2148
      %v2362 = vpop.f32.mrf.mxu0
      %v2363 = vadd.f32 0.0, %v2362
      %v2364 = vpop.f32.mrf.mxu0
      %2365 = vmatprep.mubr.f32.mxu0 %v2152
      %2366 = vmatmul.mubr.f32.gmra.mxu0 %v2151
      %v2367 = vpop.f32.mrf.mxu0
      %v2368 = vadd.f32 0.0, %v2367
      %v2369 = vpop.f32.mrf.mxu0
      %2370 = vmatprep.mubr.f32.mxu0 %v2155
      %2371 = vmatmul.mubr.f32.gmra.mxu0 %v2154
      %v2372 = vpop.f32.mrf.mxu0
      %v2373 = vadd.f32 0.0, %v2372
      %v2374 = vpop.f32.mrf.mxu0
      %2375 = vmatprep.mubr.f32.mxu0 %v2158
      %2376 = vmatmul.mubr.f32.gmra.mxu0 %v2157
      %v2377 = vpop.f32.mrf.mxu0
      %v2378 = vadd.f32 0.0, %v2377
      %v2379 = vpop.f32.mrf.mxu0
      %2380 = vmatprep.mubr.f32.mxu0 %v2161
      %2381 = vmatmul.mubr.f32.gmra.mxu0 %v2160
      %v2382 = vpop.f32.mrf.mxu0
      %v2383 = vadd.f32 0.0, %v2382
      %v2384 = vpop.f32.mrf.mxu0
      %2385 = vmatprep.mubr.f32.mxu0 %v2164
      %2386 = vmatmul.mubr.f32.gmra.mxu0 %v2163
      %v2387 = vpop.f32.mrf.mxu0
      %v2388 = vadd.f32 0.0, %v2387
      %v2389 = vpop.f32.mrf.mxu0
      %2390 = vmatprep.mubr.f32.mxu0 %v2167
      %2391 = vmatmul.mubr.f32.gmra.mxu0 %v2166
      %v2392 = vpop.f32.mrf.mxu0
      %v2393 = vadd.f32 0.0, %v2392
      %v2394 = vpop.f32.mrf.mxu0
      %2395 = vmatprep.mubr.f32.mxu0 %v2170
      %2396 = vmatmul.mubr.f32.gmra.mxu0 %v2169
      %v2397 = vpop.f32.mrf.mxu0
      %v2398 = vadd.f32 0.0, %v2397
      %v2399 = vpop.f32.mrf.mxu0
      %2400 = vmatprep.mubr.f32.mxu0 %v2173
      %2401 = vmatmul.mubr.f32.gmra.mxu0 %v2172
      %v2402 = vpop.f32.mrf.mxu0
      %v2403 = vadd.f32 0.0, %v2402
      %v2404 = vpop.f32.mrf.mxu0
      %2405 = vmatprep.mubr.f32.mxu0 %v2176
      %2406 = vmatmul.mubr.f32.gmra.mxu0 %v2175
      %v2407 = vpop.f32.mrf.mxu0
      %v2408 = vadd.f32 0.0, %v2407
      %v2409 = vpop.f32.mrf.mxu0
      %2410 = vmatprep.mubr.f32.mxu0 %v2179
      %2411 = vmatmul.mubr.f32.gmra.mxu0 %v2178
      %v2412 = vpop.f32.mrf.mxu0
      %v2413 = vadd.f32 0.0, %v2412
      %v2414 = vpop.f32.mrf.mxu0
      %2415 = vmatprep.mubr.f32.mxu0 %v2230
      %2416 = vmatmul.mubr.f32.gmra.mxu0 %v2229
      %v2417 = vpop.f32.mrf.mxu0
      %v2418 = vadd.f32 0.0, %v2417
      %v2419 = vpop.f32.mrf.mxu0
      %2420 = vmatprep.mubr.f32.mxu0 %v2233
      %2421 = vmatmul.mubr.f32.gmra.mxu0 %v2232
      %v2422 = vpop.f32.mrf.mxu0
      %v2423 = vadd.f32 0.0, %v2422
      %v2424 = vpop.f32.mrf.mxu0
      %2425 = vmatprep.mubr.f32.mxu0 %v2236
      %2426 = vmatmul.mubr.f32.gmra.mxu0 %v2235
      %v2427 = vpop.f32.mrf.mxu0
      %v2428 = vadd.f32 0.0, %v2427
      %v2429 = vpop.f32.mrf.mxu0
      %2430 = vdwg.mxu0
      %2431 = vmatprep.subr.mxu0 0.0
      %2432 = vmatpush1.msra.mxu0 %v2285
      %2433 = vmatprep.subr.mxu0 0.0
      %2434 = vmatpush1.msra.mxu0 %v2284
      %2435 = vmatprep.subr.mxu0 0.0
      %2436 = vmatpush1.msra.mxu0 %v2283
      %2437 = vmatprep.subr.mxu0 0.0
      %2438 = vmatpush1.msra.mxu0 %v2282
      %2439 = vmatprep.subr.mxu0 0.0
      %2440 = vmatpush1.msra.mxu0 %v2281
      %2441 = vmatprep.subr.mxu0 0.0
      %2442 = vmatpush1.msra.mxu0 %v2280
      %2443 = vmatprep.subr.mxu0 0.0
      %2444 = vmatpush1.msra.mxu0 %v2279
      %2445 = vmatprep.subr.mxu0 0.0
      %2446 = vmatpush1.msra.mxu0 %v2278
      %2447 = vmatprep.subr.mxu0 0.0
      %2448 = vmatpush1.msra.mxu0 %v2277
      %2449 = vmatprep.subr.mxu0 0.0
      %2450 = vmatpush1.msra.mxu0 %v2276
      %2451 = vmatprep.subr.mxu0 0.0
      %2452 = vmatpush1.msra.mxu0 %v2275
      %2453 = vmatprep.subr.mxu0 0.0
      %2454 = vmatpush1.msra.mxu0 %v2274
      %2455 = vmatprep.subr.mxu0 0.0
      %2456 = vmatpush1.msra.mxu0 %v2273
      %2457 = vmatprep.subr.mxu0 0.0
      %2458 = vmatpush1.msra.mxu0 %v2272
      %2459 = vmatprep.subr.mxu0 0.0
      %2460 = vmatpush1.msra.mxu0 %v2271
      %2461 = vmatprep.subr.mxu0 0.0
      %2462 = vmatpush1.msra.mxu0 %v2270
      %2463 = vmatprep.subr.mxu0 0.0
      %2464 = vmatpush2.msra.mxu0 0.0
      %2465 = vmatprep.subr.mxu0 0.0
      %2466 = vmatpush2.msra.mxu0 0.0
      %2467 = vmatprep.subr.mxu0 0.0
      %2468 = vmatpush2.msra.mxu0 0.0
      %2469 = vmatprep.subr.mxu0 0.0
      %2470 = vmatpush2.msra.mxu0 0.0
      %2471 = vmatprep.subr.mxu0 0.0
      %2472 = vmatpush2.msra.mxu0 0.0
      %2473 = vmatprep.subr.mxu0 0.0
      %2474 = vmatpush2.msra.mxu0 0.0
      %2475 = vmatprep.subr.mxu0 0.0
      %2476 = vmatpush2.msra.mxu0 0.0
      %2477 = vmatprep.subr.mxu0 0.0
      %2478 = vmatpush2.msra.mxu0 0.0
      %2479 = vmatprep.subr.mxu0 0.0
      %2480 = vmatpush2.msra.mxu0 0.0
      %2481 = vmatprep.subr.mxu0 0.0
      %2482 = vmatpush2.msra.mxu0 0.0
      %2483 = vmatprep.subr.mxu0 0.0
      %2484 = vmatpush2.msra.mxu0 0.0
      %2485 = vmatprep.subr.mxu0 0.0
      %2486 = vmatpush2.msra.mxu0 0.0
      %2487 = vmatprep.subr.mxu0 0.0
      %2488 = vmatpush2.msra.mxu0 0.0
      %2489 = vmatprep.subr.mxu0 0.0
      %2490 = vmatpush2.msra.mxu0 0.0
      %2491 = vmatprep.subr.mxu0 0.0
      %2492 = vmatpush2.msra.mxu0 0.0
      %2493 = vmatprep.subr.mxu0 0.0
      %2494 = vmatpush2.msra.mxu0 0.0
      %2495 = vmatprep.mubr.f32.mxu0 0.0
      %2496 = vmatmul.mubr.f32.gmra.mxu0 %v2144
      %v2497 = vpop.f32.mrf.mxu0
      %v2498 = vadd.f32 %v2353, %v2497
      %v2499 = vpop.f32.mrf.mxu0
      %2500 = vmatprep.mubr.f32.mxu0 0.0
      %2501 = vmatmul.mubr.f32.gmra.mxu0 %v2147
      %v2502 = vpop.f32.mrf.mxu0
      %v2503 = vadd.f32 %v2358, %v2502
      %v2504 = vpop.f32.mrf.mxu0
      %2505 = vmatprep.mubr.f32.mxu0 0.0
      %2506 = vmatmul.mubr.f32.gmra.mxu0 %v2150
      %v2507 = vpop.f32.mrf.mxu0
      %v2508 = vadd.f32 %v2363, %v2507
      %v2509 = vpop.f32.mrf.mxu0
      %2510 = vmatprep.mubr.f32.mxu0 0.0
      %2511 = vmatmul.mubr.f32.gmra.mxu0 %v2153
      %v2512 = vpop.f32.mrf.mxu0
      %v2513 = vadd.f32 %v2368, %v2512
      %v2514 = vpop.f32.mrf.mxu0
      %2515 = vmatprep.mubr.f32.mxu0 0.0
      %2516 = vmatmul.mubr.f32.gmra.mxu0 %v2156
      %v2517 = vpop.f32.mrf.mxu0
      %v2518 = vadd.f32 %v2373, %v2517
      %v2519 = vpop.f32.mrf.mxu0
      %2520 = vmatprep.mubr.f32.mxu0 0.0
      %2521 = vmatmul.mubr.f32.gmra.mxu0 %v2159
      %v2522 = vpop.f32.mrf.mxu0
      %v2523 = vadd.f32 %v2378, %v2522
      %v2524 = vpop.f32.mrf.mxu0
      %2525 = vmatprep.mubr.f32.mxu0 0.0
      %2526 = vmatmul.mubr.f32.gmra.mxu0 %v2162
      %v2527 = vpop.f32.mrf.mxu0
      %v2528 = vadd.f32 %v2383, %v2527
      %v2529 = vpop.f32.mrf.mxu0
      %2530 = vmatprep.mubr.f32.mxu0 0.0
      %2531 = vmatmul.mubr.f32.gmra.mxu0 %v2165
      %v2532 = vpop.f32.mrf.mxu0
      %v2533 = vadd.f32 %v2388, %v2532
      %v2534 = vpop.f32.mrf.mxu0
      %2535 = vmatprep.mubr.f32.mxu0 0.0
      %2536 = vmatmul.mubr.f32.gmra.mxu0 %v2168
      %v2537 = vpop.f32.mrf.mxu0
      %v2538 = vadd.f32 %v2393, %v2537
      %v2539 = vpop.f32.mrf.mxu0
      %2540 = vmatprep.mubr.f32.mxu0 0.0
      %2541 = vmatmul.mubr.f32.gmra.mxu0 %v2171
      %v2542 = vpop.f32.mrf.mxu0
      %v2543 = vadd.f32 %v2398, %v2542
      %v2544 = vpop.f32.mrf.mxu0
      %2545 = vmatprep.mubr.f32.mxu0 0.0
      %2546 = vmatmul.mubr.f32.gmra.mxu0 %v2174
      %v2547 = vpop.f32.mrf.mxu0
      %v2548 = vadd.f32 %v2403, %v2547
      %v2549 = vpop.f32.mrf.mxu0
      %2550 = vmatprep.mubr.f32.mxu0 0.0
      %2551 = vmatmul.mubr.f32.gmra.mxu0 %v2177
      %v2552 = vpop.f32.mrf.mxu0
      %v2553 = vadd.f32 %v2408, %v2552
      %v2554 = vpop.f32.mrf.mxu0
      %2555 = vmatprep.mubr.f32.mxu0 0.0
      %2556 = vmatmul.mubr.f32.gmra.mxu0 %v2180
      %v2557 = vpop.f32.mrf.mxu0
      %v2558 = vadd.f32 %v2413, %v2557
      %v2559 = vpop.f32.mrf.mxu0
      %2560 = vmatprep.mubr.f32.mxu0 0.0
      %2561 = vmatmul.mubr.f32.gmra.mxu0 %v2231
      %v2562 = vpop.f32.mrf.mxu0
      %v2563 = vadd.f32 %v2418, %v2562
      %v2564 = vpop.f32.mrf.mxu0
      %2565 = vmatprep.mubr.f32.mxu0 0.0
      %2566 = vmatmul.mubr.f32.gmra.mxu0 %v2234
      %v2567 = vpop.f32.mrf.mxu0
      %v2568 = vadd.f32 %v2423, %v2567
      %v2569 = vpop.f32.mrf.mxu0
      %2570 = vmatprep.mubr.f32.mxu0 0.0
      %2571 = vmatmul.mubr.f32.gmra.mxu0 %v2237
      %v2572 = vpop.f32.mrf.mxu0
      %v2573 = vadd.f32 %v2428, %v2572
      %v2574 = vpop.f32.mrf.mxu0
      %2575 = vdwg.mxu0
      %2576 = vmatprep.subr.mxu0 0.0
      %2577 = vmatpush1.msra.mxu0 %v2196
      %2578 = vmatprep.subr.mxu0 0.0
      %2579 = vmatpush1.msra.mxu0 %v2195
      %2580 = vmatprep.subr.mxu0 0.0
      %2581 = vmatpush1.msra.mxu0 %v2194
      %2582 = vmatprep.subr.mxu0 0.0
      %2583 = vmatpush1.msra.mxu0 %v2193
      %2584 = vmatprep.subr.mxu0 0.0
      %2585 = vmatpush1.msra.mxu0 %v2192
      %2586 = vmatprep.subr.mxu0 0.0
      %2587 = vmatpush1.msra.mxu0 %v2191
      %2588 = vmatprep.subr.mxu0 0.0
      %2589 = vmatpush1.msra.mxu0 %v2190
      %2590 = vmatprep.subr.mxu0 0.0
      %2591 = vmatpush1.msra.mxu0 %v2189
      %2592 = vmatprep.subr.mxu0 0.0
      %2593 = vmatpush1.msra.mxu0 %v2188
      %2594 = vmatprep.subr.mxu0 0.0
      %2595 = vmatpush1.msra.mxu0 %v2187
      %2596 = vmatprep.subr.mxu0 0.0
      %2597 = vmatpush1.msra.mxu0 %v2186
      %2598 = vmatprep.subr.mxu0 0.0
      %2599 = vmatpush1.msra.mxu0 %v2185
      %2600 = vmatprep.subr.mxu0 0.0
      %2601 = vmatpush1.msra.mxu0 %v2184
      %2602 = vmatprep.subr.mxu0 0.0
      %2603 = vmatpush1.msra.mxu0 %v2183
      %2604 = vmatprep.subr.mxu0 0.0
      %2605 = vmatpush1.msra.mxu0 %v2182
      %2606 = vmatprep.subr.mxu0 0.0
      %2607 = vmatpush1.msra.mxu0 %v2181
      %2608 = vmatprep.subr.mxu0 0.0
      %2609 = vmatpush2.msra.mxu0 %v2212
      %2610 = vmatprep.subr.mxu0 0.0
      %2611 = vmatpush2.msra.mxu0 %v2211
      %2612 = vmatprep.subr.mxu0 0.0
      %2613 = vmatpush2.msra.mxu0 %v2210
      %2614 = vmatprep.subr.mxu0 0.0
      %2615 = vmatpush2.msra.mxu0 %v2209
      %2616 = vmatprep.subr.mxu0 0.0
      %2617 = vmatpush2.msra.mxu0 %v2208
      %2618 = vmatprep.subr.mxu0 0.0
      %2619 = vmatpush2.msra.mxu0 %v2207
      %2620 = vmatprep.subr.mxu0 0.0
      %2621 = vmatpush2.msra.mxu0 %v2206
      %2622 = vmatprep.subr.mxu0 0.0
      %2623 = vmatpush2.msra.mxu0 %v2205
      %2624 = vmatprep.subr.mxu0 0.0
      %2625 = vmatpush2.msra.mxu0 %v2204
      %2626 = vmatprep.subr.mxu0 0.0
      %2627 = vmatpush2.msra.mxu0 %v2203
      %2628 = vmatprep.subr.mxu0 0.0
      %2629 = vmatpush2.msra.mxu0 %v2202
      %2630 = vmatprep.subr.mxu0 0.0
      %2631 = vmatpush2.msra.mxu0 %v2201
      %2632 = vmatprep.subr.mxu0 0.0
      %2633 = vmatpush2.msra.mxu0 %v2200
      %2634 = vmatprep.subr.mxu0 0.0
      %2635 = vmatpush2.msra.mxu0 %v2199
      %2636 = vmatprep.subr.mxu0 0.0
      %2637 = vmatpush2.msra.mxu0 %v2198
      %2638 = vmatprep.subr.mxu0 0.0
      %2639 = vmatpush2.msra.mxu0 %v2197
      %2640 = vmatprep.mubr.f32.mxu0 %v2134
      %2641 = vmatmul.mubr.f32.gmra.mxu0 %v2133
      %v2642 = vpop.f32.mrf.mxu0
      %v2643 = vadd.f32 %v2498, %v2642
      %v2644 = vpop.f32.mrf.mxu0
      %2645 = vmatprep.mubr.f32.mxu0 %v2137
      %2646 = vmatmul.mubr.f32.gmra.mxu0 %v2136
      %v2647 = vpop.f32.mrf.mxu0
      %v2648 = vadd.f32 %v2503, %v2647
      %v2649 = vpop.f32.mrf.mxu0
      %2650 = vmatprep.mubr.f32.mxu0 %v2140
      %2651 = vmatmul.mubr.f32.gmra.mxu0 %v2139
      %v2652 = vpop.f32.mrf.mxu0
      %v2653 = vadd.f32 %v2508, %v2652
      %v2654 = vpop.f32.mrf.mxu0
      %2655 = vmatprep.mubr.f32.mxu0 %v2143
      %2656 = vmatmul.mubr.f32.gmra.mxu0 %v2142
      %v2657 = vpop.f32.mrf.mxu0
      %v2658 = vadd.f32 %v2513, %v2657
      %v2659 = vpop.f32.mrf.mxu0
      %2660 = vmatprep.mubr.f32.mxu0 %v2146
      %2661 = vmatmul.mubr.f32.gmra.mxu0 %v2145
      %v2662 = vpop.f32.mrf.mxu0
      %v2663 = vadd.f32 %v2518, %v2662
      %v2664 = vpop.f32.mrf.mxu0
      %2665 = vmatprep.mubr.f32.mxu0 %v2149
      %2666 = vmatmul.mubr.f32.gmra.mxu0 %v2148
      %v2667 = vpop.f32.mrf.mxu0
      %v2668 = vadd.f32 %v2523, %v2667
      %v2669 = vpop.f32.mrf.mxu0
      %2670 = vmatprep.mubr.f32.mxu0 %v2152
      %2671 = vmatmul.mubr.f32.gmra.mxu0 %v2151
      %v2672 = vpop.f32.mrf.mxu0
      %v2673 = vadd.f32 %v2528, %v2672
      %v2674 = vpop.f32.mrf.mxu0
      %2675 = vmatprep.mubr.f32.mxu0 %v2155
      %2676 = vmatmul.mubr.f32.gmra.mxu0 %v2154
      %v2677 = vpop.f32.mrf.mxu0
      %v2678 = vadd.f32 %v2533, %v2677
      %v2679 = vpop.f32.mrf.mxu0
      %2680 = vmatprep.mubr.f32.mxu0 %v2158
      %2681 = vmatmul.mubr.f32.gmra.mxu0 %v2157
      %v2682 = vpop.f32.mrf.mxu0
      %v2683 = vadd.f32 %v2538, %v2682
      %v2684 = vpop.f32.mrf.mxu0
      %2685 = vmatprep.mubr.f32.mxu0 %v2161
      %2686 = vmatmul.mubr.f32.gmra.mxu0 %v2160
      %v2687 = vpop.f32.mrf.mxu0
      %v2688 = vadd.f32 %v2543, %v2687
      %v2689 = vpop.f32.mrf.mxu0
      %2690 = vmatprep.mubr.f32.mxu0 %v2164
      %2691 = vmatmul.mubr.f32.gmra.mxu0 %v2163
      %v2692 = vpop.f32.mrf.mxu0
      %v2693 = vadd.f32 %v2548, %v2692
      %v2694 = vpop.f32.mrf.mxu0
      %2695 = vmatprep.mubr.f32.mxu0 %v2167
      %2696 = vmatmul.mubr.f32.gmra.mxu0 %v2166
      %v2697 = vpop.f32.mrf.mxu0
      %v2698 = vadd.f32 %v2553, %v2697
      %v2699 = vpop.f32.mrf.mxu0
      %2700 = vmatprep.mubr.f32.mxu0 %v2170
      %2701 = vmatmul.mubr.f32.gmra.mxu0 %v2169
      %v2702 = vpop.f32.mrf.mxu0
      %v2703 = vadd.f32 %v2558, %v2702
      %v2704 = vpop.f32.mrf.mxu0
      %2705 = vmatprep.mubr.f32.mxu0 %v2173
      %2706 = vmatmul.mubr.f32.gmra.mxu0 %v2172
      %v2707 = vpop.f32.mrf.mxu0
      %v2708 = vadd.f32 %v2563, %v2707
      %v2709 = vpop.f32.mrf.mxu0
      %2710 = vmatprep.mubr.f32.mxu0 %v2176
      %2711 = vmatmul.mubr.f32.gmra.mxu0 %v2175
      %v2712 = vpop.f32.mrf.mxu0
      %v2713 = vadd.f32 %v2568, %v2712
      %v2714 = vpop.f32.mrf.mxu0
      %2715 = vmatprep.mubr.f32.mxu0 %v2179
      %2716 = vmatmul.mubr.f32.gmra.mxu0 %v2178
      %v2717 = vpop.f32.mrf.mxu0
      %v2718 = vadd.f32 %v2573, %v2717
      %v2719 = vpop.f32.mrf.mxu0
      %2720 = vdwg.mxu0
      %2721 = vmatprep.subr.mxu0 0.0
      %2722 = vmatpush1.msra.mxu0 %v2228
      %2723 = vmatprep.subr.mxu0 0.0
      %2724 = vmatpush1.msra.mxu0 %v2227
      %2725 = vmatprep.subr.mxu0 0.0
      %2726 = vmatpush1.msra.mxu0 %v2226
      %2727 = vmatprep.subr.mxu0 0.0
      %2728 = vmatpush1.msra.mxu0 %v2225
      %2729 = vmatprep.subr.mxu0 0.0
      %2730 = vmatpush1.msra.mxu0 %v2224
      %2731 = vmatprep.subr.mxu0 0.0
      %2732 = vmatpush1.msra.mxu0 %v2223
      %2733 = vmatprep.subr.mxu0 0.0
      %2734 = vmatpush1.msra.mxu0 %v2222
      %2735 = vmatprep.subr.mxu0 0.0
      %2736 = vmatpush1.msra.mxu0 %v2221
      %2737 = vmatprep.subr.mxu0 0.0
      %2738 = vmatpush1.msra.mxu0 %v2220
      %2739 = vmatprep.subr.mxu0 0.0
      %2740 = vmatpush1.msra.mxu0 %v2219
      %2741 = vmatprep.subr.mxu0 0.0
      %2742 = vmatpush1.msra.mxu0 %v2218
      %2743 = vmatprep.subr.mxu0 0.0
      %2744 = vmatpush1.msra.mxu0 %v2217
      %2745 = vmatprep.subr.mxu0 0.0
      %2746 = vmatpush1.msra.mxu0 %v2216
      %2747 = vmatprep.subr.mxu0 0.0
      %2748 = vmatpush1.msra.mxu0 %v2215
      %2749 = vmatprep.subr.mxu0 0.0
      %2750 = vmatpush1.msra.mxu0 %v2214
      %2751 = vmatprep.subr.mxu0 0.0
      %2752 = vmatpush1.msra.mxu0 %v2213
      %2753 = vmatprep.subr.mxu0 0.0
      %2754 = vmatpush2.msra.mxu0 0.0
      %2755 = vmatprep.subr.mxu0 0.0
      %2756 = vmatpush2.msra.mxu0 0.0
      %2757 = vmatprep.subr.mxu0 0.0
      %2758 = vmatpush2.msra.mxu0 0.0
      %2759 = vmatprep.subr.mxu0 0.0
      %2760 = vmatpush2.msra.mxu0 0.0
      %2761 = vmatprep.subr.mxu0 0.0
      %2762 = vmatpush2.msra.mxu0 0.0
      %2763 = vmatprep.subr.mxu0 0.0
      %2764 = vmatpush2.msra.mxu0 0.0
      %2765 = vmatprep.subr.mxu0 0.0
      %2766 = vmatpush2.msra.mxu0 0.0
      %2767 = vmatprep.subr.mxu0 0.0
      %2768 = vmatpush2.msra.mxu0 0.0
      %2769 = vmatprep.subr.mxu0 0.0
      %2770 = vmatpush2.msra.mxu0 0.0
      %2771 = vmatprep.subr.mxu0 0.0
      %2772 = vmatpush2.msra.mxu0 0.0
      %2773 = vmatprep.subr.mxu0 0.0
      %2774 = vmatpush2.msra.mxu0 0.0
      %2775 = vmatprep.subr.mxu0 0.0
      %2776 = vmatpush2.msra.mxu0 0.0
      %2777 = vmatprep.subr.mxu0 0.0
      %2778 = vmatpush2.msra.mxu0 0.0
      %2779 = vmatprep.subr.mxu0 0.0
      %2780 = vmatpush2.msra.mxu0 0.0
      %2781 = vmatprep.subr.mxu0 0.0
      %2782 = vmatpush2.msra.mxu0 0.0
      %2783 = vmatprep.subr.mxu0 0.0
      %2784 = vmatpush2.msra.mxu0 0.0
      %2785 = vmatprep.mubr.f32.mxu0 0.0
      %2786 = vmatmul.mubr.f32.gmra.mxu0 %v2135
      %v2787 = vpop.f32.mrf.mxu0
      %v2788 = vadd.f32 %v2643, %v2787
      %v2789 = vpop.f32.mrf.mxu0
      %2790 = vmatprep.mubr.f32.mxu0 0.0
      %2791 = vmatmul.mubr.f32.gmra.mxu0 %v2138
      %v2792 = vpop.f32.mrf.mxu0
      %v2793 = vadd.f32 %v2648, %v2792
      %v2794 = vpop.f32.mrf.mxu0
      %2795 = vmatprep.mubr.f32.mxu0 0.0
      %2796 = vmatmul.mubr.f32.gmra.mxu0 %v2141
      %v2797 = vpop.f32.mrf.mxu0
      %v2798 = vadd.f32 %v2653, %v2797
      %v2799 = vpop.f32.mrf.mxu0
      %2800 = vmatprep.mubr.f32.mxu0 0.0
      %2801 = vmatmul.mubr.f32.gmra.mxu0 %v2144
      %v2802 = vpop.f32.mrf.mxu0
      %v2803 = vadd.f32 %v2658, %v2802
      %v2804 = vpop.f32.mrf.mxu0
      %2805 = vmatprep.mubr.f32.mxu0 0.0
      %2806 = vmatmul.mubr.f32.gmra.mxu0 %v2147
      %v2807 = vpop.f32.mrf.mxu0
      %v2808 = vadd.f32 %v2663, %v2807
      %v2809 = vpop.f32.mrf.mxu0
      %2810 = vmatprep.mubr.f32.mxu0 0.0
      %2811 = vmatmul.mubr.f32.gmra.mxu0 %v2150
      %v2812 = vpop.f32.mrf.mxu0
      %v2813 = vadd.f32 %v2668, %v2812
      %v2814 = vpop.f32.mrf.mxu0
      %2815 = vmatprep.mubr.f32.mxu0 0.0
      %2816 = vmatmul.mubr.f32.gmra.mxu0 %v2153
      %v2817 = vpop.f32.mrf.mxu0
      %v2818 = vadd.f32 %v2673, %v2817
      %v2819 = vpop.f32.mrf.mxu0
      %2820 = vmatprep.mubr.f32.mxu0 0.0
      %2821 = vmatmul.mubr.f32.gmra.mxu0 %v2156
      %v2822 = vpop.f32.mrf.mxu0
      %v2823 = vadd.f32 %v2678, %v2822
      %v2824 = vpop.f32.mrf.mxu0
      %2825 = vmatprep.mubr.f32.mxu0 0.0
      %2826 = vmatmul.mubr.f32.gmra.mxu0 %v2159
      %v2827 = vpop.f32.mrf.mxu0
      %v2828 = vadd.f32 %v2683, %v2827
      %v2829 = vpop.f32.mrf.mxu0
      %2830 = vmatprep.mubr.f32.mxu0 0.0
      %2831 = vmatmul.mubr.f32.gmra.mxu0 %v2162
      %v2832 = vpop.f32.mrf.mxu0
      %v2833 = vadd.f32 %v2688, %v2832
      %v2834 = vpop.f32.mrf.mxu0
      %2835 = vmatprep.mubr.f32.mxu0 0.0
      %2836 = vmatmul.mubr.f32.gmra.mxu0 %v2165
      %v2837 = vpop.f32.mrf.mxu0
      %v2838 = vadd.f32 %v2693, %v2837
      %v2839 = vpop.f32.mrf.mxu0
      %2840 = vmatprep.mubr.f32.mxu0 0.0
      %2841 = vmatmul.mubr.f32.gmra.mxu0 %v2168
      %v2842 = vpop.f32.mrf.mxu0
      %v2843 = vadd.f32 %v2698, %v2842
      %v2844 = vpop.f32.mrf.mxu0
      %2845 = vmatprep.mubr.f32.mxu0 0.0
      %2846 = vmatmul.mubr.f32.gmra.mxu0 %v2171
      %v2847 = vpop.f32.mrf.mxu0
      %v2848 = vadd.f32 %v2703, %v2847
      %v2849 = vpop.f32.mrf.mxu0
      %2850 = vmatprep.mubr.f32.mxu0 0.0
      %2851 = vmatmul.mubr.f32.gmra.mxu0 %v2174
      %v2852 = vpop.f32.mrf.mxu0
      %v2853 = vadd.f32 %v2708, %v2852
      %v2854 = vpop.f32.mrf.mxu0
      %2855 = vmatprep.mubr.f32.mxu0 0.0
      %2856 = vmatmul.mubr.f32.gmra.mxu0 %v2177
      %v2857 = vpop.f32.mrf.mxu0
      %v2858 = vadd.f32 %v2713, %v2857
      %v2859 = vpop.f32.mrf.mxu0
      %2860 = vmatprep.mubr.f32.mxu0 0.0
      %2861 = vmatmul.mubr.f32.gmra.mxu0 %v2180
      %v2862 = vpop.f32.mrf.mxu0
      %v2863 = vadd.f32 %v2718, %v2862
      %v2864 = vpop.f32.mrf.mxu0
      %2865 = vdwg.mxu0
      %v2866 = vld [vmem:[#allocation2 + $0x210] sm:$0xff]
      %v2867 = vld [vmem:[#allocation2 + $0x218] sm:$0xff]
      %v2868 = vld [vmem:[#allocation2 + $0x220] sm:$0xff]
      %v2869 = vld [vmem:[#allocation2 + $0x228] sm:$0xff]
      %v2870 = vld [vmem:[#allocation2 + $0x230] sm:$0xff]
      %v2871 = vld [vmem:[#allocation2 + $0x238] sm:$0xff]
      %v2872 = vld [vmem:[#allocation2 + $0x240] sm:$0xff]
      %v2873 = vld [vmem:[#allocation2 + $0x248] sm:$0xff]
      %v2874 = vld [vmem:[#allocation2 + $0x250] sm:$0xff]
      %v2875 = vld [vmem:[#allocation2 + $0x258] sm:$0xff]
      %v2876 = vld [vmem:[#allocation2 + $0x260] sm:$0xff]
      %v2877 = vld [vmem:[#allocation2 + $0x268] sm:$0xff]
      %v2878 = vld [vmem:[#allocation2 + $0x270] sm:$0xff]
      %v2879 = vld [vmem:[#allocation2 + $0x278] sm:$0xff]
      %v2880 = vld [vmem:[#allocation2 + $0x280] sm:$0xff]
      %v2881 = vld [vmem:[#allocation2 + $0x288] sm:$0xff]
      %v2882 = vld [vmem:[#allocation2 + $0x290] sm:$0xff]
      %v2883 = vld [vmem:[#allocation2 + $0x298] sm:$0xff]
      %v2884 = vld [vmem:[#allocation2 + $0x2a0] sm:$0xff]
      %v2885 = vld [vmem:[#allocation2 + $0x2a8] sm:$0xff]
      %v2886 = vld [vmem:[#allocation2 + $0x2b0] sm:$0xff]
      %v2887 = vld [vmem:[#allocation2 + $0x2b8] sm:$0xff]
      %v2888 = vld [vmem:[#allocation2 + $0x2c0] sm:$0xff]
      %v2889 = vld [vmem:[#allocation2 + $0x2c8] sm:$0xff]
      %v2890 = vld [vmem:[#allocation2 + $0x2d0] sm:$0xff]
      %v2891 = vld [vmem:[#allocation2 + $0x2d8] sm:$0xff]
      %v2892 = vld [vmem:[#allocation2 + $0x2e0] sm:$0xff]
      %v2893 = vld [vmem:[#allocation2 + $0x2e8] sm:$0xff]
      %v2894 = vld [vmem:[#allocation2 + $0x2f0] sm:$0xff]
      %v2895 = vld [vmem:[#allocation2 + $0x2f8] sm:$0xff]
      %v2896 = vld [vmem:[#allocation2 + $0x300] sm:$0xff]
      %v2897 = vld [vmem:[#allocation2 + $0x308] sm:$0xff]
      %v2898 = vld [vmem:[#allocation2 + $0x310] sm:$0xff]
      %v2899 = vld [vmem:[#allocation2 + $0x318] sm:$0xff]
      %v2900 = vld [vmem:[#allocation2 + $0x320] sm:$0xff]
      %v2901 = vld [vmem:[#allocation2 + $0x328] sm:$0xff]
      %v2902 = vld [vmem:[#allocation2 + $0x330] sm:$0xff]
      %v2903 = vld [vmem:[#allocation2 + $0x338] sm:$0xff]
      %v2904 = vld [vmem:[#allocation2 + $0x340] sm:$0xff]
      %v2905 = vld [vmem:[#allocation2 + $0x348] sm:$0xff]
      %v2906 = vld [vmem:[#allocation2 + $0x350] sm:$0xff]
      %v2907 = vld [vmem:[#allocation2 + $0x358] sm:$0xff]
      %v2908 = vld [vmem:[#allocation2 + $0x360] sm:$0xff]
      %v2909 = vld [vmem:[#allocation2 + $0x368] sm:$0xff]
      %v2910 = vld [vmem:[#allocation2 + $0x370] sm:$0xff]
      %v2911 = vld [vmem:[#allocation2 + $0x378] sm:$0xff]
      %v2912 = vld [vmem:[#allocation2 + $0x380] sm:$0xff]
      %v2913 = vld [vmem:[#allocation2 + $0x388] sm:$0xff]
      %v2914 = vld [vmem:[%s1339] sm:$0xff]
      %v2915 = vld [vmem:[%s1339 + $0x8] sm:$0xff]
      %v2916 = vld [vmem:[%s1339 + $0x10] sm:$0xff]
      %v2917 = vld [vmem:[%s1339 + $0x18] sm:$0xff]
      %v2918 = vld [vmem:[%s1339 + $0x20] sm:$0xff]
      %v2919 = vld [vmem:[%s1339 + $0x28] sm:$0xff]
      %v2920 = vld [vmem:[%s1339 + $0x30] sm:$0xff]
      %v2921 = vld [vmem:[%s1339 + $0x38] sm:$0xff]
      %v2922 = vld [vmem:[%s1339 + $0x40] sm:$0xff]
      %v2923 = vld [vmem:[%s1339 + $0x48] sm:$0xff]
      %v2924 = vld [vmem:[%s1339 + $0x50] sm:$0xff]
      %v2925 = vld [vmem:[%s1339 + $0x58] sm:$0xff]
      %v2926 = vld [vmem:[%s1339 + $0x60] sm:$0xff]
      %v2927 = vld [vmem:[%s1339 + $0x68] sm:$0xff]
      %v2928 = vld [vmem:[%s1339 + $0x70] sm:$0xff]
      %v2929 = vld [vmem:[%s1339 + $0x78] sm:$0xff]
      %v2930 = vld [vmem:[%s1339 + $0x80] sm:$0xff]
      %v2931 = vld [vmem:[%s1339 + $0x88] sm:$0xff]
      %v2932 = vld [vmem:[%s1339 + $0x90] sm:$0xff]
      %v2933 = vld [vmem:[%s1339 + $0x98] sm:$0xff]
      %v2934 = vld [vmem:[%s1339 + $0xa0] sm:$0xff]
      %v2935 = vld [vmem:[%s1339 + $0xa8] sm:$0xff]
      %v2936 = vld [vmem:[%s1339 + $0xb0] sm:$0xff]
      %v2937 = vld [vmem:[%s1339 + $0xb8] sm:$0xff]
      %v2938 = vld [vmem:[%s1339 + $0xc0] sm:$0xff]
      %v2939 = vld [vmem:[%s1339 + $0xc8] sm:$0xff]
      %v2940 = vld [vmem:[%s1339 + $0xd0] sm:$0xff]
      %v2941 = vld [vmem:[%s1339 + $0xd8] sm:$0xff]
      %v2942 = vld [vmem:[%s1339 + $0xe0] sm:$0xff]
      %v2943 = vld [vmem:[%s1339 + $0xe8] sm:$0xff]
      %v2944 = vld [vmem:[%s1339 + $0xf0] sm:$0xff]
      %v2945 = vld [vmem:[%s1339 + $0xf8] sm:$0xff]
      %v2946 = vld [vmem:[%s1339 + $0x100] sm:$0xff]
      %v2947 = vld [vmem:[%s1339 + $0x108] sm:$0xff]
      %v2948 = vld [vmem:[%s1339 + $0x110] sm:$0xff]
      %v2949 = vld [vmem:[%s1339 + $0x118] sm:$0xff]
      %v2950 = vld [vmem:[%s1339 + $0x120] sm:$0xff]
      %v2951 = vld [vmem:[%s1339 + $0x128] sm:$0xff]
      %v2952 = vld [vmem:[%s1339 + $0x130] sm:$0xff]
      %v2953 = vld [vmem:[%s1339 + $0x138] sm:$0xff]
      %v2954 = vld [vmem:[%s1339 + $0x140] sm:$0xff]
      %v2955 = vld [vmem:[%s1339 + $0x148] sm:$0xff]
      %v2956 = vld [vmem:[%s1339 + $0x150] sm:$0xff]
      %v2957 = vld [vmem:[%s1339 + $0x158] sm:$0xff]
      %v2958 = vld [vmem:[%s1339 + $0x160] sm:$0xff]
      %v2959 = vld [vmem:[%s1339 + $0x168] sm:$0xff]
      %v2960 = vld [vmem:[%s1339 + $0x170] sm:$0xff]
      %v2961 = vld [vmem:[%s1339 + $0x178] sm:$0xff]
      %2962 = vmatprep.subr.mxu0 0.0
      %2963 = vmatpush1.msra.mxu0 %v2929
      %2964 = vmatprep.subr.mxu0 0.0
      %2965 = vmatpush1.msra.mxu0 %v2928
      %2966 = vmatprep.subr.mxu0 0.0
      %2967 = vmatpush1.msra.mxu0 %v2927
      %2968 = vmatprep.subr.mxu0 0.0
      %2969 = vmatpush1.msra.mxu0 %v2926
      %2970 = vmatprep.subr.mxu0 0.0
      %2971 = vmatpush1.msra.mxu0 %v2925
      %2972 = vmatprep.subr.mxu0 0.0
      %2973 = vmatpush1.msra.mxu0 %v2924
      %2974 = vmatprep.subr.mxu0 0.0
      %2975 = vmatpush1.msra.mxu0 %v2923
      %2976 = vmatprep.subr.mxu0 0.0
      %2977 = vmatpush1.msra.mxu0 %v2922
      %2978 = vmatprep.subr.mxu0 0.0
      %2979 = vmatpush1.msra.mxu0 %v2921
      %2980 = vmatprep.subr.mxu0 0.0
      %2981 = vmatpush1.msra.mxu0 %v2920
      %2982 = vmatprep.subr.mxu0 0.0
      %2983 = vmatpush1.msra.mxu0 %v2919
      %2984 = vmatprep.subr.mxu0 0.0
      %2985 = vmatpush1.msra.mxu0 %v2918
      %2986 = vmatprep.subr.mxu0 0.0
      %2987 = vmatpush1.msra.mxu0 %v2917
      %2988 = vmatprep.subr.mxu0 0.0
      %2989 = vmatpush1.msra.mxu0 %v2916
      %2990 = vmatprep.subr.mxu0 0.0
      %2991 = vmatpush1.msra.mxu0 %v2915
      %2992 = vmatprep.subr.mxu0 0.0
      %2993 = vmatpush1.msra.mxu0 %v2914
      %2994 = vmatprep.subr.mxu0 0.0
      %2995 = vmatpush2.msra.mxu0 %v2945
      %2996 = vmatprep.subr.mxu0 0.0
      %2997 = vmatpush2.msra.mxu0 %v2944
      %2998 = vmatprep.subr.mxu0 0.0
      %2999 = vmatpush2.msra.mxu0 %v2943
      %3000 = vmatprep.subr.mxu0 0.0
      %3001 = vmatpush2.msra.mxu0 %v2942
      %3002 = vmatprep.subr.mxu0 0.0
      %3003 = vmatpush2.msra.mxu0 %v2941
      %3004 = vmatprep.subr.mxu0 0.0
      %3005 = vmatpush2.msra.mxu0 %v2940
      %3006 = vmatprep.subr.mxu0 0.0
      %3007 = vmatpush2.msra.mxu0 %v2939
      %3008 = vmatprep.subr.mxu0 0.0
      %3009 = vmatpush2.msra.mxu0 %v2938
      %3010 = vmatprep.subr.mxu0 0.0
      %3011 = vmatpush2.msra.mxu0 %v2937
      %3012 = vmatprep.subr.mxu0 0.0
      %3013 = vmatpush2.msra.mxu0 %v2936
      %3014 = vmatprep.subr.mxu0 0.0
      %3015 = vmatpush2.msra.mxu0 %v2935
      %3016 = vmatprep.subr.mxu0 0.0
      %3017 = vmatpush2.msra.mxu0 %v2934
      %3018 = vmatprep.subr.mxu0 0.0
      %3019 = vmatpush2.msra.mxu0 %v2933
      %3020 = vmatprep.subr.mxu0 0.0
      %3021 = vmatpush2.msra.mxu0 %v2932
      %3022 = vmatprep.subr.mxu0 0.0
      %3023 = vmatpush2.msra.mxu0 %v2931
      %3024 = vmatprep.subr.mxu0 0.0
      %3025 = vmatpush2.msra.mxu0 %v2930
      %3026 = vmatprep.mubr.f32.mxu0 %v2867
      %3027 = vmatmul.mubr.f32.gmra.mxu0 %v2866
      %v3028 = vpop.f32.mrf.mxu0
      %v3029 = vadd.f32 0.0, %v3028
      %v3030 = vpop.f32.mrf.mxu0
      %3031 = vmatprep.mubr.f32.mxu0 %v2870
      %3032 = vmatmul.mubr.f32.gmra.mxu0 %v2869
      %v3033 = vpop.f32.mrf.mxu0
      %v3034 = vadd.f32 0.0, %v3033
      %v3035 = vpop.f32.mrf.mxu0
      %3036 = vmatprep.mubr.f32.mxu0 %v2873
      %3037 = vmatmul.mubr.f32.gmra.mxu0 %v2872
      %v3038 = vpop.f32.mrf.mxu0
      %v3039 = vadd.f32 0.0, %v3038
      %v3040 = vpop.f32.mrf.mxu0
      %3041 = vmatprep.mubr.f32.mxu0 %v2876
      %3042 = vmatmul.mubr.f32.gmra.mxu0 %v2875
      %v3043 = vpop.f32.mrf.mxu0
      %v3044 = vadd.f32 0.0, %v3043
      %v3045 = vpop.f32.mrf.mxu0
      %3046 = vmatprep.mubr.f32.mxu0 %v2879
      %3047 = vmatmul.mubr.f32.gmra.mxu0 %v2878
      %v3048 = vpop.f32.mrf.mxu0
      %v3049 = vadd.f32 0.0, %v3048
      %v3050 = vpop.f32.mrf.mxu0
      %3051 = vmatprep.mubr.f32.mxu0 %v2882
      %3052 = vmatmul.mubr.f32.gmra.mxu0 %v2881
      %v3053 = vpop.f32.mrf.mxu0
      %v3054 = vadd.f32 0.0, %v3053
      %v3055 = vpop.f32.mrf.mxu0
      %3056 = vmatprep.mubr.f32.mxu0 %v2885
      %3057 = vmatmul.mubr.f32.gmra.mxu0 %v2884
      %v3058 = vpop.f32.mrf.mxu0
      %v3059 = vadd.f32 0.0, %v3058
      %v3060 = vpop.f32.mrf.mxu0
      %3061 = vmatprep.mubr.f32.mxu0 %v2888
      %3062 = vmatmul.mubr.f32.gmra.mxu0 %v2887
      %v3063 = vpop.f32.mrf.mxu0
      %v3064 = vadd.f32 0.0, %v3063
      %v3065 = vpop.f32.mrf.mxu0
      %3066 = vmatprep.mubr.f32.mxu0 %v2891
      %3067 = vmatmul.mubr.f32.gmra.mxu0 %v2890
      %v3068 = vpop.f32.mrf.mxu0
      %v3069 = vadd.f32 0.0, %v3068
      %v3070 = vpop.f32.mrf.mxu0
      %3071 = vmatprep.mubr.f32.mxu0 %v2894
      %3072 = vmatmul.mubr.f32.gmra.mxu0 %v2893
      %v3073 = vpop.f32.mrf.mxu0
      %v3074 = vadd.f32 0.0, %v3073
      %v3075 = vpop.f32.mrf.mxu0
      %3076 = vmatprep.mubr.f32.mxu0 %v2897
      %3077 = vmatmul.mubr.f32.gmra.mxu0 %v2896
      %v3078 = vpop.f32.mrf.mxu0
      %v3079 = vadd.f32 0.0, %v3078
      %v3080 = vpop.f32.mrf.mxu0
      %3081 = vmatprep.mubr.f32.mxu0 %v2900
      %3082 = vmatmul.mubr.f32.gmra.mxu0 %v2899
      %v3083 = vpop.f32.mrf.mxu0
      %v3084 = vadd.f32 0.0, %v3083
      %v3085 = vpop.f32.mrf.mxu0
      %3086 = vmatprep.mubr.f32.mxu0 %v2903
      %3087 = vmatmul.mubr.f32.gmra.mxu0 %v2902
      %v3088 = vpop.f32.mrf.mxu0
      %v3089 = vadd.f32 0.0, %v3088
      %v3090 = vpop.f32.mrf.mxu0
      %3091 = vmatprep.mubr.f32.mxu0 %v2906
      %3092 = vmatmul.mubr.f32.gmra.mxu0 %v2905
      %v3093 = vpop.f32.mrf.mxu0
      %v3094 = vadd.f32 0.0, %v3093
      %v3095 = vpop.f32.mrf.mxu0
      %3096 = vmatprep.mubr.f32.mxu0 %v2909
      %3097 = vmatmul.mubr.f32.gmra.mxu0 %v2908
      %v3098 = vpop.f32.mrf.mxu0
      %v3099 = vadd.f32 0.0, %v3098
      %v3100 = vpop.f32.mrf.mxu0
      %3101 = vmatprep.mubr.f32.mxu0 %v2912
      %3102 = vmatmul.mubr.f32.gmra.mxu0 %v2911
      %v3103 = vpop.f32.mrf.mxu0
      %v3104 = vadd.f32 0.0, %v3103
      %v3105 = vpop.f32.mrf.mxu0
      %3106 = vdwg.mxu0
      %3107 = vmatprep.subr.mxu0 0.0
      %3108 = vmatpush1.msra.mxu0 %v2961
      %3109 = vmatprep.subr.mxu0 0.0
      %3110 = vmatpush1.msra.mxu0 %v2960
      %3111 = vmatprep.subr.mxu0 0.0
      %3112 = vmatpush1.msra.mxu0 %v2959
      %3113 = vmatprep.subr.mxu0 0.0
      %3114 = vmatpush1.msra.mxu0 %v2958
      %3115 = vmatprep.subr.mxu0 0.0
      %3116 = vmatpush1.msra.mxu0 %v2957
      %3117 = vmatprep.subr.mxu0 0.0
      %3118 = vmatpush1.msra.mxu0 %v2956
      %3119 = vmatprep.subr.mxu0 0.0
      %3120 = vmatpush1.msra.mxu0 %v2955
      %3121 = vmatprep.subr.mxu0 0.0
      %3122 = vmatpush1.msra.mxu0 %v2954
      %3123 = vmatprep.subr.mxu0 0.0
      %3124 = vmatpush1.msra.mxu0 %v2953
      %3125 = vmatprep.subr.mxu0 0.0
      %3126 = vmatpush1.msra.mxu0 %v2952
      %3127 = vmatprep.subr.mxu0 0.0
      %3128 = vmatpush1.msra.mxu0 %v2951
      %3129 = vmatprep.subr.mxu0 0.0
      %3130 = vmatpush1.msra.mxu0 %v2950
      %3131 = vmatprep.subr.mxu0 0.0
      %3132 = vmatpush1.msra.mxu0 %v2949
      %3133 = vmatprep.subr.mxu0 0.0
      %3134 = vmatpush1.msra.mxu0 %v2948
      %3135 = vmatprep.subr.mxu0 0.0
      %3136 = vmatpush1.msra.mxu0 %v2947
      %3137 = vmatprep.subr.mxu0 0.0
      %3138 = vmatpush1.msra.mxu0 %v2946
      %3139 = vmatprep.subr.mxu0 0.0
      %3140 = vmatpush2.msra.mxu0 0.0
      %3141 = vmatprep.subr.mxu0 0.0
      %3142 = vmatpush2.msra.mxu0 0.0
      %3143 = vmatprep.subr.mxu0 0.0
      %3144 = vmatpush2.msra.mxu0 0.0
      %3145 = vmatprep.subr.mxu0 0.0
      %3146 = vmatpush2.msra.mxu0 0.0
      %3147 = vmatprep.subr.mxu0 0.0
      %3148 = vmatpush2.msra.mxu0 0.0
      %3149 = vmatprep.subr.mxu0 0.0
      %3150 = vmatpush2.msra.mxu0 0.0
      %3151 = vmatprep.subr.mxu0 0.0
      %3152 = vmatpush2.msra.mxu0 0.0
      %3153 = vmatprep.subr.mxu0 0.0
      %3154 = vmatpush2.msra.mxu0 0.0
      %3155 = vmatprep.subr.mxu0 0.0
      %3156 = vmatpush2.msra.mxu0 0.0
      %3157 = vmatprep.subr.mxu0 0.0
      %3158 = vmatpush2.msra.mxu0 0.0
      %3159 = vmatprep.subr.mxu0 0.0
      %3160 = vmatpush2.msra.mxu0 0.0
      %3161 = vmatprep.subr.mxu0 0.0
      %3162 = vmatpush2.msra.mxu0 0.0
      %3163 = vmatprep.subr.mxu0 0.0
      %3164 = vmatpush2.msra.mxu0 0.0
      %3165 = vmatprep.subr.mxu0 0.0
      %3166 = vmatpush2.msra.mxu0 0.0
      %3167 = vmatprep.subr.mxu0 0.0
      %3168 = vmatpush2.msra.mxu0 0.0
      %3169 = vmatprep.subr.mxu0 0.0
      %3170 = vmatpush2.msra.mxu0 0.0
      %3171 = vmatprep.mubr.f32.mxu0 0.0
      %3172 = vmatmul.mubr.f32.gmra.mxu0 %v2868
      %v3173 = vpop.f32.mrf.mxu0
      %v3174 = vadd.f32 %v3029, %v3173
      %v3175 = vpop.f32.mrf.mxu0
      %3176 = vmatprep.mubr.f32.mxu0 0.0
      %3177 = vmatmul.mubr.f32.gmra.mxu0 %v2871
      %v3178 = vpop.f32.mrf.mxu0
      %v3179 = vadd.f32 %v3034, %v3178
      %v3180 = vpop.f32.mrf.mxu0
      %3181 = vmatprep.mubr.f32.mxu0 0.0
      %3182 = vmatmul.mubr.f32.gmra.mxu0 %v2874
      %v3183 = vpop.f32.mrf.mxu0
      %v3184 = vadd.f32 %v3039, %v3183
      %v3185 = vpop.f32.mrf.mxu0
      %3186 = vmatprep.mubr.f32.mxu0 0.0
      %3187 = vmatmul.mubr.f32.gmra.mxu0 %v2877
      %v3188 = vpop.f32.mrf.mxu0
      %v3189 = vadd.f32 %v3044, %v3188
      %v3190 = vpop.f32.mrf.mxu0
      %3191 = vmatprep.mubr.f32.mxu0 0.0
      %3192 = vmatmul.mubr.f32.gmra.mxu0 %v2880
      %v3193 = vpop.f32.mrf.mxu0
      %v3194 = vadd.f32 %v3049, %v3193
      %v3195 = vpop.f32.mrf.mxu0
      %3196 = vmatprep.mubr.f32.mxu0 0.0
      %3197 = vmatmul.mubr.f32.gmra.mxu0 %v2883
      %v3198 = vpop.f32.mrf.mxu0
      %v3199 = vadd.f32 %v3054, %v3198
      %v3200 = vpop.f32.mrf.mxu0
      %3201 = vmatprep.mubr.f32.mxu0 0.0
      %3202 = vmatmul.mubr.f32.gmra.mxu0 %v2886
      %v3203 = vpop.f32.mrf.mxu0
      %v3204 = vadd.f32 %v3059, %v3203
      %v3205 = vpop.f32.mrf.mxu0
      %3206 = vmatprep.mubr.f32.mxu0 0.0
      %3207 = vmatmul.mubr.f32.gmra.mxu0 %v2889
      %v3208 = vpop.f32.mrf.mxu0
      %v3209 = vadd.f32 %v3064, %v3208
      %v3210 = vpop.f32.mrf.mxu0
      %3211 = vmatprep.mubr.f32.mxu0 0.0
      %3212 = vmatmul.mubr.f32.gmra.mxu0 %v2892
      %v3213 = vpop.f32.mrf.mxu0
      %v3214 = vadd.f32 %v3069, %v3213
      %v3215 = vpop.f32.mrf.mxu0
      %3216 = vmatprep.mubr.f32.mxu0 0.0
      %3217 = vmatmul.mubr.f32.gmra.mxu0 %v2895
      %v3218 = vpop.f32.mrf.mxu0
      %v3219 = vadd.f32 %v3074, %v3218
      %v3220 = vpop.f32.mrf.mxu0
      %3221 = vmatprep.mubr.f32.mxu0 0.0
      %3222 = vmatmul.mubr.f32.gmra.mxu0 %v2898
      %v3223 = vpop.f32.mrf.mxu0
      %v3224 = vadd.f32 %v3079, %v3223
      %v3225 = vpop.f32.mrf.mxu0
      %3226 = vmatprep.mubr.f32.mxu0 0.0
      %3227 = vmatmul.mubr.f32.gmra.mxu0 %v2901
      %v3228 = vpop.f32.mrf.mxu0
      %v3229 = vadd.f32 %v3084, %v3228
      %v3230 = vpop.f32.mrf.mxu0
      %3231 = vmatprep.mubr.f32.mxu0 0.0
      %3232 = vmatmul.mubr.f32.gmra.mxu0 %v2904
      %v3233 = vpop.f32.mrf.mxu0
      %v3234 = vadd.f32 %v3089, %v3233
      %v3235 = vpop.f32.mrf.mxu0
      %3236 = vmatprep.mubr.f32.mxu0 0.0
      %3237 = vmatmul.mubr.f32.gmra.mxu0 %v2907
      %v3238 = vpop.f32.mrf.mxu0
      %v3239 = vadd.f32 %v3094, %v3238
      %v3240 = vpop.f32.mrf.mxu0
      %3241 = vmatprep.mubr.f32.mxu0 0.0
      %3242 = vmatmul.mubr.f32.gmra.mxu0 %v2910
      %v3243 = vpop.f32.mrf.mxu0
      %v3244 = vadd.f32 %v3099, %v3243
      %v3245 = vpop.f32.mrf.mxu0
      %3246 = vmatprep.mubr.f32.mxu0 0.0
      %3247 = vmatmul.mubr.f32.gmra.mxu0 %v2913
      %v3248 = vpop.f32.mrf.mxu0
      %v3249 = vadd.f32 %v3104, %v3248
      %v3250 = vpop.f32.mrf.mxu0
      %3251 = vdwg.mxu0
      %v3252 = vadd.f32 %v2788, %v3174
      %v3253 = vadd.f32 %v2793, %v3179
      %v3254 = vadd.f32 %v2798, %v3184
      %v3255 = vadd.f32 %v2803, %v3189
      %v3256 = vadd.f32 %v2808, %v3194
      %v3257 = vadd.f32 %v2813, %v3199
      %v3258 = vadd.f32 %v2818, %v3204
      %v3259 = vadd.f32 %v2823, %v3209
      %v3260 = vadd.f32 %v2828, %v3214
      %v3261 = vadd.f32 %v2833, %v3219
      %v3262 = vadd.f32 %v2838, %v3224
      %v3263 = vadd.f32 %v2843, %v3229
      %v3264 = vadd.f32 %v2848, %v3234
      %v3265 = vadd.f32 %v2853, %v3239
      %v3266 = vadd.f32 %v2858, %v3244
      %v3267 = vadd.f32 %v2863, %v3249
      %v3268 = vld [vmem:[%s2] sm:$0x1]
      %v3270 = vlaneseq
      %v3271 = vshrl.u32 %v3270, 7
      %v3272 = vsub.s32 0, %v3271
      %v3273 = vrot.slane %v3268, %v3272
      %v3275 = vadd.f32 %v3252, %v3273
      %v3276 = vadd.f32 %v3253, %v3273
      %v3277 = vadd.f32 %v3254, %v3273
      %v3278 = vadd.f32 %v3255, %v3273
      %v3279 = vadd.f32 %v3256, %v3273
      %v3280 = vadd.f32 %v3257, %v3273
      %v3281 = vadd.f32 %v3258, %v3273
      %v3282 = vadd.f32 %v3259, %v3273
      %v3283 = vadd.f32 %v3260, %v3273
      %v3284 = vadd.f32 %v3261, %v3273
      %v3285 = vadd.f32 %v3262, %v3273
      %v3286 = vadd.f32 %v3263, %v3273
      %v3287 = vadd.f32 %v3264, %v3273
      %v3288 = vadd.f32 %v3265, %v3273
      %v3289 = vadd.f32 %v3266, %v3273
      %v3290 = vadd.f32 %v3267, %v3273
      %v3291 = vmax.f32 %v3275, 0.0
      %v3292 = vmax.f32 %v3276, 0.0
      %v3293 = vmax.f32 %v3277, 0.0
      %v3294 = vmax.f32 %v3278, 0.0
      %v3295 = vmax.f32 %v3279, 0.0
      %v3296 = vmax.f32 %v3280, 0.0
      %v3297 = vmax.f32 %v3281, 0.0
      %v3298 = vmax.f32 %v3282, 0.0
      %v3299 = vmax.f32 %v3283, 0.0
      %v3300 = vmax.f32 %v3284, 0.0
      %v3301 = vmax.f32 %v3285, 0.0
      %v3302 = vmax.f32 %v3286, 0.0
      %v3303 = vmax.f32 %v3287, 0.0
      %v3304 = vmax.f32 %v3288, 0.0
      %v3305 = vmax.f32 %v3289, 0.0
      %v3306 = vmax.f32 %v3290, 0.0
      %v3307 = vadd.s32 %v1734, 152
      %v3308 = vadd.s32 %v1735, 152
      %v3309 = vadd.s32 %v1736, 152
      %v3310 = vadd.s32 %v1737, 152
      %v3311 = vadd.s32 %v1738, 152
      %v3312 = vadd.s32 %v1739, 152
      %v3313 = vadd.s32 %v1740, 152
      %v3314 = vadd.s32 %v1741, 152
      %v3315 = vadd.s32 %v1742, 152
      %v3316 = vadd.s32 %v1743, 152
      %v3317 = vadd.s32 %v1744, 152
      %v3318 = vadd.s32 %v1745, 152
      %v3319 = vadd.s32 %v1746, 152
      %v3320 = vadd.s32 %v1747, 152
      %v3321 = vadd.s32 %v1748, 152
      %v3322 = vadd.s32 %v1749, 152
      %vm3323 = vcmp.lt.s32.totalorder %v3307, 0
      %v3324 = vsub.s32 0, %v3307
      %v3325 = vsel %vm3323, %v3324, %v3307
      %v3326 = vmul.u32.u64.compose %v3325, 2863311531
      %v3327 = vextract.low.u32 %v3326
      %v3328 = vextract.high.u32 %v3326
      %v3329 = vshrl.u32 %v3328, 4
      %v3330 = vmul.u32 %v3329, 24
      %v3331 = vsub.s32 %v3325, %v3330
      %v3332 = vsub.s32 0, %v3331
      %v3333 = vsel %vm3323, %v3332, %v3331
      %vm3334 = vcmp.lt.s32.totalorder %v3308, 0
      %v3335 = vsub.s32 0, %v3308
      %v3336 = vsel %vm3334, %v3335, %v3308
      %v3337 = vmul.u32.u64.compose %v3336, 2863311531
      %v3338 = vextract.low.u32 %v3337
      %v3339 = vextract.high.u32 %v3337
      %v3340 = vshrl.u32 %v3339, 4
      %v3341 = vmul.u32 %v3340, 24
      %v3342 = vsub.s32 %v3336, %v3341
      %v3343 = vsub.s32 0, %v3342
      %v3344 = vsel %vm3334, %v3343, %v3342
      %vm3345 = vcmp.lt.s32.totalorder %v3309, 0
      %v3346 = vsub.s32 0, %v3309
      %v3347 = vsel %vm3345, %v3346, %v3309
      %v3348 = vmul.u32.u64.compose %v3347, 2863311531
      %v3349 = vextract.low.u32 %v3348
      %v3350 = vextract.high.u32 %v3348
      %v3351 = vshrl.u32 %v3350, 4
      %v3352 = vmul.u32 %v3351, 24
      %v3353 = vsub.s32 %v3347, %v3352
      %v3354 = vsub.s32 0, %v3353
      %v3355 = vsel %vm3345, %v3354, %v3353
      %vm3356 = vcmp.lt.s32.totalorder %v3310, 0
      %v3357 = vsub.s32 0, %v3310
      %v3358 = vsel %vm3356, %v3357, %v3310
      %v3359 = vmul.u32.u64.compose %v3358, 2863311531
      %v3360 = vextract.low.u32 %v3359
      %v3361 = vextract.high.u32 %v3359
      %v3362 = vshrl.u32 %v3361, 4
      %v3363 = vmul.u32 %v3362, 24
      %v3364 = vsub.s32 %v3358, %v3363
      %v3365 = vsub.s32 0, %v3364
      %v3366 = vsel %vm3356, %v3365, %v3364
      %vm3367 = vcmp.lt.s32.totalorder %v3311, 0
      %v3368 = vsub.s32 0, %v3311
      %v3369 = vsel %vm3367, %v3368, %v3311
      %v3370 = vmul.u32.u64.compose %v3369, 2863311531
      %v3371 = vextract.low.u32 %v3370
      %v3372 = vextract.high.u32 %v3370
      %v3373 = vshrl.u32 %v3372, 4
      %v3374 = vmul.u32 %v3373, 24
      %v3375 = vsub.s32 %v3369, %v3374
      %v3376 = vsub.s32 0, %v3375
      %v3377 = vsel %vm3367, %v3376, %v3375
      %vm3378 = vcmp.lt.s32.totalorder %v3312, 0
      %v3379 = vsub.s32 0, %v3312
      %v3380 = vsel %vm3378, %v3379, %v3312
      %v3381 = vmul.u32.u64.compose %v3380, 2863311531
      %v3382 = vextract.low.u32 %v3381
      %v3383 = vextract.high.u32 %v3381
      %v3384 = vshrl.u32 %v3383, 4
      %v3385 = vmul.u32 %v3384, 24
      %v3386 = vsub.s32 %v3380, %v3385
      %v3387 = vsub.s32 0, %v3386
      %v3388 = vsel %vm3378, %v3387, %v3386
      %vm3389 = vcmp.lt.s32.totalorder %v3313, 0
      %v3390 = vsub.s32 0, %v3313
      %v3391 = vsel %vm3389, %v3390, %v3313
      %v3392 = vmul.u32.u64.compose %v3391, 2863311531
      %v3393 = vextract.low.u32 %v3392
      %v3394 = vextract.high.u32 %v3392
      %v3395 = vshrl.u32 %v3394, 4
      %v3396 = vmul.u32 %v3395, 24
      %v3397 = vsub.s32 %v3391, %v3396
      %v3398 = vsub.s32 0, %v3397
      %v3399 = vsel %vm3389, %v3398, %v3397
      %vm3400 = vcmp.lt.s32.totalorder %v3314, 0
      %v3401 = vsub.s32 0, %v3314
      %v3402 = vsel %vm3400, %v3401, %v3314
      %v3403 = vmul.u32.u64.compose %v3402, 2863311531
      %v3404 = vextract.low.u32 %v3403
      %v3405 = vextract.high.u32 %v3403
      %v3406 = vshrl.u32 %v3405, 4
      %v3407 = vmul.u32 %v3406, 24
      %v3408 = vsub.s32 %v3402, %v3407
      %v3409 = vsub.s32 0, %v3408
      %v3410 = vsel %vm3400, %v3409, %v3408
      %vm3411 = vcmp.lt.s32.totalorder %v3315, 0
      %v3412 = vsub.s32 0, %v3315
      %v3413 = vsel %vm3411, %v3412, %v3315
      %v3414 = vmul.u32.u64.compose %v3413, 2863311531
      %v3415 = vextract.low.u32 %v3414
      %v3416 = vextract.high.u32 %v3414
      %v3417 = vshrl.u32 %v3416, 4
      %v3418 = vmul.u32 %v3417, 24
      %v3419 = vsub.s32 %v3413, %v3418
      %v3420 = vsub.s32 0, %v3419
      %v3421 = vsel %vm3411, %v3420, %v3419
      %vm3422 = vcmp.lt.s32.totalorder %v3316, 0
      %v3423 = vsub.s32 0, %v3316
      %v3424 = vsel %vm3422, %v3423, %v3316
      %v3425 = vmul.u32.u64.compose %v3424, 2863311531
      %v3426 = vextract.low.u32 %v3425
      %v3427 = vextract.high.u32 %v3425
      %v3428 = vshrl.u32 %v3427, 4
      %v3429 = vmul.u32 %v3428, 24
      %v3430 = vsub.s32 %v3424, %v3429
      %v3431 = vsub.s32 0, %v3430
      %v3432 = vsel %vm3422, %v3431, %v3430
      %vm3433 = vcmp.lt.s32.totalorder %v3317, 0
      %v3434 = vsub.s32 0, %v3317
      %v3435 = vsel %vm3433, %v3434, %v3317
      %v3436 = vmul.u32.u64.compose %v3435, 2863311531
      %v3437 = vextract.low.u32 %v3436
      %v3438 = vextract.high.u32 %v3436
      %v3439 = vshrl.u32 %v3438, 4
      %v3440 = vmul.u32 %v3439, 24
      %v3441 = vsub.s32 %v3435, %v3440
      %v3442 = vsub.s32 0, %v3441
      %v3443 = vsel %vm3433, %v3442, %v3441
      %vm3444 = vcmp.lt.s32.totalorder %v3318, 0
      %v3445 = vsub.s32 0, %v3318
      %v3446 = vsel %vm3444, %v3445, %v3318
      %v3447 = vmul.u32.u64.compose %v3446, 2863311531
      %v3448 = vextract.low.u32 %v3447
      %v3449 = vextract.high.u32 %v3447
      %v3450 = vshrl.u32 %v3449, 4
      %v3451 = vmul.u32 %v3450, 24
      %v3452 = vsub.s32 %v3446, %v3451
      %v3453 = vsub.s32 0, %v3452
      %v3454 = vsel %vm3444, %v3453, %v3452
      %vm3455 = vcmp.lt.s32.totalorder %v3319, 0
      %v3456 = vsub.s32 0, %v3319
      %v3457 = vsel %vm3455, %v3456, %v3319
      %v3458 = vmul.u32.u64.compose %v3457, 2863311531
      %v3459 = vextract.low.u32 %v3458
      %v3460 = vextract.high.u32 %v3458
      %v3461 = vshrl.u32 %v3460, 4
      %v3462 = vmul.u32 %v3461, 24
      %v3463 = vsub.s32 %v3457, %v3462
      %v3464 = vsub.s32 0, %v3463
      %v3465 = vsel %vm3455, %v3464, %v3463
      %vm3466 = vcmp.lt.s32.totalorder %v3320, 0
      %v3467 = vsub.s32 0, %v3320
      %v3468 = vsel %vm3466, %v3467, %v3320
      %v3469 = vmul.u32.u64.compose %v3468, 2863311531
      %v3470 = vextract.low.u32 %v3469
      %v3471 = vextract.high.u32 %v3469
      %v3472 = vshrl.u32 %v3471, 4
      %v3473 = vmul.u32 %v3472, 24
      %v3474 = vsub.s32 %v3468, %v3473
      %v3475 = vsub.s32 0, %v3474
      %v3476 = vsel %vm3466, %v3475, %v3474
      %vm3477 = vcmp.lt.s32.totalorder %v3321, 0
      %v3478 = vsub.s32 0, %v3321
      %v3479 = vsel %vm3477, %v3478, %v3321
      %v3480 = vmul.u32.u64.compose %v3479, 2863311531
      %v3481 = vextract.low.u32 %v3480
      %v3482 = vextract.high.u32 %v3480
      %v3483 = vshrl.u32 %v3482, 4
      %v3484 = vmul.u32 %v3483, 24
      %v3485 = vsub.s32 %v3479, %v3484
      %v3486 = vsub.s32 0, %v3485
      %v3487 = vsel %vm3477, %v3486, %v3485
      %vm3488 = vcmp.lt.s32.totalorder %v3322, 0
      %v3489 = vsub.s32 0, %v3322
      %v3490 = vsel %vm3488, %v3489, %v3322
      %v3491 = vmul.u32.u64.compose %v3490, 2863311531
      %v3492 = vextract.low.u32 %v3491
      %v3493 = vextract.high.u32 %v3491
      %v3494 = vshrl.u32 %v3493, 4
      %v3495 = vmul.u32 %v3494, 24
      %v3496 = vsub.s32 %v3490, %v3495
      %v3497 = vsub.s32 0, %v3496
      %v3498 = vsel %vm3488, %v3497, %v3496
      %vm3499 = vcmp.ne.s32.totalorder %v3333, 0
      %vm3500 = vcmp.ne.s32.totalorder %v3344, 0
      %vm3501 = vcmp.ne.s32.totalorder %v3355, 0
      %vm3502 = vcmp.ne.s32.totalorder %v3366, 0
      %vm3503 = vcmp.ne.s32.totalorder %v3377, 0
      %vm3504 = vcmp.ne.s32.totalorder %v3388, 0
      %vm3505 = vcmp.ne.s32.totalorder %v3399, 0
      %vm3506 = vcmp.ne.s32.totalorder %v3410, 0
      %vm3507 = vcmp.ne.s32.totalorder %v3421, 0
      %vm3508 = vcmp.ne.s32.totalorder %v3432, 0
      %vm3509 = vcmp.ne.s32.totalorder %v3443, 0
      %vm3510 = vcmp.ne.s32.totalorder %v3454, 0
      %vm3511 = vcmp.ne.s32.totalorder %v3465, 0
      %vm3512 = vcmp.ne.s32.totalorder %v3476, 0
      %vm3513 = vcmp.ne.s32.totalorder %v3487, 0
      %vm3514 = vcmp.ne.s32.totalorder %v3498, 0
      %vm3515 = vcmp.lt.s32.totalorder %v3333, 0
      %vm3516 = vcmp.lt.s32.totalorder %v3344, 0
      %vm3517 = vcmp.lt.s32.totalorder %v3355, 0
      %vm3518 = vcmp.lt.s32.totalorder %v3366, 0
      %vm3519 = vcmp.lt.s32.totalorder %v3377, 0
      %vm3520 = vcmp.lt.s32.totalorder %v3388, 0
      %vm3521 = vcmp.lt.s32.totalorder %v3399, 0
      %vm3522 = vcmp.lt.s32.totalorder %v3410, 0
      %vm3523 = vcmp.lt.s32.totalorder %v3421, 0
      %vm3524 = vcmp.lt.s32.totalorder %v3432, 0
      %vm3525 = vcmp.lt.s32.totalorder %v3443, 0
      %vm3526 = vcmp.lt.s32.totalorder %v3454, 0
      %vm3527 = vcmp.lt.s32.totalorder %v3465, 0
      %vm3528 = vcmp.lt.s32.totalorder %v3476, 0
      %vm3529 = vcmp.lt.s32.totalorder %v3487, 0
      %vm3530 = vcmp.lt.s32.totalorder %v3498, 0
      %vm3531 = vmand %vm3515, %vm3499
      %vm3532 = vmand %vm3516, %vm3500
      %vm3533 = vmand %vm3517, %vm3501
      %vm3534 = vmand %vm3518, %vm3502
      %vm3535 = vmand %vm3519, %vm3503
      %vm3536 = vmand %vm3520, %vm3504
      %vm3537 = vmand %vm3521, %vm3505
      %vm3538 = vmand %vm3522, %vm3506
      %vm3539 = vmand %vm3523, %vm3507
      %vm3540 = vmand %vm3524, %vm3508
      %vm3541 = vmand %vm3525, %vm3509
      %vm3542 = vmand %vm3526, %vm3510
      %vm3543 = vmand %vm3527, %vm3511
      %vm3544 = vmand %vm3528, %vm3512
      %vm3545 = vmand %vm3529, %vm3513
      %vm3546 = vmand %vm3530, %vm3514
      %v3547 = vadd.s32 %v3333, 24
      %v3548 = vadd.s32 %v3344, 24
      %v3549 = vadd.s32 %v3355, 24
      %v3550 = vadd.s32 %v3366, 24
      %v3551 = vadd.s32 %v3377, 24
      %v3552 = vadd.s32 %v3388, 24
      %v3553 = vadd.s32 %v3399, 24
      %v3554 = vadd.s32 %v3410, 24
      %v3555 = vadd.s32 %v3421, 24
      %v3556 = vadd.s32 %v3432, 24
      %v3557 = vadd.s32 %v3443, 24
      %v3558 = vadd.s32 %v3454, 24
      %v3559 = vadd.s32 %v3465, 24
      %v3560 = vadd.s32 %v3476, 24
      %v3561 = vadd.s32 %v3487, 24
      %v3562 = vadd.s32 %v3498, 24
      %v3563 = vsel %vm3531, %v3547, %v3333
      %v3564 = vsel %vm3532, %v3548, %v3344
      %v3565 = vsel %vm3533, %v3549, %v3355
      %v3566 = vsel %vm3534, %v3550, %v3366
      %v3567 = vsel %vm3535, %v3551, %v3377
      %v3568 = vsel %vm3536, %v3552, %v3388
      %v3569 = vsel %vm3537, %v3553, %v3399
      %v3570 = vsel %vm3538, %v3554, %v3410
      %v3571 = vsel %vm3539, %v3555, %v3421
      %v3572 = vsel %vm3540, %v3556, %v3432
      %v3573 = vsel %vm3541, %v3557, %v3443
      %v3574 = vsel %vm3542, %v3558, %v3454
      %v3575 = vsel %vm3543, %v3559, %v3465
      %v3576 = vsel %vm3544, %v3560, %v3476
      %v3577 = vsel %vm3545, %v3561, %v3487
      %v3578 = vsel %vm3546, %v3562, %v3498
      %vm3579 = vcmp.ge.s32.totalorder %v3563, 1
      %vm3580 = vcmp.ge.s32.totalorder %v3564, 1
      %vm3581 = vcmp.ge.s32.totalorder %v3565, 1
      %vm3582 = vcmp.ge.s32.totalorder %v3566, 1
      %vm3583 = vcmp.ge.s32.totalorder %v3567, 1
      %vm3584 = vcmp.ge.s32.totalorder %v3568, 1
      %vm3585 = vcmp.ge.s32.totalorder %v3569, 1
      %vm3586 = vcmp.ge.s32.totalorder %v3570, 1
      %vm3587 = vcmp.ge.s32.totalorder %v3571, 1
      %vm3588 = vcmp.ge.s32.totalorder %v3572, 1
      %vm3589 = vcmp.ge.s32.totalorder %v3573, 1
      %vm3590 = vcmp.ge.s32.totalorder %v3574, 1
      %vm3591 = vcmp.ge.s32.totalorder %v3575, 1
      %vm3592 = vcmp.ge.s32.totalorder %v3576, 1
      %vm3593 = vcmp.ge.s32.totalorder %v3577, 1
      %vm3594 = vcmp.ge.s32.totalorder %v3578, 1
      %vm3595 = vcmp.le.s32.totalorder %v3563, 16
      %vm3596 = vcmp.le.s32.totalorder %v3564, 16
      %vm3597 = vcmp.le.s32.totalorder %v3565, 16
      %vm3598 = vcmp.le.s32.totalorder %v3566, 16
      %vm3599 = vcmp.le.s32.totalorder %v3567, 16
      %vm3600 = vcmp.le.s32.totalorder %v3568, 16
      %vm3601 = vcmp.le.s32.totalorder %v3569, 16
      %vm3602 = vcmp.le.s32.totalorder %v3570, 16
      %vm3603 = vcmp.le.s32.totalorder %v3571, 16
      %vm3604 = vcmp.le.s32.totalorder %v3572, 16
      %vm3605 = vcmp.le.s32.totalorder %v3573, 16
      %vm3606 = vcmp.le.s32.totalorder %v3574, 16
      %vm3607 = vcmp.le.s32.totalorder %v3575, 16
      %vm3608 = vcmp.le.s32.totalorder %v3576, 16
      %vm3609 = vcmp.le.s32.totalorder %v3577, 16
      %vm3610 = vcmp.le.s32.totalorder %v3578, 16
      %vm3611 = vmand %vm3579, %vm3595
      %vm3612 = vmand %vm3580, %vm3596
      %vm3613 = vmand %vm3581, %vm3597
      %vm3614 = vmand %vm3582, %vm3598
      %vm3615 = vmand %vm3583, %vm3599
      %vm3616 = vmand %vm3584, %vm3600
      %vm3617 = vmand %vm3585, %vm3601
      %vm3618 = vmand %vm3586, %vm3602
      %vm3619 = vmand %vm3587, %vm3603
      %vm3620 = vmand %vm3588, %vm3604
      %vm3621 = vmand %vm3589, %vm3605
      %vm3622 = vmand %vm3590, %vm3606
      %vm3623 = vmand %vm3591, %vm3607
      %vm3624 = vmand %vm3592, %vm3608
      %vm3625 = vmand %vm3593, %vm3609
      %vm3626 = vmand %vm3594, %vm3610
      %v3627 = vsel %vm3611, 1, 0
      %v3628 = vsel %vm3612, 1, 0
      %v3629 = vsel %vm3613, 1, 0
      %v3630 = vsel %vm3614, 1, 0
      %v3631 = vsel %vm3615, 1, 0
      %v3632 = vsel %vm3616, 1, 0
      %v3633 = vsel %vm3617, 1, 0
      %v3634 = vsel %vm3618, 1, 0
      %v3635 = vsel %vm3619, 1, 0
      %v3636 = vsel %vm3620, 1, 0
      %v3637 = vsel %vm3621, 1, 0
      %v3638 = vsel %vm3622, 1, 0
      %v3639 = vsel %vm3623, 1, 0
      %v3640 = vsel %vm3624, 1, 0
      %v3641 = vsel %vm3625, 1, 0
      %v3642 = vsel %vm3626, 1, 0
      %vm3643 = vcmp.eq.s32.totalorder %v3627, 1
      %vm3644 = vcmp.eq.s32.totalorder %v3628, 1
      %vm3645 = vcmp.eq.s32.totalorder %v3629, 1
      %vm3646 = vcmp.eq.s32.totalorder %v3630, 1
      %vm3647 = vcmp.eq.s32.totalorder %v3631, 1
      %vm3648 = vcmp.eq.s32.totalorder %v3632, 1
      %vm3649 = vcmp.eq.s32.totalorder %v3633, 1
      %vm3650 = vcmp.eq.s32.totalorder %v3634, 1
      %vm3651 = vcmp.eq.s32.totalorder %v3635, 1
      %vm3652 = vcmp.eq.s32.totalorder %v3636, 1
      %vm3653 = vcmp.eq.s32.totalorder %v3637, 1
      %vm3654 = vcmp.eq.s32.totalorder %v3638, 1
      %vm3655 = vcmp.eq.s32.totalorder %v3639, 1
      %vm3656 = vcmp.eq.s32.totalorder %v3640, 1
      %vm3657 = vcmp.eq.s32.totalorder %v3641, 1
      %vm3658 = vcmp.eq.s32.totalorder %v3642, 1
      %v3659 = vsel %vm3643, %v3291, 0.0
      %v3660 = vsel %vm3644, %v3292, 0.0
      %v3661 = vsel %vm3645, %v3293, 0.0
      %v3662 = vsel %vm3646, %v3294, 0.0
      %v3663 = vsel %vm3647, %v3295, 0.0
      %v3664 = vsel %vm3648, %v3296, 0.0
      %v3665 = vsel %vm3649, %v3297, 0.0
      %v3666 = vsel %vm3650, %v3298, 0.0
      %v3667 = vsel %vm3651, %v3299, 0.0
      %v3668 = vsel %vm3652, %v3300, 0.0
      %v3669 = vsel %vm3653, %v3301, 0.0
      %v3670 = vsel %vm3654, %v3302, 0.0
      %v3671 = vsel %vm3655, %v3303, 0.0
      %v3672 = vsel %vm3656, %v3304, 0.0
      %v3673 = vsel %vm3657, %v3305, 0.0
      %v3674 = vsel %vm3658, %v3306, 0.0
      %3675 = vst [vmem:[#allocation3 + $0xa0] sm:$0xff] %v3659
      %3676 = vst [vmem:[#allocation3 + $0xa8] sm:$0xff] %v3660
      %3677 = vst [vmem:[#allocation3 + $0xb0] sm:$0xff] %v3661
      %3678 = vst [vmem:[#allocation3 + $0xb8] sm:$0xff] %v3662
      %3679 = vst [vmem:[#allocation3 + $0xc0] sm:$0xff] %v3663
      %3680 = vst [vmem:[#allocation3 + $0xc8] sm:$0xff] %v3664
      %3681 = vst [vmem:[#allocation3 + $0xd0] sm:$0xff] %v3665
      %3682 = vst [vmem:[#allocation3 + $0xd8] sm:$0xff] %v3666
      %3683 = vst [vmem:[#allocation3 + $0xe0] sm:$0xff] %v3667
      %3684 = vst [vmem:[#allocation3 + $0xe8] sm:$0xff] %v3668
      %3685 = vst [vmem:[#allocation3 + $0xf0] sm:$0xff] %v3669
      %3686 = vst [vmem:[#allocation3 + $0xf8] sm:$0xff] %v3670
      %3687 = vst [vmem:[#allocation3 + $0x100] sm:$0xff] %v3671
      %3688 = vst [vmem:[#allocation3 + $0x108] sm:$0xff] %v3672
      %3689 = vst [vmem:[#allocation3 + $0x110] sm:$0xff] %v3673
      %3690 = vst [vmem:[#allocation3 + $0x118] sm:$0xff] %v3674
      %v3691 = vld [vmem:[#allocation2 + $0x300] sm:$0xff]
      %v3692 = vld [vmem:[#allocation2 + $0x308] sm:$0xff]
      %v3693 = vld [vmem:[#allocation2 + $0x310] sm:$0xff]
      %v3694 = vld [vmem:[#allocation2 + $0x318] sm:$0xff]
      %v3695 = vld [vmem:[#allocation2 + $0x320] sm:$0xff]
      %v3696 = vld [vmem:[#allocation2 + $0x328] sm:$0xff]
      %v3697 = vld [vmem:[#allocation2 + $0x330] sm:$0xff]
      %v3698 = vld [vmem:[#allocation2 + $0x338] sm:$0xff]
      %v3699 = vld [vmem:[#allocation2 + $0x340] sm:$0xff]
      %v3700 = vld [vmem:[#allocation2 + $0x348] sm:$0xff]
      %v3701 = vld [vmem:[#allocation2 + $0x350] sm:$0xff]
      %v3702 = vld [vmem:[#allocation2 + $0x358] sm:$0xff]
      %v3703 = vld [vmem:[#allocation2 + $0x360] sm:$0xff]
      %v3704 = vld [vmem:[#allocation2 + $0x368] sm:$0xff]
      %v3705 = vld [vmem:[#allocation2 + $0x370] sm:$0xff]
      %v3706 = vld [vmem:[#allocation2 + $0x378] sm:$0xff]
      %v3707 = vld [vmem:[#allocation2 + $0x380] sm:$0xff]
      %v3708 = vld [vmem:[#allocation2 + $0x388] sm:$0xff]
      %v3709 = vld [vmem:[#allocation2 + $0x390] sm:$0xff]
      %v3710 = vld [vmem:[#allocation2 + $0x398] sm:$0xff]
      %v3711 = vld [vmem:[#allocation2 + $0x3a0] sm:$0xff]
      %v3712 = vld [vmem:[#allocation2 + $0x3a8] sm:$0xff]
      %v3713 = vld [vmem:[#allocation2 + $0x3b0] sm:$0xff]
      %v3714 = vld [vmem:[#allocation2 + $0x3b8] sm:$0xff]
      %v3715 = vld [vmem:[#allocation2 + $0x3c0] sm:$0xff]
      %v3716 = vld [vmem:[#allocation2 + $0x3c8] sm:$0xff]
      %v3717 = vld [vmem:[#allocation2 + $0x3d0] sm:$0xff]
      %v3718 = vld [vmem:[#allocation2 + $0x3d8] sm:$0xff]
      %v3719 = vld [vmem:[#allocation2 + $0x3e0] sm:$0xff]
      %v3720 = vld [vmem:[#allocation2 + $0x3e8] sm:$0xff]
      %v3721 = vld [vmem:[#allocation2 + $0x3f0] sm:$0xff]
      %v3722 = vld [vmem:[#allocation2 + $0x3f8] sm:$0xff]
      %v3723 = vld [vmem:[#allocation2 + $0x400] sm:$0xff]
      %v3724 = vld [vmem:[#allocation2 + $0x408] sm:$0xff]
      %v3725 = vld [vmem:[#allocation2 + $0x410] sm:$0xff]
      %v3726 = vld [vmem:[#allocation2 + $0x418] sm:$0xff]
      %v3727 = vld [vmem:[#allocation2 + $0x420] sm:$0xff]
      %v3728 = vld [vmem:[#allocation2 + $0x428] sm:$0xff]
      %v3729 = vld [vmem:[#allocation2 + $0x430] sm:$0xff]
      %v3730 = vld [vmem:[#allocation2 + $0x438] sm:$0xff]
      %v3731 = vld [vmem:[#allocation2 + $0x440] sm:$0xff]
      %v3732 = vld [vmem:[#allocation2 + $0x448] sm:$0xff]
      %v3733 = vld [vmem:[#allocation2 + $0x450] sm:$0xff]
      %v3734 = vld [vmem:[#allocation2 + $0x458] sm:$0xff]
      %v3735 = vld [vmem:[#allocation2 + $0x460] sm:$0xff]
      %v3736 = vld [vmem:[#allocation2 + $0x468] sm:$0xff]
      %v3737 = vld [vmem:[#allocation2 + $0x470] sm:$0xff]
      %v3738 = vld [vmem:[#allocation2 + $0x478] sm:$0xff]
      %v3739 = vld [vmem:[%s1] sm:$0xff]
      %v3740 = vld [vmem:[%s1 + $0x8] sm:$0xff]
      %v3741 = vld [vmem:[%s1 + $0x10] sm:$0xff]
      %v3742 = vld [vmem:[%s1 + $0x18] sm:$0xff]
      %v3743 = vld [vmem:[%s1 + $0x20] sm:$0xff]
      %v3744 = vld [vmem:[%s1 + $0x28] sm:$0xff]
      %v3745 = vld [vmem:[%s1 + $0x30] sm:$0xff]
      %v3746 = vld [vmem:[%s1 + $0x38] sm:$0xff]
      %v3747 = vld [vmem:[%s1 + $0x40] sm:$0xff]
      %v3748 = vld [vmem:[%s1 + $0x48] sm:$0xff]
      %v3749 = vld [vmem:[%s1 + $0x50] sm:$0xff]
      %v3750 = vld [vmem:[%s1 + $0x58] sm:$0xff]
      %v3751 = vld [vmem:[%s1 + $0x60] sm:$0xff]
      %v3752 = vld [vmem:[%s1 + $0x68] sm:$0xff]
      %v3753 = vld [vmem:[%s1 + $0x70] sm:$0xff]
      %v3754 = vld [vmem:[%s1 + $0x78] sm:$0xff]
      %v3755 = vld [vmem:[%s1 + $0x80] sm:$0xff]
      %v3756 = vld [vmem:[%s1 + $0x88] sm:$0xff]
      %v3757 = vld [vmem:[%s1 + $0x90] sm:$0xff]
      %v3758 = vld [vmem:[%s1 + $0x98] sm:$0xff]
      %v3759 = vld [vmem:[%s1 + $0xa0] sm:$0xff]
      %v3760 = vld [vmem:[%s1 + $0xa8] sm:$0xff]
      %v3761 = vld [vmem:[%s1 + $0xb0] sm:$0xff]
      %v3762 = vld [vmem:[%s1 + $0xb8] sm:$0xff]
      %v3763 = vld [vmem:[%s1 + $0xc0] sm:$0xff]
      %v3764 = vld [vmem:[%s1 + $0xc8] sm:$0xff]
      %v3765 = vld [vmem:[%s1 + $0xd0] sm:$0xff]
      %v3766 = vld [vmem:[%s1 + $0xd8] sm:$0xff]
      %v3767 = vld [vmem:[%s1 + $0xe0] sm:$0xff]
      %v3768 = vld [vmem:[%s1 + $0xe8] sm:$0xff]
      %v3769 = vld [vmem:[%s1 + $0xf0] sm:$0xff]
      %v3770 = vld [vmem:[%s1 + $0xf8] sm:$0xff]
      %v3771 = vld [vmem:[%s1 + $0x100] sm:$0xff]
      %v3772 = vld [vmem:[%s1 + $0x108] sm:$0xff]
      %v3773 = vld [vmem:[%s1 + $0x110] sm:$0xff]
      %v3774 = vld [vmem:[%s1 + $0x118] sm:$0xff]
      %v3775 = vld [vmem:[%s1 + $0x120] sm:$0xff]
      %v3776 = vld [vmem:[%s1 + $0x128] sm:$0xff]
      %v3777 = vld [vmem:[%s1 + $0x130] sm:$0xff]
      %v3778 = vld [vmem:[%s1 + $0x138] sm:$0xff]
      %v3779 = vld [vmem:[%s1 + $0x140] sm:$0xff]
      %v3780 = vld [vmem:[%s1 + $0x148] sm:$0xff]
      %v3781 = vld [vmem:[%s1 + $0x150] sm:$0xff]
      %v3782 = vld [vmem:[%s1 + $0x158] sm:$0xff]
      %v3783 = vld [vmem:[%s1 + $0x160] sm:$0xff]
      %v3784 = vld [vmem:[%s1 + $0x168] sm:$0xff]
      %v3785 = vld [vmem:[%s1 + $0x170] sm:$0xff]
      %v3786 = vld [vmem:[%s1 + $0x178] sm:$0xff]
      %v3787 = vld [vmem:[#allocation2 + $0x480] sm:$0xff]
      %v3788 = vld [vmem:[#allocation2 + $0x488] sm:$0xff]
      %v3789 = vld [vmem:[#allocation2 + $0x490] sm:$0xff]
      %v3790 = vld [vmem:[#allocation2 + $0x498] sm:$0xff]
      %v3791 = vld [vmem:[#allocation2 + $0x4a0] sm:$0xff]
      %v3792 = vld [vmem:[#allocation2 + $0x4a8] sm:$0xff]
      %v3793 = vld [vmem:[#allocation2 + $0x4b0] sm:$0xff]
      %v3794 = vld [vmem:[#allocation2 + $0x4b8] sm:$0xff]
      %v3795 = vld [vmem:[#allocation2 + $0x4c0] sm:$0xff]
      %v3796 = vld [vmem:[%s662] sm:$0xff]
      %v3797 = vld [vmem:[%s662 + $0x8] sm:$0xff]
      %v3798 = vld [vmem:[%s662 + $0x10] sm:$0xff]
      %v3799 = vld [vmem:[%s662 + $0x18] sm:$0xff]
      %v3800 = vld [vmem:[%s662 + $0x20] sm:$0xff]
      %v3801 = vld [vmem:[%s662 + $0x28] sm:$0xff]
      %v3802 = vld [vmem:[%s662 + $0x30] sm:$0xff]
      %v3803 = vld [vmem:[%s662 + $0x38] sm:$0xff]
      %v3804 = vld [vmem:[%s662 + $0x40] sm:$0xff]
      %v3805 = vld [vmem:[%s662 + $0x48] sm:$0xff]
      %v3806 = vld [vmem:[%s662 + $0x50] sm:$0xff]
      %v3807 = vld [vmem:[%s662 + $0x58] sm:$0xff]
      %v3808 = vld [vmem:[%s662 + $0x60] sm:$0xff]
      %v3809 = vld [vmem:[%s662 + $0x68] sm:$0xff]
      %v3810 = vld [vmem:[%s662 + $0x70] sm:$0xff]
      %v3811 = vld [vmem:[%s662 + $0x78] sm:$0xff]
      %v3812 = vld [vmem:[%s662 + $0x80] sm:$0xff]
      %v3813 = vld [vmem:[%s662 + $0x88] sm:$0xff]
      %v3814 = vld [vmem:[%s662 + $0x90] sm:$0xff]
      %v3815 = vld [vmem:[%s662 + $0x98] sm:$0xff]
      %v3816 = vld [vmem:[%s662 + $0xa0] sm:$0xff]
      %v3817 = vld [vmem:[%s662 + $0xa8] sm:$0xff]
      %v3818 = vld [vmem:[%s662 + $0xb0] sm:$0xff]
      %v3819 = vld [vmem:[%s662 + $0xb8] sm:$0xff]
      %v3820 = vld [vmem:[%s662 + $0xc0] sm:$0xff]
      %v3821 = vld [vmem:[%s662 + $0xc8] sm:$0xff]
      %v3822 = vld [vmem:[%s662 + $0xd0] sm:$0xff]
      %v3823 = vld [vmem:[%s662 + $0xd8] sm:$0xff]
      %v3824 = vld [vmem:[%s662 + $0xe0] sm:$0xff]
      %v3825 = vld [vmem:[%s662 + $0xe8] sm:$0xff]
      %v3826 = vld [vmem:[%s662 + $0xf0] sm:$0xff]
      %v3827 = vld [vmem:[%s662 + $0xf8] sm:$0xff]
      %v3828 = vld [vmem:[%s662 + $0x100] sm:$0xff]
      %v3829 = vld [vmem:[%s662 + $0x108] sm:$0xff]
      %v3830 = vld [vmem:[%s662 + $0x110] sm:$0xff]
      %v3831 = vld [vmem:[%s662 + $0x118] sm:$0xff]
      %v3832 = vld [vmem:[%s662 + $0x120] sm:$0xff]
      %v3833 = vld [vmem:[%s662 + $0x128] sm:$0xff]
      %v3834 = vld [vmem:[%s662 + $0x130] sm:$0xff]
      %v3835 = vld [vmem:[%s662 + $0x138] sm:$0xff]
      %v3836 = vld [vmem:[%s662 + $0x140] sm:$0xff]
      %v3837 = vld [vmem:[%s662 + $0x148] sm:$0xff]
      %v3838 = vld [vmem:[%s662 + $0x150] sm:$0xff]
      %v3839 = vld [vmem:[%s662 + $0x158] sm:$0xff]
      %v3840 = vld [vmem:[%s662 + $0x160] sm:$0xff]
      %v3841 = vld [vmem:[%s662 + $0x168] sm:$0xff]
      %v3842 = vld [vmem:[%s662 + $0x170] sm:$0xff]
      %v3843 = vld [vmem:[%s662 + $0x178] sm:$0xff]
      %3844 = vmatprep.subr.mxu0 0.0
      %3845 = vmatpush1.msra.mxu0 %v3811
      %3846 = vmatprep.subr.mxu0 0.0
      %3847 = vmatpush1.msra.mxu0 %v3810
      %3848 = vmatprep.subr.mxu0 0.0
      %3849 = vmatpush1.msra.mxu0 %v3809
      %3850 = vmatprep.subr.mxu0 0.0
      %3851 = vmatpush1.msra.mxu0 %v3808
      %3852 = vmatprep.subr.mxu0 0.0
      %3853 = vmatpush1.msra.mxu0 %v3807
      %3854 = vmatprep.subr.mxu0 0.0
      %3855 = vmatpush1.msra.mxu0 %v3806
      %3856 = vmatprep.subr.mxu0 0.0
      %3857 = vmatpush1.msra.mxu0 %v3805
      %3858 = vmatprep.subr.mxu0 0.0
      %3859 = vmatpush1.msra.mxu0 %v3804
      %3860 = vmatprep.subr.mxu0 0.0
      %3861 = vmatpush1.msra.mxu0 %v3803
      %3862 = vmatprep.subr.mxu0 0.0
      %3863 = vmatpush1.msra.mxu0 %v3802
      %3864 = vmatprep.subr.mxu0 0.0
      %3865 = vmatpush1.msra.mxu0 %v3801
      %3866 = vmatprep.subr.mxu0 0.0
      %3867 = vmatpush1.msra.mxu0 %v3800
      %3868 = vmatprep.subr.mxu0 0.0
      %3869 = vmatpush1.msra.mxu0 %v3799
      %3870 = vmatprep.subr.mxu0 0.0
      %3871 = vmatpush1.msra.mxu0 %v3798
      %3872 = vmatprep.subr.mxu0 0.0
      %3873 = vmatpush1.msra.mxu0 %v3797
      %3874 = vmatprep.subr.mxu0 0.0
      %3875 = vmatpush1.msra.mxu0 %v3796
      %3876 = vmatprep.subr.mxu0 0.0
      %3877 = vmatpush2.msra.mxu0 %v3827
      %3878 = vmatprep.subr.mxu0 0.0
      %3879 = vmatpush2.msra.mxu0 %v3826
      %3880 = vmatprep.subr.mxu0 0.0
      %3881 = vmatpush2.msra.mxu0 %v3825
      %3882 = vmatprep.subr.mxu0 0.0
      %3883 = vmatpush2.msra.mxu0 %v3824
      %3884 = vmatprep.subr.mxu0 0.0
      %3885 = vmatpush2.msra.mxu0 %v3823
      %3886 = vmatprep.subr.mxu0 0.0
      %3887 = vmatpush2.msra.mxu0 %v3822
      %3888 = vmatprep.subr.mxu0 0.0
      %3889 = vmatpush2.msra.mxu0 %v3821
      %3890 = vmatprep.subr.mxu0 0.0
      %3891 = vmatpush2.msra.mxu0 %v3820
      %3892 = vmatprep.subr.mxu0 0.0
      %3893 = vmatpush2.msra.mxu0 %v3819
      %3894 = vmatprep.subr.mxu0 0.0
      %3895 = vmatpush2.msra.mxu0 %v3818
      %3896 = vmatprep.subr.mxu0 0.0
      %3897 = vmatpush2.msra.mxu0 %v3817
      %3898 = vmatprep.subr.mxu0 0.0
      %3899 = vmatpush2.msra.mxu0 %v3816
      %3900 = vmatprep.subr.mxu0 0.0
      %3901 = vmatpush2.msra.mxu0 %v3815
      %3902 = vmatprep.subr.mxu0 0.0
      %3903 = vmatpush2.msra.mxu0 %v3814
      %3904 = vmatprep.subr.mxu0 0.0
      %3905 = vmatpush2.msra.mxu0 %v3813
      %3906 = vmatprep.subr.mxu0 0.0
      %3907 = vmatpush2.msra.mxu0 %v3812
      %3908 = vmatprep.mubr.f32.mxu0 %v3701
      %3909 = vmatmul.mubr.f32.gmra.mxu0 %v3700
      %v3910 = vpop.f32.mrf.mxu0
      %v3911 = vadd.f32 0.0, %v3910
      %v3912 = vpop.f32.mrf.mxu0
      %3913 = vmatprep.mubr.f32.mxu0 %v3704
      %3914 = vmatmul.mubr.f32.gmra.mxu0 %v3703
      %v3915 = vpop.f32.mrf.mxu0
      %v3916 = vadd.f32 0.0, %v3915
      %v3917 = vpop.f32.mrf.mxu0
      %3918 = vmatprep.mubr.f32.mxu0 %v3707
      %3919 = vmatmul.mubr.f32.gmra.mxu0 %v3706
      %v3920 = vpop.f32.mrf.mxu0
      %v3921 = vadd.f32 0.0, %v3920
      %v3922 = vpop.f32.mrf.mxu0
      %3923 = vmatprep.mubr.f32.mxu0 %v3710
      %3924 = vmatmul.mubr.f32.gmra.mxu0 %v3709
      %v3925 = vpop.f32.mrf.mxu0
      %v3926 = vadd.f32 0.0, %v3925
      %v3927 = vpop.f32.mrf.mxu0
      %3928 = vmatprep.mubr.f32.mxu0 %v3713
      %3929 = vmatmul.mubr.f32.gmra.mxu0 %v3712
      %v3930 = vpop.f32.mrf.mxu0
      %v3931 = vadd.f32 0.0, %v3930
      %v3932 = vpop.f32.mrf.mxu0
      %3933 = vmatprep.mubr.f32.mxu0 %v3716
      %3934 = vmatmul.mubr.f32.gmra.mxu0 %v3715
      %v3935 = vpop.f32.mrf.mxu0
      %v3936 = vadd.f32 0.0, %v3935
      %v3937 = vpop.f32.mrf.mxu0
      %3938 = vmatprep.mubr.f32.mxu0 %v3719
      %3939 = vmatmul.mubr.f32.gmra.mxu0 %v3718
      %v3940 = vpop.f32.mrf.mxu0
      %v3941 = vadd.f32 0.0, %v3940
      %v3942 = vpop.f32.mrf.mxu0
      %3943 = vmatprep.mubr.f32.mxu0 %v3722
      %3944 = vmatmul.mubr.f32.gmra.mxu0 %v3721
      %v3945 = vpop.f32.mrf.mxu0
      %v3946 = vadd.f32 0.0, %v3945
      %v3947 = vpop.f32.mrf.mxu0
      %3948 = vmatprep.mubr.f32.mxu0 %v3725
      %3949 = vmatmul.mubr.f32.gmra.mxu0 %v3724
      %v3950 = vpop.f32.mrf.mxu0
      %v3951 = vadd.f32 0.0, %v3950
      %v3952 = vpop.f32.mrf.mxu0
      %3953 = vmatprep.mubr.f32.mxu0 %v3728
      %3954 = vmatmul.mubr.f32.gmra.mxu0 %v3727
      %v3955 = vpop.f32.mrf.mxu0
      %v3956 = vadd.f32 0.0, %v3955
      %v3957 = vpop.f32.mrf.mxu0
      %3958 = vmatprep.mubr.f32.mxu0 %v3731
      %3959 = vmatmul.mubr.f32.gmra.mxu0 %v3730
      %v3960 = vpop.f32.mrf.mxu0
      %v3961 = vadd.f32 0.0, %v3960
      %v3962 = vpop.f32.mrf.mxu0
      %3963 = vmatprep.mubr.f32.mxu0 %v3734
      %3964 = vmatmul.mubr.f32.gmra.mxu0 %v3733
      %v3965 = vpop.f32.mrf.mxu0
      %v3966 = vadd.f32 0.0, %v3965
      %v3967 = vpop.f32.mrf.mxu0
      %3968 = vmatprep.mubr.f32.mxu0 %v3737
      %3969 = vmatmul.mubr.f32.gmra.mxu0 %v3736
      %v3970 = vpop.f32.mrf.mxu0
      %v3971 = vadd.f32 0.0, %v3970
      %v3972 = vpop.f32.mrf.mxu0
      %3973 = vmatprep.mubr.f32.mxu0 %v3788
      %3974 = vmatmul.mubr.f32.gmra.mxu0 %v3787
      %v3975 = vpop.f32.mrf.mxu0
      %v3976 = vadd.f32 0.0, %v3975
      %v3977 = vpop.f32.mrf.mxu0
      %3978 = vmatprep.mubr.f32.mxu0 %v3791
      %3979 = vmatmul.mubr.f32.gmra.mxu0 %v3790
      %v3980 = vpop.f32.mrf.mxu0
      %v3981 = vadd.f32 0.0, %v3980
      %v3982 = vpop.f32.mrf.mxu0
      %3983 = vmatprep.mubr.f32.mxu0 %v3794
      %3984 = vmatmul.mubr.f32.gmra.mxu0 %v3793
      %v3985 = vpop.f32.mrf.mxu0
      %v3986 = vadd.f32 0.0, %v3985
      %v3987 = vpop.f32.mrf.mxu0
      %3988 = vdwg.mxu0
      %3989 = vmatprep.subr.mxu0 0.0
      %3990 = vmatpush1.msra.mxu0 %v3843
      %3991 = vmatprep.subr.mxu0 0.0
      %3992 = vmatpush1.msra.mxu0 %v3842
      %3993 = vmatprep.subr.mxu0 0.0
      %3994 = vmatpush1.msra.mxu0 %v3841
      %3995 = vmatprep.subr.mxu0 0.0
      %3996 = vmatpush1.msra.mxu0 %v3840
      %3997 = vmatprep.subr.mxu0 0.0
      %3998 = vmatpush1.msra.mxu0 %v3839
      %3999 = vmatprep.subr.mxu0 0.0
      %4000 = vmatpush1.msra.mxu0 %v3838
      %4001 = vmatprep.subr.mxu0 0.0
      %4002 = vmatpush1.msra.mxu0 %v3837
      %4003 = vmatprep.subr.mxu0 0.0
      %4004 = vmatpush1.msra.mxu0 %v3836
      %4005 = vmatprep.subr.mxu0 0.0
      %4006 = vmatpush1.msra.mxu0 %v3835
      %4007 = vmatprep.subr.mxu0 0.0
      %4008 = vmatpush1.msra.mxu0 %v3834
      %4009 = vmatprep.subr.mxu0 0.0
      %4010 = vmatpush1.msra.mxu0 %v3833
      %4011 = vmatprep.subr.mxu0 0.0
      %4012 = vmatpush1.msra.mxu0 %v3832
      %4013 = vmatprep.subr.mxu0 0.0
      %4014 = vmatpush1.msra.mxu0 %v3831
      %4015 = vmatprep.subr.mxu0 0.0
      %4016 = vmatpush1.msra.mxu0 %v3830
      %4017 = vmatprep.subr.mxu0 0.0
      %4018 = vmatpush1.msra.mxu0 %v3829
      %4019 = vmatprep.subr.mxu0 0.0
      %4020 = vmatpush1.msra.mxu0 %v3828
      %4021 = vmatprep.subr.mxu0 0.0
      %4022 = vmatpush2.msra.mxu0 0.0
      %4023 = vmatprep.subr.mxu0 0.0
      %4024 = vmatpush2.msra.mxu0 0.0
      %4025 = vmatprep.subr.mxu0 0.0
      %4026 = vmatpush2.msra.mxu0 0.0
      %4027 = vmatprep.subr.mxu0 0.0
      %4028 = vmatpush2.msra.mxu0 0.0
      %4029 = vmatprep.subr.mxu0 0.0
      %4030 = vmatpush2.msra.mxu0 0.0
      %4031 = vmatprep.subr.mxu0 0.0
      %4032 = vmatpush2.msra.mxu0 0.0
      %4033 = vmatprep.subr.mxu0 0.0
      %4034 = vmatpush2.msra.mxu0 0.0
      %4035 = vmatprep.subr.mxu0 0.0
      %4036 = vmatpush2.msra.mxu0 0.0
      %4037 = vmatprep.subr.mxu0 0.0
      %4038 = vmatpush2.msra.mxu0 0.0
      %4039 = vmatprep.subr.mxu0 0.0
      %4040 = vmatpush2.msra.mxu0 0.0
      %4041 = vmatprep.subr.mxu0 0.0
      %4042 = vmatpush2.msra.mxu0 0.0
      %4043 = vmatprep.subr.mxu0 0.0
      %4044 = vmatpush2.msra.mxu0 0.0
      %4045 = vmatprep.subr.mxu0 0.0
      %4046 = vmatpush2.msra.mxu0 0.0
      %4047 = vmatprep.subr.mxu0 0.0
      %4048 = vmatpush2.msra.mxu0 0.0
      %4049 = vmatprep.subr.mxu0 0.0
      %4050 = vmatpush2.msra.mxu0 0.0
      %4051 = vmatprep.subr.mxu0 0.0
      %4052 = vmatpush2.msra.mxu0 0.0
      %4053 = vmatprep.mubr.f32.mxu0 0.0
      %4054 = vmatmul.mubr.f32.gmra.mxu0 %v3702
      %v4055 = vpop.f32.mrf.mxu0
      %v4056 = vadd.f32 %v3911, %v4055
      %v4057 = vpop.f32.mrf.mxu0
      %4058 = vmatprep.mubr.f32.mxu0 0.0
      %4059 = vmatmul.mubr.f32.gmra.mxu0 %v3705
      %v4060 = vpop.f32.mrf.mxu0
      %v4061 = vadd.f32 %v3916, %v4060
      %v4062 = vpop.f32.mrf.mxu0
      %4063 = vmatprep.mubr.f32.mxu0 0.0
      %4064 = vmatmul.mubr.f32.gmra.mxu0 %v3708
      %v4065 = vpop.f32.mrf.mxu0
      %v4066 = vadd.f32 %v3921, %v4065
      %v4067 = vpop.f32.mrf.mxu0
      %4068 = vmatprep.mubr.f32.mxu0 0.0
      %4069 = vmatmul.mubr.f32.gmra.mxu0 %v3711
      %v4070 = vpop.f32.mrf.mxu0
      %v4071 = vadd.f32 %v3926, %v4070
      %v4072 = vpop.f32.mrf.mxu0
      %4073 = vmatprep.mubr.f32.mxu0 0.0
      %4074 = vmatmul.mubr.f32.gmra.mxu0 %v3714
      %v4075 = vpop.f32.mrf.mxu0
      %v4076 = vadd.f32 %v3931, %v4075
      %v4077 = vpop.f32.mrf.mxu0
      %4078 = vmatprep.mubr.f32.mxu0 0.0
      %4079 = vmatmul.mubr.f32.gmra.mxu0 %v3717
      %v4080 = vpop.f32.mrf.mxu0
      %v4081 = vadd.f32 %v3936, %v4080
      %v4082 = vpop.f32.mrf.mxu0
      %4083 = vmatprep.mubr.f32.mxu0 0.0
      %4084 = vmatmul.mubr.f32.gmra.mxu0 %v3720
      %v4085 = vpop.f32.mrf.mxu0
      %v4086 = vadd.f32 %v3941, %v4085
      %v4087 = vpop.f32.mrf.mxu0
      %4088 = vmatprep.mubr.f32.mxu0 0.0
      %4089 = vmatmul.mubr.f32.gmra.mxu0 %v3723
      %v4090 = vpop.f32.mrf.mxu0
      %v4091 = vadd.f32 %v3946, %v4090
      %v4092 = vpop.f32.mrf.mxu0
      %4093 = vmatprep.mubr.f32.mxu0 0.0
      %4094 = vmatmul.mubr.f32.gmra.mxu0 %v3726
      %v4095 = vpop.f32.mrf.mxu0
      %v4096 = vadd.f32 %v3951, %v4095
      %v4097 = vpop.f32.mrf.mxu0
      %4098 = vmatprep.mubr.f32.mxu0 0.0
      %4099 = vmatmul.mubr.f32.gmra.mxu0 %v3729
      %v4100 = vpop.f32.mrf.mxu0
      %v4101 = vadd.f32 %v3956, %v4100
      %v4102 = vpop.f32.mrf.mxu0
      %4103 = vmatprep.mubr.f32.mxu0 0.0
      %4104 = vmatmul.mubr.f32.gmra.mxu0 %v3732
      %v4105 = vpop.f32.mrf.mxu0
      %v4106 = vadd.f32 %v3961, %v4105
      %v4107 = vpop.f32.mrf.mxu0
      %4108 = vmatprep.mubr.f32.mxu0 0.0
      %4109 = vmatmul.mubr.f32.gmra.mxu0 %v3735
      %v4110 = vpop.f32.mrf.mxu0
      %v4111 = vadd.f32 %v3966, %v4110
      %v4112 = vpop.f32.mrf.mxu0
      %4113 = vmatprep.mubr.f32.mxu0 0.0
      %4114 = vmatmul.mubr.f32.gmra.mxu0 %v3738
      %v4115 = vpop.f32.mrf.mxu0
      %v4116 = vadd.f32 %v3971, %v4115
      %v4117 = vpop.f32.mrf.mxu0
      %4118 = vmatprep.mubr.f32.mxu0 0.0
      %4119 = vmatmul.mubr.f32.gmra.mxu0 %v3789
      %v4120 = vpop.f32.mrf.mxu0
      %v4121 = vadd.f32 %v3976, %v4120
      %v4122 = vpop.f32.mrf.mxu0
      %4123 = vmatprep.mubr.f32.mxu0 0.0
      %4124 = vmatmul.mubr.f32.gmra.mxu0 %v3792
      %v4125 = vpop.f32.mrf.mxu0
      %v4126 = vadd.f32 %v3981, %v4125
      %v4127 = vpop.f32.mrf.mxu0
      %4128 = vmatprep.mubr.f32.mxu0 0.0
      %4129 = vmatmul.mubr.f32.gmra.mxu0 %v3795
      %v4130 = vpop.f32.mrf.mxu0
      %v4131 = vadd.f32 %v3986, %v4130
      %v4132 = vpop.f32.mrf.mxu0
      %4133 = vdwg.mxu0
      %4134 = vmatprep.subr.mxu0 0.0
      %4135 = vmatpush1.msra.mxu0 %v3754
      %4136 = vmatprep.subr.mxu0 0.0
      %4137 = vmatpush1.msra.mxu0 %v3753
      %4138 = vmatprep.subr.mxu0 0.0
      %4139 = vmatpush1.msra.mxu0 %v3752
      %4140 = vmatprep.subr.mxu0 0.0
      %4141 = vmatpush1.msra.mxu0 %v3751
      %4142 = vmatprep.subr.mxu0 0.0
      %4143 = vmatpush1.msra.mxu0 %v3750
      %4144 = vmatprep.subr.mxu0 0.0
      %4145 = vmatpush1.msra.mxu0 %v3749
      %4146 = vmatprep.subr.mxu0 0.0
      %4147 = vmatpush1.msra.mxu0 %v3748
      %4148 = vmatprep.subr.mxu0 0.0
      %4149 = vmatpush1.msra.mxu0 %v3747
      %4150 = vmatprep.subr.mxu0 0.0
      %4151 = vmatpush1.msra.mxu0 %v3746
      %4152 = vmatprep.subr.mxu0 0.0
      %4153 = vmatpush1.msra.mxu0 %v3745
      %4154 = vmatprep.subr.mxu0 0.0
      %4155 = vmatpush1.msra.mxu0 %v3744
      %4156 = vmatprep.subr.mxu0 0.0
      %4157 = vmatpush1.msra.mxu0 %v3743
      %4158 = vmatprep.subr.mxu0 0.0
      %4159 = vmatpush1.msra.mxu0 %v3742
      %4160 = vmatprep.subr.mxu0 0.0
      %4161 = vmatpush1.msra.mxu0 %v3741
      %4162 = vmatprep.subr.mxu0 0.0
      %4163 = vmatpush1.msra.mxu0 %v3740
      %4164 = vmatprep.subr.mxu0 0.0
      %4165 = vmatpush1.msra.mxu0 %v3739
      %4166 = vmatprep.subr.mxu0 0.0
      %4167 = vmatpush2.msra.mxu0 %v3770
      %4168 = vmatprep.subr.mxu0 0.0
      %4169 = vmatpush2.msra.mxu0 %v3769
      %4170 = vmatprep.subr.mxu0 0.0
      %4171 = vmatpush2.msra.mxu0 %v3768
      %4172 = vmatprep.subr.mxu0 0.0
      %4173 = vmatpush2.msra.mxu0 %v3767
      %4174 = vmatprep.subr.mxu0 0.0
      %4175 = vmatpush2.msra.mxu0 %v3766
      %4176 = vmatprep.subr.mxu0 0.0
      %4177 = vmatpush2.msra.mxu0 %v3765
      %4178 = vmatprep.subr.mxu0 0.0
      %4179 = vmatpush2.msra.mxu0 %v3764
      %4180 = vmatprep.subr.mxu0 0.0
      %4181 = vmatpush2.msra.mxu0 %v3763
      %4182 = vmatprep.subr.mxu0 0.0
      %4183 = vmatpush2.msra.mxu0 %v3762
      %4184 = vmatprep.subr.mxu0 0.0
      %4185 = vmatpush2.msra.mxu0 %v3761
      %4186 = vmatprep.subr.mxu0 0.0
      %4187 = vmatpush2.msra.mxu0 %v3760
      %4188 = vmatprep.subr.mxu0 0.0
      %4189 = vmatpush2.msra.mxu0 %v3759
      %4190 = vmatprep.subr.mxu0 0.0
      %4191 = vmatpush2.msra.mxu0 %v3758
      %4192 = vmatprep.subr.mxu0 0.0
      %4193 = vmatpush2.msra.mxu0 %v3757
      %4194 = vmatprep.subr.mxu0 0.0
      %4195 = vmatpush2.msra.mxu0 %v3756
      %4196 = vmatprep.subr.mxu0 0.0
      %4197 = vmatpush2.msra.mxu0 %v3755
      %4198 = vmatprep.mubr.f32.mxu0 %v3692
      %4199 = vmatmul.mubr.f32.gmra.mxu0 %v3691
      %v4200 = vpop.f32.mrf.mxu0
      %v4201 = vadd.f32 %v4056, %v4200
      %v4202 = vpop.f32.mrf.mxu0
      %4203 = vmatprep.mubr.f32.mxu0 %v3695
      %4204 = vmatmul.mubr.f32.gmra.mxu0 %v3694
      %v4205 = vpop.f32.mrf.mxu0
      %v4206 = vadd.f32 %v4061, %v4205
      %v4207 = vpop.f32.mrf.mxu0
      %4208 = vmatprep.mubr.f32.mxu0 %v3698
      %4209 = vmatmul.mubr.f32.gmra.mxu0 %v3697
      %v4210 = vpop.f32.mrf.mxu0
      %v4211 = vadd.f32 %v4066, %v4210
      %v4212 = vpop.f32.mrf.mxu0
      %4213 = vmatprep.mubr.f32.mxu0 %v3701
      %4214 = vmatmul.mubr.f32.gmra.mxu0 %v3700
      %v4215 = vpop.f32.mrf.mxu0
      %v4216 = vadd.f32 %v4071, %v4215
      %v4217 = vpop.f32.mrf.mxu0
      %4218 = vmatprep.mubr.f32.mxu0 %v3704
      %4219 = vmatmul.mubr.f32.gmra.mxu0 %v3703
      %v4220 = vpop.f32.mrf.mxu0
      %v4221 = vadd.f32 %v4076, %v4220
      %v4222 = vpop.f32.mrf.mxu0
      %4223 = vmatprep.mubr.f32.mxu0 %v3707
      %4224 = vmatmul.mubr.f32.gmra.mxu0 %v3706
      %v4225 = vpop.f32.mrf.mxu0
      %v4226 = vadd.f32 %v4081, %v4225
      %v4227 = vpop.f32.mrf.mxu0
      %4228 = vmatprep.mubr.f32.mxu0 %v3710
      %4229 = vmatmul.mubr.f32.gmra.mxu0 %v3709
      %v4230 = vpop.f32.mrf.mxu0
      %v4231 = vadd.f32 %v4086, %v4230
      %v4232 = vpop.f32.mrf.mxu0
      %4233 = vmatprep.mubr.f32.mxu0 %v3713
      %4234 = vmatmul.mubr.f32.gmra.mxu0 %v3712
      %v4235 = vpop.f32.mrf.mxu0
      %v4236 = vadd.f32 %v4091, %v4235
      %v4237 = vpop.f32.mrf.mxu0
      %4238 = vmatprep.mubr.f32.mxu0 %v3716
      %4239 = vmatmul.mubr.f32.gmra.mxu0 %v3715
      %v4240 = vpop.f32.mrf.mxu0
      %v4241 = vadd.f32 %v4096, %v4240
      %v4242 = vpop.f32.mrf.mxu0
      %4243 = vmatprep.mubr.f32.mxu0 %v3719
      %4244 = vmatmul.mubr.f32.gmra.mxu0 %v3718
      %v4245 = vpop.f32.mrf.mxu0
      %v4246 = vadd.f32 %v4101, %v4245
      %v4247 = vpop.f32.mrf.mxu0
      %4248 = vmatprep.mubr.f32.mxu0 %v3722
      %4249 = vmatmul.mubr.f32.gmra.mxu0 %v3721
      %v4250 = vpop.f32.mrf.mxu0
      %v4251 = vadd.f32 %v4106, %v4250
      %v4252 = vpop.f32.mrf.mxu0
      %4253 = vmatprep.mubr.f32.mxu0 %v3725
      %4254 = vmatmul.mubr.f32.gmra.mxu0 %v3724
      %v4255 = vpop.f32.mrf.mxu0
      %v4256 = vadd.f32 %v4111, %v4255
      %v4257 = vpop.f32.mrf.mxu0
      %4258 = vmatprep.mubr.f32.mxu0 %v3728
      %4259 = vmatmul.mubr.f32.gmra.mxu0 %v3727
      %v4260 = vpop.f32.mrf.mxu0
      %v4261 = vadd.f32 %v4116, %v4260
      %v4262 = vpop.f32.mrf.mxu0
      %4263 = vmatprep.mubr.f32.mxu0 %v3731
      %4264 = vmatmul.mubr.f32.gmra.mxu0 %v3730
      %v4265 = vpop.f32.mrf.mxu0
      %v4266 = vadd.f32 %v4121, %v4265
      %v4267 = vpop.f32.mrf.mxu0
      %4268 = vmatprep.mubr.f32.mxu0 %v3734
      %4269 = vmatmul.mubr.f32.gmra.mxu0 %v3733
      %v4270 = vpop.f32.mrf.mxu0
      %v4271 = vadd.f32 %v4126, %v4270
      %v4272 = vpop.f32.mrf.mxu0
      %4273 = vmatprep.mubr.f32.mxu0 %v3737
      %4274 = vmatmul.mubr.f32.gmra.mxu0 %v3736
      %v4275 = vpop.f32.mrf.mxu0
      %v4276 = vadd.f32 %v4131, %v4275
      %v4277 = vpop.f32.mrf.mxu0
      %4278 = vdwg.mxu0
      %4279 = vmatprep.subr.mxu0 0.0
      %4280 = vmatpush1.msra.mxu0 %v3786
      %4281 = vmatprep.subr.mxu0 0.0
      %4282 = vmatpush1.msra.mxu0 %v3785
      %4283 = vmatprep.subr.mxu0 0.0
      %4284 = vmatpush1.msra.mxu0 %v3784
      %4285 = vmatprep.subr.mxu0 0.0
      %4286 = vmatpush1.msra.mxu0 %v3783
      %4287 = vmatprep.subr.mxu0 0.0
      %4288 = vmatpush1.msra.mxu0 %v3782
      %4289 = vmatprep.subr.mxu0 0.0
      %4290 = vmatpush1.msra.mxu0 %v3781
      %4291 = vmatprep.subr.mxu0 0.0
      %4292 = vmatpush1.msra.mxu0 %v3780
      %4293 = vmatprep.subr.mxu0 0.0
      %4294 = vmatpush1.msra.mxu0 %v3779
      %4295 = vmatprep.subr.mxu0 0.0
      %4296 = vmatpush1.msra.mxu0 %v3778
      %4297 = vmatprep.subr.mxu0 0.0
      %4298 = vmatpush1.msra.mxu0 %v3777
      %4299 = vmatprep.subr.mxu0 0.0
      %4300 = vmatpush1.msra.mxu0 %v3776
      %4301 = vmatprep.subr.mxu0 0.0
      %4302 = vmatpush1.msra.mxu0 %v3775
      %4303 = vmatprep.subr.mxu0 0.0
      %4304 = vmatpush1.msra.mxu0 %v3774
      %4305 = vmatprep.subr.mxu0 0.0
      %4306 = vmatpush1.msra.mxu0 %v3773
      %4307 = vmatprep.subr.mxu0 0.0
      %4308 = vmatpush1.msra.mxu0 %v3772
      %4309 = vmatprep.subr.mxu0 0.0
      %4310 = vmatpush1.msra.mxu0 %v3771
      %4311 = vmatprep.subr.mxu0 0.0
      %4312 = vmatpush2.msra.mxu0 0.0
      %4313 = vmatprep.subr.mxu0 0.0
      %4314 = vmatpush2.msra.mxu0 0.0
      %4315 = vmatprep.subr.mxu0 0.0
      %4316 = vmatpush2.msra.mxu0 0.0
      %4317 = vmatprep.subr.mxu0 0.0
      %4318 = vmatpush2.msra.mxu0 0.0
      %4319 = vmatprep.subr.mxu0 0.0
      %4320 = vmatpush2.msra.mxu0 0.0
      %4321 = vmatprep.subr.mxu0 0.0
      %4322 = vmatpush2.msra.mxu0 0.0
      %4323 = vmatprep.subr.mxu0 0.0
      %4324 = vmatpush2.msra.mxu0 0.0
      %4325 = vmatprep.subr.mxu0 0.0
      %4326 = vmatpush2.msra.mxu0 0.0
      %4327 = vmatprep.subr.mxu0 0.0
      %4328 = vmatpush2.msra.mxu0 0.0
      %4329 = vmatprep.subr.mxu0 0.0
      %4330 = vmatpush2.msra.mxu0 0.0
      %4331 = vmatprep.subr.mxu0 0.0
      %4332 = vmatpush2.msra.mxu0 0.0
      %4333 = vmatprep.subr.mxu0 0.0
      %4334 = vmatpush2.msra.mxu0 0.0
      %4335 = vmatprep.subr.mxu0 0.0
      %4336 = vmatpush2.msra.mxu0 0.0
      %4337 = vmatprep.subr.mxu0 0.0
      %4338 = vmatpush2.msra.mxu0 0.0
      %4339 = vmatprep.subr.mxu0 0.0
      %4340 = vmatpush2.msra.mxu0 0.0
      %4341 = vmatprep.subr.mxu0 0.0
      %4342 = vmatpush2.msra.mxu0 0.0
      %4343 = vmatprep.mubr.f32.mxu0 0.0
      %4344 = vmatmul.mubr.f32.gmra.mxu0 %v3693
      %v4345 = vpop.f32.mrf.mxu0
      %v4346 = vadd.f32 %v4201, %v4345
      %v4347 = vpop.f32.mrf.mxu0
      %4348 = vmatprep.mubr.f32.mxu0 0.0
      %4349 = vmatmul.mubr.f32.gmra.mxu0 %v3696
      %v4350 = vpop.f32.mrf.mxu0
      %v4351 = vadd.f32 %v4206, %v4350
      %v4352 = vpop.f32.mrf.mxu0
      %4353 = vmatprep.mubr.f32.mxu0 0.0
      %4354 = vmatmul.mubr.f32.gmra.mxu0 %v3699
      %v4355 = vpop.f32.mrf.mxu0
      %v4356 = vadd.f32 %v4211, %v4355
      %v4357 = vpop.f32.mrf.mxu0
      %4358 = vmatprep.mubr.f32.mxu0 0.0
      %4359 = vmatmul.mubr.f32.gmra.mxu0 %v3702
      %v4360 = vpop.f32.mrf.mxu0
      %v4361 = vadd.f32 %v4216, %v4360
      %v4362 = vpop.f32.mrf.mxu0
      %4363 = vmatprep.mubr.f32.mxu0 0.0
      %4364 = vmatmul.mubr.f32.gmra.mxu0 %v3705
      %v4365 = vpop.f32.mrf.mxu0
      %v4366 = vadd.f32 %v4221, %v4365
      %v4367 = vpop.f32.mrf.mxu0
      %4368 = vmatprep.mubr.f32.mxu0 0.0
      %4369 = vmatmul.mubr.f32.gmra.mxu0 %v3708
      %v4370 = vpop.f32.mrf.mxu0
      %v4371 = vadd.f32 %v4226, %v4370
      %v4372 = vpop.f32.mrf.mxu0
      %4373 = vmatprep.mubr.f32.mxu0 0.0
      %4374 = vmatmul.mubr.f32.gmra.mxu0 %v3711
      %v4375 = vpop.f32.mrf.mxu0
      %v4376 = vadd.f32 %v4231, %v4375
      %v4377 = vpop.f32.mrf.mxu0
      %4378 = vmatprep.mubr.f32.mxu0 0.0
      %4379 = vmatmul.mubr.f32.gmra.mxu0 %v3714
      %v4380 = vpop.f32.mrf.mxu0
      %v4381 = vadd.f32 %v4236, %v4380
      %v4382 = vpop.f32.mrf.mxu0
      %4383 = vmatprep.mubr.f32.mxu0 0.0
      %4384 = vmatmul.mubr.f32.gmra.mxu0 %v3717
      %v4385 = vpop.f32.mrf.mxu0
      %v4386 = vadd.f32 %v4241, %v4385
      %v4387 = vpop.f32.mrf.mxu0
      %4388 = vmatprep.mubr.f32.mxu0 0.0
      %4389 = vmatmul.mubr.f32.gmra.mxu0 %v3720
      %v4390 = vpop.f32.mrf.mxu0
      %v4391 = vadd.f32 %v4246, %v4390
      %v4392 = vpop.f32.mrf.mxu0
      %4393 = vmatprep.mubr.f32.mxu0 0.0
      %4394 = vmatmul.mubr.f32.gmra.mxu0 %v3723
      %v4395 = vpop.f32.mrf.mxu0
      %v4396 = vadd.f32 %v4251, %v4395
      %v4397 = vpop.f32.mrf.mxu0
      %4398 = vmatprep.mubr.f32.mxu0 0.0
      %4399 = vmatmul.mubr.f32.gmra.mxu0 %v3726
      %v4400 = vpop.f32.mrf.mxu0
      %v4401 = vadd.f32 %v4256, %v4400
      %v4402 = vpop.f32.mrf.mxu0
      %4403 = vmatprep.mubr.f32.mxu0 0.0
      %4404 = vmatmul.mubr.f32.gmra.mxu0 %v3729
      %v4405 = vpop.f32.mrf.mxu0
      %v4406 = vadd.f32 %v4261, %v4405
      %v4407 = vpop.f32.mrf.mxu0
      %4408 = vmatprep.mubr.f32.mxu0 0.0
      %4409 = vmatmul.mubr.f32.gmra.mxu0 %v3732
      %v4410 = vpop.f32.mrf.mxu0
      %v4411 = vadd.f32 %v4266, %v4410
      %v4412 = vpop.f32.mrf.mxu0
      %4413 = vmatprep.mubr.f32.mxu0 0.0
      %4414 = vmatmul.mubr.f32.gmra.mxu0 %v3735
      %v4415 = vpop.f32.mrf.mxu0
      %v4416 = vadd.f32 %v4271, %v4415
      %v4417 = vpop.f32.mrf.mxu0
      %4418 = vmatprep.mubr.f32.mxu0 0.0
      %4419 = vmatmul.mubr.f32.gmra.mxu0 %v3738
      %v4420 = vpop.f32.mrf.mxu0
      %v4421 = vadd.f32 %v4276, %v4420
      %v4422 = vpop.f32.mrf.mxu0
      %4423 = vdwg.mxu0
      %v4424 = vld [vmem:[#allocation2 + $0x390] sm:$0xff]
      %v4425 = vld [vmem:[#allocation2 + $0x398] sm:$0xff]
      %v4426 = vld [vmem:[#allocation2 + $0x3a0] sm:$0xff]
      %v4427 = vld [vmem:[#allocation2 + $0x3a8] sm:$0xff]
      %v4428 = vld [vmem:[#allocation2 + $0x3b0] sm:$0xff]
      %v4429 = vld [vmem:[#allocation2 + $0x3b8] sm:$0xff]
      %v4430 = vld [vmem:[#allocation2 + $0x3c0] sm:$0xff]
      %v4431 = vld [vmem:[#allocation2 + $0x3c8] sm:$0xff]
      %v4432 = vld [vmem:[#allocation2 + $0x3d0] sm:$0xff]
      %v4433 = vld [vmem:[#allocation2 + $0x3d8] sm:$0xff]
      %v4434 = vld [vmem:[#allocation2 + $0x3e0] sm:$0xff]
      %v4435 = vld [vmem:[#allocation2 + $0x3e8] sm:$0xff]
      %v4436 = vld [vmem:[#allocation2 + $0x3f0] sm:$0xff]
      %v4437 = vld [vmem:[#allocation2 + $0x3f8] sm:$0xff]
      %v4438 = vld [vmem:[#allocation2 + $0x400] sm:$0xff]
      %v4439 = vld [vmem:[#allocation2 + $0x408] sm:$0xff]
      %v4440 = vld [vmem:[#allocation2 + $0x410] sm:$0xff]
      %v4441 = vld [vmem:[#allocation2 + $0x418] sm:$0xff]
      %v4442 = vld [vmem:[#allocation2 + $0x420] sm:$0xff]
      %v4443 = vld [vmem:[#allocation2 + $0x428] sm:$0xff]
      %v4444 = vld [vmem:[#allocation2 + $0x430] sm:$0xff]
      %v4445 = vld [vmem:[#allocation2 + $0x438] sm:$0xff]
      %v4446 = vld [vmem:[#allocation2 + $0x440] sm:$0xff]
      %v4447 = vld [vmem:[#allocation2 + $0x448] sm:$0xff]
      %v4448 = vld [vmem:[#allocation2 + $0x450] sm:$0xff]
      %v4449 = vld [vmem:[#allocation2 + $0x458] sm:$0xff]
      %v4450 = vld [vmem:[#allocation2 + $0x460] sm:$0xff]
      %v4451 = vld [vmem:[#allocation2 + $0x468] sm:$0xff]
      %v4452 = vld [vmem:[#allocation2 + $0x470] sm:$0xff]
      %v4453 = vld [vmem:[#allocation2 + $0x478] sm:$0xff]
      %v4454 = vld [vmem:[#allocation2 + $0x480] sm:$0xff]
      %v4455 = vld [vmem:[#allocation2 + $0x488] sm:$0xff]
      %v4456 = vld [vmem:[#allocation2 + $0x490] sm:$0xff]
      %v4457 = vld [vmem:[#allocation2 + $0x498] sm:$0xff]
      %v4458 = vld [vmem:[#allocation2 + $0x4a0] sm:$0xff]
      %v4459 = vld [vmem:[#allocation2 + $0x4a8] sm:$0xff]
      %v4460 = vld [vmem:[#allocation2 + $0x4b0] sm:$0xff]
      %v4461 = vld [vmem:[#allocation2 + $0x4b8] sm:$0xff]
      %v4462 = vld [vmem:[#allocation2 + $0x4c0] sm:$0xff]
      %v4463 = vld [vmem:[#allocation2 + $0x4c8] sm:$0xff]
      %v4464 = vld [vmem:[#allocation2 + $0x4d0] sm:$0xff]
      %v4465 = vld [vmem:[#allocation2 + $0x4d8] sm:$0xff]
      %v4466 = vld [vmem:[#allocation2 + $0x4e0] sm:$0xff]
      %v4467 = vld [vmem:[#allocation2 + $0x4e8] sm:$0xff]
      %v4468 = vld [vmem:[#allocation2 + $0x4f0] sm:$0xff]
      %v4469 = vld [vmem:[#allocation2 + $0x4f8] sm:$0xff]
      %v4470 = vld [vmem:[#allocation2 + $0x500] sm:$0xff]
      %v4471 = vld [vmem:[#allocation2 + $0x508] sm:$0xff]
      %v4472 = vld [vmem:[%s1339] sm:$0xff]
      %v4473 = vld [vmem:[%s1339 + $0x8] sm:$0xff]
      %v4474 = vld [vmem:[%s1339 + $0x10] sm:$0xff]
      %v4475 = vld [vmem:[%s1339 + $0x18] sm:$0xff]
      %v4476 = vld [vmem:[%s1339 + $0x20] sm:$0xff]
      %v4477 = vld [vmem:[%s1339 + $0x28] sm:$0xff]
      %v4478 = vld [vmem:[%s1339 + $0x30] sm:$0xff]
      %v4479 = vld [vmem:[%s1339 + $0x38] sm:$0xff]
      %v4480 = vld [vmem:[%s1339 + $0x40] sm:$0xff]
      %v4481 = vld [vmem:[%s1339 + $0x48] sm:$0xff]
      %v4482 = vld [vmem:[%s1339 + $0x50] sm:$0xff]
      %v4483 = vld [vmem:[%s1339 + $0x58] sm:$0xff]
      %v4484 = vld [vmem:[%s1339 + $0x60] sm:$0xff]
      %v4485 = vld [vmem:[%s1339 + $0x68] sm:$0xff]
      %v4486 = vld [vmem:[%s1339 + $0x70] sm:$0xff]
      %v4487 = vld [vmem:[%s1339 + $0x78] sm:$0xff]
      %v4488 = vld [vmem:[%s1339 + $0x80] sm:$0xff]
      %v4489 = vld [vmem:[%s1339 + $0x88] sm:$0xff]
      %v4490 = vld [vmem:[%s1339 + $0x90] sm:$0xff]
      %v4491 = vld [vmem:[%s1339 + $0x98] sm:$0xff]
      %v4492 = vld [vmem:[%s1339 + $0xa0] sm:$0xff]
      %v4493 = vld [vmem:[%s1339 + $0xa8] sm:$0xff]
      %v4494 = vld [vmem:[%s1339 + $0xb0] sm:$0xff]
      %v4495 = vld [vmem:[%s1339 + $0xb8] sm:$0xff]
      %v4496 = vld [vmem:[%s1339 + $0xc0] sm:$0xff]
      %v4497 = vld [vmem:[%s1339 + $0xc8] sm:$0xff]
      %v4498 = vld [vmem:[%s1339 + $0xd0] sm:$0xff]
      %v4499 = vld [vmem:[%s1339 + $0xd8] sm:$0xff]
      %v4500 = vld [vmem:[%s1339 + $0xe0] sm:$0xff]
      %v4501 = vld [vmem:[%s1339 + $0xe8] sm:$0xff]
      %v4502 = vld [vmem:[%s1339 + $0xf0] sm:$0xff]
      %v4503 = vld [vmem:[%s1339 + $0xf8] sm:$0xff]
      %v4504 = vld [vmem:[%s1339 + $0x100] sm:$0xff]
      %v4505 = vld [vmem:[%s1339 + $0x108] sm:$0xff]
      %v4506 = vld [vmem:[%s1339 + $0x110] sm:$0xff]
      %v4507 = vld [vmem:[%s1339 + $0x118] sm:$0xff]
      %v4508 = vld [vmem:[%s1339 + $0x120] sm:$0xff]
      %v4509 = vld [vmem:[%s1339 + $0x128] sm:$0xff]
      %v4510 = vld [vmem:[%s1339 + $0x130] sm:$0xff]
      %v4511 = vld [vmem:[%s1339 + $0x138] sm:$0xff]
      %v4512 = vld [vmem:[%s1339 + $0x140] sm:$0xff]
      %v4513 = vld [vmem:[%s1339 + $0x148] sm:$0xff]
      %v4514 = vld [vmem:[%s1339 + $0x150] sm:$0xff]
      %v4515 = vld [vmem:[%s1339 + $0x158] sm:$0xff]
      %v4516 = vld [vmem:[%s1339 + $0x160] sm:$0xff]
      %v4517 = vld [vmem:[%s1339 + $0x168] sm:$0xff]
      %v4518 = vld [vmem:[%s1339 + $0x170] sm:$0xff]
      %v4519 = vld [vmem:[%s1339 + $0x178] sm:$0xff]
      %4520 = vmatprep.subr.mxu0 0.0
      %4521 = vmatpush1.msra.mxu0 %v4487
      %4522 = vmatprep.subr.mxu0 0.0
      %4523 = vmatpush1.msra.mxu0 %v4486
      %4524 = vmatprep.subr.mxu0 0.0
      %4525 = vmatpush1.msra.mxu0 %v4485
      %4526 = vmatprep.subr.mxu0 0.0
      %4527 = vmatpush1.msra.mxu0 %v4484
      %4528 = vmatprep.subr.mxu0 0.0
      %4529 = vmatpush1.msra.mxu0 %v4483
      %4530 = vmatprep.subr.mxu0 0.0
      %4531 = vmatpush1.msra.mxu0 %v4482
      %4532 = vmatprep.subr.mxu0 0.0
      %4533 = vmatpush1.msra.mxu0 %v4481
      %4534 = vmatprep.subr.mxu0 0.0
      %4535 = vmatpush1.msra.mxu0 %v4480
      %4536 = vmatprep.subr.mxu0 0.0
      %4537 = vmatpush1.msra.mxu0 %v4479
      %4538 = vmatprep.subr.mxu0 0.0
      %4539 = vmatpush1.msra.mxu0 %v4478
      %4540 = vmatprep.subr.mxu0 0.0
      %4541 = vmatpush1.msra.mxu0 %v4477
      %4542 = vmatprep.subr.mxu0 0.0
      %4543 = vmatpush1.msra.mxu0 %v4476
      %4544 = vmatprep.subr.mxu0 0.0
      %4545 = vmatpush1.msra.mxu0 %v4475
      %4546 = vmatprep.subr.mxu0 0.0
      %4547 = vmatpush1.msra.mxu0 %v4474
      %4548 = vmatprep.subr.mxu0 0.0
      %4549 = vmatpush1.msra.mxu0 %v4473
      %4550 = vmatprep.subr.mxu0 0.0
      %4551 = vmatpush1.msra.mxu0 %v4472
      %4552 = vmatprep.subr.mxu0 0.0
      %4553 = vmatpush2.msra.mxu0 %v4503
      %4554 = vmatprep.subr.mxu0 0.0
      %4555 = vmatpush2.msra.mxu0 %v4502
      %4556 = vmatprep.subr.mxu0 0.0
      %4557 = vmatpush2.msra.mxu0 %v4501
      %4558 = vmatprep.subr.mxu0 0.0
      %4559 = vmatpush2.msra.mxu0 %v4500
      %4560 = vmatprep.subr.mxu0 0.0
      %4561 = vmatpush2.msra.mxu0 %v4499
      %4562 = vmatprep.subr.mxu0 0.0
      %4563 = vmatpush2.msra.mxu0 %v4498
      %4564 = vmatprep.subr.mxu0 0.0
      %4565 = vmatpush2.msra.mxu0 %v4497
      %4566 = vmatprep.subr.mxu0 0.0
      %4567 = vmatpush2.msra.mxu0 %v4496
      %4568 = vmatprep.subr.mxu0 0.0
      %4569 = vmatpush2.msra.mxu0 %v4495
      %4570 = vmatprep.subr.mxu0 0.0
      %4571 = vmatpush2.msra.mxu0 %v4494
      %4572 = vmatprep.subr.mxu0 0.0
      %4573 = vmatpush2.msra.mxu0 %v4493
      %4574 = vmatprep.subr.mxu0 0.0
      %4575 = vmatpush2.msra.mxu0 %v4492
      %4576 = vmatprep.subr.mxu0 0.0
      %4577 = vmatpush2.msra.mxu0 %v4491
      %4578 = vmatprep.subr.mxu0 0.0
      %4579 = vmatpush2.msra.mxu0 %v4490
      %4580 = vmatprep.subr.mxu0 0.0
      %4581 = vmatpush2.msra.mxu0 %v4489
      %4582 = vmatprep.subr.mxu0 0.0
      %4583 = vmatpush2.msra.mxu0 %v4488
      %4584 = vmatprep.mubr.f32.mxu0 %v4425
      %4585 = vmatmul.mubr.f32.gmra.mxu0 %v4424
      %v4586 = vpop.f32.mrf.mxu0
      %v4587 = vadd.f32 0.0, %v4586
      %v4588 = vpop.f32.mrf.mxu0
      %4589 = vmatprep.mubr.f32.mxu0 %v4428
      %4590 = vmatmul.mubr.f32.gmra.mxu0 %v4427
      %v4591 = vpop.f32.mrf.mxu0
      %v4592 = vadd.f32 0.0, %v4591
      %v4593 = vpop.f32.mrf.mxu0
      %4594 = vmatprep.mubr.f32.mxu0 %v4431
      %4595 = vmatmul.mubr.f32.gmra.mxu0 %v4430
      %v4596 = vpop.f32.mrf.mxu0
      %v4597 = vadd.f32 0.0, %v4596
      %v4598 = vpop.f32.mrf.mxu0
      %4599 = vmatprep.mubr.f32.mxu0 %v4434
      %4600 = vmatmul.mubr.f32.gmra.mxu0 %v4433
      %v4601 = vpop.f32.mrf.mxu0
      %v4602 = vadd.f32 0.0, %v4601
      %v4603 = vpop.f32.mrf.mxu0
      %4604 = vmatprep.mubr.f32.mxu0 %v4437
      %4605 = vmatmul.mubr.f32.gmra.mxu0 %v4436
      %v4606 = vpop.f32.mrf.mxu0
      %v4607 = vadd.f32 0.0, %v4606
      %v4608 = vpop.f32.mrf.mxu0
      %4609 = vmatprep.mubr.f32.mxu0 %v4440
      %4610 = vmatmul.mubr.f32.gmra.mxu0 %v4439
      %v4611 = vpop.f32.mrf.mxu0
      %v4612 = vadd.f32 0.0, %v4611
      %v4613 = vpop.f32.mrf.mxu0
      %4614 = vmatprep.mubr.f32.mxu0 %v4443
      %4615 = vmatmul.mubr.f32.gmra.mxu0 %v4442
      %v4616 = vpop.f32.mrf.mxu0
      %v4617 = vadd.f32 0.0, %v4616
      %v4618 = vpop.f32.mrf.mxu0
      %4619 = vmatprep.mubr.f32.mxu0 %v4446
      %4620 = vmatmul.mubr.f32.gmra.mxu0 %v4445
      %v4621 = vpop.f32.mrf.mxu0
      %v4622 = vadd.f32 0.0, %v4621
      %v4623 = vpop.f32.mrf.mxu0
      %4624 = vmatprep.mubr.f32.mxu0 %v4449
      %4625 = vmatmul.mubr.f32.gmra.mxu0 %v4448
      %v4626 = vpop.f32.mrf.mxu0
      %v4627 = vadd.f32 0.0, %v4626
      %v4628 = vpop.f32.mrf.mxu0
      %4629 = vmatprep.mubr.f32.mxu0 %v4452
      %4630 = vmatmul.mubr.f32.gmra.mxu0 %v4451
      %v4631 = vpop.f32.mrf.mxu0
      %v4632 = vadd.f32 0.0, %v4631
      %v4633 = vpop.f32.mrf.mxu0
      %4634 = vmatprep.mubr.f32.mxu0 %v4455
      %4635 = vmatmul.mubr.f32.gmra.mxu0 %v4454
      %v4636 = vpop.f32.mrf.mxu0
      %v4637 = vadd.f32 0.0, %v4636
      %v4638 = vpop.f32.mrf.mxu0
      %4639 = vmatprep.mubr.f32.mxu0 %v4458
      %4640 = vmatmul.mubr.f32.gmra.mxu0 %v4457
      %v4641 = vpop.f32.mrf.mxu0
      %v4642 = vadd.f32 0.0, %v4641
      %v4643 = vpop.f32.mrf.mxu0
      %4644 = vmatprep.mubr.f32.mxu0 %v4461
      %4645 = vmatmul.mubr.f32.gmra.mxu0 %v4460
      %v4646 = vpop.f32.mrf.mxu0
      %v4647 = vadd.f32 0.0, %v4646
      %v4648 = vpop.f32.mrf.mxu0
      %4649 = vmatprep.mubr.f32.mxu0 %v4464
      %4650 = vmatmul.mubr.f32.gmra.mxu0 %v4463
      %v4651 = vpop.f32.mrf.mxu0
      %v4652 = vadd.f32 0.0, %v4651
      %v4653 = vpop.f32.mrf.mxu0
      %4654 = vmatprep.mubr.f32.mxu0 %v4467
      %4655 = vmatmul.mubr.f32.gmra.mxu0 %v4466
      %v4656 = vpop.f32.mrf.mxu0
      %v4657 = vadd.f32 0.0, %v4656
      %v4658 = vpop.f32.mrf.mxu0
      %4659 = vmatprep.mubr.f32.mxu0 %v4470
      %4660 = vmatmul.mubr.f32.gmra.mxu0 %v4469
      %v4661 = vpop.f32.mrf.mxu0
      %v4662 = vadd.f32 0.0, %v4661
      %v4663 = vpop.f32.mrf.mxu0
      %4664 = vdwg.mxu0
      %4665 = vmatprep.subr.mxu0 0.0
      %4666 = vmatpush1.msra.mxu0 %v4519
      %4667 = vmatprep.subr.mxu0 0.0
      %4668 = vmatpush1.msra.mxu0 %v4518
      %4669 = vmatprep.subr.mxu0 0.0
      %4670 = vmatpush1.msra.mxu0 %v4517
      %4671 = vmatprep.subr.mxu0 0.0
      %4672 = vmatpush1.msra.mxu0 %v4516
      %4673 = vmatprep.subr.mxu0 0.0
      %4674 = vmatpush1.msra.mxu0 %v4515
      %4675 = vmatprep.subr.mxu0 0.0
      %4676 = vmatpush1.msra.mxu0 %v4514
      %4677 = vmatprep.subr.mxu0 0.0
      %4678 = vmatpush1.msra.mxu0 %v4513
      %4679 = vmatprep.subr.mxu0 0.0
      %4680 = vmatpush1.msra.mxu0 %v4512
      %4681 = vmatprep.subr.mxu0 0.0
      %4682 = vmatpush1.msra.mxu0 %v4511
      %4683 = vmatprep.subr.mxu0 0.0
      %4684 = vmatpush1.msra.mxu0 %v4510
      %4685 = vmatprep.subr.mxu0 0.0
      %4686 = vmatpush1.msra.mxu0 %v4509
      %4687 = vmatprep.subr.mxu0 0.0
      %4688 = vmatpush1.msra.mxu0 %v4508
      %4689 = vmatprep.subr.mxu0 0.0
      %4690 = vmatpush1.msra.mxu0 %v4507
      %4691 = vmatprep.subr.mxu0 0.0
      %4692 = vmatpush1.msra.mxu0 %v4506
      %4693 = vmatprep.subr.mxu0 0.0
      %4694 = vmatpush1.msra.mxu0 %v4505
      %4695 = vmatprep.subr.mxu0 0.0
      %4696 = vmatpush1.msra.mxu0 %v4504
      %4697 = vmatprep.subr.mxu0 0.0
      %4698 = vmatpush2.msra.mxu0 0.0
      %4699 = vmatprep.subr.mxu0 0.0
      %4700 = vmatpush2.msra.mxu0 0.0
      %4701 = vmatprep.subr.mxu0 0.0
      %4702 = vmatpush2.msra.mxu0 0.0
      %4703 = vmatprep.subr.mxu0 0.0
      %4704 = vmatpush2.msra.mxu0 0.0
      %4705 = vmatprep.subr.mxu0 0.0
      %4706 = vmatpush2.msra.mxu0 0.0
      %4707 = vmatprep.subr.mxu0 0.0
      %4708 = vmatpush2.msra.mxu0 0.0
      %4709 = vmatprep.subr.mxu0 0.0
      %4710 = vmatpush2.msra.mxu0 0.0
      %4711 = vmatprep.subr.mxu0 0.0
      %4712 = vmatpush2.msra.mxu0 0.0
      %4713 = vmatprep.subr.mxu0 0.0
      %4714 = vmatpush2.msra.mxu0 0.0
      %4715 = vmatprep.subr.mxu0 0.0
      %4716 = vmatpush2.msra.mxu0 0.0
      %4717 = vmatprep.subr.mxu0 0.0
      %4718 = vmatpush2.msra.mxu0 0.0
      %4719 = vmatprep.subr.mxu0 0.0
      %4720 = vmatpush2.msra.mxu0 0.0
      %4721 = vmatprep.subr.mxu0 0.0
      %4722 = vmatpush2.msra.mxu0 0.0
      %4723 = vmatprep.subr.mxu0 0.0
      %4724 = vmatpush2.msra.mxu0 0.0
      %4725 = vmatprep.subr.mxu0 0.0
      %4726 = vmatpush2.msra.mxu0 0.0
      %4727 = vmatprep.subr.mxu0 0.0
      %4728 = vmatpush2.msra.mxu0 0.0
      %4729 = vmatprep.mubr.f32.mxu0 0.0
      %4730 = vmatmul.mubr.f32.gmra.mxu0 %v4426
      %v4731 = vpop.f32.mrf.mxu0
      %v4732 = vadd.f32 %v4587, %v4731
      %v4733 = vpop.f32.mrf.mxu0
      %4734 = vmatprep.mubr.f32.mxu0 0.0
      %4735 = vmatmul.mubr.f32.gmra.mxu0 %v4429
      %v4736 = vpop.f32.mrf.mxu0
      %v4737 = vadd.f32 %v4592, %v4736
      %v4738 = vpop.f32.mrf.mxu0
      %4739 = vmatprep.mubr.f32.mxu0 0.0
      %4740 = vmatmul.mubr.f32.gmra.mxu0 %v4432
      %v4741 = vpop.f32.mrf.mxu0
      %v4742 = vadd.f32 %v4597, %v4741
      %v4743 = vpop.f32.mrf.mxu0
      %4744 = vmatprep.mubr.f32.mxu0 0.0
      %4745 = vmatmul.mubr.f32.gmra.mxu0 %v4435
      %v4746 = vpop.f32.mrf.mxu0
      %v4747 = vadd.f32 %v4602, %v4746
      %v4748 = vpop.f32.mrf.mxu0
      %4749 = vmatprep.mubr.f32.mxu0 0.0
      %4750 = vmatmul.mubr.f32.gmra.mxu0 %v4438
      %v4751 = vpop.f32.mrf.mxu0
      %v4752 = vadd.f32 %v4607, %v4751
      %v4753 = vpop.f32.mrf.mxu0
      %4754 = vmatprep.mubr.f32.mxu0 0.0
      %4755 = vmatmul.mubr.f32.gmra.mxu0 %v4441
      %v4756 = vpop.f32.mrf.mxu0
      %v4757 = vadd.f32 %v4612, %v4756
      %v4758 = vpop.f32.mrf.mxu0
      %4759 = vmatprep.mubr.f32.mxu0 0.0
      %4760 = vmatmul.mubr.f32.gmra.mxu0 %v4444
      %v4761 = vpop.f32.mrf.mxu0
      %v4762 = vadd.f32 %v4617, %v4761
      %v4763 = vpop.f32.mrf.mxu0
      %4764 = vmatprep.mubr.f32.mxu0 0.0
      %4765 = vmatmul.mubr.f32.gmra.mxu0 %v4447
      %v4766 = vpop.f32.mrf.mxu0
      %v4767 = vadd.f32 %v4622, %v4766
      %v4768 = vpop.f32.mrf.mxu0
      %4769 = vmatprep.mubr.f32.mxu0 0.0
      %4770 = vmatmul.mubr.f32.gmra.mxu0 %v4450
      %v4771 = vpop.f32.mrf.mxu0
      %v4772 = vadd.f32 %v4627, %v4771
      %v4773 = vpop.f32.mrf.mxu0
      %4774 = vmatprep.mubr.f32.mxu0 0.0
      %4775 = vmatmul.mubr.f32.gmra.mxu0 %v4453
      %v4776 = vpop.f32.mrf.mxu0
      %v4777 = vadd.f32 %v4632, %v4776
      %v4778 = vpop.f32.mrf.mxu0
      %4779 = vmatprep.mubr.f32.mxu0 0.0
      %4780 = vmatmul.mubr.f32.gmra.mxu0 %v4456
      %v4781 = vpop.f32.mrf.mxu0
      %v4782 = vadd.f32 %v4637, %v4781
      %v4783 = vpop.f32.mrf.mxu0
      %4784 = vmatprep.mubr.f32.mxu0 0.0
      %4785 = vmatmul.mubr.f32.gmra.mxu0 %v4459
      %v4786 = vpop.f32.mrf.mxu0
      %v4787 = vadd.f32 %v4642, %v4786
      %v4788 = vpop.f32.mrf.mxu0
      %4789 = vmatprep.mubr.f32.mxu0 0.0
      %4790 = vmatmul.mubr.f32.gmra.mxu0 %v4462
      %v4791 = vpop.f32.mrf.mxu0
      %v4792 = vadd.f32 %v4647, %v4791
      %v4793 = vpop.f32.mrf.mxu0
      %4794 = vmatprep.mubr.f32.mxu0 0.0
      %4795 = vmatmul.mubr.f32.gmra.mxu0 %v4465
      %v4796 = vpop.f32.mrf.mxu0
      %v4797 = vadd.f32 %v4652, %v4796
      %v4798 = vpop.f32.mrf.mxu0
      %4799 = vmatprep.mubr.f32.mxu0 0.0
      %4800 = vmatmul.mubr.f32.gmra.mxu0 %v4468
      %v4801 = vpop.f32.mrf.mxu0
      %v4802 = vadd.f32 %v4657, %v4801
      %v4803 = vpop.f32.mrf.mxu0
      %4804 = vmatprep.mubr.f32.mxu0 0.0
      %4805 = vmatmul.mubr.f32.gmra.mxu0 %v4471
      %v4806 = vpop.f32.mrf.mxu0
      %v4807 = vadd.f32 %v4662, %v4806
      %v4808 = vpop.f32.mrf.mxu0
      %4809 = vdwg.mxu0
      %v4810 = vadd.f32 %v4346, %v4732
      %v4811 = vadd.f32 %v4351, %v4737
      %v4812 = vadd.f32 %v4356, %v4742
      %v4813 = vadd.f32 %v4361, %v4747
      %v4814 = vadd.f32 %v4366, %v4752
      %v4815 = vadd.f32 %v4371, %v4757
      %v4816 = vadd.f32 %v4376, %v4762
      %v4817 = vadd.f32 %v4381, %v4767
      %v4818 = vadd.f32 %v4386, %v4772
      %v4819 = vadd.f32 %v4391, %v4777
      %v4820 = vadd.f32 %v4396, %v4782
      %v4821 = vadd.f32 %v4401, %v4787
      %v4822 = vadd.f32 %v4406, %v4792
      %v4823 = vadd.f32 %v4411, %v4797
      %v4824 = vadd.f32 %v4416, %v4802
      %v4825 = vadd.f32 %v4421, %v4807
      %v4826 = vld [vmem:[%s2] sm:$0x1]
      %v4828 = vlaneseq
      %v4829 = vshrl.u32 %v4828, 7
      %v4830 = vsub.s32 0, %v4829
      %v4831 = vrot.slane %v4826, %v4830
      %v4833 = vadd.f32 %v4810, %v4831
      %v4834 = vadd.f32 %v4811, %v4831
      %v4835 = vadd.f32 %v4812, %v4831
      %v4836 = vadd.f32 %v4813, %v4831
      %v4837 = vadd.f32 %v4814, %v4831
      %v4838 = vadd.f32 %v4815, %v4831
      %v4839 = vadd.f32 %v4816, %v4831
      %v4840 = vadd.f32 %v4817, %v4831
      %v4841 = vadd.f32 %v4818, %v4831
      %v4842 = vadd.f32 %v4819, %v4831
      %v4843 = vadd.f32 %v4820, %v4831
      %v4844 = vadd.f32 %v4821, %v4831
      %v4845 = vadd.f32 %v4822, %v4831
      %v4846 = vadd.f32 %v4823, %v4831
      %v4847 = vadd.f32 %v4824, %v4831
      %v4848 = vadd.f32 %v4825, %v4831
      %v4849 = vmax.f32 %v4833, 0.0
      %v4850 = vmax.f32 %v4834, 0.0
      %v4851 = vmax.f32 %v4835, 0.0
      %v4852 = vmax.f32 %v4836, 0.0
      %v4853 = vmax.f32 %v4837, 0.0
      %v4854 = vmax.f32 %v4838, 0.0
      %v4855 = vmax.f32 %v4839, 0.0
      %v4856 = vmax.f32 %v4840, 0.0
      %v4857 = vmax.f32 %v4841, 0.0
      %v4858 = vmax.f32 %v4842, 0.0
      %v4859 = vmax.f32 %v4843, 0.0
      %v4860 = vmax.f32 %v4844, 0.0
      %v4861 = vmax.f32 %v4845, 0.0
      %v4862 = vmax.f32 %v4846, 0.0
      %v4863 = vmax.f32 %v4847, 0.0
      %v4864 = vmax.f32 %v4848, 0.0
      %v4865 = vadd.s32 %v1734, 280
      %v4866 = vadd.s32 %v1735, 280
      %v4867 = vadd.s32 %v1736, 280
      %v4868 = vadd.s32 %v1737, 280
      %v4869 = vadd.s32 %v1738, 280
      %v4870 = vadd.s32 %v1739, 280
      %v4871 = vadd.s32 %v1740, 280
      %v4872 = vadd.s32 %v1741, 280
      %v4873 = vadd.s32 %v1742, 280
      %v4874 = vadd.s32 %v1743, 280
      %v4875 = vadd.s32 %v1744, 280
      %v4876 = vadd.s32 %v1745, 280
      %v4877 = vadd.s32 %v1746, 280
      %v4878 = vadd.s32 %v1747, 280
      %v4879 = vadd.s32 %v1748, 280
      %v4880 = vadd.s32 %v1749, 280
      %vm4881 = vcmp.lt.s32.totalorder %v4865, 0
      %v4882 = vsub.s32 0, %v4865
      %v4883 = vsel %vm4881, %v4882, %v4865
      %v4884 = vmul.u32.u64.compose %v4883, 2863311531
      %v4885 = vextract.low.u32 %v4884
      %v4886 = vextract.high.u32 %v4884
      %v4887 = vshrl.u32 %v4886, 4
      %v4888 = vmul.u32 %v4887, 24
      %v4889 = vsub.s32 %v4883, %v4888
      %v4890 = vsub.s32 0, %v4889
      %v4891 = vsel %vm4881, %v4890, %v4889
      %vm4892 = vcmp.lt.s32.totalorder %v4866, 0
      %v4893 = vsub.s32 0, %v4866
      %v4894 = vsel %vm4892, %v4893, %v4866
      %v4895 = vmul.u32.u64.compose %v4894, 2863311531
      %v4896 = vextract.low.u32 %v4895
      %v4897 = vextract.high.u32 %v4895
      %v4898 = vshrl.u32 %v4897, 4
      %v4899 = vmul.u32 %v4898, 24
      %v4900 = vsub.s32 %v4894, %v4899
      %v4901 = vsub.s32 0, %v4900
      %v4902 = vsel %vm4892, %v4901, %v4900
      %vm4903 = vcmp.lt.s32.totalorder %v4867, 0
      %v4904 = vsub.s32 0, %v4867
      %v4905 = vsel %vm4903, %v4904, %v4867
      %v4906 = vmul.u32.u64.compose %v4905, 2863311531
      %v4907 = vextract.low.u32 %v4906
      %v4908 = vextract.high.u32 %v4906
      %v4909 = vshrl.u32 %v4908, 4
      %v4910 = vmul.u32 %v4909, 24
      %v4911 = vsub.s32 %v4905, %v4910
      %v4912 = vsub.s32 0, %v4911
      %v4913 = vsel %vm4903, %v4912, %v4911
      %vm4914 = vcmp.lt.s32.totalorder %v4868, 0
      %v4915 = vsub.s32 0, %v4868
      %v4916 = vsel %vm4914, %v4915, %v4868
      %v4917 = vmul.u32.u64.compose %v4916, 2863311531
      %v4918 = vextract.low.u32 %v4917
      %v4919 = vextract.high.u32 %v4917
      %v4920 = vshrl.u32 %v4919, 4
      %v4921 = vmul.u32 %v4920, 24
      %v4922 = vsub.s32 %v4916, %v4921
      %v4923 = vsub.s32 0, %v4922
      %v4924 = vsel %vm4914, %v4923, %v4922
      %vm4925 = vcmp.lt.s32.totalorder %v4869, 0
      %v4926 = vsub.s32 0, %v4869
      %v4927 = vsel %vm4925, %v4926, %v4869
      %v4928 = vmul.u32.u64.compose %v4927, 2863311531
      %v4929 = vextract.low.u32 %v4928
      %v4930 = vextract.high.u32 %v4928
      %v4931 = vshrl.u32 %v4930, 4
      %v4932 = vmul.u32 %v4931, 24
      %v4933 = vsub.s32 %v4927, %v4932
      %v4934 = vsub.s32 0, %v4933
      %v4935 = vsel %vm4925, %v4934, %v4933
      %vm4936 = vcmp.lt.s32.totalorder %v4870, 0
      %v4937 = vsub.s32 0, %v4870
      %v4938 = vsel %vm4936, %v4937, %v4870
      %v4939 = vmul.u32.u64.compose %v4938, 2863311531
      %v4940 = vextract.low.u32 %v4939
      %v4941 = vextract.high.u32 %v4939
      %v4942 = vshrl.u32 %v4941, 4
      %v4943 = vmul.u32 %v4942, 24
      %v4944 = vsub.s32 %v4938, %v4943
      %v4945 = vsub.s32 0, %v4944
      %v4946 = vsel %vm4936, %v4945, %v4944
      %vm4947 = vcmp.lt.s32.totalorder %v4871, 0
      %v4948 = vsub.s32 0, %v4871
      %v4949 = vsel %vm4947, %v4948, %v4871
      %v4950 = vmul.u32.u64.compose %v4949, 2863311531
      %v4951 = vextract.low.u32 %v4950
      %v4952 = vextract.high.u32 %v4950
      %v4953 = vshrl.u32 %v4952, 4
      %v4954 = vmul.u32 %v4953, 24
      %v4955 = vsub.s32 %v4949, %v4954
      %v4956 = vsub.s32 0, %v4955
      %v4957 = vsel %vm4947, %v4956, %v4955
      %vm4958 = vcmp.lt.s32.totalorder %v4872, 0
      %v4959 = vsub.s32 0, %v4872
      %v4960 = vsel %vm4958, %v4959, %v4872
      %v4961 = vmul.u32.u64.compose %v4960, 2863311531
      %v4962 = vextract.low.u32 %v4961
      %v4963 = vextract.high.u32 %v4961
      %v4964 = vshrl.u32 %v4963, 4
      %v4965 = vmul.u32 %v4964, 24
      %v4966 = vsub.s32 %v4960, %v4965
      %v4967 = vsub.s32 0, %v4966
      %v4968 = vsel %vm4958, %v4967, %v4966
      %vm4969 = vcmp.lt.s32.totalorder %v4873, 0
      %v4970 = vsub.s32 0, %v4873
      %v4971 = vsel %vm4969, %v4970, %v4873
      %v4972 = vmul.u32.u64.compose %v4971, 2863311531
      %v4973 = vextract.low.u32 %v4972
      %v4974 = vextract.high.u32 %v4972
      %v4975 = vshrl.u32 %v4974, 4
      %v4976 = vmul.u32 %v4975, 24
      %v4977 = vsub.s32 %v4971, %v4976
      %v4978 = vsub.s32 0, %v4977
      %v4979 = vsel %vm4969, %v4978, %v4977
      %vm4980 = vcmp.lt.s32.totalorder %v4874, 0
      %v4981 = vsub.s32 0, %v4874
      %v4982 = vsel %vm4980, %v4981, %v4874
      %v4983 = vmul.u32.u64.compose %v4982, 2863311531
      %v4984 = vextract.low.u32 %v4983
      %v4985 = vextract.high.u32 %v4983
      %v4986 = vshrl.u32 %v4985, 4
      %v4987 = vmul.u32 %v4986, 24
      %v4988 = vsub.s32 %v4982, %v4987
      %v4989 = vsub.s32 0, %v4988
      %v4990 = vsel %vm4980, %v4989, %v4988
      %vm4991 = vcmp.lt.s32.totalorder %v4875, 0
      %v4992 = vsub.s32 0, %v4875
      %v4993 = vsel %vm4991, %v4992, %v4875
      %v4994 = vmul.u32.u64.compose %v4993, 2863311531
      %v4995 = vextract.low.u32 %v4994
      %v4996 = vextract.high.u32 %v4994
      %v4997 = vshrl.u32 %v4996, 4
      %v4998 = vmul.u32 %v4997, 24
      %v4999 = vsub.s32 %v4993, %v4998
      %v5000 = vsub.s32 0, %v4999
      %v5001 = vsel %vm4991, %v5000, %v4999
      %vm5002 = vcmp.lt.s32.totalorder %v4876, 0
      %v5003 = vsub.s32 0, %v4876
      %v5004 = vsel %vm5002, %v5003, %v4876
      %v5005 = vmul.u32.u64.compose %v5004, 2863311531
      %v5006 = vextract.low.u32 %v5005
      %v5007 = vextract.high.u32 %v5005
      %v5008 = vshrl.u32 %v5007, 4
      %v5009 = vmul.u32 %v5008, 24
      %v5010 = vsub.s32 %v5004, %v5009
      %v5011 = vsub.s32 0, %v5010
      %v5012 = vsel %vm5002, %v5011, %v5010
      %vm5013 = vcmp.lt.s32.totalorder %v4877, 0
      %v5014 = vsub.s32 0, %v4877
      %v5015 = vsel %vm5013, %v5014, %v4877
      %v5016 = vmul.u32.u64.compose %v5015, 2863311531
      %v5017 = vextract.low.u32 %v5016
      %v5018 = vextract.high.u32 %v5016
      %v5019 = vshrl.u32 %v5018, 4
      %v5020 = vmul.u32 %v5019, 24
      %v5021 = vsub.s32 %v5015, %v5020
      %v5022 = vsub.s32 0, %v5021
      %v5023 = vsel %vm5013, %v5022, %v5021
      %vm5024 = vcmp.lt.s32.totalorder %v4878, 0
      %v5025 = vsub.s32 0, %v4878
      %v5026 = vsel %vm5024, %v5025, %v4878
      %v5027 = vmul.u32.u64.compose %v5026, 2863311531
      %v5028 = vextract.low.u32 %v5027
      %v5029 = vextract.high.u32 %v5027
      %v5030 = vshrl.u32 %v5029, 4
      %v5031 = vmul.u32 %v5030, 24
      %v5032 = vsub.s32 %v5026, %v5031
      %v5033 = vsub.s32 0, %v5032
      %v5034 = vsel %vm5024, %v5033, %v5032
      %vm5035 = vcmp.lt.s32.totalorder %v4879, 0
      %v5036 = vsub.s32 0, %v4879
      %v5037 = vsel %vm5035, %v5036, %v4879
      %v5038 = vmul.u32.u64.compose %v5037, 2863311531
      %v5039 = vextract.low.u32 %v5038
      %v5040 = vextract.high.u32 %v5038
      %v5041 = vshrl.u32 %v5040, 4
      %v5042 = vmul.u32 %v5041, 24
      %v5043 = vsub.s32 %v5037, %v5042
      %v5044 = vsub.s32 0, %v5043
      %v5045 = vsel %vm5035, %v5044, %v5043
      %vm5046 = vcmp.lt.s32.totalorder %v4880, 0
      %v5047 = vsub.s32 0, %v4880
      %v5048 = vsel %vm5046, %v5047, %v4880
      %v5049 = vmul.u32.u64.compose %v5048, 2863311531
      %v5050 = vextract.low.u32 %v5049
      %v5051 = vextract.high.u32 %v5049
      %v5052 = vshrl.u32 %v5051, 4
      %v5053 = vmul.u32 %v5052, 24
      %v5054 = vsub.s32 %v5048, %v5053
      %v5055 = vsub.s32 0, %v5054
      %v5056 = vsel %vm5046, %v5055, %v5054
      %vm5057 = vcmp.ne.s32.totalorder %v4891, 0
      %vm5058 = vcmp.ne.s32.totalorder %v4902, 0
      %vm5059 = vcmp.ne.s32.totalorder %v4913, 0
      %vm5060 = vcmp.ne.s32.totalorder %v4924, 0
      %vm5061 = vcmp.ne.s32.totalorder %v4935, 0
      %vm5062 = vcmp.ne.s32.totalorder %v4946, 0
      %vm5063 = vcmp.ne.s32.totalorder %v4957, 0
      %vm5064 = vcmp.ne.s32.totalorder %v4968, 0
      %vm5065 = vcmp.ne.s32.totalorder %v4979, 0
      %vm5066 = vcmp.ne.s32.totalorder %v4990, 0
      %vm5067 = vcmp.ne.s32.totalorder %v5001, 0
      %vm5068 = vcmp.ne.s32.totalorder %v5012, 0
      %vm5069 = vcmp.ne.s32.totalorder %v5023, 0
      %vm5070 = vcmp.ne.s32.totalorder %v5034, 0
      %vm5071 = vcmp.ne.s32.totalorder %v5045, 0
      %vm5072 = vcmp.ne.s32.totalorder %v5056, 0
      %vm5073 = vcmp.lt.s32.totalorder %v4891, 0
      %vm5074 = vcmp.lt.s32.totalorder %v4902, 0
      %vm5075 = vcmp.lt.s32.totalorder %v4913, 0
      %vm5076 = vcmp.lt.s32.totalorder %v4924, 0
      %vm5077 = vcmp.lt.s32.totalorder %v4935, 0
      %vm5078 = vcmp.lt.s32.totalorder %v4946, 0
      %vm5079 = vcmp.lt.s32.totalorder %v4957, 0
      %vm5080 = vcmp.lt.s32.totalorder %v4968, 0
      %vm5081 = vcmp.lt.s32.totalorder %v4979, 0
      %vm5082 = vcmp.lt.s32.totalorder %v4990, 0
      %vm5083 = vcmp.lt.s32.totalorder %v5001, 0
      %vm5084 = vcmp.lt.s32.totalorder %v5012, 0
      %vm5085 = vcmp.lt.s32.totalorder %v5023, 0
      %vm5086 = vcmp.lt.s32.totalorder %v5034, 0
      %vm5087 = vcmp.lt.s32.totalorder %v5045, 0
      %vm5088 = vcmp.lt.s32.totalorder %v5056, 0
      %vm5089 = vmand %vm5073, %vm5057
      %vm5090 = vmand %vm5074, %vm5058
      %vm5091 = vmand %vm5075, %vm5059
      %vm5092 = vmand %vm5076, %vm5060
      %vm5093 = vmand %vm5077, %vm5061
      %vm5094 = vmand %vm5078, %vm5062
      %vm5095 = vmand %vm5079, %vm5063
      %vm5096 = vmand %vm5080, %vm5064
      %vm5097 = vmand %vm5081, %vm5065
      %vm5098 = vmand %vm5082, %vm5066
      %vm5099 = vmand %vm5083, %vm5067
      %vm5100 = vmand %vm5084, %vm5068
      %vm5101 = vmand %vm5085, %vm5069
      %vm5102 = vmand %vm5086, %vm5070
      %vm5103 = vmand %vm5087, %vm5071
      %vm5104 = vmand %vm5088, %vm5072
      %v5105 = vadd.s32 %v4891, 24
      %v5106 = vadd.s32 %v4902, 24
      %v5107 = vadd.s32 %v4913, 24
      %v5108 = vadd.s32 %v4924, 24
      %v5109 = vadd.s32 %v4935, 24
      %v5110 = vadd.s32 %v4946, 24
      %v5111 = vadd.s32 %v4957, 24
      %v5112 = vadd.s32 %v4968, 24
      %v5113 = vadd.s32 %v4979, 24
      %v5114 = vadd.s32 %v4990, 24
      %v5115 = vadd.s32 %v5001, 24
      %v5116 = vadd.s32 %v5012, 24
      %v5117 = vadd.s32 %v5023, 24
      %v5118 = vadd.s32 %v5034, 24
      %v5119 = vadd.s32 %v5045, 24
      %v5120 = vadd.s32 %v5056, 24
      %v5121 = vsel %vm5089, %v5105, %v4891
      %v5122 = vsel %vm5090, %v5106, %v4902
      %v5123 = vsel %vm5091, %v5107, %v4913
      %v5124 = vsel %vm5092, %v5108, %v4924
      %v5125 = vsel %vm5093, %v5109, %v4935
      %v5126 = vsel %vm5094, %v5110, %v4946
      %v5127 = vsel %vm5095, %v5111, %v4957
      %v5128 = vsel %vm5096, %v5112, %v4968
      %v5129 = vsel %vm5097, %v5113, %v4979
      %v5130 = vsel %vm5098, %v5114, %v4990
      %v5131 = vsel %vm5099, %v5115, %v5001
      %v5132 = vsel %vm5100, %v5116, %v5012
      %v5133 = vsel %vm5101, %v5117, %v5023
      %v5134 = vsel %vm5102, %v5118, %v5034
      %v5135 = vsel %vm5103, %v5119, %v5045
      %v5136 = vsel %vm5104, %v5120, %v5056
      %vm5137 = vcmp.ge.s32.totalorder %v5121, 1
      %vm5138 = vcmp.ge.s32.totalorder %v5122, 1
      %vm5139 = vcmp.ge.s32.totalorder %v5123, 1
      %vm5140 = vcmp.ge.s32.totalorder %v5124, 1
      %vm5141 = vcmp.ge.s32.totalorder %v5125, 1
      %vm5142 = vcmp.ge.s32.totalorder %v5126, 1
      %vm5143 = vcmp.ge.s32.totalorder %v5127, 1
      %vm5144 = vcmp.ge.s32.totalorder %v5128, 1
      %vm5145 = vcmp.ge.s32.totalorder %v5129, 1
      %vm5146 = vcmp.ge.s32.totalorder %v5130, 1
      %vm5147 = vcmp.ge.s32.totalorder %v5131, 1
      %vm5148 = vcmp.ge.s32.totalorder %v5132, 1
      %vm5149 = vcmp.ge.s32.totalorder %v5133, 1
      %vm5150 = vcmp.ge.s32.totalorder %v5134, 1
      %vm5151 = vcmp.ge.s32.totalorder %v5135, 1
      %vm5152 = vcmp.ge.s32.totalorder %v5136, 1
      %vm5153 = vcmp.le.s32.totalorder %v5121, 16
      %vm5154 = vcmp.le.s32.totalorder %v5122, 16
      %vm5155 = vcmp.le.s32.totalorder %v5123, 16
      %vm5156 = vcmp.le.s32.totalorder %v5124, 16
      %vm5157 = vcmp.le.s32.totalorder %v5125, 16
      %vm5158 = vcmp.le.s32.totalorder %v5126, 16
      %vm5159 = vcmp.le.s32.totalorder %v5127, 16
      %vm5160 = vcmp.le.s32.totalorder %v5128, 16
      %vm5161 = vcmp.le.s32.totalorder %v5129, 16
      %vm5162 = vcmp.le.s32.totalorder %v5130, 16
      %vm5163 = vcmp.le.s32.totalorder %v5131, 16
      %vm5164 = vcmp.le.s32.totalorder %v5132, 16
      %vm5165 = vcmp.le.s32.totalorder %v5133, 16
      %vm5166 = vcmp.le.s32.totalorder %v5134, 16
      %vm5167 = vcmp.le.s32.totalorder %v5135, 16
      %vm5168 = vcmp.le.s32.totalorder %v5136, 16
      %vm5169 = vmand %vm5137, %vm5153
      %vm5170 = vmand %vm5138, %vm5154
      %vm5171 = vmand %vm5139, %vm5155
      %vm5172 = vmand %vm5140, %vm5156
      %vm5173 = vmand %vm5141, %vm5157
      %vm5174 = vmand %vm5142, %vm5158
      %vm5175 = vmand %vm5143, %vm5159
      %vm5176 = vmand %vm5144, %vm5160
      %vm5177 = vmand %vm5145, %vm5161
      %vm5178 = vmand %vm5146, %vm5162
      %vm5179 = vmand %vm5147, %vm5163
      %vm5180 = vmand %vm5148, %vm5164
      %vm5181 = vmand %vm5149, %vm5165
      %vm5182 = vmand %vm5150, %vm5166
      %vm5183 = vmand %vm5151, %vm5167
      %vm5184 = vmand %vm5152, %vm5168
      %v5185 = vsel %vm5169, 1, 0
      %v5186 = vsel %vm5170, 1, 0
      %v5187 = vsel %vm5171, 1, 0
      %v5188 = vsel %vm5172, 1, 0
      %v5189 = vsel %vm5173, 1, 0
      %v5190 = vsel %vm5174, 1, 0
      %v5191 = vsel %vm5175, 1, 0
      %v5192 = vsel %vm5176, 1, 0
      %v5193 = vsel %vm5177, 1, 0
      %v5194 = vsel %vm5178, 1, 0
      %v5195 = vsel %vm5179, 1, 0
      %v5196 = vsel %vm5180, 1, 0
      %v5197 = vsel %vm5181, 1, 0
      %v5198 = vsel %vm5182, 1, 0
      %v5199 = vsel %vm5183, 1, 0
      %v5200 = vsel %vm5184, 1, 0
      %vm5201 = vcmp.eq.s32.totalorder %v5185, 1
      %vm5202 = vcmp.eq.s32.totalorder %v5186, 1
      %vm5203 = vcmp.eq.s32.totalorder %v5187, 1
      %vm5204 = vcmp.eq.s32.totalorder %v5188, 1
      %vm5205 = vcmp.eq.s32.totalorder %v5189, 1
      %vm5206 = vcmp.eq.s32.totalorder %v5190, 1
      %vm5207 = vcmp.eq.s32.totalorder %v5191, 1
      %vm5208 = vcmp.eq.s32.totalorder %v5192, 1
      %vm5209 = vcmp.eq.s32.totalorder %v5193, 1
      %vm5210 = vcmp.eq.s32.totalorder %v5194, 1
      %vm5211 = vcmp.eq.s32.totalorder %v5195, 1
      %vm5212 = vcmp.eq.s32.totalorder %v5196, 1
      %vm5213 = vcmp.eq.s32.totalorder %v5197, 1
      %vm5214 = vcmp.eq.s32.totalorder %v5198, 1
      %vm5215 = vcmp.eq.s32.totalorder %v5199, 1
      %vm5216 = vcmp.eq.s32.totalorder %v5200, 1
      %v5217 = vsel %vm5201, %v4849, 0.0
      %v5218 = vsel %vm5202, %v4850, 0.0
      %v5219 = vsel %vm5203, %v4851, 0.0
      %v5220 = vsel %vm5204, %v4852, 0.0
      %v5221 = vsel %vm5205, %v4853, 0.0
      %v5222 = vsel %vm5206, %v4854, 0.0
      %v5223 = vsel %vm5207, %v4855, 0.0
      %v5224 = vsel %vm5208, %v4856, 0.0
      %v5225 = vsel %vm5209, %v4857, 0.0
      %v5226 = vsel %vm5210, %v4858, 0.0
      %v5227 = vsel %vm5211, %v4859, 0.0
      %v5228 = vsel %vm5212, %v4860, 0.0
      %v5229 = vsel %vm5213, %v4861, 0.0
      %v5230 = vsel %vm5214, %v4862, 0.0
      %v5231 = vsel %vm5215, %v4863, 0.0
      %v5232 = vsel %vm5216, %v4864, 0.0
      %5233 = vst [vmem:[#allocation3 + $0x120] sm:$0xff] %v5217
      %5234 = vst [vmem:[#allocation3 + $0x128] sm:$0xff] %v5218
      %5235 = vst [vmem:[#allocation3 + $0x130] sm:$0xff] %v5219
      %5236 = vst [vmem:[#allocation3 + $0x138] sm:$0xff] %v5220
      %5237 = vst [vmem:[#allocation3 + $0x140] sm:$0xff] %v5221
      %5238 = vst [vmem:[#allocation3 + $0x148] sm:$0xff] %v5222
      %5239 = vst [vmem:[#allocation3 + $0x150] sm:$0xff] %v5223
      %5240 = vst [vmem:[#allocation3 + $0x158] sm:$0xff] %v5224
      %5241 = vst [vmem:[#allocation3 + $0x160] sm:$0xff] %v5225
      %5242 = vst [vmem:[#allocation3 + $0x168] sm:$0xff] %v5226
      %5243 = vst [vmem:[#allocation3 + $0x170] sm:$0xff] %v5227
      %5244 = vst [vmem:[#allocation3 + $0x178] sm:$0xff] %v5228
      %5245 = vst [vmem:[#allocation3 + $0x180] sm:$0xff] %v5229
      %5246 = vst [vmem:[#allocation3 + $0x188] sm:$0xff] %v5230
      %5247 = vst [vmem:[#allocation3 + $0x190] sm:$0xff] %v5231
      %5248 = vst [vmem:[#allocation3 + $0x198] sm:$0xff] %v5232
      %v5249 = vld [vmem:[#allocation3 + $0x7] sm:$0xff]
      %v5250 = vld [vmem:[#allocation3 + $0xf] sm:$0xff]
      %v5251 = vld [vmem:[#allocation3 + $0x17] sm:$0xff]
      %v5252 = vld [vmem:[#allocation3 + $0x1f] sm:$0xff]
      %v5253 = vld [vmem:[#allocation3 + $0x27] sm:$0xff]
      %v5254 = vld [vmem:[#allocation3 + $0x2f] sm:$0xff]
      %v5255 = vld [vmem:[#allocation3 + $0x37] sm:$0xff]
      %v5256 = vld [vmem:[#allocation3 + $0x3f] sm:$0xff]
      %v5257 = vld [vmem:[#allocation3 + $0x47] sm:$0xff]
      %v5258 = vld [vmem:[#allocation3 + $0x4f] sm:$0xff]
      %v5259 = vld [vmem:[#allocation3 + $0x57] sm:$0xff]
      %v5260 = vld [vmem:[#allocation3 + $0x5f] sm:$0xff]
      %v5261 = vld [vmem:[#allocation3 + $0x67] sm:$0xff]
      %v5262 = vld [vmem:[#allocation3 + $0x6f] sm:$0xff]
      %v5263 = vld [vmem:[#allocation3 + $0x77] sm:$0xff]
      %v5264 = vld [vmem:[#allocation3 + $0x7f] sm:$0xff]
      %v5265 = vld [vmem:[#allocation3 + $0x87] sm:$0xff]
      %v5266 = vld [vmem:[#allocation3 + $0x8f] sm:$0xff]
      %v5267 = vld [vmem:[#allocation3 + $0x97] sm:$0xff]
      %v5268 = vld [vmem:[#allocation3 + $0x9f] sm:$0xff]
      %v5269 = vld [vmem:[#allocation3 + $0xa7] sm:$0xff]
      %v5270 = vld [vmem:[#allocation3 + $0xaf] sm:$0xff]
      %v5271 = vld [vmem:[#allocation3 + $0xb7] sm:$0xff]
      %v5272 = vld [vmem:[#allocation3 + $0xbf] sm:$0xff]
      %v5273 = vld [vmem:[#allocation3 + $0xc7] sm:$0xff]
      %v5274 = vld [vmem:[#allocation3 + $0xcf] sm:$0xff]
      %v5275 = vld [vmem:[#allocation3 + $0xd7] sm:$0xff]
      %v5276 = vld [vmem:[#allocation3 + $0xdf] sm:$0xff]
      %v5277 = vld [vmem:[#allocation3 + $0xe7] sm:$0xff]
      %v5278 = vld [vmem:[#allocation3 + $0xef] sm:$0xff]
      %v5279 = vld [vmem:[#allocation3 + $0xf7] sm:$0xff]
      %v5280 = vld [vmem:[#allocation3 + $0xff] sm:$0xff]
      %v5281 = vld [vmem:[#allocation3 + $0x107] sm:$0xff]
      %v5282 = vld [vmem:[#allocation3 + $0x10f] sm:$0xff]
      %v5283 = vld [vmem:[#allocation3 + $0x117] sm:$0xff]
      %v5284 = vld [vmem:[#allocation3 + $0x11f] sm:$0xff]
      %v5285 = vld [vmem:[#allocation3 + $0x127] sm:$0xff]
      %v5286 = vld [vmem:[#allocation3 + $0x12f] sm:$0xff]
      %v5287 = vld [vmem:[#allocation3 + $0x137] sm:$0xff]
      %v5288 = vld [vmem:[#allocation3 + $0x13f] sm:$0xff]
      %v5289 = vld [vmem:[#allocation3 + $0x147] sm:$0xff]
      %v5290 = vld [vmem:[#allocation3 + $0x14f] sm:$0xff]
      %v5291 = vld [vmem:[#allocation3 + $0x157] sm:$0xff]
      %v5292 = vld [vmem:[#allocation3 + $0x15f] sm:$0xff]
      %v5293 = vld [vmem:[#allocation3 + $0x167] sm:$0xff]
      %v5294 = vld [vmem:[#allocation3 + $0x16f] sm:$0xff]
      %v5295 = vld [vmem:[#allocation3 + $0x177] sm:$0xff]
      %v5296 = vld [vmem:[#allocation3 + $0x17f] sm:$0xff]
      %v5297 = vld [vmem:[#allocation3 + $0x187] sm:$0xff]
      %v5298 = vld [vmem:[#allocation3 + $0x18f] sm:$0xff]
      %v5299 = vld [vmem:[#allocation3 + $0x197] sm:$0xff]
      %v5300 = vld [vmem:[#allocation3 + $0x19f] sm:$0xff]
      %v5301 = vld [vmem:[#allocation3 + $0x1a7] sm:$0xff]
      %v5302 = vld [vmem:[#allocation3 + $0x1af] sm:$0xff]
      %5303 = vst [vmem:[#allocation2] sm:$0xff] %v5249
      %5304 = vst [vmem:[#allocation2 + $0x18] sm:$0xff] %v5250
      %5305 = vst [vmem:[#allocation2 + $0x30] sm:$0xff] %v5251
      %5306 = vst [vmem:[#allocation2 + $0x48] sm:$0xff] %v5252
      %5307 = vst [vmem:[#allocation2 + $0x60] sm:$0xff] %v5253
      %5308 = vst [vmem:[#allocation2 + $0x78] sm:$0xff] %v5254
      %5309 = vst [vmem:[#allocation2 + $0x90] sm:$0xff] %v5255
      %5310 = vst [vmem:[#allocation2 + $0xa8] sm:$0xff] %v5256
      %5311 = vst [vmem:[#allocation2 + $0xc0] sm:$0xff] %v5257
      %5312 = vst [vmem:[#allocation2 + $0xd8] sm:$0xff] %v5258
      %5313 = vst [vmem:[#allocation2 + $0xf0] sm:$0xff] %v5259
      %5314 = vst [vmem:[#allocation2 + $0x108] sm:$0xff] %v5260
      %5315 = vst [vmem:[#allocation2 + $0x120] sm:$0xff] %v5261
      %5316 = vst [vmem:[#allocation2 + $0x138] sm:$0xff] %v5262
      %5317 = vst [vmem:[#allocation2 + $0x150] sm:$0xff] %v5263
      %5318 = vst [vmem:[#allocation2 + $0x168] sm:$0xff] %v5264
      %5319 = vst [vmem:[#allocation2 + $0x180] sm:$0xff] %v5265
      %5320 = vst [vmem:[#allocation2 + $0x198] sm:$0xff] %v5266
      %5321 = vst [vmem:[#allocation2 + $0x1b0] sm:$0xff] %v5267
      %5322 = vst [vmem:[#allocation2 + $0x1c8] sm:$0xff] %v5268
      %5323 = vst [vmem:[#allocation2 + $0x1e0] sm:$0xff] %v5269
      %5324 = vst [vmem:[#allocation2 + $0x1f8] sm:$0xff] %v5270
      %5325 = vst [vmem:[#allocation2 + $0x210] sm:$0xff] %v5271
      %5326 = vst [vmem:[#allocation2 + $0x228] sm:$0xff] %v5272
      %5327 = vst [vmem:[#allocation2 + $0x240] sm:$0xff] %v5273
      %5328 = vst [vmem:[#allocation2 + $0x258] sm:$0xff] %v5274
      %5329 = vst [vmem:[#allocation2 + $0x270] sm:$0xff] %v5275
      %5330 = vst [vmem:[#allocation2 + $0x288] sm:$0xff] %v5276
      %5331 = vst [vmem:[#allocation2 + $0x2a0] sm:$0xff] %v5277
      %5332 = vst [vmem:[#allocation2 + $0x2b8] sm:$0xff] %v5278
      %5333 = vst [vmem:[#allocation2 + $0x2d0] sm:$0xff] %v5279
      %5334 = vst [vmem:[#allocation2 + $0x2e8] sm:$0xff] %v5280
      %5335 = vst [vmem:[#allocation2 + $0x300] sm:$0xff] %v5281
      %5336 = vst [vmem:[#allocation2 + $0x318] sm:$0xff] %v5282
      %5337 = vst [vmem:[#allocation2 + $0x330] sm:$0xff] %v5283
      %5338 = vst [vmem:[#allocation2 + $0x348] sm:$0xff] %v5284
      %5339 = vst [vmem:[#allocation2 + $0x360] sm:$0xff] %v5285
      %5340 = vst [vmem:[#allocation2 + $0x378] sm:$0xff] %v5286
      %5341 = vst [vmem:[#allocation2 + $0x390] sm:$0xff] %v5287
      %5342 = vst [vmem:[#allocation2 + $0x3a8] sm:$0xff] %v5288
      %5343 = vst [vmem:[#allocation2 + $0x3c0] sm:$0xff] %v5289
      %5344 = vst [vmem:[#allocation2 + $0x3d8] sm:$0xff] %v5290
      %5345 = vst [vmem:[#allocation2 + $0x3f0] sm:$0xff] %v5291
      %5346 = vst [vmem:[#allocation2 + $0x408] sm:$0xff] %v5292
      %5347 = vst [vmem:[#allocation2 + $0x420] sm:$0xff] %v5293
      %5348 = vst [vmem:[#allocation2 + $0x438] sm:$0xff] %v5294
      %5349 = vst [vmem:[#allocation2 + $0x450] sm:$0xff] %v5295
      %5350 = vst [vmem:[#allocation2 + $0x468] sm:$0xff] %v5296
      %5351 = vst [vmem:[#allocation2 + $0x480] sm:$0xff] %v5297
      %5352 = vst [vmem:[#allocation2 + $0x498] sm:$0xff] %v5298
      %5353 = vst [vmem:[#allocation2 + $0x4b0] sm:$0xff] %v5299
      %5354 = vst [vmem:[#allocation2 + $0x4c8] sm:$0xff] %v5300
      %5355 = vst [vmem:[#allocation2 + $0x4e0] sm:$0xff] %v5301
      %5356 = vst [vmem:[#allocation2 + $0x4f8] sm:$0xff] %v5302
      %v5357 = vld [vmem:[#allocation3 + $0x8] sm:$0xff]
      %v5358 = vld [vmem:[#allocation3 + $0x10] sm:$0xff]
      %v5359 = vld [vmem:[#allocation3 + $0x18] sm:$0xff]
      %v5360 = vld [vmem:[#allocation3 + $0x20] sm:$0xff]
      %v5361 = vld [vmem:[#allocation3 + $0x28] sm:$0xff]
      %v5362 = vld [vmem:[#allocation3 + $0x30] sm:$0xff]
      %v5363 = vld [vmem:[#allocation3 + $0x38] sm:$0xff]
      %v5364 = vld [vmem:[#allocation3 + $0x40] sm:$0xff]
      %v5365 = vld [vmem:[#allocation3 + $0x48] sm:$0xff]
      %v5366 = vld [vmem:[#allocation3 + $0x50] sm:$0xff]
      %v5367 = vld [vmem:[#allocation3 + $0x58] sm:$0xff]
      %v5368 = vld [vmem:[#allocation3 + $0x60] sm:$0xff]
      %v5369 = vld [vmem:[#allocation3 + $0x68] sm:$0xff]
      %v5370 = vld [vmem:[#allocation3 + $0x70] sm:$0xff]
      %v5371 = vld [vmem:[#allocation3 + $0x78] sm:$0xff]
      %v5372 = vld [vmem:[#allocation3 + $0x80] sm:$0xff]
      %v5373 = vld [vmem:[#allocation3 + $0x88] sm:$0xff]
      %v5374 = vld [vmem:[#allocation3 + $0x90] sm:$0xff]
      %v5375 = vld [vmem:[#allocation3 + $0x98] sm:$0xff]
      %v5376 = vld [vmem:[#allocation3 + $0xa0] sm:$0xff]
      %v5377 = vld [vmem:[#allocation3 + $0xa8] sm:$0xff]
      %v5378 = vld [vmem:[#allocation3 + $0xb0] sm:$0xff]
      %v5379 = vld [vmem:[#allocation3 + $0xb8] sm:$0xff]
      %v5380 = vld [vmem:[#allocation3 + $0xc0] sm:$0xff]
      %v5381 = vld [vmem:[#allocation3 + $0xc8] sm:$0xff]
      %v5382 = vld [vmem:[#allocation3 + $0xd0] sm:$0xff]
      %v5383 = vld [vmem:[#allocation3 + $0xd8] sm:$0xff]
      %v5384 = vld [vmem:[#allocation3 + $0xe0] sm:$0xff]
      %v5385 = vld [vmem:[#allocation3 + $0xe8] sm:$0xff]
      %v5386 = vld [vmem:[#allocation3 + $0xf0] sm:$0xff]
      %v5387 = vld [vmem:[#allocation3 + $0xf8] sm:$0xff]
      %v5388 = vld [vmem:[#allocation3 + $0x100] sm:$0xff]
      %v5389 = vld [vmem:[#allocation3 + $0x108] sm:$0xff]
      %v5390 = vld [vmem:[#allocation3 + $0x110] sm:$0xff]
      %v5391 = vld [vmem:[#allocation3 + $0x118] sm:$0xff]
      %v5392 = vld [vmem:[#allocation3 + $0x120] sm:$0xff]
      %v5393 = vld [vmem:[#allocation3 + $0x128] sm:$0xff]
      %v5394 = vld [vmem:[#allocation3 + $0x130] sm:$0xff]
      %v5395 = vld [vmem:[#allocation3 + $0x138] sm:$0xff]
      %v5396 = vld [vmem:[#allocation3 + $0x140] sm:$0xff]
      %v5397 = vld [vmem:[#allocation3 + $0x148] sm:$0xff]
      %v5398 = vld [vmem:[#allocation3 + $0x150] sm:$0xff]
      %v5399 = vld [vmem:[#allocation3 + $0x158] sm:$0xff]
      %v5400 = vld [vmem:[#allocation3 + $0x160] sm:$0xff]
      %v5401 = vld [vmem:[#allocation3 + $0x168] sm:$0xff]
      %v5402 = vld [vmem:[#allocation3 + $0x170] sm:$0xff]
      %v5403 = vld [vmem:[#allocation3 + $0x178] sm:$0xff]
      %v5404 = vld [vmem:[#allocation3 + $0x180] sm:$0xff]
      %v5405 = vld [vmem:[#allocation3 + $0x188] sm:$0xff]
      %v5406 = vld [vmem:[#allocation3 + $0x190] sm:$0xff]
      %v5407 = vld [vmem:[#allocation3 + $0x198] sm:$0xff]
      %v5408 = vld [vmem:[#allocation3 + $0x1a0] sm:$0xff]
      %v5409 = vld [vmem:[#allocation3 + $0x1a8] sm:$0xff]
      %v5410 = vld [vmem:[#allocation3 + $0x1b0] sm:$0xff]
      %5411 = vst [vmem:[#allocation2 + $0x8] sm:$0xff] %v5357
      %5412 = vst [vmem:[#allocation2 + $0x20] sm:$0xff] %v5358
      %5413 = vst [vmem:[#allocation2 + $0x38] sm:$0xff] %v5359
      %5414 = vst [vmem:[#allocation2 + $0x50] sm:$0xff] %v5360
      %5415 = vst [vmem:[#allocation2 + $0x68] sm:$0xff] %v5361
      %5416 = vst [vmem:[#allocation2 + $0x80] sm:$0xff] %v5362
      %5417 = vst [vmem:[#allocation2 + $0x98] sm:$0xff] %v5363
      %5418 = vst [vmem:[#allocation2 + $0xb0] sm:$0xff] %v5364
      %5419 = vst [vmem:[#allocation2 + $0xc8] sm:$0xff] %v5365
      %5420 = vst [vmem:[#allocation2 + $0xe0] sm:$0xff] %v5366
      %5421 = vst [vmem:[#allocation2 + $0xf8] sm:$0xff] %v5367
      %5422 = vst [vmem:[#allocation2 + $0x110] sm:$0xff] %v5368
      %5423 = vst [vmem:[#allocation2 + $0x128] sm:$0xff] %v5369
      %5424 = vst [vmem:[#allocation2 + $0x140] sm:$0xff] %v5370
      %5425 = vst [vmem:[#allocation2 + $0x158] sm:$0xff] %v5371
      %5426 = vst [vmem:[#allocation2 + $0x170] sm:$0xff] %v5372
      %5427 = vst [vmem:[#allocation2 + $0x188] sm:$0xff] %v5373
      %5428 = vst [vmem:[#allocation2 + $0x1a0] sm:$0xff] %v5374
      %5429 = vst [vmem:[#allocation2 + $0x1b8] sm:$0xff] %v5375
      %5430 = vst [vmem:[#allocation2 + $0x1d0] sm:$0xff] %v5376
      %5431 = vst [vmem:[#allocation2 + $0x1e8] sm:$0xff] %v5377
      %5432 = vst [vmem:[#allocation2 + $0x200] sm:$0xff] %v5378
      %5433 = vst [vmem:[#allocation2 + $0x218] sm:$0xff] %v5379
      %5434 = vst [vmem:[#allocation2 + $0x230] sm:$0xff] %v5380
      %5435 = vst [vmem:[#allocation2 + $0x248] sm:$0xff] %v5381
      %5436 = vst [vmem:[#allocation2 + $0x260] sm:$0xff] %v5382
      %5437 = vst [vmem:[#allocation2 + $0x278] sm:$0xff] %v5383
      %5438 = vst [vmem:[#allocation2 + $0x290] sm:$0xff] %v5384
      %5439 = vst [vmem:[#allocation2 + $0x2a8] sm:$0xff] %v5385
      %5440 = vst [vmem:[#allocation2 + $0x2c0] sm:$0xff] %v5386
      %5441 = vst [vmem:[#allocation2 + $0x2d8] sm:$0xff] %v5387
      %5442 = vst [vmem:[#allocation2 + $0x2f0] sm:$0xff] %v5388
      %5443 = vst [vmem:[#allocation2 + $0x308] sm:$0xff] %v5389
      %5444 = vst [vmem:[#allocation2 + $0x320] sm:$0xff] %v5390
      %5445 = vst [vmem:[#allocation2 + $0x338] sm:$0xff] %v5391
      %5446 = vst [vmem:[#allocation2 + $0x350] sm:$0xff] %v5392
      %5447 = vst [vmem:[#allocation2 + $0x368] sm:$0xff] %v5393
      %5448 = vst [vmem:[#allocation2 + $0x380] sm:$0xff] %v5394
      %5449 = vst [vmem:[#allocation2 + $0x398] sm:$0xff] %v5395
      %5450 = vst [vmem:[#allocation2 + $0x3b0] sm:$0xff] %v5396
      %5451 = vst [vmem:[#allocation2 + $0x3c8] sm:$0xff] %v5397
      %5452 = vst [vmem:[#allocation2 + $0x3e0] sm:$0xff] %v5398
      %5453 = vst [vmem:[#allocation2 + $0x3f8] sm:$0xff] %v5399
      %5454 = vst [vmem:[#allocation2 + $0x410] sm:$0xff] %v5400
      %5455 = vst [vmem:[#allocation2 + $0x428] sm:$0xff] %v5401
      %5456 = vst [vmem:[#allocation2 + $0x440] sm:$0xff] %v5402
      %5457 = vst [vmem:[#allocation2 + $0x458] sm:$0xff] %v5403
      %5458 = vst [vmem:[#allocation2 + $0x470] sm:$0xff] %v5404
      %5459 = vst [vmem:[#allocation2 + $0x488] sm:$0xff] %v5405
      %5460 = vst [vmem:[#allocation2 + $0x4a0] sm:$0xff] %v5406
      %5461 = vst [vmem:[#allocation2 + $0x4b8] sm:$0xff] %v5407
      %5462 = vst [vmem:[#allocation2 + $0x4d0] sm:$0xff] %v5408
      %5463 = vst [vmem:[#allocation2 + $0x4e8] sm:$0xff] %v5409
      %5464 = vst [vmem:[#allocation2 + $0x500] sm:$0xff] %v5410
      %v5465 = vld [vmem:[#allocation3 + $0x9] sm:$0xff]
      %v5466 = vld [vmem:[#allocation3 + $0x11] sm:$0xff]
      %v5467 = vld [vmem:[#allocation3 + $0x19] sm:$0xff]
      %v5468 = vld [vmem:[#allocation3 + $0x21] sm:$0xff]
      %v5469 = vld [vmem:[#allocation3 + $0x29] sm:$0xff]
      %v5470 = vld [vmem:[#allocation3 + $0x31] sm:$0xff]
      %v5471 = vld [vmem:[#allocation3 + $0x39] sm:$0xff]
      %v5472 = vld [vmem:[#allocation3 + $0x41] sm:$0xff]
      %v5473 = vld [vmem:[#allocation3 + $0x49] sm:$0xff]
      %v5474 = vld [vmem:[#allocation3 + $0x51] sm:$0xff]
      %v5475 = vld [vmem:[#allocation3 + $0x59] sm:$0xff]
      %v5476 = vld [vmem:[#allocation3 + $0x61] sm:$0xff]
      %v5477 = vld [vmem:[#allocation3 + $0x69] sm:$0xff]
      %v5478 = vld [vmem:[#allocation3 + $0x71] sm:$0xff]
      %v5479 = vld [vmem:[#allocation3 + $0x79] sm:$0xff]
      %v5480 = vld [vmem:[#allocation3 + $0x81] sm:$0xff]
      %v5481 = vld [vmem:[#allocation3 + $0x89] sm:$0xff]
      %v5482 = vld [vmem:[#allocation3 + $0x91] sm:$0xff]
      %v5483 = vld [vmem:[#allocation3 + $0x99] sm:$0xff]
      %v5484 = vld [vmem:[#allocation3 + $0xa1] sm:$0xff]
      %v5485 = vld [vmem:[#allocation3 + $0xa9] sm:$0xff]
      %v5486 = vld [vmem:[#allocation3 + $0xb1] sm:$0xff]
      %v5487 = vld [vmem:[#allocation3 + $0xb9] sm:$0xff]
      %v5488 = vld [vmem:[#allocation3 + $0xc1] sm:$0xff]
      %v5489 = vld [vmem:[#allocation3 + $0xc9] sm:$0xff]
      %v5490 = vld [vmem:[#allocation3 + $0xd1] sm:$0xff]
      %v5491 = vld [vmem:[#allocation3 + $0xd9] sm:$0xff]
      %v5492 = vld [vmem:[#allocation3 + $0xe1] sm:$0xff]
      %v5493 = vld [vmem:[#allocation3 + $0xe9] sm:$0xff]
      %v5494 = vld [vmem:[#allocation3 + $0xf1] sm:$0xff]
      %v5495 = vld [vmem:[#allocation3 + $0xf9] sm:$0xff]
      %v5496 = vld [vmem:[#allocation3 + $0x101] sm:$0xff]
      %v5497 = vld [vmem:[#allocation3 + $0x109] sm:$0xff]
      %v5498 = vld [vmem:[#allocation3 + $0x111] sm:$0xff]
      %v5499 = vld [vmem:[#allocation3 + $0x119] sm:$0xff]
      %v5500 = vld [vmem:[#allocation3 + $0x121] sm:$0xff]
      %v5501 = vld [vmem:[#allocation3 + $0x129] sm:$0xff]
      %v5502 = vld [vmem:[#allocation3 + $0x131] sm:$0xff]
      %v5503 = vld [vmem:[#allocation3 + $0x139] sm:$0xff]
      %v5504 = vld [vmem:[#allocation3 + $0x141] sm:$0xff]
      %v5505 = vld [vmem:[#allocation3 + $0x149] sm:$0xff]
      %v5506 = vld [vmem:[#allocation3 + $0x151] sm:$0xff]
      %v5507 = vld [vmem:[#allocation3 + $0x159] sm:$0xff]
      %v5508 = vld [vmem:[#allocation3 + $0x161] sm:$0xff]
      %v5509 = vld [vmem:[#allocation3 + $0x169] sm:$0xff]
      %v5510 = vld [vmem:[#allocation3 + $0x171] sm:$0xff]
      %v5511 = vld [vmem:[#allocation3 + $0x179] sm:$0xff]
      %v5512 = vld [vmem:[#allocation3 + $0x181] sm:$0xff]
      %v5513 = vld [vmem:[#allocation3 + $0x189] sm:$0xff]
      %v5514 = vld [vmem:[#allocation3 + $0x191] sm:$0xff]
      %v5515 = vld [vmem:[#allocation3 + $0x199] sm:$0xff]
      %v5516 = vld [vmem:[#allocation3 + $0x1a1] sm:$0xff]
      %v5517 = vld [vmem:[#allocation3 + $0x1a9] sm:$0xff]
      %v5518 = vld [vmem:[#allocation3 + $0x1b1] sm:$0xff]
      %5519 = vst [vmem:[#allocation2 + $0x10] sm:$0xff] %v5465
      %5520 = vst [vmem:[#allocation2 + $0x28] sm:$0xff] %v5466
      %5521 = vst [vmem:[#allocation2 + $0x40] sm:$0xff] %v5467
      %5522 = vst [vmem:[#allocation2 + $0x58] sm:$0xff] %v5468
      %5523 = vst [vmem:[#allocation2 + $0x70] sm:$0xff] %v5469
      %5524 = vst [vmem:[#allocation2 + $0x88] sm:$0xff] %v5470
      %5525 = vst [vmem:[#allocation2 + $0xa0] sm:$0xff] %v5471
      %5526 = vst [vmem:[#allocation2 + $0xb8] sm:$0xff] %v5472
      %5527 = vst [vmem:[#allocation2 + $0xd0] sm:$0xff] %v5473
      %5528 = vst [vmem:[#allocation2 + $0xe8] sm:$0xff] %v5474
      %5529 = vst [vmem:[#allocation2 + $0x100] sm:$0xff] %v5475
      %5530 = vst [vmem:[#allocation2 + $0x118] sm:$0xff] %v5476
      %5531 = vst [vmem:[#allocation2 + $0x130] sm:$0xff] %v5477
      %5532 = vst [vmem:[#allocation2 + $0x148] sm:$0xff] %v5478
      %5533 = vst [vmem:[#allocation2 + $0x160] sm:$0xff] %v5479
      %5534 = vst [vmem:[#allocation2 + $0x178] sm:$0xff] %v5480
      %5535 = vst [vmem:[#allocation2 + $0x190] sm:$0xff] %v5481
      %5536 = vst [vmem:[#allocation2 + $0x1a8] sm:$0xff] %v5482
      %5537 = vst [vmem:[#allocation2 + $0x1c0] sm:$0xff] %v5483
      %5538 = vst [vmem:[#allocation2 + $0x1d8] sm:$0xff] %v5484
      %5539 = vst [vmem:[#allocation2 + $0x1f0] sm:$0xff] %v5485
      %5540 = vst [vmem:[#allocation2 + $0x208] sm:$0xff] %v5486
      %5541 = vst [vmem:[#allocation2 + $0x220] sm:$0xff] %v5487
      %5542 = vst [vmem:[#allocation2 + $0x238] sm:$0xff] %v5488
      %5543 = vst [vmem:[#allocation2 + $0x250] sm:$0xff] %v5489
      %5544 = vst [vmem:[#allocation2 + $0x268] sm:$0xff] %v5490
      %5545 = vst [vmem:[#allocation2 + $0x280] sm:$0xff] %v5491
      %5546 = vst [vmem:[#allocation2 + $0x298] sm:$0xff] %v5492
      %5547 = vst [vmem:[#allocation2 + $0x2b0] sm:$0xff] %v5493
      %5548 = vst [vmem:[#allocation2 + $0x2c8] sm:$0xff] %v5494
      %5549 = vst [vmem:[#allocation2 + $0x2e0] sm:$0xff] %v5495
      %5550 = vst [vmem:[#allocation2 + $0x2f8] sm:$0xff] %v5496
      %5551 = vst [vmem:[#allocation2 + $0x310] sm:$0xff] %v5497
      %5552 = vst [vmem:[#allocation2 + $0x328] sm:$0xff] %v5498
      %5553 = vst [vmem:[#allocation2 + $0x340] sm:$0xff] %v5499
      %5554 = vst [vmem:[#allocation2 + $0x358] sm:$0xff] %v5500
      %5555 = vst [vmem:[#allocation2 + $0x370] sm:$0xff] %v5501
      %5556 = vst [vmem:[#allocation2 + $0x388] sm:$0xff] %v5502
      %5557 = vst [vmem:[#allocation2 + $0x3a0] sm:$0xff] %v5503
      %5558 = vst [vmem:[#allocation2 + $0x3b8] sm:$0xff] %v5504
      %5559 = vst [vmem:[#allocation2 + $0x3d0] sm:$0xff] %v5505
      %5560 = vst [vmem:[#allocation2 + $0x3e8] sm:$0xff] %v5506
      %5561 = vst [vmem:[#allocation2 + $0x400] sm:$0xff] %v5507
      %5562 = vst [vmem:[#allocation2 + $0x418] sm:$0xff] %v5508
      %5563 = vst [vmem:[#allocation2 + $0x430] sm:$0xff] %v5509
      %5564 = vst [vmem:[#allocation2 + $0x448] sm:$0xff] %v5510
      %5565 = vst [vmem:[#allocation2 + $0x460] sm:$0xff] %v5511
      %5566 = vst [vmem:[#allocation2 + $0x478] sm:$0xff] %v5512
      %5567 = vst [vmem:[#allocation2 + $0x490] sm:$0xff] %v5513
      %5568 = vst [vmem:[#allocation2 + $0x4a8] sm:$0xff] %v5514
      %5569 = vst [vmem:[#allocation2 + $0x4c0] sm:$0xff] %v5515
      %5570 = vst [vmem:[#allocation2 + $0x4d8] sm:$0xff] %v5516
      %5571 = vst [vmem:[#allocation2 + $0x4f0] sm:$0xff] %v5517
      %5572 = vst [vmem:[#allocation2 + $0x508] sm:$0xff] %v5518
      %v5573 = vld [vmem:[#allocation2] sm:$0xff]
      %v5574 = vld [vmem:[#allocation2 + $0x8] sm:$0xff]
      %v5575 = vld [vmem:[#allocation2 + $0x10] sm:$0xff]
      %v5576 = vld [vmem:[#allocation2 + $0x18] sm:$0xff]
      %v5577 = vld [vmem:[#allocation2 + $0x20] sm:$0xff]
      %v5578 = vld [vmem:[#allocation2 + $0x28] sm:$0xff]
      %v5579 = vld [vmem:[#allocation2 + $0x30] sm:$0xff]
      %v5580 = vld [vmem:[#allocation2 + $0x38] sm:$0xff]
      %v5581 = vld [vmem:[#allocation2 + $0x40] sm:$0xff]
      %v5582 = vld [vmem:[#allocation2 + $0x48] sm:$0xff]
      %v5583 = vld [vmem:[#allocation2 + $0x50] sm:$0xff]
      %v5584 = vld [vmem:[#allocation2 + $0x58] sm:$0xff]
      %v5585 = vld [vmem:[#allocation2 + $0x60] sm:$0xff]
      %v5586 = vld [vmem:[#allocation2 + $0x68] sm:$0xff]
      %v5587 = vld [vmem:[#allocation2 + $0x70] sm:$0xff]
      %v5588 = vld [vmem:[#allocation2 + $0x78] sm:$0xff]
      %v5589 = vld [vmem:[#allocation2 + $0x80] sm:$0xff]
      %v5590 = vld [vmem:[#allocation2 + $0x88] sm:$0xff]
      %v5591 = vld [vmem:[#allocation2 + $0x90] sm:$0xff]
      %v5592 = vld [vmem:[#allocation2 + $0x98] sm:$0xff]
      %v5593 = vld [vmem:[#allocation2 + $0xa0] sm:$0xff]
      %v5594 = vld [vmem:[#allocation2 + $0xa8] sm:$0xff]
      %v5595 = vld [vmem:[#allocation2 + $0xb0] sm:$0xff]
      %v5596 = vld [vmem:[#allocation2 + $0xb8] sm:$0xff]
      %v5597 = vld [vmem:[#allocation2 + $0xc0] sm:$0xff]
      %v5598 = vld [vmem:[#allocation2 + $0xc8] sm:$0xff]
      %v5599 = vld [vmem:[#allocation2 + $0xd0] sm:$0xff]
      %v5600 = vld [vmem:[#allocation2 + $0xd8] sm:$0xff]
      %v5601 = vld [vmem:[#allocation2 + $0xe0] sm:$0xff]
      %v5602 = vld [vmem:[#allocation2 + $0xe8] sm:$0xff]
      %v5603 = vld [vmem:[#allocation2 + $0xf0] sm:$0xff]
      %v5604 = vld [vmem:[#allocation2 + $0xf8] sm:$0xff]
      %v5605 = vld [vmem:[#allocation2 + $0x100] sm:$0xff]
      %v5606 = vld [vmem:[#allocation2 + $0x108] sm:$0xff]
      %v5607 = vld [vmem:[#allocation2 + $0x110] sm:$0xff]
      %v5608 = vld [vmem:[#allocation2 + $0x118] sm:$0xff]
      %v5609 = vld [vmem:[#allocation2 + $0x120] sm:$0xff]
      %v5610 = vld [vmem:[#allocation2 + $0x128] sm:$0xff]
      %v5611 = vld [vmem:[#allocation2 + $0x130] sm:$0xff]
      %v5612 = vld [vmem:[#allocation2 + $0x138] sm:$0xff]
      %v5613 = vld [vmem:[#allocation2 + $0x140] sm:$0xff]
      %v5614 = vld [vmem:[#allocation2 + $0x148] sm:$0xff]
      %v5615 = vld [vmem:[#allocation2 + $0x150] sm:$0xff]
      %v5616 = vld [vmem:[#allocation2 + $0x158] sm:$0xff]
      %v5617 = vld [vmem:[#allocation2 + $0x160] sm:$0xff]
      %v5618 = vld [vmem:[#allocation2 + $0x168] sm:$0xff]
      %v5619 = vld [vmem:[#allocation2 + $0x170] sm:$0xff]
      %v5620 = vld [vmem:[#allocation2 + $0x178] sm:$0xff]
      %v5621 = vld [vmem:[%s3] sm:$0xff]
      %v5622 = vld [vmem:[%s3 + $0x8] sm:$0xff]
      %v5623 = vld [vmem:[%s3 + $0x10] sm:$0xff]
      %v5624 = vld [vmem:[%s3 + $0x18] sm:$0xff]
      %v5625 = vld [vmem:[%s3 + $0x20] sm:$0xff]
      %v5626 = vld [vmem:[%s3 + $0x28] sm:$0xff]
      %v5627 = vld [vmem:[%s3 + $0x30] sm:$0xff]
      %v5628 = vld [vmem:[%s3 + $0x38] sm:$0xff]
      %v5629 = vld [vmem:[%s3 + $0x40] sm:$0xff]
      %v5630 = vld [vmem:[%s3 + $0x48] sm:$0xff]
      %v5631 = vld [vmem:[%s3 + $0x50] sm:$0xff]
      %v5632 = vld [vmem:[%s3 + $0x58] sm:$0xff]
      %v5633 = vld [vmem:[%s3 + $0x60] sm:$0xff]
      %v5634 = vld [vmem:[%s3 + $0x68] sm:$0xff]
      %v5635 = vld [vmem:[%s3 + $0x70] sm:$0xff]
      %v5636 = vld [vmem:[%s3 + $0x78] sm:$0xff]
      %v5637 = vld [vmem:[%s3 + $0x80] sm:$0xff]
      %v5638 = vld [vmem:[%s3 + $0x88] sm:$0xff]
      %v5639 = vld [vmem:[%s3 + $0x90] sm:$0xff]
      %v5640 = vld [vmem:[%s3 + $0x98] sm:$0xff]
      %v5641 = vld [vmem:[%s3 + $0xa0] sm:$0xff]
      %v5642 = vld [vmem:[%s3 + $0xa8] sm:$0xff]
      %v5643 = vld [vmem:[%s3 + $0xb0] sm:$0xff]
      %v5644 = vld [vmem:[%s3 + $0xb8] sm:$0xff]
      %v5645 = vld [vmem:[%s3 + $0xc0] sm:$0xff]
      %v5646 = vld [vmem:[%s3 + $0xc8] sm:$0xff]
      %v5647 = vld [vmem:[%s3 + $0xd0] sm:$0xff]
      %v5648 = vld [vmem:[%s3 + $0xd8] sm:$0xff]
      %v5649 = vld [vmem:[%s3 + $0xe0] sm:$0xff]
      %v5650 = vld [vmem:[%s3 + $0xe8] sm:$0xff]
      %v5651 = vld [vmem:[%s3 + $0xf0] sm:$0xff]
      %v5652 = vld [vmem:[%s3 + $0xf8] sm:$0xff]
      %v5653 = vld [vmem:[%s3 + $0x100] sm:$0xff]
      %v5654 = vld [vmem:[%s3 + $0x108] sm:$0xff]
      %v5655 = vld [vmem:[%s3 + $0x110] sm:$0xff]
      %v5656 = vld [vmem:[%s3 + $0x118] sm:$0xff]
      %v5657 = vld [vmem:[%s3 + $0x120] sm:$0xff]
      %v5658 = vld [vmem:[%s3 + $0x128] sm:$0xff]
      %v5659 = vld [vmem:[%s3 + $0x130] sm:$0xff]
      %v5660 = vld [vmem:[%s3 + $0x138] sm:$0xff]
      %v5661 = vld [vmem:[%s3 + $0x140] sm:$0xff]
      %v5662 = vld [vmem:[%s3 + $0x148] sm:$0xff]
      %v5663 = vld [vmem:[%s3 + $0x150] sm:$0xff]
      %v5664 = vld [vmem:[%s3 + $0x158] sm:$0xff]
      %v5665 = vld [vmem:[%s3 + $0x160] sm:$0xff]
      %v5666 = vld [vmem:[%s3 + $0x168] sm:$0xff]
      %v5667 = vld [vmem:[%s3 + $0x170] sm:$0xff]
      %v5668 = vld [vmem:[%s3 + $0x178] sm:$0xff]
      %v5669 = vld [vmem:[#allocation2 + $0x180] sm:$0xff]
      %v5670 = vld [vmem:[#allocation2 + $0x188] sm:$0xff]
      %v5671 = vld [vmem:[#allocation2 + $0x190] sm:$0xff]
      %v5672 = vld [vmem:[#allocation2 + $0x198] sm:$0xff]
      %v5673 = vld [vmem:[#allocation2 + $0x1a0] sm:$0xff]
      %v5674 = vld [vmem:[#allocation2 + $0x1a8] sm:$0xff]
      %v5675 = vld [vmem:[#allocation2 + $0x1b0] sm:$0xff]
      %v5676 = vld [vmem:[#allocation2 + $0x1b8] sm:$0xff]
      %v5677 = vld [vmem:[#allocation2 + $0x1c0] sm:$0xff]
      %s5678 = scalar_lea.vmem %s3, 384
      %v5679 = vld [vmem:[%s5678] sm:$0xff]
      %v5680 = vld [vmem:[%s5678 + $0x8] sm:$0xff]
      %v5681 = vld [vmem:[%s5678 + $0x10] sm:$0xff]
      %v5682 = vld [vmem:[%s5678 + $0x18] sm:$0xff]
      %v5683 = vld [vmem:[%s5678 + $0x20] sm:$0xff]
      %v5684 = vld [vmem:[%s5678 + $0x28] sm:$0xff]
      %v5685 = vld [vmem:[%s5678 + $0x30] sm:$0xff]
      %v5686 = vld [vmem:[%s5678 + $0x38] sm:$0xff]
      %v5687 = vld [vmem:[%s5678 + $0x40] sm:$0xff]
      %v5688 = vld [vmem:[%s5678 + $0x48] sm:$0xff]
      %v5689 = vld [vmem:[%s5678 + $0x50] sm:$0xff]
      %v5690 = vld [vmem:[%s5678 + $0x58] sm:$0xff]
      %v5691 = vld [vmem:[%s5678 + $0x60] sm:$0xff]
      %v5692 = vld [vmem:[%s5678 + $0x68] sm:$0xff]
      %v5693 = vld [vmem:[%s5678 + $0x70] sm:$0xff]
      %v5694 = vld [vmem:[%s5678 + $0x78] sm:$0xff]
      %v5695 = vld [vmem:[%s5678 + $0x80] sm:$0xff]
      %v5696 = vld [vmem:[%s5678 + $0x88] sm:$0xff]
      %v5697 = vld [vmem:[%s5678 + $0x90] sm:$0xff]
      %v5698 = vld [vmem:[%s5678 + $0x98] sm:$0xff]
      %v5699 = vld [vmem:[%s5678 + $0xa0] sm:$0xff]
      %v5700 = vld [vmem:[%s5678 + $0xa8] sm:$0xff]
      %v5701 = vld [vmem:[%s5678 + $0xb0] sm:$0xff]
      %v5702 = vld [vmem:[%s5678 + $0xb8] sm:$0xff]
      %v5703 = vld [vmem:[%s5678 + $0xc0] sm:$0xff]
      %v5704 = vld [vmem:[%s5678 + $0xc8] sm:$0xff]
      %v5705 = vld [vmem:[%s5678 + $0xd0] sm:$0xff]
      %v5706 = vld [vmem:[%s5678 + $0xd8] sm:$0xff]
      %v5707 = vld [vmem:[%s5678 + $0xe0] sm:$0xff]
      %v5708 = vld [vmem:[%s5678 + $0xe8] sm:$0xff]
      %v5709 = vld [vmem:[%s5678 + $0xf0] sm:$0xff]
      %v5710 = vld [vmem:[%s5678 + $0xf8] sm:$0xff]
      %v5711 = vld [vmem:[%s5678 + $0x100] sm:$0xff]
      %v5712 = vld [vmem:[%s5678 + $0x108] sm:$0xff]
      %v5713 = vld [vmem:[%s5678 + $0x110] sm:$0xff]
      %v5714 = vld [vmem:[%s5678 + $0x118] sm:$0xff]
      %v5715 = vld [vmem:[%s5678 + $0x120] sm:$0xff]
      %v5716 = vld [vmem:[%s5678 + $0x128] sm:$0xff]
      %v5717 = vld [vmem:[%s5678 + $0x130] sm:$0xff]
      %v5718 = vld [vmem:[%s5678 + $0x138] sm:$0xff]
      %v5719 = vld [vmem:[%s5678 + $0x140] sm:$0xff]
      %v5720 = vld [vmem:[%s5678 + $0x148] sm:$0xff]
      %v5721 = vld [vmem:[%s5678 + $0x150] sm:$0xff]
      %v5722 = vld [vmem:[%s5678 + $0x158] sm:$0xff]
      %v5723 = vld [vmem:[%s5678 + $0x160] sm:$0xff]
      %v5724 = vld [vmem:[%s5678 + $0x168] sm:$0xff]
      %v5725 = vld [vmem:[%s5678 + $0x170] sm:$0xff]
      %v5726 = vld [vmem:[%s5678 + $0x178] sm:$0xff]
      %5727 = vmatprep.subr.mxu0 0.0
      %5728 = vmatpush1.msra.mxu0 %v5694
      %5729 = vmatprep.subr.mxu0 0.0
      %5730 = vmatpush1.msra.mxu0 %v5693
      %5731 = vmatprep.subr.mxu0 0.0
      %5732 = vmatpush1.msra.mxu0 %v5692
      %5733 = vmatprep.subr.mxu0 0.0
      %5734 = vmatpush1.msra.mxu0 %v5691
      %5735 = vmatprep.subr.mxu0 0.0
      %5736 = vmatpush1.msra.mxu0 %v5690
      %5737 = vmatprep.subr.mxu0 0.0
      %5738 = vmatpush1.msra.mxu0 %v5689
      %5739 = vmatprep.subr.mxu0 0.0
      %5740 = vmatpush1.msra.mxu0 %v5688
      %5741 = vmatprep.subr.mxu0 0.0
      %5742 = vmatpush1.msra.mxu0 %v5687
      %5743 = vmatprep.subr.mxu0 0.0
      %5744 = vmatpush1.msra.mxu0 %v5686
      %5745 = vmatprep.subr.mxu0 0.0
      %5746 = vmatpush1.msra.mxu0 %v5685
      %5747 = vmatprep.subr.mxu0 0.0
      %5748 = vmatpush1.msra.mxu0 %v5684
      %5749 = vmatprep.subr.mxu0 0.0
      %5750 = vmatpush1.msra.mxu0 %v5683
      %5751 = vmatprep.subr.mxu0 0.0
      %5752 = vmatpush1.msra.mxu0 %v5682
      %5753 = vmatprep.subr.mxu0 0.0
      %5754 = vmatpush1.msra.mxu0 %v5681
      %5755 = vmatprep.subr.mxu0 0.0
      %5756 = vmatpush1.msra.mxu0 %v5680
      %5757 = vmatprep.subr.mxu0 0.0
      %5758 = vmatpush1.msra.mxu0 %v5679
      %5759 = vmatprep.subr.mxu0 0.0
      %5760 = vmatpush2.msra.mxu0 %v5710
      %5761 = vmatprep.subr.mxu0 0.0
      %5762 = vmatpush2.msra.mxu0 %v5709
      %5763 = vmatprep.subr.mxu0 0.0
      %5764 = vmatpush2.msra.mxu0 %v5708
      %5765 = vmatprep.subr.mxu0 0.0
      %5766 = vmatpush2.msra.mxu0 %v5707
      %5767 = vmatprep.subr.mxu0 0.0
      %5768 = vmatpush2.msra.mxu0 %v5706
      %5769 = vmatprep.subr.mxu0 0.0
      %5770 = vmatpush2.msra.mxu0 %v5705
      %5771 = vmatprep.subr.mxu0 0.0
      %5772 = vmatpush2.msra.mxu0 %v5704
      %5773 = vmatprep.subr.mxu0 0.0
      %5774 = vmatpush2.msra.mxu0 %v5703
      %5775 = vmatprep.subr.mxu0 0.0
      %5776 = vmatpush2.msra.mxu0 %v5702
      %5777 = vmatprep.subr.mxu0 0.0
      %5778 = vmatpush2.msra.mxu0 %v5701
      %5779 = vmatprep.subr.mxu0 0.0
      %5780 = vmatpush2.msra.mxu0 %v5700
      %5781 = vmatprep.subr.mxu0 0.0
      %5782 = vmatpush2.msra.mxu0 %v5699
      %5783 = vmatprep.subr.mxu0 0.0
      %5784 = vmatpush2.msra.mxu0 %v5698
      %5785 = vmatprep.subr.mxu0 0.0
      %5786 = vmatpush2.msra.mxu0 %v5697
      %5787 = vmatprep.subr.mxu0 0.0
      %5788 = vmatpush2.msra.mxu0 %v5696
      %5789 = vmatprep.subr.mxu0 0.0
      %5790 = vmatpush2.msra.mxu0 %v5695
      %5791 = vmatprep.mubr.f32.mxu0 %v5583
      %5792 = vmatmul.mubr.f32.gmra.mxu0 %v5582
      %v5793 = vpop.f32.mrf.mxu0
      %v5794 = vadd.f32 0.0, %v5793
      %v5795 = vpop.f32.mrf.mxu0
      %5796 = vmatprep.mubr.f32.mxu0 %v5586
      %5797 = vmatmul.mubr.f32.gmra.mxu0 %v5585
      %v5798 = vpop.f32.mrf.mxu0
      %v5799 = vadd.f32 0.0, %v5798
      %v5800 = vpop.f32.mrf.mxu0
      %5801 = vmatprep.mubr.f32.mxu0 %v5589
      %5802 = vmatmul.mubr.f32.gmra.mxu0 %v5588
      %v5803 = vpop.f32.mrf.mxu0
      %v5804 = vadd.f32 0.0, %v5803
      %v5805 = vpop.f32.mrf.mxu0
      %5806 = vmatprep.mubr.f32.mxu0 %v5592
      %5807 = vmatmul.mubr.f32.gmra.mxu0 %v5591
      %v5808 = vpop.f32.mrf.mxu0
      %v5809 = vadd.f32 0.0, %v5808
      %v5810 = vpop.f32.mrf.mxu0
      %5811 = vmatprep.mubr.f32.mxu0 %v5595
      %5812 = vmatmul.mubr.f32.gmra.mxu0 %v5594
      %v5813 = vpop.f32.mrf.mxu0
      %v5814 = vadd.f32 0.0, %v5813
      %v5815 = vpop.f32.mrf.mxu0
      %5816 = vmatprep.mubr.f32.mxu0 %v5598
      %5817 = vmatmul.mubr.f32.gmra.mxu0 %v5597
      %v5818 = vpop.f32.mrf.mxu0
      %v5819 = vadd.f32 0.0, %v5818
      %v5820 = vpop.f32.mrf.mxu0
      %5821 = vmatprep.mubr.f32.mxu0 %v5601
      %5822 = vmatmul.mubr.f32.gmra.mxu0 %v5600
      %v5823 = vpop.f32.mrf.mxu0
      %v5824 = vadd.f32 0.0, %v5823
      %v5825 = vpop.f32.mrf.mxu0
      %5826 = vmatprep.mubr.f32.mxu0 %v5604
      %5827 = vmatmul.mubr.f32.gmra.mxu0 %v5603
      %v5828 = vpop.f32.mrf.mxu0
      %v5829 = vadd.f32 0.0, %v5828
      %v5830 = vpop.f32.mrf.mxu0
      %5831 = vmatprep.mubr.f32.mxu0 %v5607
      %5832 = vmatmul.mubr.f32.gmra.mxu0 %v5606
      %v5833 = vpop.f32.mrf.mxu0
      %v5834 = vadd.f32 0.0, %v5833
      %v5835 = vpop.f32.mrf.mxu0
      %5836 = vmatprep.mubr.f32.mxu0 %v5610
      %5837 = vmatmul.mubr.f32.gmra.mxu0 %v5609
      %v5838 = vpop.f32.mrf.mxu0
      %v5839 = vadd.f32 0.0, %v5838
      %v5840 = vpop.f32.mrf.mxu0
      %5841 = vmatprep.mubr.f32.mxu0 %v5613
      %5842 = vmatmul.mubr.f32.gmra.mxu0 %v5612
      %v5843 = vpop.f32.mrf.mxu0
      %v5844 = vadd.f32 0.0, %v5843
      %v5845 = vpop.f32.mrf.mxu0
      %5846 = vmatprep.mubr.f32.mxu0 %v5616
      %5847 = vmatmul.mubr.f32.gmra.mxu0 %v5615
      %v5848 = vpop.f32.mrf.mxu0
      %v5849 = vadd.f32 0.0, %v5848
      %v5850 = vpop.f32.mrf.mxu0
      %5851 = vmatprep.mubr.f32.mxu0 %v5619
      %5852 = vmatmul.mubr.f32.gmra.mxu0 %v5618
      %v5853 = vpop.f32.mrf.mxu0
      %v5854 = vadd.f32 0.0, %v5853
      %v5855 = vpop.f32.mrf.mxu0
      %5856 = vmatprep.mubr.f32.mxu0 %v5670
      %5857 = vmatmul.mubr.f32.gmra.mxu0 %v5669
      %v5858 = vpop.f32.mrf.mxu0
      %v5859 = vadd.f32 0.0, %v5858
      %v5860 = vpop.f32.mrf.mxu0
      %5861 = vmatprep.mubr.f32.mxu0 %v5673
      %5862 = vmatmul.mubr.f32.gmra.mxu0 %v5672
      %v5863 = vpop.f32.mrf.mxu0
      %v5864 = vadd.f32 0.0, %v5863
      %v5865 = vpop.f32.mrf.mxu0
      %5866 = vmatprep.mubr.f32.mxu0 %v5676
      %5867 = vmatmul.mubr.f32.gmra.mxu0 %v5675
      %v5868 = vpop.f32.mrf.mxu0
      %v5869 = vadd.f32 0.0, %v5868
      %v5870 = vpop.f32.mrf.mxu0
      %5871 = vdwg.mxu0
      %5872 = vmatprep.subr.mxu0 0.0
      %5873 = vmatpush1.msra.mxu0 %v5726
      %5874 = vmatprep.subr.mxu0 0.0
      %5875 = vmatpush1.msra.mxu0 %v5725
      %5876 = vmatprep.subr.mxu0 0.0
      %5877 = vmatpush1.msra.mxu0 %v5724
      %5878 = vmatprep.subr.mxu0 0.0
      %5879 = vmatpush1.msra.mxu0 %v5723
      %5880 = vmatprep.subr.mxu0 0.0
      %5881 = vmatpush1.msra.mxu0 %v5722
      %5882 = vmatprep.subr.mxu0 0.0
      %5883 = vmatpush1.msra.mxu0 %v5721
      %5884 = vmatprep.subr.mxu0 0.0
      %5885 = vmatpush1.msra.mxu0 %v5720
      %5886 = vmatprep.subr.mxu0 0.0
      %5887 = vmatpush1.msra.mxu0 %v5719
      %5888 = vmatprep.subr.mxu0 0.0
      %5889 = vmatpush1.msra.mxu0 %v5718
      %5890 = vmatprep.subr.mxu0 0.0
      %5891 = vmatpush1.msra.mxu0 %v5717
      %5892 = vmatprep.subr.mxu0 0.0
      %5893 = vmatpush1.msra.mxu0 %v5716
      %5894 = vmatprep.subr.mxu0 0.0
      %5895 = vmatpush1.msra.mxu0 %v5715
      %5896 = vmatprep.subr.mxu0 0.0
      %5897 = vmatpush1.msra.mxu0 %v5714
      %5898 = vmatprep.subr.mxu0 0.0
      %5899 = vmatpush1.msra.mxu0 %v5713
      %5900 = vmatprep.subr.mxu0 0.0
      %5901 = vmatpush1.msra.mxu0 %v5712
      %5902 = vmatprep.subr.mxu0 0.0
      %5903 = vmatpush1.msra.mxu0 %v5711
      %5904 = vmatprep.subr.mxu0 0.0
      %5905 = vmatpush2.msra.mxu0 0.0
      %5906 = vmatprep.subr.mxu0 0.0
      %5907 = vmatpush2.msra.mxu0 0.0
      %5908 = vmatprep.subr.mxu0 0.0
      %5909 = vmatpush2.msra.mxu0 0.0
      %5910 = vmatprep.subr.mxu0 0.0
      %5911 = vmatpush2.msra.mxu0 0.0
      %5912 = vmatprep.subr.mxu0 0.0
      %5913 = vmatpush2.msra.mxu0 0.0
      %5914 = vmatprep.subr.mxu0 0.0
      %5915 = vmatpush2.msra.mxu0 0.0
      %5916 = vmatprep.subr.mxu0 0.0
      %5917 = vmatpush2.msra.mxu0 0.0
      %5918 = vmatprep.subr.mxu0 0.0
      %5919 = vmatpush2.msra.mxu0 0.0
      %5920 = vmatprep.subr.mxu0 0.0
      %5921 = vmatpush2.msra.mxu0 0.0
      %5922 = vmatprep.subr.mxu0 0.0
      %5923 = vmatpush2.msra.mxu0 0.0
      %5924 = vmatprep.subr.mxu0 0.0
      %5925 = vmatpush2.msra.mxu0 0.0
      %5926 = vmatprep.subr.mxu0 0.0
      %5927 = vmatpush2.msra.mxu0 0.0
      %5928 = vmatprep.subr.mxu0 0.0
      %5929 = vmatpush2.msra.mxu0 0.0
      %5930 = vmatprep.subr.mxu0 0.0
      %5931 = vmatpush2.msra.mxu0 0.0
      %5932 = vmatprep.subr.mxu0 0.0
      %5933 = vmatpush2.msra.mxu0 0.0
      %5934 = vmatprep.subr.mxu0 0.0
      %5935 = vmatpush2.msra.mxu0 0.0
      %5936 = vmatprep.mubr.f32.mxu0 0.0
      %5937 = vmatmul.mubr.f32.gmra.mxu0 %v5584
      %v5938 = vpop.f32.mrf.mxu0
      %v5939 = vadd.f32 %v5794, %v5938
      %v5940 = vpop.f32.mrf.mxu0
      %5941 = vmatprep.mubr.f32.mxu0 0.0
      %5942 = vmatmul.mubr.f32.gmra.mxu0 %v5587
      %v5943 = vpop.f32.mrf.mxu0
      %v5944 = vadd.f32 %v5799, %v5943
      %v5945 = vpop.f32.mrf.mxu0
      %5946 = vmatprep.mubr.f32.mxu0 0.0
      %5947 = vmatmul.mubr.f32.gmra.mxu0 %v5590
      %v5948 = vpop.f32.mrf.mxu0
      %v5949 = vadd.f32 %v5804, %v5948
      %v5950 = vpop.f32.mrf.mxu0
      %5951 = vmatprep.mubr.f32.mxu0 0.0
      %5952 = vmatmul.mubr.f32.gmra.mxu0 %v5593
      %v5953 = vpop.f32.mrf.mxu0
      %v5954 = vadd.f32 %v5809, %v5953
      %v5955 = vpop.f32.mrf.mxu0
      %5956 = vmatprep.mubr.f32.mxu0 0.0
      %5957 = vmatmul.mubr.f32.gmra.mxu0 %v5596
      %v5958 = vpop.f32.mrf.mxu0
      %v5959 = vadd.f32 %v5814, %v5958
      %v5960 = vpop.f32.mrf.mxu0
      %5961 = vmatprep.mubr.f32.mxu0 0.0
      %5962 = vmatmul.mubr.f32.gmra.mxu0 %v5599
      %v5963 = vpop.f32.mrf.mxu0
      %v5964 = vadd.f32 %v5819, %v5963
      %v5965 = vpop.f32.mrf.mxu0
      %5966 = vmatprep.mubr.f32.mxu0 0.0
      %5967 = vmatmul.mubr.f32.gmra.mxu0 %v5602
      %v5968 = vpop.f32.mrf.mxu0
      %v5969 = vadd.f32 %v5824, %v5968
      %v5970 = vpop.f32.mrf.mxu0
      %5971 = vmatprep.mubr.f32.mxu0 0.0
      %5972 = vmatmul.mubr.f32.gmra.mxu0 %v5605
      %v5973 = vpop.f32.mrf.mxu0
      %v5974 = vadd.f32 %v5829, %v5973
      %v5975 = vpop.f32.mrf.mxu0
      %5976 = vmatprep.mubr.f32.mxu0 0.0
      %5977 = vmatmul.mubr.f32.gmra.mxu0 %v5608
      %v5978 = vpop.f32.mrf.mxu0
      %v5979 = vadd.f32 %v5834, %v5978
      %v5980 = vpop.f32.mrf.mxu0
      %5981 = vmatprep.mubr.f32.mxu0 0.0
      %5982 = vmatmul.mubr.f32.gmra.mxu0 %v5611
      %v5983 = vpop.f32.mrf.mxu0
      %v5984 = vadd.f32 %v5839, %v5983
      %v5985 = vpop.f32.mrf.mxu0
      %5986 = vmatprep.mubr.f32.mxu0 0.0
      %5987 = vmatmul.mubr.f32.gmra.mxu0 %v5614
      %v5988 = vpop.f32.mrf.mxu0
      %v5989 = vadd.f32 %v5844, %v5988
      %v5990 = vpop.f32.mrf.mxu0
      %5991 = vmatprep.mubr.f32.mxu0 0.0
      %5992 = vmatmul.mubr.f32.gmra.mxu0 %v5617
      %v5993 = vpop.f32.mrf.mxu0
      %v5994 = vadd.f32 %v5849, %v5993
      %v5995 = vpop.f32.mrf.mxu0
      %5996 = vmatprep.mubr.f32.mxu0 0.0
      %5997 = vmatmul.mubr.f32.gmra.mxu0 %v5620
      %v5998 = vpop.f32.mrf.mxu0
      %v5999 = vadd.f32 %v5854, %v5998
      %v6000 = vpop.f32.mrf.mxu0
      %6001 = vmatprep.mubr.f32.mxu0 0.0
      %6002 = vmatmul.mubr.f32.gmra.mxu0 %v5671
      %v6003 = vpop.f32.mrf.mxu0
      %v6004 = vadd.f32 %v5859, %v6003
      %v6005 = vpop.f32.mrf.mxu0
      %6006 = vmatprep.mubr.f32.mxu0 0.0
      %6007 = vmatmul.mubr.f32.gmra.mxu0 %v5674
      %v6008 = vpop.f32.mrf.mxu0
      %v6009 = vadd.f32 %v5864, %v6008
      %v6010 = vpop.f32.mrf.mxu0
      %6011 = vmatprep.mubr.f32.mxu0 0.0
      %6012 = vmatmul.mubr.f32.gmra.mxu0 %v5677
      %v6013 = vpop.f32.mrf.mxu0
      %v6014 = vadd.f32 %v5869, %v6013
      %v6015 = vpop.f32.mrf.mxu0
      %6016 = vdwg.mxu0
      %6017 = vmatprep.subr.mxu0 0.0
      %6018 = vmatpush1.msra.mxu0 %v5636
      %6019 = vmatprep.subr.mxu0 0.0
      %6020 = vmatpush1.msra.mxu0 %v5635
      %6021 = vmatprep.subr.mxu0 0.0
      %6022 = vmatpush1.msra.mxu0 %v5634
      %6023 = vmatprep.subr.mxu0 0.0
      %6024 = vmatpush1.msra.mxu0 %v5633
      %6025 = vmatprep.subr.mxu0 0.0
      %6026 = vmatpush1.msra.mxu0 %v5632
      %6027 = vmatprep.subr.mxu0 0.0
      %6028 = vmatpush1.msra.mxu0 %v5631
      %6029 = vmatprep.subr.mxu0 0.0
      %6030 = vmatpush1.msra.mxu0 %v5630
      %6031 = vmatprep.subr.mxu0 0.0
      %6032 = vmatpush1.msra.mxu0 %v5629
      %6033 = vmatprep.subr.mxu0 0.0
      %6034 = vmatpush1.msra.mxu0 %v5628
      %6035 = vmatprep.subr.mxu0 0.0
      %6036 = vmatpush1.msra.mxu0 %v5627
      %6037 = vmatprep.subr.mxu0 0.0
      %6038 = vmatpush1.msra.mxu0 %v5626
      %6039 = vmatprep.subr.mxu0 0.0
      %6040 = vmatpush1.msra.mxu0 %v5625
      %6041 = vmatprep.subr.mxu0 0.0
      %6042 = vmatpush1.msra.mxu0 %v5624
      %6043 = vmatprep.subr.mxu0 0.0
      %6044 = vmatpush1.msra.mxu0 %v5623
      %6045 = vmatprep.subr.mxu0 0.0
      %6046 = vmatpush1.msra.mxu0 %v5622
      %6047 = vmatprep.subr.mxu0 0.0
      %6048 = vmatpush1.msra.mxu0 %v5621
      %6049 = vmatprep.subr.mxu0 0.0
      %6050 = vmatpush2.msra.mxu0 %v5652
      %6051 = vmatprep.subr.mxu0 0.0
      %6052 = vmatpush2.msra.mxu0 %v5651
      %6053 = vmatprep.subr.mxu0 0.0
      %6054 = vmatpush2.msra.mxu0 %v5650
      %6055 = vmatprep.subr.mxu0 0.0
      %6056 = vmatpush2.msra.mxu0 %v5649
      %6057 = vmatprep.subr.mxu0 0.0
      %6058 = vmatpush2.msra.mxu0 %v5648
      %6059 = vmatprep.subr.mxu0 0.0
      %6060 = vmatpush2.msra.mxu0 %v5647
      %6061 = vmatprep.subr.mxu0 0.0
      %6062 = vmatpush2.msra.mxu0 %v5646
      %6063 = vmatprep.subr.mxu0 0.0
      %6064 = vmatpush2.msra.mxu0 %v5645
      %6065 = vmatprep.subr.mxu0 0.0
      %6066 = vmatpush2.msra.mxu0 %v5644
      %6067 = vmatprep.subr.mxu0 0.0
      %6068 = vmatpush2.msra.mxu0 %v5643
      %6069 = vmatprep.subr.mxu0 0.0
      %6070 = vmatpush2.msra.mxu0 %v5642
      %6071 = vmatprep.subr.mxu0 0.0
      %6072 = vmatpush2.msra.mxu0 %v5641
      %6073 = vmatprep.subr.mxu0 0.0
      %6074 = vmatpush2.msra.mxu0 %v5640
      %6075 = vmatprep.subr.mxu0 0.0
      %6076 = vmatpush2.msra.mxu0 %v5639
      %6077 = vmatprep.subr.mxu0 0.0
      %6078 = vmatpush2.msra.mxu0 %v5638
      %6079 = vmatprep.subr.mxu0 0.0
      %6080 = vmatpush2.msra.mxu0 %v5637
      %6081 = vmatprep.mubr.f32.mxu0 %v5574
      %6082 = vmatmul.mubr.f32.gmra.mxu0 %v5573
      %v6083 = vpop.f32.mrf.mxu0
      %v6084 = vadd.f32 %v5939, %v6083
      %v6085 = vpop.f32.mrf.mxu0
      %6086 = vmatprep.mubr.f32.mxu0 %v5577
      %6087 = vmatmul.mubr.f32.gmra.mxu0 %v5576
      %v6088 = vpop.f32.mrf.mxu0
      %v6089 = vadd.f32 %v5944, %v6088
      %v6090 = vpop.f32.mrf.mxu0
      %6091 = vmatprep.mubr.f32.mxu0 %v5580
      %6092 = vmatmul.mubr.f32.gmra.mxu0 %v5579
      %v6093 = vpop.f32.mrf.mxu0
      %v6094 = vadd.f32 %v5949, %v6093
      %v6095 = vpop.f32.mrf.mxu0
      %6096 = vmatprep.mubr.f32.mxu0 %v5583
      %6097 = vmatmul.mubr.f32.gmra.mxu0 %v5582
      %v6098 = vpop.f32.mrf.mxu0
      %v6099 = vadd.f32 %v5954, %v6098
      %v6100 = vpop.f32.mrf.mxu0
      %6101 = vmatprep.mubr.f32.mxu0 %v5586
      %6102 = vmatmul.mubr.f32.gmra.mxu0 %v5585
      %v6103 = vpop.f32.mrf.mxu0
      %v6104 = vadd.f32 %v5959, %v6103
      %v6105 = vpop.f32.mrf.mxu0
      %6106 = vmatprep.mubr.f32.mxu0 %v5589
      %6107 = vmatmul.mubr.f32.gmra.mxu0 %v5588
      %v6108 = vpop.f32.mrf.mxu0
      %v6109 = vadd.f32 %v5964, %v6108
      %v6110 = vpop.f32.mrf.mxu0
      %6111 = vmatprep.mubr.f32.mxu0 %v5592
      %6112 = vmatmul.mubr.f32.gmra.mxu0 %v5591
      %v6113 = vpop.f32.mrf.mxu0
      %v6114 = vadd.f32 %v5969, %v6113
      %v6115 = vpop.f32.mrf.mxu0
      %6116 = vmatprep.mubr.f32.mxu0 %v5595
      %6117 = vmatmul.mubr.f32.gmra.mxu0 %v5594
      %v6118 = vpop.f32.mrf.mxu0
      %v6119 = vadd.f32 %v5974, %v6118
      %v6120 = vpop.f32.mrf.mxu0
      %6121 = vmatprep.mubr.f32.mxu0 %v5598
      %6122 = vmatmul.mubr.f32.gmra.mxu0 %v5597
      %v6123 = vpop.f32.mrf.mxu0
      %v6124 = vadd.f32 %v5979, %v6123
      %v6125 = vpop.f32.mrf.mxu0
      %6126 = vmatprep.mubr.f32.mxu0 %v5601
      %6127 = vmatmul.mubr.f32.gmra.mxu0 %v5600
      %v6128 = vpop.f32.mrf.mxu0
      %v6129 = vadd.f32 %v5984, %v6128
      %v6130 = vpop.f32.mrf.mxu0
      %6131 = vmatprep.mubr.f32.mxu0 %v5604
      %6132 = vmatmul.mubr.f32.gmra.mxu0 %v5603
      %v6133 = vpop.f32.mrf.mxu0
      %v6134 = vadd.f32 %v5989, %v6133
      %v6135 = vpop.f32.mrf.mxu0
      %6136 = vmatprep.mubr.f32.mxu0 %v5607
      %6137 = vmatmul.mubr.f32.gmra.mxu0 %v5606
      %v6138 = vpop.f32.mrf.mxu0
      %v6139 = vadd.f32 %v5994, %v6138
      %v6140 = vpop.f32.mrf.mxu0
      %6141 = vmatprep.mubr.f32.mxu0 %v5610
      %6142 = vmatmul.mubr.f32.gmra.mxu0 %v5609
      %v6143 = vpop.f32.mrf.mxu0
      %v6144 = vadd.f32 %v5999, %v6143
      %v6145 = vpop.f32.mrf.mxu0
      %6146 = vmatprep.mubr.f32.mxu0 %v5613
      %6147 = vmatmul.mubr.f32.gmra.mxu0 %v5612
      %v6148 = vpop.f32.mrf.mxu0
      %v6149 = vadd.f32 %v6004, %v6148
      %v6150 = vpop.f32.mrf.mxu0
      %6151 = vmatprep.mubr.f32.mxu0 %v5616
      %6152 = vmatmul.mubr.f32.gmra.mxu0 %v5615
      %v6153 = vpop.f32.mrf.mxu0
      %v6154 = vadd.f32 %v6009, %v6153
      %v6155 = vpop.f32.mrf.mxu0
      %6156 = vmatprep.mubr.f32.mxu0 %v5619
      %6157 = vmatmul.mubr.f32.gmra.mxu0 %v5618
      %v6158 = vpop.f32.mrf.mxu0
      %v6159 = vadd.f32 %v6014, %v6158
      %v6160 = vpop.f32.mrf.mxu0
      %6161 = vdwg.mxu0
      %6162 = vmatprep.subr.mxu0 0.0
      %6163 = vmatpush1.msra.mxu0 %v5668
      %6164 = vmatprep.subr.mxu0 0.0
      %6165 = vmatpush1.msra.mxu0 %v5667
      %6166 = vmatprep.subr.mxu0 0.0
      %6167 = vmatpush1.msra.mxu0 %v5666
      %6168 = vmatprep.subr.mxu0 0.0
      %6169 = vmatpush1.msra.mxu0 %v5665
      %6170 = vmatprep.subr.mxu0 0.0
      %6171 = vmatpush1.msra.mxu0 %v5664
      %6172 = vmatprep.subr.mxu0 0.0
      %6173 = vmatpush1.msra.mxu0 %v5663
      %6174 = vmatprep.subr.mxu0 0.0
      %6175 = vmatpush1.msra.mxu0 %v5662
      %6176 = vmatprep.subr.mxu0 0.0
      %6177 = vmatpush1.msra.mxu0 %v5661
      %6178 = vmatprep.subr.mxu0 0.0
      %6179 = vmatpush1.msra.mxu0 %v5660
      %6180 = vmatprep.subr.mxu0 0.0
      %6181 = vmatpush1.msra.mxu0 %v5659
      %6182 = vmatprep.subr.mxu0 0.0
      %6183 = vmatpush1.msra.mxu0 %v5658
      %6184 = vmatprep.subr.mxu0 0.0
      %6185 = vmatpush1.msra.mxu0 %v5657
      %6186 = vmatprep.subr.mxu0 0.0
      %6187 = vmatpush1.msra.mxu0 %v5656
      %6188 = vmatprep.subr.mxu0 0.0
      %6189 = vmatpush1.msra.mxu0 %v5655
      %6190 = vmatprep.subr.mxu0 0.0
      %6191 = vmatpush1.msra.mxu0 %v5654
      %6192 = vmatprep.subr.mxu0 0.0
      %6193 = vmatpush1.msra.mxu0 %v5653
      %6194 = vmatprep.subr.mxu0 0.0
      %6195 = vmatpush2.msra.mxu0 0.0
      %6196 = vmatprep.subr.mxu0 0.0
      %6197 = vmatpush2.msra.mxu0 0.0
      %6198 = vmatprep.subr.mxu0 0.0
      %6199 = vmatpush2.msra.mxu0 0.0
      %6200 = vmatprep.subr.mxu0 0.0
      %6201 = vmatpush2.msra.mxu0 0.0
      %6202 = vmatprep.subr.mxu0 0.0
      %6203 = vmatpush2.msra.mxu0 0.0
      %6204 = vmatprep.subr.mxu0 0.0
      %6205 = vmatpush2.msra.mxu0 0.0
      %6206 = vmatprep.subr.mxu0 0.0
      %6207 = vmatpush2.msra.mxu0 0.0
      %6208 = vmatprep.subr.mxu0 0.0
      %6209 = vmatpush2.msra.mxu0 0.0
      %6210 = vmatprep.subr.mxu0 0.0
      %6211 = vmatpush2.msra.mxu0 0.0
      %6212 = vmatprep.subr.mxu0 0.0
      %6213 = vmatpush2.msra.mxu0 0.0
      %6214 = vmatprep.subr.mxu0 0.0
      %6215 = vmatpush2.msra.mxu0 0.0
      %6216 = vmatprep.subr.mxu0 0.0
      %6217 = vmatpush2.msra.mxu0 0.0
      %6218 = vmatprep.subr.mxu0 0.0
      %6219 = vmatpush2.msra.mxu0 0.0
      %6220 = vmatprep.subr.mxu0 0.0
      %6221 = vmatpush2.msra.mxu0 0.0
      %6222 = vmatprep.subr.mxu0 0.0
      %6223 = vmatpush2.msra.mxu0 0.0
      %6224 = vmatprep.subr.mxu0 0.0
      %6225 = vmatpush2.msra.mxu0 0.0
      %6226 = vmatprep.mubr.f32.mxu0 0.0
      %6227 = vmatmul.mubr.f32.gmra.mxu0 %v5575
      %v6228 = vpop.f32.mrf.mxu0
      %v6229 = vadd.f32 %v6084, %v6228
      %v6230 = vpop.f32.mrf.mxu0
      %6231 = vmatprep.mubr.f32.mxu0 0.0
      %6232 = vmatmul.mubr.f32.gmra.mxu0 %v5578
      %v6233 = vpop.f32.mrf.mxu0
      %v6234 = vadd.f32 %v6089, %v6233
      %v6235 = vpop.f32.mrf.mxu0
      %6236 = vmatprep.mubr.f32.mxu0 0.0
      %6237 = vmatmul.mubr.f32.gmra.mxu0 %v5581
      %v6238 = vpop.f32.mrf.mxu0
      %v6239 = vadd.f32 %v6094, %v6238
      %v6240 = vpop.f32.mrf.mxu0
      %6241 = vmatprep.mubr.f32.mxu0 0.0
      %6242 = vmatmul.mubr.f32.gmra.mxu0 %v5584
      %v6243 = vpop.f32.mrf.mxu0
      %v6244 = vadd.f32 %v6099, %v6243
      %v6245 = vpop.f32.mrf.mxu0
      %6246 = vmatprep.mubr.f32.mxu0 0.0
      %6247 = vmatmul.mubr.f32.gmra.mxu0 %v5587
      %v6248 = vpop.f32.mrf.mxu0
      %v6249 = vadd.f32 %v6104, %v6248
      %v6250 = vpop.f32.mrf.mxu0
      %6251 = vmatprep.mubr.f32.mxu0 0.0
      %6252 = vmatmul.mubr.f32.gmra.mxu0 %v5590
      %v6253 = vpop.f32.mrf.mxu0
      %v6254 = vadd.f32 %v6109, %v6253
      %v6255 = vpop.f32.mrf.mxu0
      %6256 = vmatprep.mubr.f32.mxu0 0.0
      %6257 = vmatmul.mubr.f32.gmra.mxu0 %v5593
      %v6258 = vpop.f32.mrf.mxu0
      %v6259 = vadd.f32 %v6114, %v6258
      %v6260 = vpop.f32.mrf.mxu0
      %6261 = vmatprep.mubr.f32.mxu0 0.0
      %6262 = vmatmul.mubr.f32.gmra.mxu0 %v5596
      %v6263 = vpop.f32.mrf.mxu0
      %v6264 = vadd.f32 %v6119, %v6263
      %v6265 = vpop.f32.mrf.mxu0
      %6266 = vmatprep.mubr.f32.mxu0 0.0
      %6267 = vmatmul.mubr.f32.gmra.mxu0 %v5599
      %v6268 = vpop.f32.mrf.mxu0
      %v6269 = vadd.f32 %v6124, %v6268
      %v6270 = vpop.f32.mrf.mxu0
      %6271 = vmatprep.mubr.f32.mxu0 0.0
      %6272 = vmatmul.mubr.f32.gmra.mxu0 %v5602
      %v6273 = vpop.f32.mrf.mxu0
      %v6274 = vadd.f32 %v6129, %v6273
      %v6275 = vpop.f32.mrf.mxu0
      %6276 = vmatprep.mubr.f32.mxu0 0.0
      %6277 = vmatmul.mubr.f32.gmra.mxu0 %v5605
      %v6278 = vpop.f32.mrf.mxu0
      %v6279 = vadd.f32 %v6134, %v6278
      %v6280 = vpop.f32.mrf.mxu0
      %6281 = vmatprep.mubr.f32.mxu0 0.0
      %6282 = vmatmul.mubr.f32.gmra.mxu0 %v5608
      %v6283 = vpop.f32.mrf.mxu0
      %v6284 = vadd.f32 %v6139, %v6283
      %v6285 = vpop.f32.mrf.mxu0
      %6286 = vmatprep.mubr.f32.mxu0 0.0
      %6287 = vmatmul.mubr.f32.gmra.mxu0 %v5611
      %v6288 = vpop.f32.mrf.mxu0
      %v6289 = vadd.f32 %v6144, %v6288
      %v6290 = vpop.f32.mrf.mxu0
      %6291 = vmatprep.mubr.f32.mxu0 0.0
      %6292 = vmatmul.mubr.f32.gmra.mxu0 %v5614
      %v6293 = vpop.f32.mrf.mxu0
      %v6294 = vadd.f32 %v6149, %v6293
      %v6295 = vpop.f32.mrf.mxu0
      %6296 = vmatprep.mubr.f32.mxu0 0.0
      %6297 = vmatmul.mubr.f32.gmra.mxu0 %v5617
      %v6298 = vpop.f32.mrf.mxu0
      %v6299 = vadd.f32 %v6154, %v6298
      %v6300 = vpop.f32.mrf.mxu0
      %6301 = vmatprep.mubr.f32.mxu0 0.0
      %6302 = vmatmul.mubr.f32.gmra.mxu0 %v5620
      %v6303 = vpop.f32.mrf.mxu0
      %v6304 = vadd.f32 %v6159, %v6303
      %v6305 = vpop.f32.mrf.mxu0
      %6306 = vdwg.mxu0
      %v6307 = vld [vmem:[#allocation2 + $0x90] sm:$0xff]
      %v6308 = vld [vmem:[#allocation2 + $0x98] sm:$0xff]
      %v6309 = vld [vmem:[#allocation2 + $0xa0] sm:$0xff]
      %v6310 = vld [vmem:[#allocation2 + $0xa8] sm:$0xff]
      %v6311 = vld [vmem:[#allocation2 + $0xb0] sm:$0xff]
      %v6312 = vld [vmem:[#allocation2 + $0xb8] sm:$0xff]
      %v6313 = vld [vmem:[#allocation2 + $0xc0] sm:$0xff]
      %v6314 = vld [vmem:[#allocation2 + $0xc8] sm:$0xff]
      %v6315 = vld [vmem:[#allocation2 + $0xd0] sm:$0xff]
      %v6316 = vld [vmem:[#allocation2 + $0xd8] sm:$0xff]
      %v6317 = vld [vmem:[#allocation2 + $0xe0] sm:$0xff]
      %v6318 = vld [vmem:[#allocation2 + $0xe8] sm:$0xff]
      %v6319 = vld [vmem:[#allocation2 + $0xf0] sm:$0xff]
      %v6320 = vld [vmem:[#allocation2 + $0xf8] sm:$0xff]
      %v6321 = vld [vmem:[#allocation2 + $0x100] sm:$0xff]
      %v6322 = vld [vmem:[#allocation2 + $0x108] sm:$0xff]
      %v6323 = vld [vmem:[#allocation2 + $0x110] sm:$0xff]
      %v6324 = vld [vmem:[#allocation2 + $0x118] sm:$0xff]
      %v6325 = vld [vmem:[#allocation2 + $0x120] sm:$0xff]
      %v6326 = vld [vmem:[#allocation2 + $0x128] sm:$0xff]
      %v6327 = vld [vmem:[#allocation2 + $0x130] sm:$0xff]
      %v6328 = vld [vmem:[#allocation2 + $0x138] sm:$0xff]
      %v6329 = vld [vmem:[#allocation2 + $0x140] sm:$0xff]
      %v6330 = vld [vmem:[#allocation2 + $0x148] sm:$0xff]
      %v6331 = vld [vmem:[#allocation2 + $0x150] sm:$0xff]
      %v6332 = vld [vmem:[#allocation2 + $0x158] sm:$0xff]
      %v6333 = vld [vmem:[#allocation2 + $0x160] sm:$0xff]
      %v6334 = vld [vmem:[#allocation2 + $0x168] sm:$0xff]
      %v6335 = vld [vmem:[#allocation2 + $0x170] sm:$0xff]
      %v6336 = vld [vmem:[#allocation2 + $0x178] sm:$0xff]
      %v6337 = vld [vmem:[#allocation2 + $0x180] sm:$0xff]
      %v6338 = vld [vmem:[#allocation2 + $0x188] sm:$0xff]
      %v6339 = vld [vmem:[#allocation2 + $0x190] sm:$0xff]
      %v6340 = vld [vmem:[#allocation2 + $0x198] sm:$0xff]
      %v6341 = vld [vmem:[#allocation2 + $0x1a0] sm:$0xff]
      %v6342 = vld [vmem:[#allocation2 + $0x1a8] sm:$0xff]
      %v6343 = vld [vmem:[#allocation2 + $0x1b0] sm:$0xff]
      %v6344 = vld [vmem:[#allocation2 + $0x1b8] sm:$0xff]
      %v6345 = vld [vmem:[#allocation2 + $0x1c0] sm:$0xff]
      %v6346 = vld [vmem:[#allocation2 + $0x1c8] sm:$0xff]
      %v6347 = vld [vmem:[#allocation2 + $0x1d0] sm:$0xff]
      %v6348 = vld [vmem:[#allocation2 + $0x1d8] sm:$0xff]
      %v6349 = vld [vmem:[#allocation2 + $0x1e0] sm:$0xff]
      %v6350 = vld [vmem:[#allocation2 + $0x1e8] sm:$0xff]
      %v6351 = vld [vmem:[#allocation2 + $0x1f0] sm:$0xff]
      %v6352 = vld [vmem:[#allocation2 + $0x1f8] sm:$0xff]
      %v6353 = vld [vmem:[#allocation2 + $0x200] sm:$0xff]
      %v6354 = vld [vmem:[#allocation2 + $0x208] sm:$0xff]
      %s6355 = scalar_lea.vmem %s3, 768
      %v6356 = vld [vmem:[%s6355] sm:$0xff]
      %v6357 = vld [vmem:[%s6355 + $0x8] sm:$0xff]
      %v6358 = vld [vmem:[%s6355 + $0x10] sm:$0xff]
      %v6359 = vld [vmem:[%s6355 + $0x18] sm:$0xff]
      %v6360 = vld [vmem:[%s6355 + $0x20] sm:$0xff]
      %v6361 = vld [vmem:[%s6355 + $0x28] sm:$0xff]
      %v6362 = vld [vmem:[%s6355 + $0x30] sm:$0xff]
      %v6363 = vld [vmem:[%s6355 + $0x38] sm:$0xff]
      %v6364 = vld [vmem:[%s6355 + $0x40] sm:$0xff]
      %v6365 = vld [vmem:[%s6355 + $0x48] sm:$0xff]
      %v6366 = vld [vmem:[%s6355 + $0x50] sm:$0xff]
      %v6367 = vld [vmem:[%s6355 + $0x58] sm:$0xff]
      %v6368 = vld [vmem:[%s6355 + $0x60] sm:$0xff]
      %v6369 = vld [vmem:[%s6355 + $0x68] sm:$0xff]
      %v6370 = vld [vmem:[%s6355 + $0x70] sm:$0xff]
      %v6371 = vld [vmem:[%s6355 + $0x78] sm:$0xff]
      %v6372 = vld [vmem:[%s6355 + $0x80] sm:$0xff]
      %v6373 = vld [vmem:[%s6355 + $0x88] sm:$0xff]
      %v6374 = vld [vmem:[%s6355 + $0x90] sm:$0xff]
      %v6375 = vld [vmem:[%s6355 + $0x98] sm:$0xff]
      %v6376 = vld [vmem:[%s6355 + $0xa0] sm:$0xff]
      %v6377 = vld [vmem:[%s6355 + $0xa8] sm:$0xff]
      %v6378 = vld [vmem:[%s6355 + $0xb0] sm:$0xff]
      %v6379 = vld [vmem:[%s6355 + $0xb8] sm:$0xff]
      %v6380 = vld [vmem:[%s6355 + $0xc0] sm:$0xff]
      %v6381 = vld [vmem:[%s6355 + $0xc8] sm:$0xff]
      %v6382 = vld [vmem:[%s6355 + $0xd0] sm:$0xff]
      %v6383 = vld [vmem:[%s6355 + $0xd8] sm:$0xff]
      %v6384 = vld [vmem:[%s6355 + $0xe0] sm:$0xff]
      %v6385 = vld [vmem:[%s6355 + $0xe8] sm:$0xff]
      %v6386 = vld [vmem:[%s6355 + $0xf0] sm:$0xff]
      %v6387 = vld [vmem:[%s6355 + $0xf8] sm:$0xff]
      %v6388 = vld [vmem:[%s6355 + $0x100] sm:$0xff]
      %v6389 = vld [vmem:[%s6355 + $0x108] sm:$0xff]
      %v6390 = vld [vmem:[%s6355 + $0x110] sm:$0xff]
      %v6391 = vld [vmem:[%s6355 + $0x118] sm:$0xff]
      %v6392 = vld [vmem:[%s6355 + $0x120] sm:$0xff]
      %v6393 = vld [vmem:[%s6355 + $0x128] sm:$0xff]
      %v6394 = vld [vmem:[%s6355 + $0x130] sm:$0xff]
      %v6395 = vld [vmem:[%s6355 + $0x138] sm:$0xff]
      %v6396 = vld [vmem:[%s6355 + $0x140] sm:$0xff]
      %v6397 = vld [vmem:[%s6355 + $0x148] sm:$0xff]
      %v6398 = vld [vmem:[%s6355 + $0x150] sm:$0xff]
      %v6399 = vld [vmem:[%s6355 + $0x158] sm:$0xff]
      %v6400 = vld [vmem:[%s6355 + $0x160] sm:$0xff]
      %v6401 = vld [vmem:[%s6355 + $0x168] sm:$0xff]
      %v6402 = vld [vmem:[%s6355 + $0x170] sm:$0xff]
      %v6403 = vld [vmem:[%s6355 + $0x178] sm:$0xff]
      %6404 = vmatprep.subr.mxu0 0.0
      %6405 = vmatpush1.msra.mxu0 %v6371
      %6406 = vmatprep.subr.mxu0 0.0
      %6407 = vmatpush1.msra.mxu0 %v6370
      %6408 = vmatprep.subr.mxu0 0.0
      %6409 = vmatpush1.msra.mxu0 %v6369
      %6410 = vmatprep.subr.mxu0 0.0
      %6411 = vmatpush1.msra.mxu0 %v6368
      %6412 = vmatprep.subr.mxu0 0.0
      %6413 = vmatpush1.msra.mxu0 %v6367
      %6414 = vmatprep.subr.mxu0 0.0
      %6415 = vmatpush1.msra.mxu0 %v6366
      %6416 = vmatprep.subr.mxu0 0.0
      %6417 = vmatpush1.msra.mxu0 %v6365
      %6418 = vmatprep.subr.mxu0 0.0
      %6419 = vmatpush1.msra.mxu0 %v6364
      %6420 = vmatprep.subr.mxu0 0.0
      %6421 = vmatpush1.msra.mxu0 %v6363
      %6422 = vmatprep.subr.mxu0 0.0
      %6423 = vmatpush1.msra.mxu0 %v6362
      %6424 = vmatprep.subr.mxu0 0.0
      %6425 = vmatpush1.msra.mxu0 %v6361
      %6426 = vmatprep.subr.mxu0 0.0
      %6427 = vmatpush1.msra.mxu0 %v6360
      %6428 = vmatprep.subr.mxu0 0.0
      %6429 = vmatpush1.msra.mxu0 %v6359
      %6430 = vmatprep.subr.mxu0 0.0
      %6431 = vmatpush1.msra.mxu0 %v6358
      %6432 = vmatprep.subr.mxu0 0.0
      %6433 = vmatpush1.msra.mxu0 %v6357
      %6434 = vmatprep.subr.mxu0 0.0
      %6435 = vmatpush1.msra.mxu0 %v6356
      %6436 = vmatprep.subr.mxu0 0.0
      %6437 = vmatpush2.msra.mxu0 %v6387
      %6438 = vmatprep.subr.mxu0 0.0
      %6439 = vmatpush2.msra.mxu0 %v6386
      %6440 = vmatprep.subr.mxu0 0.0
      %6441 = vmatpush2.msra.mxu0 %v6385
      %6442 = vmatprep.subr.mxu0 0.0
      %6443 = vmatpush2.msra.mxu0 %v6384
      %6444 = vmatprep.subr.mxu0 0.0
      %6445 = vmatpush2.msra.mxu0 %v6383
      %6446 = vmatprep.subr.mxu0 0.0
      %6447 = vmatpush2.msra.mxu0 %v6382
      %6448 = vmatprep.subr.mxu0 0.0
      %6449 = vmatpush2.msra.mxu0 %v6381
      %6450 = vmatprep.subr.mxu0 0.0
      %6451 = vmatpush2.msra.mxu0 %v6380
      %6452 = vmatprep.subr.mxu0 0.0
      %6453 = vmatpush2.msra.mxu0 %v6379
      %6454 = vmatprep.subr.mxu0 0.0
      %6455 = vmatpush2.msra.mxu0 %v6378
      %6456 = vmatprep.subr.mxu0 0.0
      %6457 = vmatpush2.msra.mxu0 %v6377
      %6458 = vmatprep.subr.mxu0 0.0
      %6459 = vmatpush2.msra.mxu0 %v6376
      %6460 = vmatprep.subr.mxu0 0.0
      %6461 = vmatpush2.msra.mxu0 %v6375
      %6462 = vmatprep.subr.mxu0 0.0
      %6463 = vmatpush2.msra.mxu0 %v6374
      %6464 = vmatprep.subr.mxu0 0.0
      %6465 = vmatpush2.msra.mxu0 %v6373
      %6466 = vmatprep.subr.mxu0 0.0
      %6467 = vmatpush2.msra.mxu0 %v6372
      %6468 = vmatprep.mubr.f32.mxu0 %v6308
      %6469 = vmatmul.mubr.f32.gmra.mxu0 %v6307
      %v6470 = vpop.f32.mrf.mxu0
      %v6471 = vadd.f32 0.0, %v6470
      %v6472 = vpop.f32.mrf.mxu0
      %6473 = vmatprep.mubr.f32.mxu0 %v6311
      %6474 = vmatmul.mubr.f32.gmra.mxu0 %v6310
      %v6475 = vpop.f32.mrf.mxu0
      %v6476 = vadd.f32 0.0, %v6475
      %v6477 = vpop.f32.mrf.mxu0
      %6478 = vmatprep.mubr.f32.mxu0 %v6314
      %6479 = vmatmul.mubr.f32.gmra.mxu0 %v6313
      %v6480 = vpop.f32.mrf.mxu0
      %v6481 = vadd.f32 0.0, %v6480
      %v6482 = vpop.f32.mrf.mxu0
      %6483 = vmatprep.mubr.f32.mxu0 %v6317
      %6484 = vmatmul.mubr.f32.gmra.mxu0 %v6316
      %v6485 = vpop.f32.mrf.mxu0
      %v6486 = vadd.f32 0.0, %v6485
      %v6487 = vpop.f32.mrf.mxu0
      %6488 = vmatprep.mubr.f32.mxu0 %v6320
      %6489 = vmatmul.mubr.f32.gmra.mxu0 %v6319
      %v6490 = vpop.f32.mrf.mxu0
      %v6491 = vadd.f32 0.0, %v6490
      %v6492 = vpop.f32.mrf.mxu0
      %6493 = vmatprep.mubr.f32.mxu0 %v6323
      %6494 = vmatmul.mubr.f32.gmra.mxu0 %v6322
      %v6495 = vpop.f32.mrf.mxu0
      %v6496 = vadd.f32 0.0, %v6495
      %v6497 = vpop.f32.mrf.mxu0
      %6498 = vmatprep.mubr.f32.mxu0 %v6326
      %6499 = vmatmul.mubr.f32.gmra.mxu0 %v6325
      %v6500 = vpop.f32.mrf.mxu0
      %v6501 = vadd.f32 0.0, %v6500
      %v6502 = vpop.f32.mrf.mxu0
      %6503 = vmatprep.mubr.f32.mxu0 %v6329
      %6504 = vmatmul.mubr.f32.gmra.mxu0 %v6328
      %v6505 = vpop.f32.mrf.mxu0
      %v6506 = vadd.f32 0.0, %v6505
      %v6507 = vpop.f32.mrf.mxu0
      %6508 = vmatprep.mubr.f32.mxu0 %v6332
      %6509 = vmatmul.mubr.f32.gmra.mxu0 %v6331
      %v6510 = vpop.f32.mrf.mxu0
      %v6511 = vadd.f32 0.0, %v6510
      %v6512 = vpop.f32.mrf.mxu0
      %6513 = vmatprep.mubr.f32.mxu0 %v6335
      %6514 = vmatmul.mubr.f32.gmra.mxu0 %v6334
      %v6515 = vpop.f32.mrf.mxu0
      %v6516 = vadd.f32 0.0, %v6515
      %v6517 = vpop.f32.mrf.mxu0
      %6518 = vmatprep.mubr.f32.mxu0 %v6338
      %6519 = vmatmul.mubr.f32.gmra.mxu0 %v6337
      %v6520 = vpop.f32.mrf.mxu0
      %v6521 = vadd.f32 0.0, %v6520
      %v6522 = vpop.f32.mrf.mxu0
      %6523 = vmatprep.mubr.f32.mxu0 %v6341
      %6524 = vmatmul.mubr.f32.gmra.mxu0 %v6340
      %v6525 = vpop.f32.mrf.mxu0
      %v6526 = vadd.f32 0.0, %v6525
      %v6527 = vpop.f32.mrf.mxu0
      %6528 = vmatprep.mubr.f32.mxu0 %v6344
      %6529 = vmatmul.mubr.f32.gmra.mxu0 %v6343
      %v6530 = vpop.f32.mrf.mxu0
      %v6531 = vadd.f32 0.0, %v6530
      %v6532 = vpop.f32.mrf.mxu0
      %6533 = vmatprep.mubr.f32.mxu0 %v6347
      %6534 = vmatmul.mubr.f32.gmra.mxu0 %v6346
      %v6535 = vpop.f32.mrf.mxu0
      %v6536 = vadd.f32 0.0, %v6535
      %v6537 = vpop.f32.mrf.mxu0
      %6538 = vmatprep.mubr.f32.mxu0 %v6350
      %6539 = vmatmul.mubr.f32.gmra.mxu0 %v6349
      %v6540 = vpop.f32.mrf.mxu0
      %v6541 = vadd.f32 0.0, %v6540
      %v6542 = vpop.f32.mrf.mxu0
      %6543 = vmatprep.mubr.f32.mxu0 %v6353
      %6544 = vmatmul.mubr.f32.gmra.mxu0 %v6352
      %v6545 = vpop.f32.mrf.mxu0
      %v6546 = vadd.f32 0.0, %v6545
      %v6547 = vpop.f32.mrf.mxu0
      %6548 = vdwg.mxu0
      %6549 = vmatprep.subr.mxu0 0.0
      %6550 = vmatpush1.msra.mxu0 %v6403
      %6551 = vmatprep.subr.mxu0 0.0
      %6552 = vmatpush1.msra.mxu0 %v6402
      %6553 = vmatprep.subr.mxu0 0.0
      %6554 = vmatpush1.msra.mxu0 %v6401
      %6555 = vmatprep.subr.mxu0 0.0
      %6556 = vmatpush1.msra.mxu0 %v6400
      %6557 = vmatprep.subr.mxu0 0.0
      %6558 = vmatpush1.msra.mxu0 %v6399
      %6559 = vmatprep.subr.mxu0 0.0
      %6560 = vmatpush1.msra.mxu0 %v6398
      %6561 = vmatprep.subr.mxu0 0.0
      %6562 = vmatpush1.msra.mxu0 %v6397
      %6563 = vmatprep.subr.mxu0 0.0
      %6564 = vmatpush1.msra.mxu0 %v6396
      %6565 = vmatprep.subr.mxu0 0.0
      %6566 = vmatpush1.msra.mxu0 %v6395
      %6567 = vmatprep.subr.mxu0 0.0
      %6568 = vmatpush1.msra.mxu0 %v6394
      %6569 = vmatprep.subr.mxu0 0.0
      %6570 = vmatpush1.msra.mxu0 %v6393
      %6571 = vmatprep.subr.mxu0 0.0
      %6572 = vmatpush1.msra.mxu0 %v6392
      %6573 = vmatprep.subr.mxu0 0.0
      %6574 = vmatpush1.msra.mxu0 %v6391
      %6575 = vmatprep.subr.mxu0 0.0
      %6576 = vmatpush1.msra.mxu0 %v6390
      %6577 = vmatprep.subr.mxu0 0.0
      %6578 = vmatpush1.msra.mxu0 %v6389
      %6579 = vmatprep.subr.mxu0 0.0
      %6580 = vmatpush1.msra.mxu0 %v6388
      %6581 = vmatprep.subr.mxu0 0.0
      %6582 = vmatpush2.msra.mxu0 0.0
      %6583 = vmatprep.subr.mxu0 0.0
      %6584 = vmatpush2.msra.mxu0 0.0
      %6585 = vmatprep.subr.mxu0 0.0
      %6586 = vmatpush2.msra.mxu0 0.0
      %6587 = vmatprep.subr.mxu0 0.0
      %6588 = vmatpush2.msra.mxu0 0.0
      %6589 = vmatprep.subr.mxu0 0.0
      %6590 = vmatpush2.msra.mxu0 0.0
      %6591 = vmatprep.subr.mxu0 0.0
      %6592 = vmatpush2.msra.mxu0 0.0
      %6593 = vmatprep.subr.mxu0 0.0
      %6594 = vmatpush2.msra.mxu0 0.0
      %6595 = vmatprep.subr.mxu0 0.0
      %6596 = vmatpush2.msra.mxu0 0.0
      %6597 = vmatprep.subr.mxu0 0.0
      %6598 = vmatpush2.msra.mxu0 0.0
      %6599 = vmatprep.subr.mxu0 0.0
      %6600 = vmatpush2.msra.mxu0 0.0
      %6601 = vmatprep.subr.mxu0 0.0
      %6602 = vmatpush2.msra.mxu0 0.0
      %6603 = vmatprep.subr.mxu0 0.0
      %6604 = vmatpush2.msra.mxu0 0.0
      %6605 = vmatprep.subr.mxu0 0.0
      %6606 = vmatpush2.msra.mxu0 0.0
      %6607 = vmatprep.subr.mxu0 0.0
      %6608 = vmatpush2.msra.mxu0 0.0
      %6609 = vmatprep.subr.mxu0 0.0
      %6610 = vmatpush2.msra.mxu0 0.0
      %6611 = vmatprep.subr.mxu0 0.0
      %6612 = vmatpush2.msra.mxu0 0.0
      %6613 = vmatprep.mubr.f32.mxu0 0.0
      %6614 = vmatmul.mubr.f32.gmra.mxu0 %v6309
      %v6615 = vpop.f32.mrf.mxu0
      %v6616 = vadd.f32 %v6471, %v6615
      %v6617 = vpop.f32.mrf.mxu0
      %6618 = vmatprep.mubr.f32.mxu0 0.0
      %6619 = vmatmul.mubr.f32.gmra.mxu0 %v6312
      %v6620 = vpop.f32.mrf.mxu0
      %v6621 = vadd.f32 %v6476, %v6620
      %v6622 = vpop.f32.mrf.mxu0
      %6623 = vmatprep.mubr.f32.mxu0 0.0
      %6624 = vmatmul.mubr.f32.gmra.mxu0 %v6315
      %v6625 = vpop.f32.mrf.mxu0
      %v6626 = vadd.f32 %v6481, %v6625
      %v6627 = vpop.f32.mrf.mxu0
      %6628 = vmatprep.mubr.f32.mxu0 0.0
      %6629 = vmatmul.mubr.f32.gmra.mxu0 %v6318
      %v6630 = vpop.f32.mrf.mxu0
      %v6631 = vadd.f32 %v6486, %v6630
      %v6632 = vpop.f32.mrf.mxu0
      %6633 = vmatprep.mubr.f32.mxu0 0.0
      %6634 = vmatmul.mubr.f32.gmra.mxu0 %v6321
      %v6635 = vpop.f32.mrf.mxu0
      %v6636 = vadd.f32 %v6491, %v6635
      %v6637 = vpop.f32.mrf.mxu0
      %6638 = vmatprep.mubr.f32.mxu0 0.0
      %6639 = vmatmul.mubr.f32.gmra.mxu0 %v6324
      %v6640 = vpop.f32.mrf.mxu0
      %v6641 = vadd.f32 %v6496, %v6640
      %v6642 = vpop.f32.mrf.mxu0
      %6643 = vmatprep.mubr.f32.mxu0 0.0
      %6644 = vmatmul.mubr.f32.gmra.mxu0 %v6327
      %v6645 = vpop.f32.mrf.mxu0
      %v6646 = vadd.f32 %v6501, %v6645
      %v6647 = vpop.f32.mrf.mxu0
      %6648 = vmatprep.mubr.f32.mxu0 0.0
      %6649 = vmatmul.mubr.f32.gmra.mxu0 %v6330
      %v6650 = vpop.f32.mrf.mxu0
      %v6651 = vadd.f32 %v6506, %v6650
      %v6652 = vpop.f32.mrf.mxu0
      %6653 = vmatprep.mubr.f32.mxu0 0.0
      %6654 = vmatmul.mubr.f32.gmra.mxu0 %v6333
      %v6655 = vpop.f32.mrf.mxu0
      %v6656 = vadd.f32 %v6511, %v6655
      %v6657 = vpop.f32.mrf.mxu0
      %6658 = vmatprep.mubr.f32.mxu0 0.0
      %6659 = vmatmul.mubr.f32.gmra.mxu0 %v6336
      %v6660 = vpop.f32.mrf.mxu0
      %v6661 = vadd.f32 %v6516, %v6660
      %v6662 = vpop.f32.mrf.mxu0
      %6663 = vmatprep.mubr.f32.mxu0 0.0
      %6664 = vmatmul.mubr.f32.gmra.mxu0 %v6339
      %v6665 = vpop.f32.mrf.mxu0
      %v6666 = vadd.f32 %v6521, %v6665
      %v6667 = vpop.f32.mrf.mxu0
      %6668 = vmatprep.mubr.f32.mxu0 0.0
      %6669 = vmatmul.mubr.f32.gmra.mxu0 %v6342
      %v6670 = vpop.f32.mrf.mxu0
      %v6671 = vadd.f32 %v6526, %v6670
      %v6672 = vpop.f32.mrf.mxu0
      %6673 = vmatprep.mubr.f32.mxu0 0.0
      %6674 = vmatmul.mubr.f32.gmra.mxu0 %v6345
      %v6675 = vpop.f32.mrf.mxu0
      %v6676 = vadd.f32 %v6531, %v6675
      %v6677 = vpop.f32.mrf.mxu0
      %6678 = vmatprep.mubr.f32.mxu0 0.0
      %6679 = vmatmul.mubr.f32.gmra.mxu0 %v6348
      %v6680 = vpop.f32.mrf.mxu0
      %v6681 = vadd.f32 %v6536, %v6680
      %v6682 = vpop.f32.mrf.mxu0
      %6683 = vmatprep.mubr.f32.mxu0 0.0
      %6684 = vmatmul.mubr.f32.gmra.mxu0 %v6351
      %v6685 = vpop.f32.mrf.mxu0
      %v6686 = vadd.f32 %v6541, %v6685
      %v6687 = vpop.f32.mrf.mxu0
      %6688 = vmatprep.mubr.f32.mxu0 0.0
      %6689 = vmatmul.mubr.f32.gmra.mxu0 %v6354
      %v6690 = vpop.f32.mrf.mxu0
      %v6691 = vadd.f32 %v6546, %v6690
      %v6692 = vpop.f32.mrf.mxu0
      %6693 = vdwg.mxu0
      %v6694 = vadd.f32 %v6229, %v6616
      %v6695 = vadd.f32 %v6234, %v6621
      %v6696 = vadd.f32 %v6239, %v6626
      %v6697 = vadd.f32 %v6244, %v6631
      %v6698 = vadd.f32 %v6249, %v6636
      %v6699 = vadd.f32 %v6254, %v6641
      %v6700 = vadd.f32 %v6259, %v6646
      %v6701 = vadd.f32 %v6264, %v6651
      %v6702 = vadd.f32 %v6269, %v6656
      %v6703 = vadd.f32 %v6274, %v6661
      %v6704 = vadd.f32 %v6279, %v6666
      %v6705 = vadd.f32 %v6284, %v6671
      %v6706 = vadd.f32 %v6289, %v6676
      %v6707 = vadd.f32 %v6294, %v6681
      %v6708 = vadd.f32 %v6299, %v6686
      %v6709 = vadd.f32 %v6304, %v6691
      %v6710 = vld [vmem:[%s4] sm:$0x1]
      %v6712 = vlaneseq
      %v6713 = vshrl.u32 %v6712, 7
      %v6714 = vsub.s32 0, %v6713
      %v6715 = vrot.slane %v6710, %v6714
      %v6717 = vadd.f32 %v6694, %v6715
      %v6718 = vadd.f32 %v6695, %v6715
      %v6719 = vadd.f32 %v6696, %v6715
      %v6720 = vadd.f32 %v6697, %v6715
      %v6721 = vadd.f32 %v6698, %v6715
      %v6722 = vadd.f32 %v6699, %v6715
      %v6723 = vadd.f32 %v6700, %v6715
      %v6724 = vadd.f32 %v6701, %v6715
      %v6725 = vadd.f32 %v6702, %v6715
      %v6726 = vadd.f32 %v6703, %v6715
      %v6727 = vadd.f32 %v6704, %v6715
      %v6728 = vadd.f32 %v6705, %v6715
      %v6729 = vadd.f32 %v6706, %v6715
      %v6730 = vadd.f32 %v6707, %v6715
      %v6731 = vadd.f32 %v6708, %v6715
      %v6732 = vadd.f32 %v6709, %v6715
      %v6733 = vld [vmem:[%s219 + $0x20] sm:$0xff]
      %v6734 = vld [vmem:[%s219 + $0x28] sm:$0xff]
      %v6735 = vld [vmem:[%s219 + $0x30] sm:$0xff]
      %v6736 = vld [vmem:[%s219 + $0x38] sm:$0xff]
      %v6737 = vld [vmem:[%s219 + $0x40] sm:$0xff]
      %v6738 = vld [vmem:[%s219 + $0x48] sm:$0xff]
      %v6739 = vld [vmem:[%s219 + $0x50] sm:$0xff]
      %v6740 = vld [vmem:[%s219 + $0x58] sm:$0xff]
      %v6741 = vld [vmem:[%s219 + $0x60] sm:$0xff]
      %v6742 = vld [vmem:[%s219 + $0x68] sm:$0xff]
      %v6743 = vld [vmem:[%s219 + $0x70] sm:$0xff]
      %v6744 = vld [vmem:[%s219 + $0x78] sm:$0xff]
      %v6745 = vld [vmem:[%s219 + $0x80] sm:$0xff]
      %v6746 = vld [vmem:[%s219 + $0x88] sm:$0xff]
      %v6747 = vld [vmem:[%s219 + $0x90] sm:$0xff]
      %v6748 = vld [vmem:[%s219 + $0x98] sm:$0xff]
      %v6749 = vadd.f32 %v6717, %v6733
      %v6750 = vadd.f32 %v6718, %v6734
      %v6751 = vadd.f32 %v6719, %v6735
      %v6752 = vadd.f32 %v6720, %v6736
      %v6753 = vadd.f32 %v6721, %v6737
      %v6754 = vadd.f32 %v6722, %v6738
      %v6755 = vadd.f32 %v6723, %v6739
      %v6756 = vadd.f32 %v6724, %v6740
      %v6757 = vadd.f32 %v6725, %v6741
      %v6758 = vadd.f32 %v6726, %v6742
      %v6759 = vadd.f32 %v6727, %v6743
      %v6760 = vadd.f32 %v6728, %v6744
      %v6761 = vadd.f32 %v6729, %v6745
      %v6762 = vadd.f32 %v6730, %v6746
      %v6763 = vadd.f32 %v6731, %v6747
      %v6764 = vadd.f32 %v6732, %v6748
      %v6765 = vmax.f32 %v6749, 0.0
      %v6766 = vmax.f32 %v6750, 0.0
      %v6767 = vmax.f32 %v6751, 0.0
      %v6768 = vmax.f32 %v6752, 0.0
      %v6769 = vmax.f32 %v6753, 0.0
      %v6770 = vmax.f32 %v6754, 0.0
      %v6771 = vmax.f32 %v6755, 0.0
      %v6772 = vmax.f32 %v6756, 0.0
      %v6773 = vmax.f32 %v6757, 0.0
      %v6774 = vmax.f32 %v6758, 0.0
      %v6775 = vmax.f32 %v6759, 0.0
      %v6776 = vmax.f32 %v6760, 0.0
      %v6777 = vmax.f32 %v6761, 0.0
      %v6778 = vmax.f32 %v6762, 0.0
      %v6779 = vmax.f32 %v6763, 0.0
      %v6780 = vmax.f32 %v6764, 0.0
      %6781 = vst [vmem:[%s224] sm:$0xff] %v6765
      %6782 = vst [vmem:[%s224 + $0x8] sm:$0xff] %v6766
      %6783 = vst [vmem:[%s224 + $0x10] sm:$0xff] %v6767
      %6784 = vst [vmem:[%s224 + $0x18] sm:$0xff] %v6768
      %6785 = vst [vmem:[%s224 + $0x20] sm:$0xff] %v6769
      %6786 = vst [vmem:[%s224 + $0x28] sm:$0xff] %v6770
      %6787 = vst [vmem:[%s224 + $0x30] sm:$0xff] %v6771
      %6788 = vst [vmem:[%s224 + $0x38] sm:$0xff] %v6772
      %6789 = vst [vmem:[%s224 + $0x40] sm:$0xff] %v6773
      %6790 = vst [vmem:[%s224 + $0x48] sm:$0xff] %v6774
      %6791 = vst [vmem:[%s224 + $0x50] sm:$0xff] %v6775
      %6792 = vst [vmem:[%s224 + $0x58] sm:$0xff] %v6776
      %6793 = vst [vmem:[%s224 + $0x60] sm:$0xff] %v6777
      %6794 = vst [vmem:[%s224 + $0x68] sm:$0xff] %v6778
      %6795 = vst [vmem:[%s224 + $0x70] sm:$0xff] %v6779
      %6796 = vst [vmem:[%s224 + $0x78] sm:$0xff] %v6780
      %v6797 = vld [vmem:[#allocation2 + $0x180] sm:$0xff]
      %v6798 = vld [vmem:[#allocation2 + $0x188] sm:$0xff]
      %v6799 = vld [vmem:[#allocation2 + $0x190] sm:$0xff]
      %v6800 = vld [vmem:[#allocation2 + $0x198] sm:$0xff]
      %v6801 = vld [vmem:[#allocation2 + $0x1a0] sm:$0xff]
      %v6802 = vld [vmem:[#allocation2 + $0x1a8] sm:$0xff]
      %v6803 = vld [vmem:[#allocation2 + $0x1b0] sm:$0xff]
      %v6804 = vld [vmem:[#allocation2 + $0x1b8] sm:$0xff]
      %v6805 = vld [vmem:[#allocation2 + $0x1c0] sm:$0xff]
      %v6806 = vld [vmem:[#allocation2 + $0x1c8] sm:$0xff]
      %v6807 = vld [vmem:[#allocation2 + $0x1d0] sm:$0xff]
      %v6808 = vld [vmem:[#allocation2 + $0x1d8] sm:$0xff]
      %v6809 = vld [vmem:[#allocation2 + $0x1e0] sm:$0xff]
      %v6810 = vld [vmem:[#allocation2 + $0x1e8] sm:$0xff]
      %v6811 = vld [vmem:[#allocation2 + $0x1f0] sm:$0xff]
      %v6812 = vld [vmem:[#allocation2 + $0x1f8] sm:$0xff]
      %v6813 = vld [vmem:[#allocation2 + $0x200] sm:$0xff]
      %v6814 = vld [vmem:[#allocation2 + $0x208] sm:$0xff]
      %v6815 = vld [vmem:[#allocation2 + $0x210] sm:$0xff]
      %v6816 = vld [vmem:[#allocation2 + $0x218] sm:$0xff]
      %v6817 = vld [vmem:[#allocation2 + $0x220] sm:$0xff]
      %v6818 = vld [vmem:[#allocation2 + $0x228] sm:$0xff]
      %v6819 = vld [vmem:[#allocation2 + $0x230] sm:$0xff]
      %v6820 = vld [vmem:[#allocation2 + $0x238] sm:$0xff]
      %v6821 = vld [vmem:[#allocation2 + $0x240] sm:$0xff]
      %v6822 = vld [vmem:[#allocation2 + $0x248] sm:$0xff]
      %v6823 = vld [vmem:[#allocation2 + $0x250] sm:$0xff]
      %v6824 = vld [vmem:[#allocation2 + $0x258] sm:$0xff]
      %v6825 = vld [vmem:[#allocation2 + $0x260] sm:$0xff]
      %v6826 = vld [vmem:[#allocation2 + $0x268] sm:$0xff]
      %v6827 = vld [vmem:[#allocation2 + $0x270] sm:$0xff]
      %v6828 = vld [vmem:[#allocation2 + $0x278] sm:$0xff]
      %v6829 = vld [vmem:[#allocation2 + $0x280] sm:$0xff]
      %v6830 = vld [vmem:[#allocation2 + $0x288] sm:$0xff]
      %v6831 = vld [vmem:[#allocation2 + $0x290] sm:$0xff]
      %v6832 = vld [vmem:[#allocation2 + $0x298] sm:$0xff]
      %v6833 = vld [vmem:[#allocation2 + $0x2a0] sm:$0xff]
      %v6834 = vld [vmem:[#allocation2 + $0x2a8] sm:$0xff]
      %v6835 = vld [vmem:[#allocation2 + $0x2b0] sm:$0xff]
      %v6836 = vld [vmem:[#allocation2 + $0x2b8] sm:$0xff]
      %v6837 = vld [vmem:[#allocation2 + $0x2c0] sm:$0xff]
      %v6838 = vld [vmem:[#allocation2 + $0x2c8] sm:$0xff]
      %v6839 = vld [vmem:[#allocation2 + $0x2d0] sm:$0xff]
      %v6840 = vld [vmem:[#allocation2 + $0x2d8] sm:$0xff]
      %v6841 = vld [vmem:[#allocation2 + $0x2e0] sm:$0xff]
      %v6842 = vld [vmem:[#allocation2 + $0x2e8] sm:$0xff]
      %v6843 = vld [vmem:[#allocation2 + $0x2f0] sm:$0xff]
      %v6844 = vld [vmem:[#allocation2 + $0x2f8] sm:$0xff]
      %v6845 = vld [vmem:[%s3] sm:$0xff]
      %v6846 = vld [vmem:[%s3 + $0x8] sm:$0xff]
      %v6847 = vld [vmem:[%s3 + $0x10] sm:$0xff]
      %v6848 = vld [vmem:[%s3 + $0x18] sm:$0xff]
      %v6849 = vld [vmem:[%s3 + $0x20] sm:$0xff]
      %v6850 = vld [vmem:[%s3 + $0x28] sm:$0xff]
      %v6851 = vld [vmem:[%s3 + $0x30] sm:$0xff]
      %v6852 = vld [vmem:[%s3 + $0x38] sm:$0xff]
      %v6853 = vld [vmem:[%s3 + $0x40] sm:$0xff]
      %v6854 = vld [vmem:[%s3 + $0x48] sm:$0xff]
      %v6855 = vld [vmem:[%s3 + $0x50] sm:$0xff]
      %v6856 = vld [vmem:[%s3 + $0x58] sm:$0xff]
      %v6857 = vld [vmem:[%s3 + $0x60] sm:$0xff]
      %v6858 = vld [vmem:[%s3 + $0x68] sm:$0xff]
      %v6859 = vld [vmem:[%s3 + $0x70] sm:$0xff]
      %v6860 = vld [vmem:[%s3 + $0x78] sm:$0xff]
      %v6861 = vld [vmem:[%s3 + $0x80] sm:$0xff]
      %v6862 = vld [vmem:[%s3 + $0x88] sm:$0xff]
      %v6863 = vld [vmem:[%s3 + $0x90] sm:$0xff]
      %v6864 = vld [vmem:[%s3 + $0x98] sm:$0xff]
      %v6865 = vld [vmem:[%s3 + $0xa0] sm:$0xff]
      %v6866 = vld [vmem:[%s3 + $0xa8] sm:$0xff]
      %v6867 = vld [vmem:[%s3 + $0xb0] sm:$0xff]
      %v6868 = vld [vmem:[%s3 + $0xb8] sm:$0xff]
      %v6869 = vld [vmem:[%s3 + $0xc0] sm:$0xff]
      %v6870 = vld [vmem:[%s3 + $0xc8] sm:$0xff]
      %v6871 = vld [vmem:[%s3 + $0xd0] sm:$0xff]
      %v6872 = vld [vmem:[%s3 + $0xd8] sm:$0xff]
      %v6873 = vld [vmem:[%s3 + $0xe0] sm:$0xff]
      %v6874 = vld [vmem:[%s3 + $0xe8] sm:$0xff]
      %v6875 = vld [vmem:[%s3 + $0xf0] sm:$0xff]
      %v6876 = vld [vmem:[%s3 + $0xf8] sm:$0xff]
      %v6877 = vld [vmem:[%s3 + $0x100] sm:$0xff]
      %v6878 = vld [vmem:[%s3 + $0x108] sm:$0xff]
      %v6879 = vld [vmem:[%s3 + $0x110] sm:$0xff]
      %v6880 = vld [vmem:[%s3 + $0x118] sm:$0xff]
      %v6881 = vld [vmem:[%s3 + $0x120] sm:$0xff]
      %v6882 = vld [vmem:[%s3 + $0x128] sm:$0xff]
      %v6883 = vld [vmem:[%s3 + $0x130] sm:$0xff]
      %v6884 = vld [vmem:[%s3 + $0x138] sm:$0xff]
      %v6885 = vld [vmem:[%s3 + $0x140] sm:$0xff]
      %v6886 = vld [vmem:[%s3 + $0x148] sm:$0xff]
      %v6887 = vld [vmem:[%s3 + $0x150] sm:$0xff]
      %v6888 = vld [vmem:[%s3 + $0x158] sm:$0xff]
      %v6889 = vld [vmem:[%s3 + $0x160] sm:$0xff]
      %v6890 = vld [vmem:[%s3 + $0x168] sm:$0xff]
      %v6891 = vld [vmem:[%s3 + $0x170] sm:$0xff]
      %v6892 = vld [vmem:[%s3 + $0x178] sm:$0xff]
      %v6893 = vld [vmem:[#allocation2 + $0x300] sm:$0xff]
      %v6894 = vld [vmem:[#allocation2 + $0x308] sm:$0xff]
      %v6895 = vld [vmem:[#allocation2 + $0x310] sm:$0xff]
      %v6896 = vld [vmem:[#allocation2 + $0x318] sm:$0xff]
      %v6897 = vld [vmem:[#allocation2 + $0x320] sm:$0xff]
      %v6898 = vld [vmem:[#allocation2 + $0x328] sm:$0xff]
      %v6899 = vld [vmem:[#allocation2 + $0x330] sm:$0xff]
      %v6900 = vld [vmem:[#allocation2 + $0x338] sm:$0xff]
      %v6901 = vld [vmem:[#allocation2 + $0x340] sm:$0xff]
      %v6902 = vld [vmem:[%s5678] sm:$0xff]
      %v6903 = vld [vmem:[%s5678 + $0x8] sm:$0xff]
      %v6904 = vld [vmem:[%s5678 + $0x10] sm:$0xff]
      %v6905 = vld [vmem:[%s5678 + $0x18] sm:$0xff]
      %v6906 = vld [vmem:[%s5678 + $0x20] sm:$0xff]
      %v6907 = vld [vmem:[%s5678 + $0x28] sm:$0xff]
      %v6908 = vld [vmem:[%s5678 + $0x30] sm:$0xff]
      %v6909 = vld [vmem:[%s5678 + $0x38] sm:$0xff]
      %v6910 = vld [vmem:[%s5678 + $0x40] sm:$0xff]
      %v6911 = vld [vmem:[%s5678 + $0x48] sm:$0xff]
      %v6912 = vld [vmem:[%s5678 + $0x50] sm:$0xff]
      %v6913 = vld [vmem:[%s5678 + $0x58] sm:$0xff]
      %v6914 = vld [vmem:[%s5678 + $0x60] sm:$0xff]
      %v6915 = vld [vmem:[%s5678 + $0x68] sm:$0xff]
      %v6916 = vld [vmem:[%s5678 + $0x70] sm:$0xff]
      %v6917 = vld [vmem:[%s5678 + $0x78] sm:$0xff]
      %v6918 = vld [vmem:[%s5678 + $0x80] sm:$0xff]
      %v6919 = vld [vmem:[%s5678 + $0x88] sm:$0xff]
      %v6920 = vld [vmem:[%s5678 + $0x90] sm:$0xff]
      %v6921 = vld [vmem:[%s5678 + $0x98] sm:$0xff]
      %v6922 = vld [vmem:[%s5678 + $0xa0] sm:$0xff]
      %v6923 = vld [vmem:[%s5678 + $0xa8] sm:$0xff]
      %v6924 = vld [vmem:[%s5678 + $0xb0] sm:$0xff]
      %v6925 = vld [vmem:[%s5678 + $0xb8] sm:$0xff]
      %v6926 = vld [vmem:[%s5678 + $0xc0] sm:$0xff]
      %v6927 = vld [vmem:[%s5678 + $0xc8] sm:$0xff]
      %v6928 = vld [vmem:[%s5678 + $0xd0] sm:$0xff]
      %v6929 = vld [vmem:[%s5678 + $0xd8] sm:$0xff]
      %v6930 = vld [vmem:[%s5678 + $0xe0] sm:$0xff]
      %v6931 = vld [vmem:[%s5678 + $0xe8] sm:$0xff]
      %v6932 = vld [vmem:[%s5678 + $0xf0] sm:$0xff]
      %v6933 = vld [vmem:[%s5678 + $0xf8] sm:$0xff]
      %v6934 = vld [vmem:[%s5678 + $0x100] sm:$0xff]
      %v6935 = vld [vmem:[%s5678 + $0x108] sm:$0xff]
      %v6936 = vld [vmem:[%s5678 + $0x110] sm:$0xff]
      %v6937 = vld [vmem:[%s5678 + $0x118] sm:$0xff]
      %v6938 = vld [vmem:[%s5678 + $0x120] sm:$0xff]
      %v6939 = vld [vmem:[%s5678 + $0x128] sm:$0xff]
      %v6940 = vld [vmem:[%s5678 + $0x130] sm:$0xff]
      %v6941 = vld [vmem:[%s5678 + $0x138] sm:$0xff]
      %v6942 = vld [vmem:[%s5678 + $0x140] sm:$0xff]
      %v6943 = vld [vmem:[%s5678 + $0x148] sm:$0xff]
      %v6944 = vld [vmem:[%s5678 + $0x150] sm:$0xff]
      %v6945 = vld [vmem:[%s5678 + $0x158] sm:$0xff]
      %v6946 = vld [vmem:[%s5678 + $0x160] sm:$0xff]
      %v6947 = vld [vmem:[%s5678 + $0x168] sm:$0xff]
      %v6948 = vld [vmem:[%s5678 + $0x170] sm:$0xff]
      %v6949 = vld [vmem:[%s5678 + $0x178] sm:$0xff]
      %6950 = vmatprep.subr.mxu0 0.0
      %6951 = vmatpush1.msra.mxu0 %v6917
      %6952 = vmatprep.subr.mxu0 0.0
      %6953 = vmatpush1.msra.mxu0 %v6916
      %6954 = vmatprep.subr.mxu0 0.0
      %6955 = vmatpush1.msra.mxu0 %v6915
      %6956 = vmatprep.subr.mxu0 0.0
      %6957 = vmatpush1.msra.mxu0 %v6914
      %6958 = vmatprep.subr.mxu0 0.0
      %6959 = vmatpush1.msra.mxu0 %v6913
      %6960 = vmatprep.subr.mxu0 0.0
      %6961 = vmatpush1.msra.mxu0 %v6912
      %6962 = vmatprep.subr.mxu0 0.0
      %6963 = vmatpush1.msra.mxu0 %v6911
      %6964 = vmatprep.subr.mxu0 0.0
      %6965 = vmatpush1.msra.mxu0 %v6910
      %6966 = vmatprep.subr.mxu0 0.0
      %6967 = vmatpush1.msra.mxu0 %v6909
      %6968 = vmatprep.subr.mxu0 0.0
      %6969 = vmatpush1.msra.mxu0 %v6908
      %6970 = vmatprep.subr.mxu0 0.0
      %6971 = vmatpush1.msra.mxu0 %v6907
      %6972 = vmatprep.subr.mxu0 0.0
      %6973 = vmatpush1.msra.mxu0 %v6906
      %6974 = vmatprep.subr.mxu0 0.0
      %6975 = vmatpush1.msra.mxu0 %v6905
      %6976 = vmatprep.subr.mxu0 0.0
      %6977 = vmatpush1.msra.mxu0 %v6904
      %6978 = vmatprep.subr.mxu0 0.0
      %6979 = vmatpush1.msra.mxu0 %v6903
      %6980 = vmatprep.subr.mxu0 0.0
      %6981 = vmatpush1.msra.mxu0 %v6902
      %6982 = vmatprep.subr.mxu0 0.0
      %6983 = vmatpush2.msra.mxu0 %v6933
      %6984 = vmatprep.subr.mxu0 0.0
      %6985 = vmatpush2.msra.mxu0 %v6932
      %6986 = vmatprep.subr.mxu0 0.0
      %6987 = vmatpush2.msra.mxu0 %v6931
      %6988 = vmatprep.subr.mxu0 0.0
      %6989 = vmatpush2.msra.mxu0 %v6930
      %6990 = vmatprep.subr.mxu0 0.0
      %6991 = vmatpush2.msra.mxu0 %v6929
      %6992 = vmatprep.subr.mxu0 0.0
      %6993 = vmatpush2.msra.mxu0 %v6928
      %6994 = vmatprep.subr.mxu0 0.0
      %6995 = vmatpush2.msra.mxu0 %v6927
      %6996 = vmatprep.subr.mxu0 0.0
      %6997 = vmatpush2.msra.mxu0 %v6926
      %6998 = vmatprep.subr.mxu0 0.0
      %6999 = vmatpush2.msra.mxu0 %v6925
      %7000 = vmatprep.subr.mxu0 0.0
      %7001 = vmatpush2.msra.mxu0 %v6924
      %7002 = vmatprep.subr.mxu0 0.0
      %7003 = vmatpush2.msra.mxu0 %v6923
      %7004 = vmatprep.subr.mxu0 0.0
      %7005 = vmatpush2.msra.mxu0 %v6922
      %7006 = vmatprep.subr.mxu0 0.0
      %7007 = vmatpush2.msra.mxu0 %v6921
      %7008 = vmatprep.subr.mxu0 0.0
      %7009 = vmatpush2.msra.mxu0 %v6920
      %7010 = vmatprep.subr.mxu0 0.0
      %7011 = vmatpush2.msra.mxu0 %v6919
      %7012 = vmatprep.subr.mxu0 0.0
      %7013 = vmatpush2.msra.mxu0 %v6918
      %7014 = vmatprep.mubr.f32.mxu0 %v6807
      %7015 = vmatmul.mubr.f32.gmra.mxu0 %v6806
      %v7016 = vpop.f32.mrf.mxu0
      %v7017 = vadd.f32 0.0, %v7016
      %v7018 = vpop.f32.mrf.mxu0
      %7019 = vmatprep.mubr.f32.mxu0 %v6810
      %7020 = vmatmul.mubr.f32.gmra.mxu0 %v6809
      %v7021 = vpop.f32.mrf.mxu0
      %v7022 = vadd.f32 0.0, %v7021
      %v7023 = vpop.f32.mrf.mxu0
      %7024 = vmatprep.mubr.f32.mxu0 %v6813
      %7025 = vmatmul.mubr.f32.gmra.mxu0 %v6812
      %v7026 = vpop.f32.mrf.mxu0
      %v7027 = vadd.f32 0.0, %v7026
      %v7028 = vpop.f32.mrf.mxu0
      %7029 = vmatprep.mubr.f32.mxu0 %v6816
      %7030 = vmatmul.mubr.f32.gmra.mxu0 %v6815
      %v7031 = vpop.f32.mrf.mxu0
      %v7032 = vadd.f32 0.0, %v7031
      %v7033 = vpop.f32.mrf.mxu0
      %7034 = vmatprep.mubr.f32.mxu0 %v6819
      %7035 = vmatmul.mubr.f32.gmra.mxu0 %v6818
      %v7036 = vpop.f32.mrf.mxu0
      %v7037 = vadd.f32 0.0, %v7036
      %v7038 = vpop.f32.mrf.mxu0
      %7039 = vmatprep.mubr.f32.mxu0 %v6822
      %7040 = vmatmul.mubr.f32.gmra.mxu0 %v6821
      %v7041 = vpop.f32.mrf.mxu0
      %v7042 = vadd.f32 0.0, %v7041
      %v7043 = vpop.f32.mrf.mxu0
      %7044 = vmatprep.mubr.f32.mxu0 %v6825
      %7045 = vmatmul.mubr.f32.gmra.mxu0 %v6824
      %v7046 = vpop.f32.mrf.mxu0
      %v7047 = vadd.f32 0.0, %v7046
      %v7048 = vpop.f32.mrf.mxu0
      %7049 = vmatprep.mubr.f32.mxu0 %v6828
      %7050 = vmatmul.mubr.f32.gmra.mxu0 %v6827
      %v7051 = vpop.f32.mrf.mxu0
      %v7052 = vadd.f32 0.0, %v7051
      %v7053 = vpop.f32.mrf.mxu0
      %7054 = vmatprep.mubr.f32.mxu0 %v6831
      %7055 = vmatmul.mubr.f32.gmra.mxu0 %v6830
      %v7056 = vpop.f32.mrf.mxu0
      %v7057 = vadd.f32 0.0, %v7056
      %v7058 = vpop.f32.mrf.mxu0
      %7059 = vmatprep.mubr.f32.mxu0 %v6834
      %7060 = vmatmul.mubr.f32.gmra.mxu0 %v6833
      %v7061 = vpop.f32.mrf.mxu0
      %v7062 = vadd.f32 0.0, %v7061
      %v7063 = vpop.f32.mrf.mxu0
      %7064 = vmatprep.mubr.f32.mxu0 %v6837
      %7065 = vmatmul.mubr.f32.gmra.mxu0 %v6836
      %v7066 = vpop.f32.mrf.mxu0
      %v7067 = vadd.f32 0.0, %v7066
      %v7068 = vpop.f32.mrf.mxu0
      %7069 = vmatprep.mubr.f32.mxu0 %v6840
      %7070 = vmatmul.mubr.f32.gmra.mxu0 %v6839
      %v7071 = vpop.f32.mrf.mxu0
      %v7072 = vadd.f32 0.0, %v7071
      %v7073 = vpop.f32.mrf.mxu0
      %7074 = vmatprep.mubr.f32.mxu0 %v6843
      %7075 = vmatmul.mubr.f32.gmra.mxu0 %v6842
      %v7076 = vpop.f32.mrf.mxu0
      %v7077 = vadd.f32 0.0, %v7076
      %v7078 = vpop.f32.mrf.mxu0
      %7079 = vmatprep.mubr.f32.mxu0 %v6894
      %7080 = vmatmul.mubr.f32.gmra.mxu0 %v6893
      %v7081 = vpop.f32.mrf.mxu0
      %v7082 = vadd.f32 0.0, %v7081
      %v7083 = vpop.f32.mrf.mxu0
      %7084 = vmatprep.mubr.f32.mxu0 %v6897
      %7085 = vmatmul.mubr.f32.gmra.mxu0 %v6896
      %v7086 = vpop.f32.mrf.mxu0
      %v7087 = vadd.f32 0.0, %v7086
      %v7088 = vpop.f32.mrf.mxu0
      %7089 = vmatprep.mubr.f32.mxu0 %v6900
      %7090 = vmatmul.mubr.f32.gmra.mxu0 %v6899
      %v7091 = vpop.f32.mrf.mxu0
      %v7092 = vadd.f32 0.0, %v7091
      %v7093 = vpop.f32.mrf.mxu0
      %7094 = vdwg.mxu0
      %7095 = vmatprep.subr.mxu0 0.0
      %7096 = vmatpush1.msra.mxu0 %v6949
      %7097 = vmatprep.subr.mxu0 0.0
      %7098 = vmatpush1.msra.mxu0 %v6948
      %7099 = vmatprep.subr.mxu0 0.0
      %7100 = vmatpush1.msra.mxu0 %v6947
      %7101 = vmatprep.subr.mxu0 0.0
      %7102 = vmatpush1.msra.mxu0 %v6946
      %7103 = vmatprep.subr.mxu0 0.0
      %7104 = vmatpush1.msra.mxu0 %v6945
      %7105 = vmatprep.subr.mxu0 0.0
      %7106 = vmatpush1.msra.mxu0 %v6944
      %7107 = vmatprep.subr.mxu0 0.0
      %7108 = vmatpush1.msra.mxu0 %v6943
      %7109 = vmatprep.subr.mxu0 0.0
      %7110 = vmatpush1.msra.mxu0 %v6942
      %7111 = vmatprep.subr.mxu0 0.0
      %7112 = vmatpush1.msra.mxu0 %v6941
      %7113 = vmatprep.subr.mxu0 0.0
      %7114 = vmatpush1.msra.mxu0 %v6940
      %7115 = vmatprep.subr.mxu0 0.0
      %7116 = vmatpush1.msra.mxu0 %v6939
      %7117 = vmatprep.subr.mxu0 0.0
      %7118 = vmatpush1.msra.mxu0 %v6938
      %7119 = vmatprep.subr.mxu0 0.0
      %7120 = vmatpush1.msra.mxu0 %v6937
      %7121 = vmatprep.subr.mxu0 0.0
      %7122 = vmatpush1.msra.mxu0 %v6936
      %7123 = vmatprep.subr.mxu0 0.0
      %7124 = vmatpush1.msra.mxu0 %v6935
      %7125 = vmatprep.subr.mxu0 0.0
      %7126 = vmatpush1.msra.mxu0 %v6934
      %7127 = vmatprep.subr.mxu0 0.0
      %7128 = vmatpush2.msra.mxu0 0.0
      %7129 = vmatprep.subr.mxu0 0.0
      %7130 = vmatpush2.msra.mxu0 0.0
      %7131 = vmatprep.subr.mxu0 0.0
      %7132 = vmatpush2.msra.mxu0 0.0
      %7133 = vmatprep.subr.mxu0 0.0
      %7134 = vmatpush2.msra.mxu0 0.0
      %7135 = vmatprep.subr.mxu0 0.0
      %7136 = vmatpush2.msra.mxu0 0.0
      %7137 = vmatprep.subr.mxu0 0.0
      %7138 = vmatpush2.msra.mxu0 0.0
      %7139 = vmatprep.subr.mxu0 0.0
      %7140 = vmatpush2.msra.mxu0 0.0
      %7141 = vmatprep.subr.mxu0 0.0
      %7142 = vmatpush2.msra.mxu0 0.0
      %7143 = vmatprep.subr.mxu0 0.0
      %7144 = vmatpush2.msra.mxu0 0.0
      %7145 = vmatprep.subr.mxu0 0.0
      %7146 = vmatpush2.msra.mxu0 0.0
      %7147 = vmatprep.subr.mxu0 0.0
      %7148 = vmatpush2.msra.mxu0 0.0
      %7149 = vmatprep.subr.mxu0 0.0
      %7150 = vmatpush2.msra.mxu0 0.0
      %7151 = vmatprep.subr.mxu0 0.0
      %7152 = vmatpush2.msra.mxu0 0.0
      %7153 = vmatprep.subr.mxu0 0.0
      %7154 = vmatpush2.msra.mxu0 0.0
      %7155 = vmatprep.subr.mxu0 0.0
      %7156 = vmatpush2.msra.mxu0 0.0
      %7157 = vmatprep.subr.mxu0 0.0
      %7158 = vmatpush2.msra.mxu0 0.0
      %7159 = vmatprep.mubr.f32.mxu0 0.0
      %7160 = vmatmul.mubr.f32.gmra.mxu0 %v6808
      %v7161 = vpop.f32.mrf.mxu0
      %v7162 = vadd.f32 %v7017, %v7161
      %v7163 = vpop.f32.mrf.mxu0
      %7164 = vmatprep.mubr.f32.mxu0 0.0
      %7165 = vmatmul.mubr.f32.gmra.mxu0 %v6811
      %v7166 = vpop.f32.mrf.mxu0
      %v7167 = vadd.f32 %v7022, %v7166
      %v7168 = vpop.f32.mrf.mxu0
      %7169 = vmatprep.mubr.f32.mxu0 0.0
      %7170 = vmatmul.mubr.f32.gmra.mxu0 %v6814
      %v7171 = vpop.f32.mrf.mxu0
      %v7172 = vadd.f32 %v7027, %v7171
      %v7173 = vpop.f32.mrf.mxu0
      %7174 = vmatprep.mubr.f32.mxu0 0.0
      %7175 = vmatmul.mubr.f32.gmra.mxu0 %v6817
      %v7176 = vpop.f32.mrf.mxu0
      %v7177 = vadd.f32 %v7032, %v7176
      %v7178 = vpop.f32.mrf.mxu0
      %7179 = vmatprep.mubr.f32.mxu0 0.0
      %7180 = vmatmul.mubr.f32.gmra.mxu0 %v6820
      %v7181 = vpop.f32.mrf.mxu0
      %v7182 = vadd.f32 %v7037, %v7181
      %v7183 = vpop.f32.mrf.mxu0
      %7184 = vmatprep.mubr.f32.mxu0 0.0
      %7185 = vmatmul.mubr.f32.gmra.mxu0 %v6823
      %v7186 = vpop.f32.mrf.mxu0
      %v7187 = vadd.f32 %v7042, %v7186
      %v7188 = vpop.f32.mrf.mxu0
      %7189 = vmatprep.mubr.f32.mxu0 0.0
      %7190 = vmatmul.mubr.f32.gmra.mxu0 %v6826
      %v7191 = vpop.f32.mrf.mxu0
      %v7192 = vadd.f32 %v7047, %v7191
      %v7193 = vpop.f32.mrf.mxu0
      %7194 = vmatprep.mubr.f32.mxu0 0.0
      %7195 = vmatmul.mubr.f32.gmra.mxu0 %v6829
      %v7196 = vpop.f32.mrf.mxu0
      %v7197 = vadd.f32 %v7052, %v7196
      %v7198 = vpop.f32.mrf.mxu0
      %7199 = vmatprep.mubr.f32.mxu0 0.0
      %7200 = vmatmul.mubr.f32.gmra.mxu0 %v6832
      %v7201 = vpop.f32.mrf.mxu0
      %v7202 = vadd.f32 %v7057, %v7201
      %v7203 = vpop.f32.mrf.mxu0
      %7204 = vmatprep.mubr.f32.mxu0 0.0
      %7205 = vmatmul.mubr.f32.gmra.mxu0 %v6835
      %v7206 = vpop.f32.mrf.mxu0
      %v7207 = vadd.f32 %v7062, %v7206
      %v7208 = vpop.f32.mrf.mxu0
      %7209 = vmatprep.mubr.f32.mxu0 0.0
      %7210 = vmatmul.mubr.f32.gmra.mxu0 %v6838
      %v7211 = vpop.f32.mrf.mxu0
      %v7212 = vadd.f32 %v7067, %v7211
      %v7213 = vpop.f32.mrf.mxu0
      %7214 = vmatprep.mubr.f32.mxu0 0.0
      %7215 = vmatmul.mubr.f32.gmra.mxu0 %v6841
      %v7216 = vpop.f32.mrf.mxu0
      %v7217 = vadd.f32 %v7072, %v7216
      %v7218 = vpop.f32.mrf.mxu0
      %7219 = vmatprep.mubr.f32.mxu0 0.0
      %7220 = vmatmul.mubr.f32.gmra.mxu0 %v6844
      %v7221 = vpop.f32.mrf.mxu0
      %v7222 = vadd.f32 %v7077, %v7221
      %v7223 = vpop.f32.mrf.mxu0
      %7224 = vmatprep.mubr.f32.mxu0 0.0
      %7225 = vmatmul.mubr.f32.gmra.mxu0 %v6895
      %v7226 = vpop.f32.mrf.mxu0
      %v7227 = vadd.f32 %v7082, %v7226
      %v7228 = vpop.f32.mrf.mxu0
      %7229 = vmatprep.mubr.f32.mxu0 0.0
      %7230 = vmatmul.mubr.f32.gmra.mxu0 %v6898
      %v7231 = vpop.f32.mrf.mxu0
      %v7232 = vadd.f32 %v7087, %v7231
      %v7233 = vpop.f32.mrf.mxu0
      %7234 = vmatprep.mubr.f32.mxu0 0.0
      %7235 = vmatmul.mubr.f32.gmra.mxu0 %v6901
      %v7236 = vpop.f32.mrf.mxu0
      %v7237 = vadd.f32 %v7092, %v7236
      %v7238 = vpop.f32.mrf.mxu0
      %7239 = vdwg.mxu0
      %7240 = vmatprep.subr.mxu0 0.0
      %7241 = vmatpush1.msra.mxu0 %v6860
      %7242 = vmatprep.subr.mxu0 0.0
      %7243 = vmatpush1.msra.mxu0 %v6859
      %7244 = vmatprep.subr.mxu0 0.0
      %7245 = vmatpush1.msra.mxu0 %v6858
      %7246 = vmatprep.subr.mxu0 0.0
      %7247 = vmatpush1.msra.mxu0 %v6857
      %7248 = vmatprep.subr.mxu0 0.0
      %7249 = vmatpush1.msra.mxu0 %v6856
      %7250 = vmatprep.subr.mxu0 0.0
      %7251 = vmatpush1.msra.mxu0 %v6855
      %7252 = vmatprep.subr.mxu0 0.0
      %7253 = vmatpush1.msra.mxu0 %v6854
      %7254 = vmatprep.subr.mxu0 0.0
      %7255 = vmatpush1.msra.mxu0 %v6853
      %7256 = vmatprep.subr.mxu0 0.0
      %7257 = vmatpush1.msra.mxu0 %v6852
      %7258 = vmatprep.subr.mxu0 0.0
      %7259 = vmatpush1.msra.mxu0 %v6851
      %7260 = vmatprep.subr.mxu0 0.0
      %7261 = vmatpush1.msra.mxu0 %v6850
      %7262 = vmatprep.subr.mxu0 0.0
      %7263 = vmatpush1.msra.mxu0 %v6849
      %7264 = vmatprep.subr.mxu0 0.0
      %7265 = vmatpush1.msra.mxu0 %v6848
      %7266 = vmatprep.subr.mxu0 0.0
      %7267 = vmatpush1.msra.mxu0 %v6847
      %7268 = vmatprep.subr.mxu0 0.0
      %7269 = vmatpush1.msra.mxu0 %v6846
      %7270 = vmatprep.subr.mxu0 0.0
      %7271 = vmatpush1.msra.mxu0 %v6845
      %7272 = vmatprep.subr.mxu0 0.0
      %7273 = vmatpush2.msra.mxu0 %v6876
      %7274 = vmatprep.subr.mxu0 0.0
      %7275 = vmatpush2.msra.mxu0 %v6875
      %7276 = vmatprep.subr.mxu0 0.0
      %7277 = vmatpush2.msra.mxu0 %v6874
      %7278 = vmatprep.subr.mxu0 0.0
      %7279 = vmatpush2.msra.mxu0 %v6873
      %7280 = vmatprep.subr.mxu0 0.0
      %7281 = vmatpush2.msra.mxu0 %v6872
      %7282 = vmatprep.subr.mxu0 0.0
      %7283 = vmatpush2.msra.mxu0 %v6871
      %7284 = vmatprep.subr.mxu0 0.0
      %7285 = vmatpush2.msra.mxu0 %v6870
      %7286 = vmatprep.subr.mxu0 0.0
      %7287 = vmatpush2.msra.mxu0 %v6869
      %7288 = vmatprep.subr.mxu0 0.0
      %7289 = vmatpush2.msra.mxu0 %v6868
      %7290 = vmatprep.subr.mxu0 0.0
      %7291 = vmatpush2.msra.mxu0 %v6867
      %7292 = vmatprep.subr.mxu0 0.0
      %7293 = vmatpush2.msra.mxu0 %v6866
      %7294 = vmatprep.subr.mxu0 0.0
      %7295 = vmatpush2.msra.mxu0 %v6865
      %7296 = vmatprep.subr.mxu0 0.0
      %7297 = vmatpush2.msra.mxu0 %v6864
      %7298 = vmatprep.subr.mxu0 0.0
      %7299 = vmatpush2.msra.mxu0 %v6863
      %7300 = vmatprep.subr.mxu0 0.0
      %7301 = vmatpush2.msra.mxu0 %v6862
      %7302 = vmatprep.subr.mxu0 0.0
      %7303 = vmatpush2.msra.mxu0 %v6861
      %7304 = vmatprep.mubr.f32.mxu0 %v6798
      %7305 = vmatmul.mubr.f32.gmra.mxu0 %v6797
      %v7306 = vpop.f32.mrf.mxu0
      %v7307 = vadd.f32 %v7162, %v7306
      %v7308 = vpop.f32.mrf.mxu0
      %7309 = vmatprep.mubr.f32.mxu0 %v6801
      %7310 = vmatmul.mubr.f32.gmra.mxu0 %v6800
      %v7311 = vpop.f32.mrf.mxu0
      %v7312 = vadd.f32 %v7167, %v7311
      %v7313 = vpop.f32.mrf.mxu0
      %7314 = vmatprep.mubr.f32.mxu0 %v6804
      %7315 = vmatmul.mubr.f32.gmra.mxu0 %v6803
      %v7316 = vpop.f32.mrf.mxu0
      %v7317 = vadd.f32 %v7172, %v7316
      %v7318 = vpop.f32.mrf.mxu0
      %7319 = vmatprep.mubr.f32.mxu0 %v6807
      %7320 = vmatmul.mubr.f32.gmra.mxu0 %v6806
      %v7321 = vpop.f32.mrf.mxu0
      %v7322 = vadd.f32 %v7177, %v7321
      %v7323 = vpop.f32.mrf.mxu0
      %7324 = vmatprep.mubr.f32.mxu0 %v6810
      %7325 = vmatmul.mubr.f32.gmra.mxu0 %v6809
      %v7326 = vpop.f32.mrf.mxu0
      %v7327 = vadd.f32 %v7182, %v7326
      %v7328 = vpop.f32.mrf.mxu0
      %7329 = vmatprep.mubr.f32.mxu0 %v6813
      %7330 = vmatmul.mubr.f32.gmra.mxu0 %v6812
      %v7331 = vpop.f32.mrf.mxu0
      %v7332 = vadd.f32 %v7187, %v7331
      %v7333 = vpop.f32.mrf.mxu0
      %7334 = vmatprep.mubr.f32.mxu0 %v6816
      %7335 = vmatmul.mubr.f32.gmra.mxu0 %v6815
      %v7336 = vpop.f32.mrf.mxu0
      %v7337 = vadd.f32 %v7192, %v7336
      %v7338 = vpop.f32.mrf.mxu0
      %7339 = vmatprep.mubr.f32.mxu0 %v6819
      %7340 = vmatmul.mubr.f32.gmra.mxu0 %v6818
      %v7341 = vpop.f32.mrf.mxu0
      %v7342 = vadd.f32 %v7197, %v7341
      %v7343 = vpop.f32.mrf.mxu0
      %7344 = vmatprep.mubr.f32.mxu0 %v6822
      %7345 = vmatmul.mubr.f32.gmra.mxu0 %v6821
      %v7346 = vpop.f32.mrf.mxu0
      %v7347 = vadd.f32 %v7202, %v7346
      %v7348 = vpop.f32.mrf.mxu0
      %7349 = vmatprep.mubr.f32.mxu0 %v6825
      %7350 = vmatmul.mubr.f32.gmra.mxu0 %v6824
      %v7351 = vpop.f32.mrf.mxu0
      %v7352 = vadd.f32 %v7207, %v7351
      %v7353 = vpop.f32.mrf.mxu0
      %7354 = vmatprep.mubr.f32.mxu0 %v6828
      %7355 = vmatmul.mubr.f32.gmra.mxu0 %v6827
      %v7356 = vpop.f32.mrf.mxu0
      %v7357 = vadd.f32 %v7212, %v7356
      %v7358 = vpop.f32.mrf.mxu0
      %7359 = vmatprep.mubr.f32.mxu0 %v6831
      %7360 = vmatmul.mubr.f32.gmra.mxu0 %v6830
      %v7361 = vpop.f32.mrf.mxu0
      %v7362 = vadd.f32 %v7217, %v7361
      %v7363 = vpop.f32.mrf.mxu0
      %7364 = vmatprep.mubr.f32.mxu0 %v6834
      %7365 = vmatmul.mubr.f32.gmra.mxu0 %v6833
      %v7366 = vpop.f32.mrf.mxu0
      %v7367 = vadd.f32 %v7222, %v7366
      %v7368 = vpop.f32.mrf.mxu0
      %7369 = vmatprep.mubr.f32.mxu0 %v6837
      %7370 = vmatmul.mubr.f32.gmra.mxu0 %v6836
      %v7371 = vpop.f32.mrf.mxu0
      %v7372 = vadd.f32 %v7227, %v7371
      %v7373 = vpop.f32.mrf.mxu0
      %7374 = vmatprep.mubr.f32.mxu0 %v6840
      %7375 = vmatmul.mubr.f32.gmra.mxu0 %v6839
      %v7376 = vpop.f32.mrf.mxu0
      %v7377 = vadd.f32 %v7232, %v7376
      %v7378 = vpop.f32.mrf.mxu0
      %7379 = vmatprep.mubr.f32.mxu0 %v6843
      %7380 = vmatmul.mubr.f32.gmra.mxu0 %v6842
      %v7381 = vpop.f32.mrf.mxu0
      %v7382 = vadd.f32 %v7237, %v7381
      %v7383 = vpop.f32.mrf.mxu0
      %7384 = vdwg.mxu0
      %7385 = vmatprep.subr.mxu0 0.0
      %7386 = vmatpush1.msra.mxu0 %v6892
      %7387 = vmatprep.subr.mxu0 0.0
      %7388 = vmatpush1.msra.mxu0 %v6891
      %7389 = vmatprep.subr.mxu0 0.0
      %7390 = vmatpush1.msra.mxu0 %v6890
      %7391 = vmatprep.subr.mxu0 0.0
      %7392 = vmatpush1.msra.mxu0 %v6889
      %7393 = vmatprep.subr.mxu0 0.0
      %7394 = vmatpush1.msra.mxu0 %v6888
      %7395 = vmatprep.subr.mxu0 0.0
      %7396 = vmatpush1.msra.mxu0 %v6887
      %7397 = vmatprep.subr.mxu0 0.0
      %7398 = vmatpush1.msra.mxu0 %v6886
      %7399 = vmatprep.subr.mxu0 0.0
      %7400 = vmatpush1.msra.mxu0 %v6885
      %7401 = vmatprep.subr.mxu0 0.0
      %7402 = vmatpush1.msra.mxu0 %v6884
      %7403 = vmatprep.subr.mxu0 0.0
      %7404 = vmatpush1.msra.mxu0 %v6883
      %7405 = vmatprep.subr.mxu0 0.0
      %7406 = vmatpush1.msra.mxu0 %v6882
      %7407 = vmatprep.subr.mxu0 0.0
      %7408 = vmatpush1.msra.mxu0 %v6881
      %7409 = vmatprep.subr.mxu0 0.0
      %7410 = vmatpush1.msra.mxu0 %v6880
      %7411 = vmatprep.subr.mxu0 0.0
      %7412 = vmatpush1.msra.mxu0 %v6879
      %7413 = vmatprep.subr.mxu0 0.0
      %7414 = vmatpush1.msra.mxu0 %v6878
      %7415 = vmatprep.subr.mxu0 0.0
      %7416 = vmatpush1.msra.mxu0 %v6877
      %7417 = vmatprep.subr.mxu0 0.0
      %7418 = vmatpush2.msra.mxu0 0.0
      %7419 = vmatprep.subr.mxu0 0.0
      %7420 = vmatpush2.msra.mxu0 0.0
      %7421 = vmatprep.subr.mxu0 0.0
      %7422 = vmatpush2.msra.mxu0 0.0
      %7423 = vmatprep.subr.mxu0 0.0
      %7424 = vmatpush2.msra.mxu0 0.0
      %7425 = vmatprep.subr.mxu0 0.0
      %7426 = vmatpush2.msra.mxu0 0.0
      %7427 = vmatprep.subr.mxu0 0.0
      %7428 = vmatpush2.msra.mxu0 0.0
      %7429 = vmatprep.subr.mxu0 0.0
      %7430 = vmatpush2.msra.mxu0 0.0
      %7431 = vmatprep.subr.mxu0 0.0
      %7432 = vmatpush2.msra.mxu0 0.0
      %7433 = vmatprep.subr.mxu0 0.0
      %7434 = vmatpush2.msra.mxu0 0.0
      %7435 = vmatprep.subr.mxu0 0.0
      %7436 = vmatpush2.msra.mxu0 0.0
      %7437 = vmatprep.subr.mxu0 0.0
      %7438 = vmatpush2.msra.mxu0 0.0
      %7439 = vmatprep.subr.mxu0 0.0
      %7440 = vmatpush2.msra.mxu0 0.0
      %7441 = vmatprep.subr.mxu0 0.0
      %7442 = vmatpush2.msra.mxu0 0.0
      %7443 = vmatprep.subr.mxu0 0.0
      %7444 = vmatpush2.msra.mxu0 0.0
      %7445 = vmatprep.subr.mxu0 0.0
      %7446 = vmatpush2.msra.mxu0 0.0
      %7447 = vmatprep.subr.mxu0 0.0
      %7448 = vmatpush2.msra.mxu0 0.0
      %7449 = vmatprep.mubr.f32.mxu0 0.0
      %7450 = vmatmul.mubr.f32.gmra.mxu0 %v6799
      %v7451 = vpop.f32.mrf.mxu0
      %v7452 = vadd.f32 %v7307, %v7451
      %v7453 = vpop.f32.mrf.mxu0
      %7454 = vmatprep.mubr.f32.mxu0 0.0
      %7455 = vmatmul.mubr.f32.gmra.mxu0 %v6802
      %v7456 = vpop.f32.mrf.mxu0
      %v7457 = vadd.f32 %v7312, %v7456
      %v7458 = vpop.f32.mrf.mxu0
      %7459 = vmatprep.mubr.f32.mxu0 0.0
      %7460 = vmatmul.mubr.f32.gmra.mxu0 %v6805
      %v7461 = vpop.f32.mrf.mxu0
      %v7462 = vadd.f32 %v7317, %v7461
      %v7463 = vpop.f32.mrf.mxu0
      %7464 = vmatprep.mubr.f32.mxu0 0.0
      %7465 = vmatmul.mubr.f32.gmra.mxu0 %v6808
      %v7466 = vpop.f32.mrf.mxu0
      %v7467 = vadd.f32 %v7322, %v7466
      %v7468 = vpop.f32.mrf.mxu0
      %7469 = vmatprep.mubr.f32.mxu0 0.0
      %7470 = vmatmul.mubr.f32.gmra.mxu0 %v6811
      %v7471 = vpop.f32.mrf.mxu0
      %v7472 = vadd.f32 %v7327, %v7471
      %v7473 = vpop.f32.mrf.mxu0
      %7474 = vmatprep.mubr.f32.mxu0 0.0
      %7475 = vmatmul.mubr.f32.gmra.mxu0 %v6814
      %v7476 = vpop.f32.mrf.mxu0
      %v7477 = vadd.f32 %v7332, %v7476
      %v7478 = vpop.f32.mrf.mxu0
      %7479 = vmatprep.mubr.f32.mxu0 0.0
      %7480 = vmatmul.mubr.f32.gmra.mxu0 %v6817
      %v7481 = vpop.f32.mrf.mxu0
      %v7482 = vadd.f32 %v7337, %v7481
      %v7483 = vpop.f32.mrf.mxu0
      %7484 = vmatprep.mubr.f32.mxu0 0.0
      %7485 = vmatmul.mubr.f32.gmra.mxu0 %v6820
      %v7486 = vpop.f32.mrf.mxu0
      %v7487 = vadd.f32 %v7342, %v7486
      %v7488 = vpop.f32.mrf.mxu0
      %7489 = vmatprep.mubr.f32.mxu0 0.0
      %7490 = vmatmul.mubr.f32.gmra.mxu0 %v6823
      %v7491 = vpop.f32.mrf.mxu0
      %v7492 = vadd.f32 %v7347, %v7491
      %v7493 = vpop.f32.mrf.mxu0
      %7494 = vmatprep.mubr.f32.mxu0 0.0
      %7495 = vmatmul.mubr.f32.gmra.mxu0 %v6826
      %v7496 = vpop.f32.mrf.mxu0
      %v7497 = vadd.f32 %v7352, %v7496
      %v7498 = vpop.f32.mrf.mxu0
      %7499 = vmatprep.mubr.f32.mxu0 0.0
      %7500 = vmatmul.mubr.f32.gmra.mxu0 %v6829
      %v7501 = vpop.f32.mrf.mxu0
      %v7502 = vadd.f32 %v7357, %v7501
      %v7503 = vpop.f32.mrf.mxu0
      %7504 = vmatprep.mubr.f32.mxu0 0.0
      %7505 = vmatmul.mubr.f32.gmra.mxu0 %v6832
      %v7506 = vpop.f32.mrf.mxu0
      %v7507 = vadd.f32 %v7362, %v7506
      %v7508 = vpop.f32.mrf.mxu0
      %7509 = vmatprep.mubr.f32.mxu0 0.0
      %7510 = vmatmul.mubr.f32.gmra.mxu0 %v6835
      %v7511 = vpop.f32.mrf.mxu0
      %v7512 = vadd.f32 %v7367, %v7511
      %v7513 = vpop.f32.mrf.mxu0
      %7514 = vmatprep.mubr.f32.mxu0 0.0
      %7515 = vmatmul.mubr.f32.gmra.mxu0 %v6838
      %v7516 = vpop.f32.mrf.mxu0
      %v7517 = vadd.f32 %v7372, %v7516
      %v7518 = vpop.f32.mrf.mxu0
      %7519 = vmatprep.mubr.f32.mxu0 0.0
      %7520 = vmatmul.mubr.f32.gmra.mxu0 %v6841
      %v7521 = vpop.f32.mrf.mxu0
      %v7522 = vadd.f32 %v7377, %v7521
      %v7523 = vpop.f32.mrf.mxu0
      %7524 = vmatprep.mubr.f32.mxu0 0.0
      %7525 = vmatmul.mubr.f32.gmra.mxu0 %v6844
      %v7526 = vpop.f32.mrf.mxu0
      %v7527 = vadd.f32 %v7382, %v7526
      %v7528 = vpop.f32.mrf.mxu0
      %7529 = vdwg.mxu0
      %v7530 = vld [vmem:[#allocation2 + $0x210] sm:$0xff]
      %v7531 = vld [vmem:[#allocation2 + $0x218] sm:$0xff]
      %v7532 = vld [vmem:[#allocation2 + $0x220] sm:$0xff]
      %v7533 = vld [vmem:[#allocation2 + $0x228] sm:$0xff]
      %v7534 = vld [vmem:[#allocation2 + $0x230] sm:$0xff]
      %v7535 = vld [vmem:[#allocation2 + $0x238] sm:$0xff]
      %v7536 = vld [vmem:[#allocation2 + $0x240] sm:$0xff]
      %v7537 = vld [vmem:[#allocation2 + $0x248] sm:$0xff]
      %v7538 = vld [vmem:[#allocation2 + $0x250] sm:$0xff]
      %v7539 = vld [vmem:[#allocation2 + $0x258] sm:$0xff]
      %v7540 = vld [vmem:[#allocation2 + $0x260] sm:$0xff]
      %v7541 = vld [vmem:[#allocation2 + $0x268] sm:$0xff]
      %v7542 = vld [vmem:[#allocation2 + $0x270] sm:$0xff]
      %v7543 = vld [vmem:[#allocation2 + $0x278] sm:$0xff]
      %v7544 = vld [vmem:[#allocation2 + $0x280] sm:$0xff]
      %v7545 = vld [vmem:[#allocation2 + $0x288] sm:$0xff]
      %v7546 = vld [vmem:[#allocation2 + $0x290] sm:$0xff]
      %v7547 = vld [vmem:[#allocation2 + $0x298] sm:$0xff]
      %v7548 = vld [vmem:[#allocation2 + $0x2a0] sm:$0xff]
      %v7549 = vld [vmem:[#allocation2 + $0x2a8] sm:$0xff]
      %v7550 = vld [vmem:[#allocation2 + $0x2b0] sm:$0xff]
      %v7551 = vld [vmem:[#allocation2 + $0x2b8] sm:$0xff]
      %v7552 = vld [vmem:[#allocation2 + $0x2c0] sm:$0xff]
      %v7553 = vld [vmem:[#allocation2 + $0x2c8] sm:$0xff]
      %v7554 = vld [vmem:[#allocation2 + $0x2d0] sm:$0xff]
      %v7555 = vld [vmem:[#allocation2 + $0x2d8] sm:$0xff]
      %v7556 = vld [vmem:[#allocation2 + $0x2e0] sm:$0xff]
      %v7557 = vld [vmem:[#allocation2 + $0x2e8] sm:$0xff]
      %v7558 = vld [vmem:[#allocation2 + $0x2f0] sm:$0xff]
      %v7559 = vld [vmem:[#allocation2 + $0x2f8] sm:$0xff]
      %v7560 = vld [vmem:[#allocation2 + $0x300] sm:$0xff]
      %v7561 = vld [vmem:[#allocation2 + $0x308] sm:$0xff]
      %v7562 = vld [vmem:[#allocation2 + $0x310] sm:$0xff]
      %v7563 = vld [vmem:[#allocation2 + $0x318] sm:$0xff]
      %v7564 = vld [vmem:[#allocation2 + $0x320] sm:$0xff]
      %v7565 = vld [vmem:[#allocation2 + $0x328] sm:$0xff]
      %v7566 = vld [vmem:[#allocation2 + $0x330] sm:$0xff]
      %v7567 = vld [vmem:[#allocation2 + $0x338] sm:$0xff]
      %v7568 = vld [vmem:[#allocation2 + $0x340] sm:$0xff]
      %v7569 = vld [vmem:[#allocation2 + $0x348] sm:$0xff]
      %v7570 = vld [vmem:[#allocation2 + $0x350] sm:$0xff]
      %v7571 = vld [vmem:[#allocation2 + $0x358] sm:$0xff]
      %v7572 = vld [vmem:[#allocation2 + $0x360] sm:$0xff]
      %v7573 = vld [vmem:[#allocation2 + $0x368] sm:$0xff]
      %v7574 = vld [vmem:[#allocation2 + $0x370] sm:$0xff]
      %v7575 = vld [vmem:[#allocation2 + $0x378] sm:$0xff]
      %v7576 = vld [vmem:[#allocation2 + $0x380] sm:$0xff]
      %v7577 = vld [vmem:[#allocation2 + $0x388] sm:$0xff]
      %v7578 = vld [vmem:[%s6355] sm:$0xff]
      %v7579 = vld [vmem:[%s6355 + $0x8] sm:$0xff]
      %v7580 = vld [vmem:[%s6355 + $0x10] sm:$0xff]
      %v7581 = vld [vmem:[%s6355 + $0x18] sm:$0xff]
      %v7582 = vld [vmem:[%s6355 + $0x20] sm:$0xff]
      %v7583 = vld [vmem:[%s6355 + $0x28] sm:$0xff]
      %v7584 = vld [vmem:[%s6355 + $0x30] sm:$0xff]
      %v7585 = vld [vmem:[%s6355 + $0x38] sm:$0xff]
      %v7586 = vld [vmem:[%s6355 + $0x40] sm:$0xff]
      %v7587 = vld [vmem:[%s6355 + $0x48] sm:$0xff]
      %v7588 = vld [vmem:[%s6355 + $0x50] sm:$0xff]
      %v7589 = vld [vmem:[%s6355 + $0x58] sm:$0xff]
      %v7590 = vld [vmem:[%s6355 + $0x60] sm:$0xff]
      %v7591 = vld [vmem:[%s6355 + $0x68] sm:$0xff]
      %v7592 = vld [vmem:[%s6355 + $0x70] sm:$0xff]
      %v7593 = vld [vmem:[%s6355 + $0x78] sm:$0xff]
      %v7594 = vld [vmem:[%s6355 + $0x80] sm:$0xff]
      %v7595 = vld [vmem:[%s6355 + $0x88] sm:$0xff]
      %v7596 = vld [vmem:[%s6355 + $0x90] sm:$0xff]
      %v7597 = vld [vmem:[%s6355 + $0x98] sm:$0xff]
      %v7598 = vld [vmem:[%s6355 + $0xa0] sm:$0xff]
      %v7599 = vld [vmem:[%s6355 + $0xa8] sm:$0xff]
      %v7600 = vld [vmem:[%s6355 + $0xb0] sm:$0xff]
      %v7601 = vld [vmem:[%s6355 + $0xb8] sm:$0xff]
      %v7602 = vld [vmem:[%s6355 + $0xc0] sm:$0xff]
      %v7603 = vld [vmem:[%s6355 + $0xc8] sm:$0xff]
      %v7604 = vld [vmem:[%s6355 + $0xd0] sm:$0xff]
      %v7605 = vld [vmem:[%s6355 + $0xd8] sm:$0xff]
      %v7606 = vld [vmem:[%s6355 + $0xe0] sm:$0xff]
      %v7607 = vld [vmem:[%s6355 + $0xe8] sm:$0xff]
      %v7608 = vld [vmem:[%s6355 + $0xf0] sm:$0xff]
      %v7609 = vld [vmem:[%s6355 + $0xf8] sm:$0xff]
      %v7610 = vld [vmem:[%s6355 + $0x100] sm:$0xff]
      %v7611 = vld [vmem:[%s6355 + $0x108] sm:$0xff]
      %v7612 = vld [vmem:[%s6355 + $0x110] sm:$0xff]
      %v7613 = vld [vmem:[%s6355 + $0x118] sm:$0xff]
      %v7614 = vld [vmem:[%s6355 + $0x120] sm:$0xff]
      %v7615 = vld [vmem:[%s6355 + $0x128] sm:$0xff]
      %v7616 = vld [vmem:[%s6355 + $0x130] sm:$0xff]
      %v7617 = vld [vmem:[%s6355 + $0x138] sm:$0xff]
      %v7618 = vld [vmem:[%s6355 + $0x140] sm:$0xff]
      %v7619 = vld [vmem:[%s6355 + $0x148] sm:$0xff]
      %v7620 = vld [vmem:[%s6355 + $0x150] sm:$0xff]
      %v7621 = vld [vmem:[%s6355 + $0x158] sm:$0xff]
      %v7622 = vld [vmem:[%s6355 + $0x160] sm:$0xff]
      %v7623 = vld [vmem:[%s6355 + $0x168] sm:$0xff]
      %v7624 = vld [vmem:[%s6355 + $0x170] sm:$0xff]
      %v7625 = vld [vmem:[%s6355 + $0x178] sm:$0xff]
      %7626 = vmatprep.subr.mxu0 0.0
      %7627 = vmatpush1.msra.mxu0 %v7593
      %7628 = vmatprep.subr.mxu0 0.0
      %7629 = vmatpush1.msra.mxu0 %v7592
      %7630 = vmatprep.subr.mxu0 0.0
      %7631 = vmatpush1.msra.mxu0 %v7591
      %7632 = vmatprep.subr.mxu0 0.0
      %7633 = vmatpush1.msra.mxu0 %v7590
      %7634 = vmatprep.subr.mxu0 0.0
      %7635 = vmatpush1.msra.mxu0 %v7589
      %7636 = vmatprep.subr.mxu0 0.0
      %7637 = vmatpush1.msra.mxu0 %v7588
      %7638 = vmatprep.subr.mxu0 0.0
      %7639 = vmatpush1.msra.mxu0 %v7587
      %7640 = vmatprep.subr.mxu0 0.0
      %7641 = vmatpush1.msra.mxu0 %v7586
      %7642 = vmatprep.subr.mxu0 0.0
      %7643 = vmatpush1.msra.mxu0 %v7585
      %7644 = vmatprep.subr.mxu0 0.0
      %7645 = vmatpush1.msra.mxu0 %v7584
      %7646 = vmatprep.subr.mxu0 0.0
      %7647 = vmatpush1.msra.mxu0 %v7583
      %7648 = vmatprep.subr.mxu0 0.0
      %7649 = vmatpush1.msra.mxu0 %v7582
      %7650 = vmatprep.subr.mxu0 0.0
      %7651 = vmatpush1.msra.mxu0 %v7581
      %7652 = vmatprep.subr.mxu0 0.0
      %7653 = vmatpush1.msra.mxu0 %v7580
      %7654 = vmatprep.subr.mxu0 0.0
      %7655 = vmatpush1.msra.mxu0 %v7579
      %7656 = vmatprep.subr.mxu0 0.0
      %7657 = vmatpush1.msra.mxu0 %v7578
      %7658 = vmatprep.subr.mxu0 0.0
      %7659 = vmatpush2.msra.mxu0 %v7609
      %7660 = vmatprep.subr.mxu0 0.0
      %7661 = vmatpush2.msra.mxu0 %v7608
      %7662 = vmatprep.subr.mxu0 0.0
      %7663 = vmatpush2.msra.mxu0 %v7607
      %7664 = vmatprep.subr.mxu0 0.0
      %7665 = vmatpush2.msra.mxu0 %v7606
      %7666 = vmatprep.subr.mxu0 0.0
      %7667 = vmatpush2.msra.mxu0 %v7605
      %7668 = vmatprep.subr.mxu0 0.0
      %7669 = vmatpush2.msra.mxu0 %v7604
      %7670 = vmatprep.subr.mxu0 0.0
      %7671 = vmatpush2.msra.mxu0 %v7603
      %7672 = vmatprep.subr.mxu0 0.0
      %7673 = vmatpush2.msra.mxu0 %v7602
      %7674 = vmatprep.subr.mxu0 0.0
      %7675 = vmatpush2.msra.mxu0 %v7601
      %7676 = vmatprep.subr.mxu0 0.0
      %7677 = vmatpush2.msra.mxu0 %v7600
      %7678 = vmatprep.subr.mxu0 0.0
      %7679 = vmatpush2.msra.mxu0 %v7599
      %7680 = vmatprep.subr.mxu0 0.0
      %7681 = vmatpush2.msra.mxu0 %v7598
      %7682 = vmatprep.subr.mxu0 0.0
      %7683 = vmatpush2.msra.mxu0 %v7597
      %7684 = vmatprep.subr.mxu0 0.0
      %7685 = vmatpush2.msra.mxu0 %v7596
      %7686 = vmatprep.subr.mxu0 0.0
      %7687 = vmatpush2.msra.mxu0 %v7595
      %7688 = vmatprep.subr.mxu0 0.0
      %7689 = vmatpush2.msra.mxu0 %v7594
      %7690 = vmatprep.mubr.f32.mxu0 %v7531
      %7691 = vmatmul.mubr.f32.gmra.mxu0 %v7530
      %v7692 = vpop.f32.mrf.mxu0
      %v7693 = vadd.f32 0.0, %v7692
      %v7694 = vpop.f32.mrf.mxu0
      %7695 = vmatprep.mubr.f32.mxu0 %v7534
      %7696 = vmatmul.mubr.f32.gmra.mxu0 %v7533
      %v7697 = vpop.f32.mrf.mxu0
      %v7698 = vadd.f32 0.0, %v7697
      %v7699 = vpop.f32.mrf.mxu0
      %7700 = vmatprep.mubr.f32.mxu0 %v7537
      %7701 = vmatmul.mubr.f32.gmra.mxu0 %v7536
      %v7702 = vpop.f32.mrf.mxu0
      %v7703 = vadd.f32 0.0, %v7702
      %v7704 = vpop.f32.mrf.mxu0
      %7705 = vmatprep.mubr.f32.mxu0 %v7540
      %7706 = vmatmul.mubr.f32.gmra.mxu0 %v7539
      %v7707 = vpop.f32.mrf.mxu0
      %v7708 = vadd.f32 0.0, %v7707
      %v7709 = vpop.f32.mrf.mxu0
      %7710 = vmatprep.mubr.f32.mxu0 %v7543
      %7711 = vmatmul.mubr.f32.gmra.mxu0 %v7542
      %v7712 = vpop.f32.mrf.mxu0
      %v7713 = vadd.f32 0.0, %v7712
      %v7714 = vpop.f32.mrf.mxu0
      %7715 = vmatprep.mubr.f32.mxu0 %v7546
      %7716 = vmatmul.mubr.f32.gmra.mxu0 %v7545
      %v7717 = vpop.f32.mrf.mxu0
      %v7718 = vadd.f32 0.0, %v7717
      %v7719 = vpop.f32.mrf.mxu0
      %7720 = vmatprep.mubr.f32.mxu0 %v7549
      %7721 = vmatmul.mubr.f32.gmra.mxu0 %v7548
      %v7722 = vpop.f32.mrf.mxu0
      %v7723 = vadd.f32 0.0, %v7722
      %v7724 = vpop.f32.mrf.mxu0
      %7725 = vmatprep.mubr.f32.mxu0 %v7552
      %7726 = vmatmul.mubr.f32.gmra.mxu0 %v7551
      %v7727 = vpop.f32.mrf.mxu0
      %v7728 = vadd.f32 0.0, %v7727
      %v7729 = vpop.f32.mrf.mxu0
      %7730 = vmatprep.mubr.f32.mxu0 %v7555
      %7731 = vmatmul.mubr.f32.gmra.mxu0 %v7554
      %v7732 = vpop.f32.mrf.mxu0
      %v7733 = vadd.f32 0.0, %v7732
      %v7734 = vpop.f32.mrf.mxu0
      %7735 = vmatprep.mubr.f32.mxu0 %v7558
      %7736 = vmatmul.mubr.f32.gmra.mxu0 %v7557
      %v7737 = vpop.f32.mrf.mxu0
      %v7738 = vadd.f32 0.0, %v7737
      %v7739 = vpop.f32.mrf.mxu0
      %7740 = vmatprep.mubr.f32.mxu0 %v7561
      %7741 = vmatmul.mubr.f32.gmra.mxu0 %v7560
      %v7742 = vpop.f32.mrf.mxu0
      %v7743 = vadd.f32 0.0, %v7742
      %v7744 = vpop.f32.mrf.mxu0
      %7745 = vmatprep.mubr.f32.mxu0 %v7564
      %7746 = vmatmul.mubr.f32.gmra.mxu0 %v7563
      %v7747 = vpop.f32.mrf.mxu0
      %v7748 = vadd.f32 0.0, %v7747
      %v7749 = vpop.f32.mrf.mxu0
      %7750 = vmatprep.mubr.f32.mxu0 %v7567
      %7751 = vmatmul.mubr.f32.gmra.mxu0 %v7566
      %v7752 = vpop.f32.mrf.mxu0
      %v7753 = vadd.f32 0.0, %v7752
      %v7754 = vpop.f32.mrf.mxu0
      %7755 = vmatprep.mubr.f32.mxu0 %v7570
      %7756 = vmatmul.mubr.f32.gmra.mxu0 %v7569
      %v7757 = vpop.f32.mrf.mxu0
      %v7758 = vadd.f32 0.0, %v7757
      %v7759 = vpop.f32.mrf.mxu0
      %7760 = vmatprep.mubr.f32.mxu0 %v7573
      %7761 = vmatmul.mubr.f32.gmra.mxu0 %v7572
      %v7762 = vpop.f32.mrf.mxu0
      %v7763 = vadd.f32 0.0, %v7762
      %v7764 = vpop.f32.mrf.mxu0
      %7765 = vmatprep.mubr.f32.mxu0 %v7576
      %7766 = vmatmul.mubr.f32.gmra.mxu0 %v7575
      %v7767 = vpop.f32.mrf.mxu0
      %v7768 = vadd.f32 0.0, %v7767
      %v7769 = vpop.f32.mrf.mxu0
      %7770 = vdwg.mxu0
      %7771 = vmatprep.subr.mxu0 0.0
      %7772 = vmatpush1.msra.mxu0 %v7625
      %7773 = vmatprep.subr.mxu0 0.0
      %7774 = vmatpush1.msra.mxu0 %v7624
      %7775 = vmatprep.subr.mxu0 0.0
      %7776 = vmatpush1.msra.mxu0 %v7623
      %7777 = vmatprep.subr.mxu0 0.0
      %7778 = vmatpush1.msra.mxu0 %v7622
      %7779 = vmatprep.subr.mxu0 0.0
      %7780 = vmatpush1.msra.mxu0 %v7621
      %7781 = vmatprep.subr.mxu0 0.0
      %7782 = vmatpush1.msra.mxu0 %v7620
      %7783 = vmatprep.subr.mxu0 0.0
      %7784 = vmatpush1.msra.mxu0 %v7619
      %7785 = vmatprep.subr.mxu0 0.0
      %7786 = vmatpush1.msra.mxu0 %v7618
      %7787 = vmatprep.subr.mxu0 0.0
      %7788 = vmatpush1.msra.mxu0 %v7617
      %7789 = vmatprep.subr.mxu0 0.0
      %7790 = vmatpush1.msra.mxu0 %v7616
      %7791 = vmatprep.subr.mxu0 0.0
      %7792 = vmatpush1.msra.mxu0 %v7615
      %7793 = vmatprep.subr.mxu0 0.0
      %7794 = vmatpush1.msra.mxu0 %v7614
      %7795 = vmatprep.subr.mxu0 0.0
      %7796 = vmatpush1.msra.mxu0 %v7613
      %7797 = vmatprep.subr.mxu0 0.0
      %7798 = vmatpush1.msra.mxu0 %v7612
      %7799 = vmatprep.subr.mxu0 0.0
      %7800 = vmatpush1.msra.mxu0 %v7611
      %7801 = vmatprep.subr.mxu0 0.0
      %7802 = vmatpush1.msra.mxu0 %v7610
      %7803 = vmatprep.subr.mxu0 0.0
      %7804 = vmatpush2.msra.mxu0 0.0
      %7805 = vmatprep.subr.mxu0 0.0
      %7806 = vmatpush2.msra.mxu0 0.0
      %7807 = vmatprep.subr.mxu0 0.0
      %7808 = vmatpush2.msra.mxu0 0.0
      %7809 = vmatprep.subr.mxu0 0.0
      %7810 = vmatpush2.msra.mxu0 0.0
      %7811 = vmatprep.subr.mxu0 0.0
      %7812 = vmatpush2.msra.mxu0 0.0
      %7813 = vmatprep.subr.mxu0 0.0
      %7814 = vmatpush2.msra.mxu0 0.0
      %7815 = vmatprep.subr.mxu0 0.0
      %7816 = vmatpush2.msra.mxu0 0.0
      %7817 = vmatprep.subr.mxu0 0.0
      %7818 = vmatpush2.msra.mxu0 0.0
      %7819 = vmatprep.subr.mxu0 0.0
      %7820 = vmatpush2.msra.mxu0 0.0
      %7821 = vmatprep.subr.mxu0 0.0
      %7822 = vmatpush2.msra.mxu0 0.0
      %7823 = vmatprep.subr.mxu0 0.0
      %7824 = vmatpush2.msra.mxu0 0.0
      %7825 = vmatprep.subr.mxu0 0.0
      %7826 = vmatpush2.msra.mxu0 0.0
      %7827 = vmatprep.subr.mxu0 0.0
      %7828 = vmatpush2.msra.mxu0 0.0
      %7829 = vmatprep.subr.mxu0 0.0
      %7830 = vmatpush2.msra.mxu0 0.0
      %7831 = vmatprep.subr.mxu0 0.0
      %7832 = vmatpush2.msra.mxu0 0.0
      %7833 = vmatprep.subr.mxu0 0.0
      %7834 = vmatpush2.msra.mxu0 0.0
      %7835 = vmatprep.mubr.f32.mxu0 0.0
      %7836 = vmatmul.mubr.f32.gmra.mxu0 %v7532
      %v7837 = vpop.f32.mrf.mxu0
      %v7838 = vadd.f32 %v7693, %v7837
      %v7839 = vpop.f32.mrf.mxu0
      %7840 = vmatprep.mubr.f32.mxu0 0.0
      %7841 = vmatmul.mubr.f32.gmra.mxu0 %v7535
      %v7842 = vpop.f32.mrf.mxu0
      %v7843 = vadd.f32 %v7698, %v7842
      %v7844 = vpop.f32.mrf.mxu0
      %7845 = vmatprep.mubr.f32.mxu0 0.0
      %7846 = vmatmul.mubr.f32.gmra.mxu0 %v7538
      %v7847 = vpop.f32.mrf.mxu0
      %v7848 = vadd.f32 %v7703, %v7847
      %v7849 = vpop.f32.mrf.mxu0
      %7850 = vmatprep.mubr.f32.mxu0 0.0
      %7851 = vmatmul.mubr.f32.gmra.mxu0 %v7541
      %v7852 = vpop.f32.mrf.mxu0
      %v7853 = vadd.f32 %v7708, %v7852
      %v7854 = vpop.f32.mrf.mxu0
      %7855 = vmatprep.mubr.f32.mxu0 0.0
      %7856 = vmatmul.mubr.f32.gmra.mxu0 %v7544
      %v7857 = vpop.f32.mrf.mxu0
      %v7858 = vadd.f32 %v7713, %v7857
      %v7859 = vpop.f32.mrf.mxu0
      %7860 = vmatprep.mubr.f32.mxu0 0.0
      %7861 = vmatmul.mubr.f32.gmra.mxu0 %v7547
      %v7862 = vpop.f32.mrf.mxu0
      %v7863 = vadd.f32 %v7718, %v7862
      %v7864 = vpop.f32.mrf.mxu0
      %7865 = vmatprep.mubr.f32.mxu0 0.0
      %7866 = vmatmul.mubr.f32.gmra.mxu0 %v7550
      %v7867 = vpop.f32.mrf.mxu0
      %v7868 = vadd.f32 %v7723, %v7867
      %v7869 = vpop.f32.mrf.mxu0
      %7870 = vmatprep.mubr.f32.mxu0 0.0
      %7871 = vmatmul.mubr.f32.gmra.mxu0 %v7553
      %v7872 = vpop.f32.mrf.mxu0
      %v7873 = vadd.f32 %v7728, %v7872
      %v7874 = vpop.f32.mrf.mxu0
      %7875 = vmatprep.mubr.f32.mxu0 0.0
      %7876 = vmatmul.mubr.f32.gmra.mxu0 %v7556
      %v7877 = vpop.f32.mrf.mxu0
      %v7878 = vadd.f32 %v7733, %v7877
      %v7879 = vpop.f32.mrf.mxu0
      %7880 = vmatprep.mubr.f32.mxu0 0.0
      %7881 = vmatmul.mubr.f32.gmra.mxu0 %v7559
      %v7882 = vpop.f32.mrf.mxu0
      %v7883 = vadd.f32 %v7738, %v7882
      %v7884 = vpop.f32.mrf.mxu0
      %7885 = vmatprep.mubr.f32.mxu0 0.0
      %7886 = vmatmul.mubr.f32.gmra.mxu0 %v7562
      %v7887 = vpop.f32.mrf.mxu0
      %v7888 = vadd.f32 %v7743, %v7887
      %v7889 = vpop.f32.mrf.mxu0
      %7890 = vmatprep.mubr.f32.mxu0 0.0
      %7891 = vmatmul.mubr.f32.gmra.mxu0 %v7565
      %v7892 = vpop.f32.mrf.mxu0
      %v7893 = vadd.f32 %v7748, %v7892
      %v7894 = vpop.f32.mrf.mxu0
      %7895 = vmatprep.mubr.f32.mxu0 0.0
      %7896 = vmatmul.mubr.f32.gmra.mxu0 %v7568
      %v7897 = vpop.f32.mrf.mxu0
      %v7898 = vadd.f32 %v7753, %v7897
      %v7899 = vpop.f32.mrf.mxu0
      %7900 = vmatprep.mubr.f32.mxu0 0.0
      %7901 = vmatmul.mubr.f32.gmra.mxu0 %v7571
      %v7902 = vpop.f32.mrf.mxu0
      %v7903 = vadd.f32 %v7758, %v7902
      %v7904 = vpop.f32.mrf.mxu0
      %7905 = vmatprep.mubr.f32.mxu0 0.0
      %7906 = vmatmul.mubr.f32.gmra.mxu0 %v7574
      %v7907 = vpop.f32.mrf.mxu0
      %v7908 = vadd.f32 %v7763, %v7907
      %v7909 = vpop.f32.mrf.mxu0
      %7910 = vmatprep.mubr.f32.mxu0 0.0
      %7911 = vmatmul.mubr.f32.gmra.mxu0 %v7577
      %v7912 = vpop.f32.mrf.mxu0
      %v7913 = vadd.f32 %v7768, %v7912
      %v7914 = vpop.f32.mrf.mxu0
      %7915 = vdwg.mxu0
      %v7916 = vadd.f32 %v7452, %v7838
      %v7917 = vadd.f32 %v7457, %v7843
      %v7918 = vadd.f32 %v7462, %v7848
      %v7919 = vadd.f32 %v7467, %v7853
      %v7920 = vadd.f32 %v7472, %v7858
      %v7921 = vadd.f32 %v7477, %v7863
      %v7922 = vadd.f32 %v7482, %v7868
      %v7923 = vadd.f32 %v7487, %v7873
      %v7924 = vadd.f32 %v7492, %v7878
      %v7925 = vadd.f32 %v7497, %v7883
      %v7926 = vadd.f32 %v7502, %v7888
      %v7927 = vadd.f32 %v7507, %v7893
      %v7928 = vadd.f32 %v7512, %v7898
      %v7929 = vadd.f32 %v7517, %v7903
      %v7930 = vadd.f32 %v7522, %v7908
      %v7931 = vadd.f32 %v7527, %v7913
      %v7932 = vld [vmem:[%s4] sm:$0x1]
      %v7934 = vlaneseq
      %v7935 = vshrl.u32 %v7934, 7
      %v7936 = vsub.s32 0, %v7935
      %v7937 = vrot.slane %v7932, %v7936
      %v7939 = vadd.f32 %v7916, %v7937
      %v7940 = vadd.f32 %v7917, %v7937
      %v7941 = vadd.f32 %v7918, %v7937
      %v7942 = vadd.f32 %v7919, %v7937
      %v7943 = vadd.f32 %v7920, %v7937
      %v7944 = vadd.f32 %v7921, %v7937
      %v7945 = vadd.f32 %v7922, %v7937
      %v7946 = vadd.f32 %v7923, %v7937
      %v7947 = vadd.f32 %v7924, %v7937
      %v7948 = vadd.f32 %v7925, %v7937
      %v7949 = vadd.f32 %v7926, %v7937
      %v7950 = vadd.f32 %v7927, %v7937
      %v7951 = vadd.f32 %v7928, %v7937
      %v7952 = vadd.f32 %v7929, %v7937
      %v7953 = vadd.f32 %v7930, %v7937
      %v7954 = vadd.f32 %v7931, %v7937
      %v7955 = vld [vmem:[%s219 + $0xa0] sm:$0xff]
      %v7956 = vld [vmem:[%s219 + $0xa8] sm:$0xff]
      %v7957 = vld [vmem:[%s219 + $0xb0] sm:$0xff]
      %v7958 = vld [vmem:[%s219 + $0xb8] sm:$0xff]
      %v7959 = vld [vmem:[%s219 + $0xc0] sm:$0xff]
      %v7960 = vld [vmem:[%s219 + $0xc8] sm:$0xff]
      %v7961 = vld [vmem:[%s219 + $0xd0] sm:$0xff]
      %v7962 = vld [vmem:[%s219 + $0xd8] sm:$0xff]
      %v7963 = vld [vmem:[%s219 + $0xe0] sm:$0xff]
      %v7964 = vld [vmem:[%s219 + $0xe8] sm:$0xff]
      %v7965 = vld [vmem:[%s219 + $0xf0] sm:$0xff]
      %v7966 = vld [vmem:[%s219 + $0xf8] sm:$0xff]
      %v7967 = vld [vmem:[%s219 + $0x100] sm:$0xff]
      %v7968 = vld [vmem:[%s219 + $0x108] sm:$0xff]
      %v7969 = vld [vmem:[%s219 + $0x110] sm:$0xff]
      %v7970 = vld [vmem:[%s219 + $0x118] sm:$0xff]
      %v7971 = vadd.f32 %v7939, %v7955
      %v7972 = vadd.f32 %v7940, %v7956
      %v7973 = vadd.f32 %v7941, %v7957
      %v7974 = vadd.f32 %v7942, %v7958
      %v7975 = vadd.f32 %v7943, %v7959
      %v7976 = vadd.f32 %v7944, %v7960
      %v7977 = vadd.f32 %v7945, %v7961
      %v7978 = vadd.f32 %v7946, %v7962
      %v7979 = vadd.f32 %v7947, %v7963
      %v7980 = vadd.f32 %v7948, %v7964
      %v7981 = vadd.f32 %v7949, %v7965
      %v7982 = vadd.f32 %v7950, %v7966
      %v7983 = vadd.f32 %v7951, %v7967
      %v7984 = vadd.f32 %v7952, %v7968
      %v7985 = vadd.f32 %v7953, %v7969
      %v7986 = vadd.f32 %v7954, %v7970
      %v7987 = vmax.f32 %v7971, 0.0
      %v7988 = vmax.f32 %v7972, 0.0
      %v7989 = vmax.f32 %v7973, 0.0
      %v7990 = vmax.f32 %v7974, 0.0
      %v7991 = vmax.f32 %v7975, 0.0
      %v7992 = vmax.f32 %v7976, 0.0
      %v7993 = vmax.f32 %v7977, 0.0
      %v7994 = vmax.f32 %v7978, 0.0
      %v7995 = vmax.f32 %v7979, 0.0
      %v7996 = vmax.f32 %v7980, 0.0
      %v7997 = vmax.f32 %v7981, 0.0
      %v7998 = vmax.f32 %v7982, 0.0
      %v7999 = vmax.f32 %v7983, 0.0
      %v8000 = vmax.f32 %v7984, 0.0
      %v8001 = vmax.f32 %v7985, 0.0
      %v8002 = vmax.f32 %v7986, 0.0
      %8003 = vst [vmem:[%s224 + $0x80] sm:$0xff] %v7987
      %8004 = vst [vmem:[%s224 + $0x88] sm:$0xff] %v7988
      %8005 = vst [vmem:[%s224 + $0x90] sm:$0xff] %v7989
      %8006 = vst [vmem:[%s224 + $0x98] sm:$0xff] %v7990
      %8007 = vst [vmem:[%s224 + $0xa0] sm:$0xff] %v7991
      %8008 = vst [vmem:[%s224 + $0xa8] sm:$0xff] %v7992
      %8009 = vst [vmem:[%s224 + $0xb0] sm:$0xff] %v7993
      %8010 = vst [vmem:[%s224 + $0xb8] sm:$0xff] %v7994
      %8011 = vst [vmem:[%s224 + $0xc0] sm:$0xff] %v7995
      %8012 = vst [vmem:[%s224 + $0xc8] sm:$0xff] %v7996
      %8013 = vst [vmem:[%s224 + $0xd0] sm:$0xff] %v7997
      %8014 = vst [vmem:[%s224 + $0xd8] sm:$0xff] %v7998
      %8015 = vst [vmem:[%s224 + $0xe0] sm:$0xff] %v7999
      %8016 = vst [vmem:[%s224 + $0xe8] sm:$0xff] %v8000
      %8017 = vst [vmem:[%s224 + $0xf0] sm:$0xff] %v8001
      %8018 = vst [vmem:[%s224 + $0xf8] sm:$0xff] %v8002
      %v8019 = vld [vmem:[#allocation2 + $0x300] sm:$0xff]
      %v8020 = vld [vmem:[#allocation2 + $0x308] sm:$0xff]
      %v8021 = vld [vmem:[#allocation2 + $0x310] sm:$0xff]
      %v8022 = vld [vmem:[#allocation2 + $0x318] sm:$0xff]
      %v8023 = vld [vmem:[#allocation2 + $0x320] sm:$0xff]
      %v8024 = vld [vmem:[#allocation2 + $0x328] sm:$0xff]
      %v8025 = vld [vmem:[#allocation2 + $0x330] sm:$0xff]
      %v8026 = vld [vmem:[#allocation2 + $0x338] sm:$0xff]
      %v8027 = vld [vmem:[#allocation2 + $0x340] sm:$0xff]
      %v8028 = vld [vmem:[#allocation2 + $0x348] sm:$0xff]
      %v8029 = vld [vmem:[#allocation2 + $0x350] sm:$0xff]
      %v8030 = vld [vmem:[#allocation2 + $0x358] sm:$0xff]
      %v8031 = vld [vmem:[#allocation2 + $0x360] sm:$0xff]
      %v8032 = vld [vmem:[#allocation2 + $0x368] sm:$0xff]
      %v8033 = vld [vmem:[#allocation2 + $0x370] sm:$0xff]
      %v8034 = vld [vmem:[#allocation2 + $0x378] sm:$0xff]
      %v8035 = vld [vmem:[#allocation2 + $0x380] sm:$0xff]
      %v8036 = vld [vmem:[#allocation2 + $0x388] sm:$0xff]
      %v8037 = vld [vmem:[#allocation2 + $0x390] sm:$0xff]
      %v8038 = vld [vmem:[#allocation2 + $0x398] sm:$0xff]
      %v8039 = vld [vmem:[#allocation2 + $0x3a0] sm:$0xff]
      %v8040 = vld [vmem:[#allocation2 + $0x3a8] sm:$0xff]
      %v8041 = vld [vmem:[#allocation2 + $0x3b0] sm:$0xff]
      %v8042 = vld [vmem:[#allocation2 + $0x3b8] sm:$0xff]
      %v8043 = vld [vmem:[#allocation2 + $0x3c0] sm:$0xff]
      %v8044 = vld [vmem:[#allocation2 + $0x3c8] sm:$0xff]
      %v8045 = vld [vmem:[#allocation2 + $0x3d0] sm:$0xff]
      %v8046 = vld [vmem:[#allocation2 + $0x3d8] sm:$0xff]
      %v8047 = vld [vmem:[#allocation2 + $0x3e0] sm:$0xff]
      %v8048 = vld [vmem:[#allocation2 + $0x3e8] sm:$0xff]
      %v8049 = vld [vmem:[#allocation2 + $0x3f0] sm:$0xff]
      %v8050 = vld [vmem:[#allocation2 + $0x3f8] sm:$0xff]
      %v8051 = vld [vmem:[#allocation2 + $0x400] sm:$0xff]
      %v8052 = vld [vmem:[#allocation2 + $0x408] sm:$0xff]
      %v8053 = vld [vmem:[#allocation2 + $0x410] sm:$0xff]
      %v8054 = vld [vmem:[#allocation2 + $0x418] sm:$0xff]
      %v8055 = vld [vmem:[#allocation2 + $0x420] sm:$0xff]
      %v8056 = vld [vmem:[#allocation2 + $0x428] sm:$0xff]
      %v8057 = vld [vmem:[#allocation2 + $0x430] sm:$0xff]
      %v8058 = vld [vmem:[#allocation2 + $0x438] sm:$0xff]
      %v8059 = vld [vmem:[#allocation2 + $0x440] sm:$0xff]
      %v8060 = vld [vmem:[#allocation2 + $0x448] sm:$0xff]
      %v8061 = vld [vmem:[#allocation2 + $0x450] sm:$0xff]
      %v8062 = vld [vmem:[#allocation2 + $0x458] sm:$0xff]
      %v8063 = vld [vmem:[#allocation2 + $0x460] sm:$0xff]
      %v8064 = vld [vmem:[#allocation2 + $0x468] sm:$0xff]
      %v8065 = vld [vmem:[#allocation2 + $0x470] sm:$0xff]
      %v8066 = vld [vmem:[#allocation2 + $0x478] sm:$0xff]
      %v8067 = vld [vmem:[%s3] sm:$0xff]
      %v8068 = vld [vmem:[%s3 + $0x8] sm:$0xff]
      %v8069 = vld [vmem:[%s3 + $0x10] sm:$0xff]
      %v8070 = vld [vmem:[%s3 + $0x18] sm:$0xff]
      %v8071 = vld [vmem:[%s3 + $0x20] sm:$0xff]
      %v8072 = vld [vmem:[%s3 + $0x28] sm:$0xff]
      %v8073 = vld [vmem:[%s3 + $0x30] sm:$0xff]
      %v8074 = vld [vmem:[%s3 + $0x38] sm:$0xff]
      %v8075 = vld [vmem:[%s3 + $0x40] sm:$0xff]
      %v8076 = vld [vmem:[%s3 + $0x48] sm:$0xff]
      %v8077 = vld [vmem:[%s3 + $0x50] sm:$0xff]
      %v8078 = vld [vmem:[%s3 + $0x58] sm:$0xff]
      %v8079 = vld [vmem:[%s3 + $0x60] sm:$0xff]
      %v8080 = vld [vmem:[%s3 + $0x68] sm:$0xff]
      %v8081 = vld [vmem:[%s3 + $0x70] sm:$0xff]
      %v8082 = vld [vmem:[%s3 + $0x78] sm:$0xff]
      %v8083 = vld [vmem:[%s3 + $0x80] sm:$0xff]
      %v8084 = vld [vmem:[%s3 + $0x88] sm:$0xff]
      %v8085 = vld [vmem:[%s3 + $0x90] sm:$0xff]
      %v8086 = vld [vmem:[%s3 + $0x98] sm:$0xff]
      %v8087 = vld [vmem:[%s3 + $0xa0] sm:$0xff]
      %v8088 = vld [vmem:[%s3 + $0xa8] sm:$0xff]
      %v8089 = vld [vmem:[%s3 + $0xb0] sm:$0xff]
      %v8090 = vld [vmem:[%s3 + $0xb8] sm:$0xff]
      %v8091 = vld [vmem:[%s3 + $0xc0] sm:$0xff]
      %v8092 = vld [vmem:[%s3 + $0xc8] sm:$0xff]
      %v8093 = vld [vmem:[%s3 + $0xd0] sm:$0xff]
      %v8094 = vld [vmem:[%s3 + $0xd8] sm:$0xff]
      %v8095 = vld [vmem:[%s3 + $0xe0] sm:$0xff]
      %v8096 = vld [vmem:[%s3 + $0xe8] sm:$0xff]
      %v8097 = vld [vmem:[%s3 + $0xf0] sm:$0xff]
      %v8098 = vld [vmem:[%s3 + $0xf8] sm:$0xff]
      %v8099 = vld [vmem:[%s3 + $0x100] sm:$0xff]
      %v8100 = vld [vmem:[%s3 + $0x108] sm:$0xff]
      %v8101 = vld [vmem:[%s3 + $0x110] sm:$0xff]
      %v8102 = vld [vmem:[%s3 + $0x118] sm:$0xff]
      %v8103 = vld [vmem:[%s3 + $0x120] sm:$0xff]
      %v8104 = vld [vmem:[%s3 + $0x128] sm:$0xff]
      %v8105 = vld [vmem:[%s3 + $0x130] sm:$0xff]
      %v8106 = vld [vmem:[%s3 + $0x138] sm:$0xff]
      %v8107 = vld [vmem:[%s3 + $0x140] sm:$0xff]
      %v8108 = vld [vmem:[%s3 + $0x148] sm:$0xff]
      %v8109 = vld [vmem:[%s3 + $0x150] sm:$0xff]
      %v8110 = vld [vmem:[%s3 + $0x158] sm:$0xff]
      %v8111 = vld [vmem:[%s3 + $0x160] sm:$0xff]
      %v8112 = vld [vmem:[%s3 + $0x168] sm:$0xff]
      %v8113 = vld [vmem:[%s3 + $0x170] sm:$0xff]
      %v8114 = vld [vmem:[%s3 + $0x178] sm:$0xff]
      %v8115 = vld [vmem:[#allocation2 + $0x480] sm:$0xff]
      %v8116 = vld [vmem:[#allocation2 + $0x488] sm:$0xff]
      %v8117 = vld [vmem:[#allocation2 + $0x490] sm:$0xff]
      %v8118 = vld [vmem:[#allocation2 + $0x498] sm:$0xff]
      %v8119 = vld [vmem:[#allocation2 + $0x4a0] sm:$0xff]
      %v8120 = vld [vmem:[#allocation2 + $0x4a8] sm:$0xff]
      %v8121 = vld [vmem:[#allocation2 + $0x4b0] sm:$0xff]
      %v8122 = vld [vmem:[#allocation2 + $0x4b8] sm:$0xff]
      %v8123 = vld [vmem:[#allocation2 + $0x4c0] sm:$0xff]
      %v8124 = vld [vmem:[%s5678] sm:$0xff]
      %v8125 = vld [vmem:[%s5678 + $0x8] sm:$0xff]
      %v8126 = vld [vmem:[%s5678 + $0x10] sm:$0xff]
      %v8127 = vld [vmem:[%s5678 + $0x18] sm:$0xff]
      %v8128 = vld [vmem:[%s5678 + $0x20] sm:$0xff]
      %v8129 = vld [vmem:[%s5678 + $0x28] sm:$0xff]
      %v8130 = vld [vmem:[%s5678 + $0x30] sm:$0xff]
      %v8131 = vld [vmem:[%s5678 + $0x38] sm:$0xff]
      %v8132 = vld [vmem:[%s5678 + $0x40] sm:$0xff]
      %v8133 = vld [vmem:[%s5678 + $0x48] sm:$0xff]
      %v8134 = vld [vmem:[%s5678 + $0x50] sm:$0xff]
      %v8135 = vld [vmem:[%s5678 + $0x58] sm:$0xff]
      %v8136 = vld [vmem:[%s5678 + $0x60] sm:$0xff]
      %v8137 = vld [vmem:[%s5678 + $0x68] sm:$0xff]
      %v8138 = vld [vmem:[%s5678 + $0x70] sm:$0xff]
      %v8139 = vld [vmem:[%s5678 + $0x78] sm:$0xff]
      %v8140 = vld [vmem:[%s5678 + $0x80] sm:$0xff]
      %v8141 = vld [vmem:[%s5678 + $0x88] sm:$0xff]
      %v8142 = vld [vmem:[%s5678 + $0x90] sm:$0xff]
      %v8143 = vld [vmem:[%s5678 + $0x98] sm:$0xff]
      %v8144 = vld [vmem:[%s5678 + $0xa0] sm:$0xff]
      %v8145 = vld [vmem:[%s5678 + $0xa8] sm:$0xff]
      %v8146 = vld [vmem:[%s5678 + $0xb0] sm:$0xff]
      %v8147 = vld [vmem:[%s5678 + $0xb8] sm:$0xff]
      %v8148 = vld [vmem:[%s5678 + $0xc0] sm:$0xff]
      %v8149 = vld [vmem:[%s5678 + $0xc8] sm:$0xff]
      %v8150 = vld [vmem:[%s5678 + $0xd0] sm:$0xff]
      %v8151 = vld [vmem:[%s5678 + $0xd8] sm:$0xff]
      %v8152 = vld [vmem:[%s5678 + $0xe0] sm:$0xff]
      %v8153 = vld [vmem:[%s5678 + $0xe8] sm:$0xff]
      %v8154 = vld [vmem:[%s5678 + $0xf0] sm:$0xff]
      %v8155 = vld [vmem:[%s5678 + $0xf8] sm:$0xff]
      %v8156 = vld [vmem:[%s5678 + $0x100] sm:$0xff]
      %v8157 = vld [vmem:[%s5678 + $0x108] sm:$0xff]
      %v8158 = vld [vmem:[%s5678 + $0x110] sm:$0xff]
      %v8159 = vld [vmem:[%s5678 + $0x118] sm:$0xff]
      %v8160 = vld [vmem:[%s5678 + $0x120] sm:$0xff]
      %v8161 = vld [vmem:[%s5678 + $0x128] sm:$0xff]
      %v8162 = vld [vmem:[%s5678 + $0x130] sm:$0xff]
      %v8163 = vld [vmem:[%s5678 + $0x138] sm:$0xff]
      %v8164 = vld [vmem:[%s5678 + $0x140] sm:$0xff]
      %v8165 = vld [vmem:[%s5678 + $0x148] sm:$0xff]
      %v8166 = vld [vmem:[%s5678 + $0x150] sm:$0xff]
      %v8167 = vld [vmem:[%s5678 + $0x158] sm:$0xff]
      %v8168 = vld [vmem:[%s5678 + $0x160] sm:$0xff]
      %v8169 = vld [vmem:[%s5678 + $0x168] sm:$0xff]
      %v8170 = vld [vmem:[%s5678 + $0x170] sm:$0xff]
      %v8171 = vld [vmem:[%s5678 + $0x178] sm:$0xff]
      %8172 = vmatprep.subr.mxu0 0.0
      %8173 = vmatpush1.msra.mxu0 %v8139
      %8174 = vmatprep.subr.mxu0 0.0
      %8175 = vmatpush1.msra.mxu0 %v8138
      %8176 = vmatprep.subr.mxu0 0.0
      %8177 = vmatpush1.msra.mxu0 %v8137
      %8178 = vmatprep.subr.mxu0 0.0
      %8179 = vmatpush1.msra.mxu0 %v8136
      %8180 = vmatprep.subr.mxu0 0.0
      %8181 = vmatpush1.msra.mxu0 %v8135
      %8182 = vmatprep.subr.mxu0 0.0
      %8183 = vmatpush1.msra.mxu0 %v8134
      %8184 = vmatprep.subr.mxu0 0.0
      %8185 = vmatpush1.msra.mxu0 %v8133
      %8186 = vmatprep.subr.mxu0 0.0
      %8187 = vmatpush1.msra.mxu0 %v8132
      %8188 = vmatprep.subr.mxu0 0.0
      %8189 = vmatpush1.msra.mxu0 %v8131
      %8190 = vmatprep.subr.mxu0 0.0
      %8191 = vmatpush1.msra.mxu0 %v8130
      %8192 = vmatprep.subr.mxu0 0.0
      %8193 = vmatpush1.msra.mxu0 %v8129
      %8194 = vmatprep.subr.mxu0 0.0
      %8195 = vmatpush1.msra.mxu0 %v8128
      %8196 = vmatprep.subr.mxu0 0.0
      %8197 = vmatpush1.msra.mxu0 %v8127
      %8198 = vmatprep.subr.mxu0 0.0
      %8199 = vmatpush1.msra.mxu0 %v8126
      %8200 = vmatprep.subr.mxu0 0.0
      %8201 = vmatpush1.msra.mxu0 %v8125
      %8202 = vmatprep.subr.mxu0 0.0
      %8203 = vmatpush1.msra.mxu0 %v8124
      %8204 = vmatprep.subr.mxu0 0.0
      %8205 = vmatpush2.msra.mxu0 %v8155
      %8206 = vmatprep.subr.mxu0 0.0
      %8207 = vmatpush2.msra.mxu0 %v8154
      %8208 = vmatprep.subr.mxu0 0.0
      %8209 = vmatpush2.msra.mxu0 %v8153
      %8210 = vmatprep.subr.mxu0 0.0
      %8211 = vmatpush2.msra.mxu0 %v8152
      %8212 = vmatprep.subr.mxu0 0.0
      %8213 = vmatpush2.msra.mxu0 %v8151
      %8214 = vmatprep.subr.mxu0 0.0
      %8215 = vmatpush2.msra.mxu0 %v8150
      %8216 = vmatprep.subr.mxu0 0.0
      %8217 = vmatpush2.msra.mxu0 %v8149
      %8218 = vmatprep.subr.mxu0 0.0
      %8219 = vmatpush2.msra.mxu0 %v8148
      %8220 = vmatprep.subr.mxu0 0.0
      %8221 = vmatpush2.msra.mxu0 %v8147
      %8222 = vmatprep.subr.mxu0 0.0
      %8223 = vmatpush2.msra.mxu0 %v8146
      %8224 = vmatprep.subr.mxu0 0.0
      %8225 = vmatpush2.msra.mxu0 %v8145
      %8226 = vmatprep.subr.mxu0 0.0
      %8227 = vmatpush2.msra.mxu0 %v8144
      %8228 = vmatprep.subr.mxu0 0.0
      %8229 = vmatpush2.msra.mxu0 %v8143
      %8230 = vmatprep.subr.mxu0 0.0
      %8231 = vmatpush2.msra.mxu0 %v8142
      %8232 = vmatprep.subr.mxu0 0.0
      %8233 = vmatpush2.msra.mxu0 %v8141
      %8234 = vmatprep.subr.mxu0 0.0
      %8235 = vmatpush2.msra.mxu0 %v8140
      %8236 = vmatprep.mubr.f32.mxu0 %v8029
      %8237 = vmatmul.mubr.f32.gmra.mxu0 %v8028
      %v8238 = vpop.f32.mrf.mxu0
      %v8239 = vadd.f32 0.0, %v8238
      %v8240 = vpop.f32.mrf.mxu0
      %8241 = vmatprep.mubr.f32.mxu0 %v8032
      %8242 = vmatmul.mubr.f32.gmra.mxu0 %v8031
      %v8243 = vpop.f32.mrf.mxu0
      %v8244 = vadd.f32 0.0, %v8243
      %v8245 = vpop.f32.mrf.mxu0
      %8246 = vmatprep.mubr.f32.mxu0 %v8035
      %8247 = vmatmul.mubr.f32.gmra.mxu0 %v8034
      %v8248 = vpop.f32.mrf.mxu0
      %v8249 = vadd.f32 0.0, %v8248
      %v8250 = vpop.f32.mrf.mxu0
      %8251 = vmatprep.mubr.f32.mxu0 %v8038
      %8252 = vmatmul.mubr.f32.gmra.mxu0 %v8037
      %v8253 = vpop.f32.mrf.mxu0
      %v8254 = vadd.f32 0.0, %v8253
      %v8255 = vpop.f32.mrf.mxu0
      %8256 = vmatprep.mubr.f32.mxu0 %v8041
      %8257 = vmatmul.mubr.f32.gmra.mxu0 %v8040
      %v8258 = vpop.f32.mrf.mxu0
      %v8259 = vadd.f32 0.0, %v8258
      %v8260 = vpop.f32.mrf.mxu0
      %8261 = vmatprep.mubr.f32.mxu0 %v8044
      %8262 = vmatmul.mubr.f32.gmra.mxu0 %v8043
      %v8263 = vpop.f32.mrf.mxu0
      %v8264 = vadd.f32 0.0, %v8263
      %v8265 = vpop.f32.mrf.mxu0
      %8266 = vmatprep.mubr.f32.mxu0 %v8047
      %8267 = vmatmul.mubr.f32.gmra.mxu0 %v8046
      %v8268 = vpop.f32.mrf.mxu0
      %v8269 = vadd.f32 0.0, %v8268
      %v8270 = vpop.f32.mrf.mxu0
      %8271 = vmatprep.mubr.f32.mxu0 %v8050
      %8272 = vmatmul.mubr.f32.gmra.mxu0 %v8049
      %v8273 = vpop.f32.mrf.mxu0
      %v8274 = vadd.f32 0.0, %v8273
      %v8275 = vpop.f32.mrf.mxu0
      %8276 = vmatprep.mubr.f32.mxu0 %v8053
      %8277 = vmatmul.mubr.f32.gmra.mxu0 %v8052
      %v8278 = vpop.f32.mrf.mxu0
      %v8279 = vadd.f32 0.0, %v8278
      %v8280 = vpop.f32.mrf.mxu0
      %8281 = vmatprep.mubr.f32.mxu0 %v8056
      %8282 = vmatmul.mubr.f32.gmra.mxu0 %v8055
      %v8283 = vpop.f32.mrf.mxu0
      %v8284 = vadd.f32 0.0, %v8283
      %v8285 = vpop.f32.mrf.mxu0
      %8286 = vmatprep.mubr.f32.mxu0 %v8059
      %8287 = vmatmul.mubr.f32.gmra.mxu0 %v8058
      %v8288 = vpop.f32.mrf.mxu0
      %v8289 = vadd.f32 0.0, %v8288
      %v8290 = vpop.f32.mrf.mxu0
      %8291 = vmatprep.mubr.f32.mxu0 %v8062
      %8292 = vmatmul.mubr.f32.gmra.mxu0 %v8061
      %v8293 = vpop.f32.mrf.mxu0
      %v8294 = vadd.f32 0.0, %v8293
      %v8295 = vpop.f32.mrf.mxu0
      %8296 = vmatprep.mubr.f32.mxu0 %v8065
      %8297 = vmatmul.mubr.f32.gmra.mxu0 %v8064
      %v8298 = vpop.f32.mrf.mxu0
      %v8299 = vadd.f32 0.0, %v8298
      %v8300 = vpop.f32.mrf.mxu0
      %8301 = vmatprep.mubr.f32.mxu0 %v8116
      %8302 = vmatmul.mubr.f32.gmra.mxu0 %v8115
      %v8303 = vpop.f32.mrf.mxu0
      %v8304 = vadd.f32 0.0, %v8303
      %v8305 = vpop.f32.mrf.mxu0
      %8306 = vmatprep.mubr.f32.mxu0 %v8119
      %8307 = vmatmul.mubr.f32.gmra.mxu0 %v8118
      %v8308 = vpop.f32.mrf.mxu0
      %v8309 = vadd.f32 0.0, %v8308
      %v8310 = vpop.f32.mrf.mxu0
      %8311 = vmatprep.mubr.f32.mxu0 %v8122
      %8312 = vmatmul.mubr.f32.gmra.mxu0 %v8121
      %v8313 = vpop.f32.mrf.mxu0
      %v8314 = vadd.f32 0.0, %v8313
      %v8315 = vpop.f32.mrf.mxu0
      %8316 = vdwg.mxu0
      %8317 = vmatprep.subr.mxu0 0.0
      %8318 = vmatpush1.msra.mxu0 %v8171
      %8319 = vmatprep.subr.mxu0 0.0
      %8320 = vmatpush1.msra.mxu0 %v8170
      %8321 = vmatprep.subr.mxu0 0.0
      %8322 = vmatpush1.msra.mxu0 %v8169
      %8323 = vmatprep.subr.mxu0 0.0
      %8324 = vmatpush1.msra.mxu0 %v8168
      %8325 = vmatprep.subr.mxu0 0.0
      %8326 = vmatpush1.msra.mxu0 %v8167
      %8327 = vmatprep.subr.mxu0 0.0
      %8328 = vmatpush1.msra.mxu0 %v8166
      %8329 = vmatprep.subr.mxu0 0.0
      %8330 = vmatpush1.msra.mxu0 %v8165
      %8331 = vmatprep.subr.mxu0 0.0
      %8332 = vmatpush1.msra.mxu0 %v8164
      %8333 = vmatprep.subr.mxu0 0.0
      %8334 = vmatpush1.msra.mxu0 %v8163
      %8335 = vmatprep.subr.mxu0 0.0
      %8336 = vmatpush1.msra.mxu0 %v8162
      %8337 = vmatprep.subr.mxu0 0.0
      %8338 = vmatpush1.msra.mxu0 %v8161
      %8339 = vmatprep.subr.mxu0 0.0
      %8340 = vmatpush1.msra.mxu0 %v8160
      %8341 = vmatprep.subr.mxu0 0.0
      %8342 = vmatpush1.msra.mxu0 %v8159
      %8343 = vmatprep.subr.mxu0 0.0
      %8344 = vmatpush1.msra.mxu0 %v8158
      %8345 = vmatprep.subr.mxu0 0.0
      %8346 = vmatpush1.msra.mxu0 %v8157
      %8347 = vmatprep.subr.mxu0 0.0
      %8348 = vmatpush1.msra.mxu0 %v8156
      %8349 = vmatprep.subr.mxu0 0.0
      %8350 = vmatpush2.msra.mxu0 0.0
      %8351 = vmatprep.subr.mxu0 0.0
      %8352 = vmatpush2.msra.mxu0 0.0
      %8353 = vmatprep.subr.mxu0 0.0
      %8354 = vmatpush2.msra.mxu0 0.0
      %8355 = vmatprep.subr.mxu0 0.0
      %8356 = vmatpush2.msra.mxu0 0.0
      %8357 = vmatprep.subr.mxu0 0.0
      %8358 = vmatpush2.msra.mxu0 0.0
      %8359 = vmatprep.subr.mxu0 0.0
      %8360 = vmatpush2.msra.mxu0 0.0
      %8361 = vmatprep.subr.mxu0 0.0
      %8362 = vmatpush2.msra.mxu0 0.0
      %8363 = vmatprep.subr.mxu0 0.0
      %8364 = vmatpush2.msra.mxu0 0.0
      %8365 = vmatprep.subr.mxu0 0.0
      %8366 = vmatpush2.msra.mxu0 0.0
      %8367 = vmatprep.subr.mxu0 0.0
      %8368 = vmatpush2.msra.mxu0 0.0
      %8369 = vmatprep.subr.mxu0 0.0
      %8370 = vmatpush2.msra.mxu0 0.0
      %8371 = vmatprep.subr.mxu0 0.0
      %8372 = vmatpush2.msra.mxu0 0.0
      %8373 = vmatprep.subr.mxu0 0.0
      %8374 = vmatpush2.msra.mxu0 0.0
      %8375 = vmatprep.subr.mxu0 0.0
      %8376 = vmatpush2.msra.mxu0 0.0
      %8377 = vmatprep.subr.mxu0 0.0
      %8378 = vmatpush2.msra.mxu0 0.0
      %8379 = vmatprep.subr.mxu0 0.0
      %8380 = vmatpush2.msra.mxu0 0.0
      %8381 = vmatprep.mubr.f32.mxu0 0.0
      %8382 = vmatmul.mubr.f32.gmra.mxu0 %v8030
      %v8383 = vpop.f32.mrf.mxu0
      %v8384 = vadd.f32 %v8239, %v8383
      %v8385 = vpop.f32.mrf.mxu0
      %8386 = vmatprep.mubr.f32.mxu0 0.0
      %8387 = vmatmul.mubr.f32.gmra.mxu0 %v8033
      %v8388 = vpop.f32.mrf.mxu0
      %v8389 = vadd.f32 %v8244, %v8388
      %v8390 = vpop.f32.mrf.mxu0
      %8391 = vmatprep.mubr.f32.mxu0 0.0
      %8392 = vmatmul.mubr.f32.gmra.mxu0 %v8036
      %v8393 = vpop.f32.mrf.mxu0
      %v8394 = vadd.f32 %v8249, %v8393
      %v8395 = vpop.f32.mrf.mxu0
      %8396 = vmatprep.mubr.f32.mxu0 0.0
      %8397 = vmatmul.mubr.f32.gmra.mxu0 %v8039
      %v8398 = vpop.f32.mrf.mxu0
      %v8399 = vadd.f32 %v8254, %v8398
      %v8400 = vpop.f32.mrf.mxu0
      %8401 = vmatprep.mubr.f32.mxu0 0.0
      %8402 = vmatmul.mubr.f32.gmra.mxu0 %v8042
      %v8403 = vpop.f32.mrf.mxu0
      %v8404 = vadd.f32 %v8259, %v8403
      %v8405 = vpop.f32.mrf.mxu0
      %8406 = vmatprep.mubr.f32.mxu0 0.0
      %8407 = vmatmul.mubr.f32.gmra.mxu0 %v8045
      %v8408 = vpop.f32.mrf.mxu0
      %v8409 = vadd.f32 %v8264, %v8408
      %v8410 = vpop.f32.mrf.mxu0
      %8411 = vmatprep.mubr.f32.mxu0 0.0
      %8412 = vmatmul.mubr.f32.gmra.mxu0 %v8048
      %v8413 = vpop.f32.mrf.mxu0
      %v8414 = vadd.f32 %v8269, %v8413
      %v8415 = vpop.f32.mrf.mxu0
      %8416 = vmatprep.mubr.f32.mxu0 0.0
      %8417 = vmatmul.mubr.f32.gmra.mxu0 %v8051
      %v8418 = vpop.f32.mrf.mxu0
      %v8419 = vadd.f32 %v8274, %v8418
      %v8420 = vpop.f32.mrf.mxu0
      %8421 = vmatprep.mubr.f32.mxu0 0.0
      %8422 = vmatmul.mubr.f32.gmra.mxu0 %v8054
      %v8423 = vpop.f32.mrf.mxu0
      %v8424 = vadd.f32 %v8279, %v8423
      %v8425 = vpop.f32.mrf.mxu0
      %8426 = vmatprep.mubr.f32.mxu0 0.0
      %8427 = vmatmul.mubr.f32.gmra.mxu0 %v8057
      %v8428 = vpop.f32.mrf.mxu0
      %v8429 = vadd.f32 %v8284, %v8428
      %v8430 = vpop.f32.mrf.mxu0
      %8431 = vmatprep.mubr.f32.mxu0 0.0
      %8432 = vmatmul.mubr.f32.gmra.mxu0 %v8060
      %v8433 = vpop.f32.mrf.mxu0
      %v8434 = vadd.f32 %v8289, %v8433
      %v8435 = vpop.f32.mrf.mxu0
      %8436 = vmatprep.mubr.f32.mxu0 0.0
      %8437 = vmatmul.mubr.f32.gmra.mxu0 %v8063
      %v8438 = vpop.f32.mrf.mxu0
      %v8439 = vadd.f32 %v8294, %v8438
      %v8440 = vpop.f32.mrf.mxu0
      %8441 = vmatprep.mubr.f32.mxu0 0.0
      %8442 = vmatmul.mubr.f32.gmra.mxu0 %v8066
      %v8443 = vpop.f32.mrf.mxu0
      %v8444 = vadd.f32 %v8299, %v8443
      %v8445 = vpop.f32.mrf.mxu0
      %8446 = vmatprep.mubr.f32.mxu0 0.0
      %8447 = vmatmul.mubr.f32.gmra.mxu0 %v8117
      %v8448 = vpop.f32.mrf.mxu0
      %v8449 = vadd.f32 %v8304, %v8448
      %v8450 = vpop.f32.mrf.mxu0
      %8451 = vmatprep.mubr.f32.mxu0 0.0
      %8452 = vmatmul.mubr.f32.gmra.mxu0 %v8120
      %v8453 = vpop.f32.mrf.mxu0
      %v8454 = vadd.f32 %v8309, %v8453
      %v8455 = vpop.f32.mrf.mxu0
      %8456 = vmatprep.mubr.f32.mxu0 0.0
      %8457 = vmatmul.mubr.f32.gmra.mxu0 %v8123
      %v8458 = vpop.f32.mrf.mxu0
      %v8459 = vadd.f32 %v8314, %v8458
      %v8460 = vpop.f32.mrf.mxu0
      %8461 = vdwg.mxu0
      %8462 = vmatprep.subr.mxu0 0.0
      %8463 = vmatpush1.msra.mxu0 %v8082
      %8464 = vmatprep.subr.mxu0 0.0
      %8465 = vmatpush1.msra.mxu0 %v8081
      %8466 = vmatprep.subr.mxu0 0.0
      %8467 = vmatpush1.msra.mxu0 %v8080
      %8468 = vmatprep.subr.mxu0 0.0
      %8469 = vmatpush1.msra.mxu0 %v8079
      %8470 = vmatprep.subr.mxu0 0.0
      %8471 = vmatpush1.msra.mxu0 %v8078
      %8472 = vmatprep.subr.mxu0 0.0
      %8473 = vmatpush1.msra.mxu0 %v8077
      %8474 = vmatprep.subr.mxu0 0.0
      %8475 = vmatpush1.msra.mxu0 %v8076
      %8476 = vmatprep.subr.mxu0 0.0
      %8477 = vmatpush1.msra.mxu0 %v8075
      %8478 = vmatprep.subr.mxu0 0.0
      %8479 = vmatpush1.msra.mxu0 %v8074
      %8480 = vmatprep.subr.mxu0 0.0
      %8481 = vmatpush1.msra.mxu0 %v8073
      %8482 = vmatprep.subr.mxu0 0.0
      %8483 = vmatpush1.msra.mxu0 %v8072
      %8484 = vmatprep.subr.mxu0 0.0
      %8485 = vmatpush1.msra.mxu0 %v8071
      %8486 = vmatprep.subr.mxu0 0.0
      %8487 = vmatpush1.msra.mxu0 %v8070
      %8488 = vmatprep.subr.mxu0 0.0
      %8489 = vmatpush1.msra.mxu0 %v8069
      %8490 = vmatprep.subr.mxu0 0.0
      %8491 = vmatpush1.msra.mxu0 %v8068
      %8492 = vmatprep.subr.mxu0 0.0
      %8493 = vmatpush1.msra.mxu0 %v8067
      %8494 = vmatprep.subr.mxu0 0.0
      %8495 = vmatpush2.msra.mxu0 %v8098
      %8496 = vmatprep.subr.mxu0 0.0
      %8497 = vmatpush2.msra.mxu0 %v8097
      %8498 = vmatprep.subr.mxu0 0.0
      %8499 = vmatpush2.msra.mxu0 %v8096
      %8500 = vmatprep.subr.mxu0 0.0
      %8501 = vmatpush2.msra.mxu0 %v8095
      %8502 = vmatprep.subr.mxu0 0.0
      %8503 = vmatpush2.msra.mxu0 %v8094
      %8504 = vmatprep.subr.mxu0 0.0
      %8505 = vmatpush2.msra.mxu0 %v8093
      %8506 = vmatprep.subr.mxu0 0.0
      %8507 = vmatpush2.msra.mxu0 %v8092
      %8508 = vmatprep.subr.mxu0 0.0
      %8509 = vmatpush2.msra.mxu0 %v8091
      %8510 = vmatprep.subr.mxu0 0.0
      %8511 = vmatpush2.msra.mxu0 %v8090
      %8512 = vmatprep.subr.mxu0 0.0
      %8513 = vmatpush2.msra.mxu0 %v8089
      %8514 = vmatprep.subr.mxu0 0.0
      %8515 = vmatpush2.msra.mxu0 %v8088
      %8516 = vmatprep.subr.mxu0 0.0
      %8517 = vmatpush2.msra.mxu0 %v8087
      %8518 = vmatprep.subr.mxu0 0.0
      %8519 = vmatpush2.msra.mxu0 %v8086
      %8520 = vmatprep.subr.mxu0 0.0
      %8521 = vmatpush2.msra.mxu0 %v8085
      %8522 = vmatprep.subr.mxu0 0.0
      %8523 = vmatpush2.msra.mxu0 %v8084
      %8524 = vmatprep.subr.mxu0 0.0
      %8525 = vmatpush2.msra.mxu0 %v8083
      %8526 = vmatprep.mubr.f32.mxu0 %v8020
      %8527 = vmatmul.mubr.f32.gmra.mxu0 %v8019
      %v8528 = vpop.f32.mrf.mxu0
      %v8529 = vadd.f32 %v8384, %v8528
      %v8530 = vpop.f32.mrf.mxu0
      %8531 = vmatprep.mubr.f32.mxu0 %v8023
      %8532 = vmatmul.mubr.f32.gmra.mxu0 %v8022
      %v8533 = vpop.f32.mrf.mxu0
      %v8534 = vadd.f32 %v8389, %v8533
      %v8535 = vpop.f32.mrf.mxu0
      %8536 = vmatprep.mubr.f32.mxu0 %v8026
      %8537 = vmatmul.mubr.f32.gmra.mxu0 %v8025
      %v8538 = vpop.f32.mrf.mxu0
      %v8539 = vadd.f32 %v8394, %v8538
      %v8540 = vpop.f32.mrf.mxu0
      %8541 = vmatprep.mubr.f32.mxu0 %v8029
      %8542 = vmatmul.mubr.f32.gmra.mxu0 %v8028
      %v8543 = vpop.f32.mrf.mxu0
      %v8544 = vadd.f32 %v8399, %v8543
      %v8545 = vpop.f32.mrf.mxu0
      %8546 = vmatprep.mubr.f32.mxu0 %v8032
      %8547 = vmatmul.mubr.f32.gmra.mxu0 %v8031
      %v8548 = vpop.f32.mrf.mxu0
      %v8549 = vadd.f32 %v8404, %v8548
      %v8550 = vpop.f32.mrf.mxu0
      %8551 = vmatprep.mubr.f32.mxu0 %v8035
      %8552 = vmatmul.mubr.f32.gmra.mxu0 %v8034
      %v8553 = vpop.f32.mrf.mxu0
      %v8554 = vadd.f32 %v8409, %v8553
      %v8555 = vpop.f32.mrf.mxu0
      %8556 = vmatprep.mubr.f32.mxu0 %v8038
      %8557 = vmatmul.mubr.f32.gmra.mxu0 %v8037
      %v8558 = vpop.f32.mrf.mxu0
      %v8559 = vadd.f32 %v8414, %v8558
      %v8560 = vpop.f32.mrf.mxu0
      %8561 = vmatprep.mubr.f32.mxu0 %v8041
      %8562 = vmatmul.mubr.f32.gmra.mxu0 %v8040
      %v8563 = vpop.f32.mrf.mxu0
      %v8564 = vadd.f32 %v8419, %v8563
      %v8565 = vpop.f32.mrf.mxu0
      %8566 = vmatprep.mubr.f32.mxu0 %v8044
      %8567 = vmatmul.mubr.f32.gmra.mxu0 %v8043
      %v8568 = vpop.f32.mrf.mxu0
      %v8569 = vadd.f32 %v8424, %v8568
      %v8570 = vpop.f32.mrf.mxu0
      %8571 = vmatprep.mubr.f32.mxu0 %v8047
      %8572 = vmatmul.mubr.f32.gmra.mxu0 %v8046
      %v8573 = vpop.f32.mrf.mxu0
      %v8574 = vadd.f32 %v8429, %v8573
      %v8575 = vpop.f32.mrf.mxu0
      %8576 = vmatprep.mubr.f32.mxu0 %v8050
      %8577 = vmatmul.mubr.f32.gmra.mxu0 %v8049
      %v8578 = vpop.f32.mrf.mxu0
      %v8579 = vadd.f32 %v8434, %v8578
      %v8580 = vpop.f32.mrf.mxu0
      %8581 = vmatprep.mubr.f32.mxu0 %v8053
      %8582 = vmatmul.mubr.f32.gmra.mxu0 %v8052
      %v8583 = vpop.f32.mrf.mxu0
      %v8584 = vadd.f32 %v8439, %v8583
      %v8585 = vpop.f32.mrf.mxu0
      %8586 = vmatprep.mubr.f32.mxu0 %v8056
      %8587 = vmatmul.mubr.f32.gmra.mxu0 %v8055
      %v8588 = vpop.f32.mrf.mxu0
      %v8589 = vadd.f32 %v8444, %v8588
      %v8590 = vpop.f32.mrf.mxu0
      %8591 = vmatprep.mubr.f32.mxu0 %v8059
      %8592 = vmatmul.mubr.f32.gmra.mxu0 %v8058
      %v8593 = vpop.f32.mrf.mxu0
      %v8594 = vadd.f32 %v8449, %v8593
      %v8595 = vpop.f32.mrf.mxu0
      %8596 = vmatprep.mubr.f32.mxu0 %v8062
      %8597 = vmatmul.mubr.f32.gmra.mxu0 %v8061
      %v8598 = vpop.f32.mrf.mxu0
      %v8599 = vadd.f32 %v8454, %v8598
      %v8600 = vpop.f32.mrf.mxu0
      %8601 = vmatprep.mubr.f32.mxu0 %v8065
      %8602 = vmatmul.mubr.f32.gmra.mxu0 %v8064
      %v8603 = vpop.f32.mrf.mxu0
      %v8604 = vadd.f32 %v8459, %v8603
      %v8605 = vpop.f32.mrf.mxu0
      %8606 = vdwg.mxu0
      %8607 = vmatprep.subr.mxu0 0.0
      %8608 = vmatpush1.msra.mxu0 %v8114
      %8609 = vmatprep.subr.mxu0 0.0
      %8610 = vmatpush1.msra.mxu0 %v8113
      %8611 = vmatprep.subr.mxu0 0.0
      %8612 = vmatpush1.msra.mxu0 %v8112
      %8613 = vmatprep.subr.mxu0 0.0
      %8614 = vmatpush1.msra.mxu0 %v8111
      %8615 = vmatprep.subr.mxu0 0.0
      %8616 = vmatpush1.msra.mxu0 %v8110
      %8617 = vmatprep.subr.mxu0 0.0
      %8618 = vmatpush1.msra.mxu0 %v8109
      %8619 = vmatprep.subr.mxu0 0.0
      %8620 = vmatpush1.msra.mxu0 %v8108
      %8621 = vmatprep.subr.mxu0 0.0
      %8622 = vmatpush1.msra.mxu0 %v8107
      %8623 = vmatprep.subr.mxu0 0.0
      %8624 = vmatpush1.msra.mxu0 %v8106
      %8625 = vmatprep.subr.mxu0 0.0
      %8626 = vmatpush1.msra.mxu0 %v8105
      %8627 = vmatprep.subr.mxu0 0.0
      %8628 = vmatpush1.msra.mxu0 %v8104
      %8629 = vmatprep.subr.mxu0 0.0
      %8630 = vmatpush1.msra.mxu0 %v8103
      %8631 = vmatprep.subr.mxu0 0.0
      %8632 = vmatpush1.msra.mxu0 %v8102
      %8633 = vmatprep.subr.mxu0 0.0
      %8634 = vmatpush1.msra.mxu0 %v8101
      %8635 = vmatprep.subr.mxu0 0.0
      %8636 = vmatpush1.msra.mxu0 %v8100
      %8637 = vmatprep.subr.mxu0 0.0
      %8638 = vmatpush1.msra.mxu0 %v8099
      %8639 = vmatprep.subr.mxu0 0.0
      %8640 = vmatpush2.msra.mxu0 0.0
      %8641 = vmatprep.subr.mxu0 0.0
      %8642 = vmatpush2.msra.mxu0 0.0
      %8643 = vmatprep.subr.mxu0 0.0
      %8644 = vmatpush2.msra.mxu0 0.0
      %8645 = vmatprep.subr.mxu0 0.0
      %8646 = vmatpush2.msra.mxu0 0.0
      %8647 = vmatprep.subr.mxu0 0.0
      %8648 = vmatpush2.msra.mxu0 0.0
      %8649 = vmatprep.subr.mxu0 0.0
      %8650 = vmatpush2.msra.mxu0 0.0
      %8651 = vmatprep.subr.mxu0 0.0
      %8652 = vmatpush2.msra.mxu0 0.0
      %8653 = vmatprep.subr.mxu0 0.0
      %8654 = vmatpush2.msra.mxu0 0.0
      %8655 = vmatprep.subr.mxu0 0.0
      %8656 = vmatpush2.msra.mxu0 0.0
      %8657 = vmatprep.subr.mxu0 0.0
      %8658 = vmatpush2.msra.mxu0 0.0
      %8659 = vmatprep.subr.mxu0 0.0
      %8660 = vmatpush2.msra.mxu0 0.0
      %8661 = vmatprep.subr.mxu0 0.0
      %8662 = vmatpush2.msra.mxu0 0.0
      %8663 = vmatprep.subr.mxu0 0.0
      %8664 = vmatpush2.msra.mxu0 0.0
      %8665 = vmatprep.subr.mxu0 0.0
      %8666 = vmatpush2.msra.mxu0 0.0
      %8667 = vmatprep.subr.mxu0 0.0
      %8668 = vmatpush2.msra.mxu0 0.0
      %8669 = vmatprep.subr.mxu0 0.0
      %8670 = vmatpush2.msra.mxu0 0.0
      %8671 = vmatprep.mubr.f32.mxu0 0.0
      %8672 = vmatmul.mubr.f32.gmra.mxu0 %v8021
      %v8673 = vpop.f32.mrf.mxu0
      %v8674 = vadd.f32 %v8529, %v8673
      %v8675 = vpop.f32.mrf.mxu0
      %8676 = vmatprep.mubr.f32.mxu0 0.0
      %8677 = vmatmul.mubr.f32.gmra.mxu0 %v8024
      %v8678 = vpop.f32.mrf.mxu0
      %v8679 = vadd.f32 %v8534, %v8678
      %v8680 = vpop.f32.mrf.mxu0
      %8681 = vmatprep.mubr.f32.mxu0 0.0
      %8682 = vmatmul.mubr.f32.gmra.mxu0 %v8027
      %v8683 = vpop.f32.mrf.mxu0
      %v8684 = vadd.f32 %v8539, %v8683
      %v8685 = vpop.f32.mrf.mxu0
      %8686 = vmatprep.mubr.f32.mxu0 0.0
      %8687 = vmatmul.mubr.f32.gmra.mxu0 %v8030
      %v8688 = vpop.f32.mrf.mxu0
      %v8689 = vadd.f32 %v8544, %v8688
      %v8690 = vpop.f32.mrf.mxu0
      %8691 = vmatprep.mubr.f32.mxu0 0.0
      %8692 = vmatmul.mubr.f32.gmra.mxu0 %v8033
      %v8693 = vpop.f32.mrf.mxu0
      %v8694 = vadd.f32 %v8549, %v8693
      %v8695 = vpop.f32.mrf.mxu0
      %8696 = vmatprep.mubr.f32.mxu0 0.0
      %8697 = vmatmul.mubr.f32.gmra.mxu0 %v8036
      %v8698 = vpop.f32.mrf.mxu0
      %v8699 = vadd.f32 %v8554, %v8698
      %v8700 = vpop.f32.mrf.mxu0
      %8701 = vmatprep.mubr.f32.mxu0 0.0
      %8702 = vmatmul.mubr.f32.gmra.mxu0 %v8039
      %v8703 = vpop.f32.mrf.mxu0
      %v8704 = vadd.f32 %v8559, %v8703
      %v8705 = vpop.f32.mrf.mxu0
      %8706 = vmatprep.mubr.f32.mxu0 0.0
      %8707 = vmatmul.mubr.f32.gmra.mxu0 %v8042
      %v8708 = vpop.f32.mrf.mxu0
      %v8709 = vadd.f32 %v8564, %v8708
      %v8710 = vpop.f32.mrf.mxu0
      %8711 = vmatprep.mubr.f32.mxu0 0.0
      %8712 = vmatmul.mubr.f32.gmra.mxu0 %v8045
      %v8713 = vpop.f32.mrf.mxu0
      %v8714 = vadd.f32 %v8569, %v8713
      %v8715 = vpop.f32.mrf.mxu0
      %8716 = vmatprep.mubr.f32.mxu0 0.0
      %8717 = vmatmul.mubr.f32.gmra.mxu0 %v8048
      %v8718 = vpop.f32.mrf.mxu0
      %v8719 = vadd.f32 %v8574, %v8718
      %v8720 = vpop.f32.mrf.mxu0
      %8721 = vmatprep.mubr.f32.mxu0 0.0
      %8722 = vmatmul.mubr.f32.gmra.mxu0 %v8051
      %v8723 = vpop.f32.mrf.mxu0
      %v8724 = vadd.f32 %v8579, %v8723
      %v8725 = vpop.f32.mrf.mxu0
      %8726 = vmatprep.mubr.f32.mxu0 0.0
      %8727 = vmatmul.mubr.f32.gmra.mxu0 %v8054
      %v8728 = vpop.f32.mrf.mxu0
      %v8729 = vadd.f32 %v8584, %v8728
      %v8730 = vpop.f32.mrf.mxu0
      %8731 = vmatprep.mubr.f32.mxu0 0.0
      %8732 = vmatmul.mubr.f32.gmra.mxu0 %v8057
      %v8733 = vpop.f32.mrf.mxu0
      %v8734 = vadd.f32 %v8589, %v8733
      %v8735 = vpop.f32.mrf.mxu0
      %8736 = vmatprep.mubr.f32.mxu0 0.0
      %8737 = vmatmul.mubr.f32.gmra.mxu0 %v8060
      %v8738 = vpop.f32.mrf.mxu0
      %v8739 = vadd.f32 %v8594, %v8738
      %v8740 = vpop.f32.mrf.mxu0
      %8741 = vmatprep.mubr.f32.mxu0 0.0
      %8742 = vmatmul.mubr.f32.gmra.mxu0 %v8063
      %v8743 = vpop.f32.mrf.mxu0
      %v8744 = vadd.f32 %v8599, %v8743
      %v8745 = vpop.f32.mrf.mxu0
      %8746 = vmatprep.mubr.f32.mxu0 0.0
      %8747 = vmatmul.mubr.f32.gmra.mxu0 %v8066
      %v8748 = vpop.f32.mrf.mxu0
      %v8749 = vadd.f32 %v8604, %v8748
      %v8750 = vpop.f32.mrf.mxu0
      %8751 = vdwg.mxu0
      %v8752 = vld [vmem:[#allocation2 + $0x390] sm:$0xff]
      %v8753 = vld [vmem:[#allocation2 + $0x398] sm:$0xff]
      %v8754 = vld [vmem:[#allocation2 + $0x3a0] sm:$0xff]
      %v8755 = vld [vmem:[#allocation2 + $0x3a8] sm:$0xff]
      %v8756 = vld [vmem:[#allocation2 + $0x3b0] sm:$0xff]
      %v8757 = vld [vmem:[#allocation2 + $0x3b8] sm:$0xff]
      %v8758 = vld [vmem:[#allocation2 + $0x3c0] sm:$0xff]
      %v8759 = vld [vmem:[#allocation2 + $0x3c8] sm:$0xff]
      %v8760 = vld [vmem:[#allocation2 + $0x3d0] sm:$0xff]
      %v8761 = vld [vmem:[#allocation2 + $0x3d8] sm:$0xff]
      %v8762 = vld [vmem:[#allocation2 + $0x3e0] sm:$0xff]
      %v8763 = vld [vmem:[#allocation2 + $0x3e8] sm:$0xff]
      %v8764 = vld [vmem:[#allocation2 + $0x3f0] sm:$0xff]
      %v8765 = vld [vmem:[#allocation2 + $0x3f8] sm:$0xff]
      %v8766 = vld [vmem:[#allocation2 + $0x400] sm:$0xff]
      %v8767 = vld [vmem:[#allocation2 + $0x408] sm:$0xff]
      %v8768 = vld [vmem:[#allocation2 + $0x410] sm:$0xff]
      %v8769 = vld [vmem:[#allocation2 + $0x418] sm:$0xff]
      %v8770 = vld [vmem:[#allocation2 + $0x420] sm:$0xff]
      %v8771 = vld [vmem:[#allocation2 + $0x428] sm:$0xff]
      %v8772 = vld [vmem:[#allocation2 + $0x430] sm:$0xff]
      %v8773 = vld [vmem:[#allocation2 + $0x438] sm:$0xff]
      %v8774 = vld [vmem:[#allocation2 + $0x440] sm:$0xff]
      %v8775 = vld [vmem:[#allocation2 + $0x448] sm:$0xff]
      %v8776 = vld [vmem:[#allocation2 + $0x450] sm:$0xff]
      %v8777 = vld [vmem:[#allocation2 + $0x458] sm:$0xff]
      %v8778 = vld [vmem:[#allocation2 + $0x460] sm:$0xff]
      %v8779 = vld [vmem:[#allocation2 + $0x468] sm:$0xff]
      %v8780 = vld [vmem:[#allocation2 + $0x470] sm:$0xff]
      %v8781 = vld [vmem:[#allocation2 + $0x478] sm:$0xff]
      %v8782 = vld [vmem:[#allocation2 + $0x480] sm:$0xff]
      %v8783 = vld [vmem:[#allocation2 + $0x488] sm:$0xff]
      %v8784 = vld [vmem:[#allocation2 + $0x490] sm:$0xff]
      %v8785 = vld [vmem:[#allocation2 + $0x498] sm:$0xff]
      %v8786 = vld [vmem:[#allocation2 + $0x4a0] sm:$0xff]
      %v8787 = vld [vmem:[#allocation2 + $0x4a8] sm:$0xff]
      %v8788 = vld [vmem:[#allocation2 + $0x4b0] sm:$0xff]
      %v8789 = vld [vmem:[#allocation2 + $0x4b8] sm:$0xff]
      %v8790 = vld [vmem:[#allocation2 + $0x4c0] sm:$0xff]
      %v8791 = vld [vmem:[#allocation2 + $0x4c8] sm:$0xff]
      %v8792 = vld [vmem:[#allocation2 + $0x4d0] sm:$0xff]
      %v8793 = vld [vmem:[#allocation2 + $0x4d8] sm:$0xff]
      %v8794 = vld [vmem:[#allocation2 + $0x4e0] sm:$0xff]
      %v8795 = vld [vmem:[#allocation2 + $0x4e8] sm:$0xff]
      %v8796 = vld [vmem:[#allocation2 + $0x4f0] sm:$0xff]
      %v8797 = vld [vmem:[#allocation2 + $0x4f8] sm:$0xff]
      %v8798 = vld [vmem:[#allocation2 + $0x500] sm:$0xff]
      %v8799 = vld [vmem:[#allocation2 + $0x508] sm:$0xff]
      %v8800 = vld [vmem:[%s6355] sm:$0xff]
      %v8801 = vld [vmem:[%s6355 + $0x8] sm:$0xff]
      %v8802 = vld [vmem:[%s6355 + $0x10] sm:$0xff]
      %v8803 = vld [vmem:[%s6355 + $0x18] sm:$0xff]
      %v8804 = vld [vmem:[%s6355 + $0x20] sm:$0xff]
      %v8805 = vld [vmem:[%s6355 + $0x28] sm:$0xff]
      %v8806 = vld [vmem:[%s6355 + $0x30] sm:$0xff]
      %v8807 = vld [vmem:[%s6355 + $0x38] sm:$0xff]
      %v8808 = vld [vmem:[%s6355 + $0x40] sm:$0xff]
      %v8809 = vld [vmem:[%s6355 + $0x48] sm:$0xff]
      %v8810 = vld [vmem:[%s6355 + $0x50] sm:$0xff]
      %v8811 = vld [vmem:[%s6355 + $0x58] sm:$0xff]
      %v8812 = vld [vmem:[%s6355 + $0x60] sm:$0xff]
      %v8813 = vld [vmem:[%s6355 + $0x68] sm:$0xff]
      %v8814 = vld [vmem:[%s6355 + $0x70] sm:$0xff]
      %v8815 = vld [vmem:[%s6355 + $0x78] sm:$0xff]
      %v8816 = vld [vmem:[%s6355 + $0x80] sm:$0xff]
      %v8817 = vld [vmem:[%s6355 + $0x88] sm:$0xff]
      %v8818 = vld [vmem:[%s6355 + $0x90] sm:$0xff]
      %v8819 = vld [vmem:[%s6355 + $0x98] sm:$0xff]
      %v8820 = vld [vmem:[%s6355 + $0xa0] sm:$0xff]
      %v8821 = vld [vmem:[%s6355 + $0xa8] sm:$0xff]
      %v8822 = vld [vmem:[%s6355 + $0xb0] sm:$0xff]
      %v8823 = vld [vmem:[%s6355 + $0xb8] sm:$0xff]
      %v8824 = vld [vmem:[%s6355 + $0xc0] sm:$0xff]
      %v8825 = vld [vmem:[%s6355 + $0xc8] sm:$0xff]
      %v8826 = vld [vmem:[%s6355 + $0xd0] sm:$0xff]
      %v8827 = vld [vmem:[%s6355 + $0xd8] sm:$0xff]
      %v8828 = vld [vmem:[%s6355 + $0xe0] sm:$0xff]
      %v8829 = vld [vmem:[%s6355 + $0xe8] sm:$0xff]
      %v8830 = vld [vmem:[%s6355 + $0xf0] sm:$0xff]
      %v8831 = vld [vmem:[%s6355 + $0xf8] sm:$0xff]
      %v8832 = vld [vmem:[%s6355 + $0x100] sm:$0xff]
      %v8833 = vld [vmem:[%s6355 + $0x108] sm:$0xff]
      %v8834 = vld [vmem:[%s6355 + $0x110] sm:$0xff]
      %v8835 = vld [vmem:[%s6355 + $0x118] sm:$0xff]
      %v8836 = vld [vmem:[%s6355 + $0x120] sm:$0xff]
      %v8837 = vld [vmem:[%s6355 + $0x128] sm:$0xff]
      %v8838 = vld [vmem:[%s6355 + $0x130] sm:$0xff]
      %v8839 = vld [vmem:[%s6355 + $0x138] sm:$0xff]
      %v8840 = vld [vmem:[%s6355 + $0x140] sm:$0xff]
      %v8841 = vld [vmem:[%s6355 + $0x148] sm:$0xff]
      %v8842 = vld [vmem:[%s6355 + $0x150] sm:$0xff]
      %v8843 = vld [vmem:[%s6355 + $0x158] sm:$0xff]
      %v8844 = vld [vmem:[%s6355 + $0x160] sm:$0xff]
      %v8845 = vld [vmem:[%s6355 + $0x168] sm:$0xff]
      %v8846 = vld [vmem:[%s6355 + $0x170] sm:$0xff]
      %v8847 = vld [vmem:[%s6355 + $0x178] sm:$0xff]
      %8848 = vmatprep.subr.mxu0 0.0
      %8849 = vmatpush1.msra.mxu0 %v8815
      %8850 = vmatprep.subr.mxu0 0.0
      %8851 = vmatpush1.msra.mxu0 %v8814
      %8852 = vmatprep.subr.mxu0 0.0
      %8853 = vmatpush1.msra.mxu0 %v8813
      %8854 = vmatprep.subr.mxu0 0.0
      %8855 = vmatpush1.msra.mxu0 %v8812
      %8856 = vmatprep.subr.mxu0 0.0
      %8857 = vmatpush1.msra.mxu0 %v8811
      %8858 = vmatprep.subr.mxu0 0.0
      %8859 = vmatpush1.msra.mxu0 %v8810
      %8860 = vmatprep.subr.mxu0 0.0
      %8861 = vmatpush1.msra.mxu0 %v8809
      %8862 = vmatprep.subr.mxu0 0.0
      %8863 = vmatpush1.msra.mxu0 %v8808
      %8864 = vmatprep.subr.mxu0 0.0
      %8865 = vmatpush1.msra.mxu0 %v8807
      %8866 = vmatprep.subr.mxu0 0.0
      %8867 = vmatpush1.msra.mxu0 %v8806
      %8868 = vmatprep.subr.mxu0 0.0
      %8869 = vmatpush1.msra.mxu0 %v8805
      %8870 = vmatprep.subr.mxu0 0.0
      %8871 = vmatpush1.msra.mxu0 %v8804
      %8872 = vmatprep.subr.mxu0 0.0
      %8873 = vmatpush1.msra.mxu0 %v8803
      %8874 = vmatprep.subr.mxu0 0.0
      %8875 = vmatpush1.msra.mxu0 %v8802
      %8876 = vmatprep.subr.mxu0 0.0
      %8877 = vmatpush1.msra.mxu0 %v8801
      %8878 = vmatprep.subr.mxu0 0.0
      %8879 = vmatpush1.msra.mxu0 %v8800
      %8880 = vmatprep.subr.mxu0 0.0
      %8881 = vmatpush2.msra.mxu0 %v8831
      %8882 = vmatprep.subr.mxu0 0.0
      %8883 = vmatpush2.msra.mxu0 %v8830
      %8884 = vmatprep.subr.mxu0 0.0
      %8885 = vmatpush2.msra.mxu0 %v8829
      %8886 = vmatprep.subr.mxu0 0.0
      %8887 = vmatpush2.msra.mxu0 %v8828
      %8888 = vmatprep.subr.mxu0 0.0
      %8889 = vmatpush2.msra.mxu0 %v8827
      %8890 = vmatprep.subr.mxu0 0.0
      %8891 = vmatpush2.msra.mxu0 %v8826
      %8892 = vmatprep.subr.mxu0 0.0
      %8893 = vmatpush2.msra.mxu0 %v8825
      %8894 = vmatprep.subr.mxu0 0.0
      %8895 = vmatpush2.msra.mxu0 %v8824
      %8896 = vmatprep.subr.mxu0 0.0
      %8897 = vmatpush2.msra.mxu0 %v8823
      %8898 = vmatprep.subr.mxu0 0.0
      %8899 = vmatpush2.msra.mxu0 %v8822
      %8900 = vmatprep.subr.mxu0 0.0
      %8901 = vmatpush2.msra.mxu0 %v8821
      %8902 = vmatprep.subr.mxu0 0.0
      %8903 = vmatpush2.msra.mxu0 %v8820
      %8904 = vmatprep.subr.mxu0 0.0
      %8905 = vmatpush2.msra.mxu0 %v8819
      %8906 = vmatprep.subr.mxu0 0.0
      %8907 = vmatpush2.msra.mxu0 %v8818
      %8908 = vmatprep.subr.mxu0 0.0
      %8909 = vmatpush2.msra.mxu0 %v8817
      %8910 = vmatprep.subr.mxu0 0.0
      %8911 = vmatpush2.msra.mxu0 %v8816
      %8912 = vmatprep.mubr.f32.mxu0 %v8753
      %8913 = vmatmul.mubr.f32.gmra.mxu0 %v8752
      %v8914 = vpop.f32.mrf.mxu0
      %v8915 = vadd.f32 0.0, %v8914
      %v8916 = vpop.f32.mrf.mxu0
      %8917 = vmatprep.mubr.f32.mxu0 %v8756
      %8918 = vmatmul.mubr.f32.gmra.mxu0 %v8755
      %v8919 = vpop.f32.mrf.mxu0
      %v8920 = vadd.f32 0.0, %v8919
      %v8921 = vpop.f32.mrf.mxu0
      %8922 = vmatprep.mubr.f32.mxu0 %v8759
      %8923 = vmatmul.mubr.f32.gmra.mxu0 %v8758
      %v8924 = vpop.f32.mrf.mxu0
      %v8925 = vadd.f32 0.0, %v8924
      %v8926 = vpop.f32.mrf.mxu0
      %8927 = vmatprep.mubr.f32.mxu0 %v8762
      %8928 = vmatmul.mubr.f32.gmra.mxu0 %v8761
      %v8929 = vpop.f32.mrf.mxu0
      %v8930 = vadd.f32 0.0, %v8929
      %v8931 = vpop.f32.mrf.mxu0
      %8932 = vmatprep.mubr.f32.mxu0 %v8765
      %8933 = vmatmul.mubr.f32.gmra.mxu0 %v8764
      %v8934 = vpop.f32.mrf.mxu0
      %v8935 = vadd.f32 0.0, %v8934
      %v8936 = vpop.f32.mrf.mxu0
      %8937 = vmatprep.mubr.f32.mxu0 %v8768
      %8938 = vmatmul.mubr.f32.gmra.mxu0 %v8767
      %v8939 = vpop.f32.mrf.mxu0
      %v8940 = vadd.f32 0.0, %v8939
      %v8941 = vpop.f32.mrf.mxu0
      %8942 = vmatprep.mubr.f32.mxu0 %v8771
      %8943 = vmatmul.mubr.f32.gmra.mxu0 %v8770
      %v8944 = vpop.f32.mrf.mxu0
      %v8945 = vadd.f32 0.0, %v8944
      %v8946 = vpop.f32.mrf.mxu0
      %8947 = vmatprep.mubr.f32.mxu0 %v8774
      %8948 = vmatmul.mubr.f32.gmra.mxu0 %v8773
      %v8949 = vpop.f32.mrf.mxu0
      %v8950 = vadd.f32 0.0, %v8949
      %v8951 = vpop.f32.mrf.mxu0
      %8952 = vmatprep.mubr.f32.mxu0 %v8777
      %8953 = vmatmul.mubr.f32.gmra.mxu0 %v8776
      %v8954 = vpop.f32.mrf.mxu0
      %v8955 = vadd.f32 0.0, %v8954
      %v8956 = vpop.f32.mrf.mxu0
      %8957 = vmatprep.mubr.f32.mxu0 %v8780
      %8958 = vmatmul.mubr.f32.gmra.mxu0 %v8779
      %v8959 = vpop.f32.mrf.mxu0
      %v8960 = vadd.f32 0.0, %v8959
      %v8961 = vpop.f32.mrf.mxu0
      %8962 = vmatprep.mubr.f32.mxu0 %v8783
      %8963 = vmatmul.mubr.f32.gmra.mxu0 %v8782
      %v8964 = vpop.f32.mrf.mxu0
      %v8965 = vadd.f32 0.0, %v8964
      %v8966 = vpop.f32.mrf.mxu0
      %8967 = vmatprep.mubr.f32.mxu0 %v8786
      %8968 = vmatmul.mubr.f32.gmra.mxu0 %v8785
      %v8969 = vpop.f32.mrf.mxu0
      %v8970 = vadd.f32 0.0, %v8969
      %v8971 = vpop.f32.mrf.mxu0
      %8972 = vmatprep.mubr.f32.mxu0 %v8789
      %8973 = vmatmul.mubr.f32.gmra.mxu0 %v8788
      %v8974 = vpop.f32.mrf.mxu0
      %v8975 = vadd.f32 0.0, %v8974
      %v8976 = vpop.f32.mrf.mxu0
      %8977 = vmatprep.mubr.f32.mxu0 %v8792
      %8978 = vmatmul.mubr.f32.gmra.mxu0 %v8791
      %v8979 = vpop.f32.mrf.mxu0
      %v8980 = vadd.f32 0.0, %v8979
      %v8981 = vpop.f32.mrf.mxu0
      %8982 = vmatprep.mubr.f32.mxu0 %v8795
      %8983 = vmatmul.mubr.f32.gmra.mxu0 %v8794
      %v8984 = vpop.f32.mrf.mxu0
      %v8985 = vadd.f32 0.0, %v8984
      %v8986 = vpop.f32.mrf.mxu0
      %8987 = vmatprep.mubr.f32.mxu0 %v8798
      %8988 = vmatmul.mubr.f32.gmra.mxu0 %v8797
      %v8989 = vpop.f32.mrf.mxu0
      %v8990 = vadd.f32 0.0, %v8989
      %v8991 = vpop.f32.mrf.mxu0
      %8992 = vdwg.mxu0
      %8993 = vmatprep.subr.mxu0 0.0
      %8994 = vmatpush1.msra.mxu0 %v8847
      %8995 = vmatprep.subr.mxu0 0.0
      %8996 = vmatpush1.msra.mxu0 %v8846
      %8997 = vmatprep.subr.mxu0 0.0
      %8998 = vmatpush1.msra.mxu0 %v8845
      %8999 = vmatprep.subr.mxu0 0.0
      %9000 = vmatpush1.msra.mxu0 %v8844
      %9001 = vmatprep.subr.mxu0 0.0
      %9002 = vmatpush1.msra.mxu0 %v8843
      %9003 = vmatprep.subr.mxu0 0.0
      %9004 = vmatpush1.msra.mxu0 %v8842
      %9005 = vmatprep.subr.mxu0 0.0
      %9006 = vmatpush1.msra.mxu0 %v8841
      %9007 = vmatprep.subr.mxu0 0.0
      %9008 = vmatpush1.msra.mxu0 %v8840
      %9009 = vmatprep.subr.mxu0 0.0
      %9010 = vmatpush1.msra.mxu0 %v8839
      %9011 = vmatprep.subr.mxu0 0.0
      %9012 = vmatpush1.msra.mxu0 %v8838
      %9013 = vmatprep.subr.mxu0 0.0
      %9014 = vmatpush1.msra.mxu0 %v8837
      %9015 = vmatprep.subr.mxu0 0.0
      %9016 = vmatpush1.msra.mxu0 %v8836
      %9017 = vmatprep.subr.mxu0 0.0
      %9018 = vmatpush1.msra.mxu0 %v8835
      %9019 = vmatprep.subr.mxu0 0.0
      %9020 = vmatpush1.msra.mxu0 %v8834
      %9021 = vmatprep.subr.mxu0 0.0
      %9022 = vmatpush1.msra.mxu0 %v8833
      %9023 = vmatprep.subr.mxu0 0.0
      %9024 = vmatpush1.msra.mxu0 %v8832
      %9025 = vmatprep.subr.mxu0 0.0
      %9026 = vmatpush2.msra.mxu0 0.0
      %9027 = vmatprep.subr.mxu0 0.0
      %9028 = vmatpush2.msra.mxu0 0.0
      %9029 = vmatprep.subr.mxu0 0.0
      %9030 = vmatpush2.msra.mxu0 0.0
      %9031 = vmatprep.subr.mxu0 0.0
      %9032 = vmatpush2.msra.mxu0 0.0
      %9033 = vmatprep.subr.mxu0 0.0
      %9034 = vmatpush2.msra.mxu0 0.0
      %9035 = vmatprep.subr.mxu0 0.0
      %9036 = vmatpush2.msra.mxu0 0.0
      %9037 = vmatprep.subr.mxu0 0.0
      %9038 = vmatpush2.msra.mxu0 0.0
      %9039 = vmatprep.subr.mxu0 0.0
      %9040 = vmatpush2.msra.mxu0 0.0
      %9041 = vmatprep.subr.mxu0 0.0
      %9042 = vmatpush2.msra.mxu0 0.0
      %9043 = vmatprep.subr.mxu0 0.0
      %9044 = vmatpush2.msra.mxu0 0.0
      %9045 = vmatprep.subr.mxu0 0.0
      %9046 = vmatpush2.msra.mxu0 0.0
      %9047 = vmatprep.subr.mxu0 0.0
      %9048 = vmatpush2.msra.mxu0 0.0
      %9049 = vmatprep.subr.mxu0 0.0
      %9050 = vmatpush2.msra.mxu0 0.0
      %9051 = vmatprep.subr.mxu0 0.0
      %9052 = vmatpush2.msra.mxu0 0.0
      %9053 = vmatprep.subr.mxu0 0.0
      %9054 = vmatpush2.msra.mxu0 0.0
      %9055 = vmatprep.subr.mxu0 0.0
      %9056 = vmatpush2.msra.mxu0 0.0
      %9057 = vmatprep.mubr.f32.mxu0 0.0
      %9058 = vmatmul.mubr.f32.gmra.mxu0 %v8754
      %v9059 = vpop.f32.mrf.mxu0
      %v9060 = vadd.f32 %v8915, %v9059
      %v9061 = vpop.f32.mrf.mxu0
      %9062 = vmatprep.mubr.f32.mxu0 0.0
      %9063 = vmatmul.mubr.f32.gmra.mxu0 %v8757
      %v9064 = vpop.f32.mrf.mxu0
      %v9065 = vadd.f32 %v8920, %v9064
      %v9066 = vpop.f32.mrf.mxu0
      %9067 = vmatprep.mubr.f32.mxu0 0.0
      %9068 = vmatmul.mubr.f32.gmra.mxu0 %v8760
      %v9069 = vpop.f32.mrf.mxu0
      %v9070 = vadd.f32 %v8925, %v9069
      %v9071 = vpop.f32.mrf.mxu0
      %9072 = vmatprep.mubr.f32.mxu0 0.0
      %9073 = vmatmul.mubr.f32.gmra.mxu0 %v8763
      %v9074 = vpop.f32.mrf.mxu0
      %v9075 = vadd.f32 %v8930, %v9074
      %v9076 = vpop.f32.mrf.mxu0
      %9077 = vmatprep.mubr.f32.mxu0 0.0
      %9078 = vmatmul.mubr.f32.gmra.mxu0 %v8766
      %v9079 = vpop.f32.mrf.mxu0
      %v9080 = vadd.f32 %v8935, %v9079
      %v9081 = vpop.f32.mrf.mxu0
      %9082 = vmatprep.mubr.f32.mxu0 0.0
      %9083 = vmatmul.mubr.f32.gmra.mxu0 %v8769
      %v9084 = vpop.f32.mrf.mxu0
      %v9085 = vadd.f32 %v8940, %v9084
      %v9086 = vpop.f32.mrf.mxu0
      %9087 = vmatprep.mubr.f32.mxu0 0.0
      %9088 = vmatmul.mubr.f32.gmra.mxu0 %v8772
      %v9089 = vpop.f32.mrf.mxu0
      %v9090 = vadd.f32 %v8945, %v9089
      %v9091 = vpop.f32.mrf.mxu0
      %9092 = vmatprep.mubr.f32.mxu0 0.0
      %9093 = vmatmul.mubr.f32.gmra.mxu0 %v8775
      %v9094 = vpop.f32.mrf.mxu0
      %v9095 = vadd.f32 %v8950, %v9094
      %v9096 = vpop.f32.mrf.mxu0
      %9097 = vmatprep.mubr.f32.mxu0 0.0
      %9098 = vmatmul.mubr.f32.gmra.mxu0 %v8778
      %v9099 = vpop.f32.mrf.mxu0
      %v9100 = vadd.f32 %v8955, %v9099
      %v9101 = vpop.f32.mrf.mxu0
      %9102 = vmatprep.mubr.f32.mxu0 0.0
      %9103 = vmatmul.mubr.f32.gmra.mxu0 %v8781
      %v9104 = vpop.f32.mrf.mxu0
      %v9105 = vadd.f32 %v8960, %v9104
      %v9106 = vpop.f32.mrf.mxu0
      %9107 = vmatprep.mubr.f32.mxu0 0.0
      %9108 = vmatmul.mubr.f32.gmra.mxu0 %v8784
      %v9109 = vpop.f32.mrf.mxu0
      %v9110 = vadd.f32 %v8965, %v9109
      %v9111 = vpop.f32.mrf.mxu0
      %9112 = vmatprep.mubr.f32.mxu0 0.0
      %9113 = vmatmul.mubr.f32.gmra.mxu0 %v8787
      %v9114 = vpop.f32.mrf.mxu0
      %v9115 = vadd.f32 %v8970, %v9114
      %v9116 = vpop.f32.mrf.mxu0
      %9117 = vmatprep.mubr.f32.mxu0 0.0
      %9118 = vmatmul.mubr.f32.gmra.mxu0 %v8790
      %v9119 = vpop.f32.mrf.mxu0
      %v9120 = vadd.f32 %v8975, %v9119
      %v9121 = vpop.f32.mrf.mxu0
      %9122 = vmatprep.mubr.f32.mxu0 0.0
      %9123 = vmatmul.mubr.f32.gmra.mxu0 %v8793
      %v9124 = vpop.f32.mrf.mxu0
      %v9125 = vadd.f32 %v8980, %v9124
      %v9126 = vpop.f32.mrf.mxu0
      %9127 = vmatprep.mubr.f32.mxu0 0.0
      %9128 = vmatmul.mubr.f32.gmra.mxu0 %v8796
      %v9129 = vpop.f32.mrf.mxu0
      %v9130 = vadd.f32 %v8985, %v9129
      %v9131 = vpop.f32.mrf.mxu0
      %9132 = vmatprep.mubr.f32.mxu0 0.0
      %9133 = vmatmul.mubr.f32.gmra.mxu0 %v8799
      %v9134 = vpop.f32.mrf.mxu0
      %v9135 = vadd.f32 %v8990, %v9134
      %v9136 = vpop.f32.mrf.mxu0
      %9137 = vdwg.mxu0
      %v9138 = vadd.f32 %v8674, %v9060
      %v9139 = vadd.f32 %v8679, %v9065
      %v9140 = vadd.f32 %v8684, %v9070
      %v9141 = vadd.f32 %v8689, %v9075
      %v9142 = vadd.f32 %v8694, %v9080
      %v9143 = vadd.f32 %v8699, %v9085
      %v9144 = vadd.f32 %v8704, %v9090
      %v9145 = vadd.f32 %v8709, %v9095
      %v9146 = vadd.f32 %v8714, %v9100
      %v9147 = vadd.f32 %v8719, %v9105
      %v9148 = vadd.f32 %v8724, %v9110
      %v9149 = vadd.f32 %v8729, %v9115
      %v9150 = vadd.f32 %v8734, %v9120
      %v9151 = vadd.f32 %v8739, %v9125
      %v9152 = vadd.f32 %v8744, %v9130
      %v9153 = vadd.f32 %v8749, %v9135
      %v9154 = vld [vmem:[%s4] sm:$0x1]
      %v9156 = vlaneseq
      %v9157 = vshrl.u32 %v9156, 7
      %v9158 = vsub.s32 0, %v9157
      %v9159 = vrot.slane %v9154, %v9158
      %v9161 = vadd.f32 %v9138, %v9159
      %v9162 = vadd.f32 %v9139, %v9159
      %v9163 = vadd.f32 %v9140, %v9159
      %v9164 = vadd.f32 %v9141, %v9159
      %v9165 = vadd.f32 %v9142, %v9159
      %v9166 = vadd.f32 %v9143, %v9159
      %v9167 = vadd.f32 %v9144, %v9159
      %v9168 = vadd.f32 %v9145, %v9159
      %v9169 = vadd.f32 %v9146, %v9159
      %v9170 = vadd.f32 %v9147, %v9159
      %v9171 = vadd.f32 %v9148, %v9159
      %v9172 = vadd.f32 %v9149, %v9159
      %v9173 = vadd.f32 %v9150, %v9159
      %v9174 = vadd.f32 %v9151, %v9159
      %v9175 = vadd.f32 %v9152, %v9159
      %v9176 = vadd.f32 %v9153, %v9159
      %v9177 = vld [vmem:[%s219 + $0x120] sm:$0xff]
      %v9178 = vld [vmem:[%s219 + $0x128] sm:$0xff]
      %v9179 = vld [vmem:[%s219 + $0x130] sm:$0xff]
      %v9180 = vld [vmem:[%s219 + $0x138] sm:$0xff]
      %v9181 = vld [vmem:[%s219 + $0x140] sm:$0xff]
      %v9182 = vld [vmem:[%s219 + $0x148] sm:$0xff]
      %v9183 = vld [vmem:[%s219 + $0x150] sm:$0xff]
      %v9184 = vld [vmem:[%s219 + $0x158] sm:$0xff]
      %v9185 = vld [vmem:[%s219 + $0x160] sm:$0xff]
      %v9186 = vld [vmem:[%s219 + $0x168] sm:$0xff]
      %v9187 = vld [vmem:[%s219 + $0x170] sm:$0xff]
      %v9188 = vld [vmem:[%s219 + $0x178] sm:$0xff]
      %v9189 = vld [vmem:[%s219 + $0x180] sm:$0xff]
      %v9190 = vld [vmem:[%s219 + $0x188] sm:$0xff]
      %v9191 = vld [vmem:[%s219 + $0x190] sm:$0xff]
      %v9192 = vld [vmem:[%s219 + $0x198] sm:$0xff]
      %v9193 = vadd.f32 %v9161, %v9177
      %v9194 = vadd.f32 %v9162, %v9178
      %v9195 = vadd.f32 %v9163, %v9179
      %v9196 = vadd.f32 %v9164, %v9180
      %v9197 = vadd.f32 %v9165, %v9181
      %v9198 = vadd.f32 %v9166, %v9182
      %v9199 = vadd.f32 %v9167, %v9183
      %v9200 = vadd.f32 %v9168, %v9184
      %v9201 = vadd.f32 %v9169, %v9185
      %v9202 = vadd.f32 %v9170, %v9186
      %v9203 = vadd.f32 %v9171, %v9187
      %v9204 = vadd.f32 %v9172, %v9188
      %v9205 = vadd.f32 %v9173, %v9189
      %v9206 = vadd.f32 %v9174, %v9190
      %v9207 = vadd.f32 %v9175, %v9191
      %v9208 = vadd.f32 %v9176, %v9192
      %v9209 = vmax.f32 %v9193, 0.0
      %v9210 = vmax.f32 %v9194, 0.0
      %v9211 = vmax.f32 %v9195, 0.0
      %v9212 = vmax.f32 %v9196, 0.0
      %v9213 = vmax.f32 %v9197, 0.0
      %v9214 = vmax.f32 %v9198, 0.0
      %v9215 = vmax.f32 %v9199, 0.0
      %v9216 = vmax.f32 %v9200, 0.0
      %v9217 = vmax.f32 %v9201, 0.0
      %v9218 = vmax.f32 %v9202, 0.0
      %v9219 = vmax.f32 %v9203, 0.0
      %v9220 = vmax.f32 %v9204, 0.0
      %v9221 = vmax.f32 %v9205, 0.0
      %v9222 = vmax.f32 %v9206, 0.0
      %v9223 = vmax.f32 %v9207, 0.0
      %v9224 = vmax.f32 %v9208, 0.0
      %9225 = vst [vmem:[%s224 + $0x100] sm:$0xff] %v9209
      %9226 = vst [vmem:[%s224 + $0x108] sm:$0xff] %v9210
      %9227 = vst [vmem:[%s224 + $0x110] sm:$0xff] %v9211
      %9228 = vst [vmem:[%s224 + $0x118] sm:$0xff] %v9212
      %9229 = vst [vmem:[%s224 + $0x120] sm:$0xff] %v9213
      %9230 = vst [vmem:[%s224 + $0x128] sm:$0xff] %v9214
      %9231 = vst [vmem:[%s224 + $0x130] sm:$0xff] %v9215
      %9232 = vst [vmem:[%s224 + $0x138] sm:$0xff] %v9216
      %9233 = vst [vmem:[%s224 + $0x140] sm:$0xff] %v9217
      %9234 = vst [vmem:[%s224 + $0x148] sm:$0xff] %v9218
      %9235 = vst [vmem:[%s224 + $0x150] sm:$0xff] %v9219
      %9236 = vst [vmem:[%s224 + $0x158] sm:$0xff] %v9220
      %9237 = vst [vmem:[%s224 + $0x160] sm:$0xff] %v9221
      %9238 = vst [vmem:[%s224 + $0x168] sm:$0xff] %v9222
      %9239 = vst [vmem:[%s224 + $0x170] sm:$0xff] %v9223
      %9240 = vst [vmem:[%s224 + $0x178] sm:$0xff] %v9224
      %p9241 = scmp.lt.s32.totalorder %s16, 1
      %s9242 = scalar_select %p9241, %s16, 1
      %s9243 = smul.addr %s9242, 48
      %s9244 = smul.addr %s9243, 8
      %s9245 = scalar_lea.vmem %s5, %s9244
      // Predicated region
      $region41: #{basic_block_forward.1} parent=39 // pred_check
        %p9246 = pneg %p144
      $region42: #{basic_block_forward.1} parent=39 // pred_check_branch
        %9248 = sbr.rel (%p9246) target = $region44
      $region43: #{basic_block_forward.1} parent=39 // pred_region
        _
      $region44: #{basic_block_forward.1} parent=39 // pred_fallthru
        _
    $region40: #{basic_block_forward.1} parent=5 // pred_fallthru
      _
    %p9249 = scmp.le.s32.totalorder 2, %s11
    // Predicated region
    $region45: #{basic_block_forward.1} parent=5 // pred_check
      %p9250 = pneg %p9249
    $region46: #{basic_block_forward.1} parent=5 // pred_check_branch
      %9252 = sbr.rel (%p9250) target = $region48
    $region47: #{basic_block_forward.1} parent=5 // pred_region
      %s9253 = ssub.s32 %s11, 2
      // Predicated region
      $region49: #{basic_block_forward.1} parent=47 // pred_check
        %p9254 = pneg %p150
      $region50: #{basic_block_forward.1} parent=47 // pred_check_branch
        %9256 = sbr.rel (%p9254) target = $region52
      $region51: #{basic_block_forward.1} parent=47 // pred_region
        %p9257 = scmp.lt.s32.totalorder %s17, 1
        %s9258 = scalar_select %p9257, %s17, 1
        %s9259 = smul.addr %s9258, 48
        %s9260 = smul.addr %s9259, 8
        %s9261 = scalar_lea.vmem %s5, %s9260
      $region52: #{basic_block_forward.1} parent=47 // pred_fallthru
        _
    $region48: #{basic_block_forward.1} parent=5 // pred_fallthru
      _
  $region6: #{basic_block_forward.1} parent=0 // loop_footer
    %s15 = sadd.s32 1, %s11
  $region7: #{basic_block_forward.1} parent=0 // loop_footer_branch
    %10 = sbr.rel target = $region3
  $region8: #{basic_block_forward.1} parent=0 // loop_exit
    _

</llo_original>
